<compile_context>
chip_gen: v7x
topology: tpu7x:2x2x1
jax: 0.10.0
libtpu: 0.0.40
codegen_flags: <defaults>
</compile_context>

<pallas_src>
import jax
import jax.numpy as jnp
from jax import lax
from jax.experimental import pallas as pl
from jax.experimental.pallas import tpu as pltpu

EPS = 1e-5


# ---------------------------------------------------------------------------
# Pallas kernel: one batch element per grid step.
# ---------------------------------------------------------------------------
def affine_modulate_kernel(
    img_ref, tp_ref,                                   # (1, HW, C) each
    w_img_ref, w_tp_ref, b_first_ref, alpha_first_ref, # (C,3C) (C,3C) (1,3C) (1,3C)
    w_second_ref, b_second_ref,                        # (3C,3C) block-diag, (1,3C)
    attn_w_ref, attn_b_ref,                            # (HW,C), (1,C)
    wa1_ref, ba1_ref, wa2_ref, ba2_ref, wa3_ref, ba3_ref,  # (C,C),(1,C) x3
    wg1_ref, bg1_ref, alpha_g_ref, wg2_ref, bg2_ref,   # aggregation (BN folded)
    bn2_scale_ref, bn2_shift_ref,                      # (1,C)
    out_ref,                                           # (1, HW, C)
):
    C = attn_w_ref.shape[1]
    img = img_ref[0]                                   # (HW, C)
    tp = tp_ref[0]                                     # (HW, C)

    # Fused first 1x1 convs of the 3 branches; tp_map's BatchNorm is folded
    # into w_tp / b_first, so no per-pixel BN work is done here.
    g = (jnp.dot(img, w_img_ref[...], preferred_element_type=jnp.float32)
         + jnp.dot(tp, w_tp_ref[...], preferred_element_type=jnp.float32)
         + b_first_ref[...])                           # (HW, 3C)
    # Per-branch PReLU (branch BNs already folded into the weights above).
    g = jnp.where(g > 0, g, alpha_first_ref[...] * g)

    # Fused second 1x1 convs (block-diagonal weight): x1|x2|x3 lane-concatenated.
    x123 = (jnp.dot(g, w_second_ref[...], preferred_element_type=jnp.float32)
            + b_second_ref[...])                       # (HW, 3C)
    x1 = x123[:, :C]
    x2 = x123[:, C:2 * C]
    x3 = x123[:, 2 * C:]

    # channel_attn: depthwise (16,64) conv over the full plane == per-channel
    # weighted spatial sum, then 3 tiny 1x1 convs with ReLU/ReLU/Sigmoid.
    s = jnp.sum(x1 * attn_w_ref[...], axis=0, keepdims=True) + attn_b_ref[...]  # (1, C)
    t = jnp.maximum(jnp.dot(s, wa1_ref[...], preferred_element_type=jnp.float32)
                    + ba1_ref[...], 0.0)
    t = jnp.maximum(jnp.dot(t, wa2_ref[...], preferred_element_type=jnp.float32)
                    + ba2_ref[...], 0.0)
    a = jax.nn.sigmoid(jnp.dot(t, wa3_ref[...], preferred_element_type=jnp.float32)
                       + ba3_ref[...])                 # (1, C) channel attention

    # aggregation(a * x2): conv1x1 + (folded BN) + PReLU + conv1x1.
    h = jnp.dot(x2 * a, wg1_ref[...], preferred_element_type=jnp.float32) + bg1_ref[...]
    h = jnp.where(h > 0, h, alpha_g_ref[...] * h)
    agg = jnp.dot(h, wg2_ref[...], preferred_element_type=jnp.float32) + bg2_ref[...]

    # BN2(x3 + agg), eval-mode BN folded to scale/shift.  One lane-dense store.
    out = (x3 + agg) * bn2_scale_ref[...] + bn2_shift_ref[...]
    out_ref[0] = out.astype(out_ref.dtype)


# ---------------------------------------------------------------------------
# Wrapper: NCHW <-> (B, H*W, C) glue + pallas_call with a batch grid.
# ---------------------------------------------------------------------------
def affine_modulate_pallas(image_feature, tp_map, kparams):
    B, C, H, W = image_feature.shape
    HW = H * W
    img = jnp.transpose(image_feature, (0, 2, 3, 1)).reshape(B, HW, C)
    tp = jnp.transpose(tp_map, (0, 2, 3, 1)).reshape(B, HW, C)

    data_spec = pl.BlockSpec((1, HW, C), lambda b: (b, 0, 0))

    def wspec(arr):
        nd = arr.ndim
        return pl.BlockSpec(arr.shape, lambda b, _nd=nd: (0,) * _nd)

    in_specs = [data_spec, data_spec] + [wspec(p) for p in kparams]

    out = pl.pallas_call(
        affine_modulate_kernel,
        out_shape=jax.ShapeDtypeStruct((B, HW, C), jnp.float32),
        grid=(B,),
        in_specs=in_specs,
        out_specs=data_spec,
        compiler_params=pltpu.CompilerParams(
            dimension_semantics=("parallel",)),
    )(img, tp, *kparams)

    out = out.reshape(B, H, W, C)
    return jnp.transpose(out, (0, 3, 1, 2))            # back to NCHW


# ---------------------------------------------------------------------------
# Parameter construction (PyTorch shapes / init ranges) + folding for kernel.
# ---------------------------------------------------------------------------
def make_raw_params(key, C, H, W):
    ks = iter(jax.random.split(key, 48))

    def conv_w(kk, o, i, kh=1, kw=1):
        k = float(i * kh * kw) ** -0.5
        return jax.random.uniform(kk, (o, i, kh, kw), jnp.float32, -k, k)

    def conv_b(kk, o, fan_in):
        k = float(fan_in) ** -0.5
        return jax.random.uniform(kk, (o,), jnp.float32, -k, k)

    def bn(kk, c):
        k1, k2, k3, k4 = jax.random.split(kk, 4)
        return dict(
            gamma=jax.random.uniform(k1, (c,), jnp.float32, 0.5, 1.5),
            beta=0.1 * jax.random.normal(k2, (c,), jnp.float32),
            mean=0.1 * jax.random.normal(k3, (c,), jnp.float32),
            var=jax.random.uniform(k4, (c,), jnp.float32, 0.5, 1.5),
        )

    def branch(cin):
        return dict(
            w1=conv_w(next(ks), C, cin)[:, :, 0, 0], b1=conv_b(next(ks), C, cin),
            bn=bn(next(ks), C),
            alpha=jnp.float32(0.25),
            w2=conv_w(next(ks), C, C)[:, :, 0, 0], b2=conv_b(next(ks), C, C),
        )

    P = dict(
        bn0=bn(next(ks), C),
        br1=branch(2 * C), br2=branch(2 * C), br3=branch(2 * C),
        attn_w=conv_w(next(ks), C, 1, H, W).reshape(C, H, W),
        attn_b=conv_b(next(ks), C, H * W),
        wa1=conv_w(next(ks), C, C)[:, :, 0, 0], ba1=conv_b(next(ks), C, C),
        wa2=conv_w(next(ks), C, C)[:, :, 0, 0], ba2=conv_b(next(ks), C, C),
        wa3=conv_w(next(ks), C, C)[:, :, 0, 0], ba3=conv_b(next(ks), C, C),
        agg=branch(C),
        bn2=bn(next(ks), C),
    )
    return P


def fold_bn(bn):
    s = bn["gamma"] / jnp.sqrt(bn["var"] + EPS)
    return s, bn["beta"] - s * bn["mean"]


def fold_params(P, C, H, W):
    HW = H * W

    def fold_branch_first(p):
        s, sh = fold_bn(p["bn"])
        return p["w1"] * s[:, None], p["b1"] * s + sh   # BN folded into conv1

    w1s, b1s, alphas, w2s, b2s = [], [], [], [], []
    for name in ("br1", "br2", "br3"):
        w1, b1 = fold_branch_first(P[name])
        w1s.append(w1.T)                                # (2C, C)
        b1s.append(b1)
        alphas.append(jnp.full((C,), P[name]["alpha"], jnp.float32))
        w2s.append(P[name]["w2"].T)                     # (C, C)
        b2s.append(P[name]["b2"])
    w_first = jnp.concatenate(w1s, axis=1)              # (2C, 3C)
    b_first = jnp.concatenate(b1s)[None, :]             # (1, 3C)
    alpha_first = jnp.concatenate(alphas)[None, :]      # (1, 3C)
    w_second = jnp.zeros((3 * C, 3 * C), jnp.float32)   # block-diagonal second convs
    for i, w2 in enumerate(w2s):
        w_second = w_second.at[i * C:(i + 1) * C, i * C:(i + 1) * C].set(w2)
    b_second = jnp.concatenate(b2s)[None, :]            # (1, 3C)

    # Fold tp_map's BatchNorm into the tp half of the fused first-conv weight.
    s0, sh0 = fold_bn(P["bn0"])
    w_img = w_first[:C, :]
    w_tp_raw = w_first[C:, :]
    w_tp = s0[:, None] * w_tp_raw
    b_first = b_first + jnp.dot(sh0[None, :], w_tp_raw,
                                precision=lax.Precision.HIGHEST)

    attn_w = jnp.transpose(P["attn_w"], (1, 2, 0)).reshape(HW, C)
    attn_b = P["attn_b"][None, :]
    wa1, ba1 = P["wa1"].T, P["ba1"][None, :]
    wa2, ba2 = P["wa2"].T, P["ba2"][None, :]
    wa3, ba3 = P["wa3"].T, P["ba3"][None, :]

    wg1_r, bg1_r = fold_branch_first(P["agg"])
    wg1, bg1 = wg1_r.T, bg1_r[None, :]
    alpha_g = jnp.full((1, C), P["agg"]["alpha"], jnp.float32)
    wg2, bg2 = P["agg"]["w2"].T, P["agg"]["b2"][None, :]

    s2, sh2 = fold_bn(P["bn2"])
    bn2_scale, bn2_shift = s2[None, :], sh2[None, :]

    return (w_img, w_tp, b_first, alpha_first, w_second, b_second,
            attn_w, attn_b, wa1, ba1, wa2, ba2, wa3, ba3,
            wg1, bg1, alpha_g, wg2, bg2, bn2_scale, bn2_shift)


# ---------------------------------------------------------------------------
# Pure-JAX reference mirroring the PyTorch forward (eval-mode BatchNorm).
# ---------------------------------------------------------------------------
def _bn_eval(x, bn):
    s = bn["gamma"] / jnp.sqrt(bn["var"] + EPS)
    sh = bn["beta"] - s * bn["mean"]
    return x * s[None, :, None, None] + sh[None, :, None, None]


def _conv1x1(x, w, b):
    y = jnp.einsum("bihw,oi->bohw", x, w, precision=lax.Precision.HIGHEST)
    return y + b[None, :, None, None]


def _branch_ref(x, p):
    y = _conv1x1(x, p["w1"], p["b1"])
    y = _bn_eval(y, p["bn"])
    y = jnp.where(y > 0, y, p["alpha"] * y)
    return _conv1x1(y, p["w2"], p["b2"])


def affine_modulate_ref(image_feature, tp_map, P):
    tp = _bn_eval(tp_map, P["bn0"])
    cat = jnp.concatenate([image_feature, tp], axis=1)
    x1 = _branch_ref(cat, P["br1"])
    x2 = _branch_ref(cat, P["br2"])
    x3 = _branch_ref(cat, P["br3"])
    s = jnp.einsum("bchw,chw->bc", x1, P["attn_w"],
                   precision=lax.Precision.HIGHEST) + P["attn_b"][None, :]
    t = jax.nn.relu(jnp.dot(s, P["wa1"].T, precision=lax.Precision.HIGHEST) + P["ba1"][None, :])
    t = jax.nn.relu(jnp.dot(t, P["wa2"].T, precision=lax.Precision.HIGHEST) + P["ba2"][None, :])
    a = jax.nn.sigmoid(jnp.dot(t, P["wa3"].T, precision=lax.Precision.HIGHEST) + P["ba3"][None, :])
    x2 = _branch_ref(a[:, :, None, None] * x2, P["agg"])
    return _bn_eval(x3 + x2, P["bn2"])


if __name__ == "__main__":
    # channel_attn's (16, 64) depthwise kernel and hard-coded 64 channels fix
    # the spatial size to H=16, W=64 and C=64.
    B, C, H, W = 2, 64, 16, 64
    key = jax.random.PRNGKey(0)
    k_img, k_tp, k_par = jax.random.split(key, 3)
    image_feature = jax.random.normal(k_img, (B, C, H, W), jnp.float32)
    tp_map = jax.random.normal(k_tp, (B, C, H, W), jnp.float32)

    raw = make_raw_params(k_par, C, H, W)
    kparams = fold_params(raw, C, H, W)

    out = affine_modulate_pallas(image_feature, tp_map, kparams)
    out = jax.block_until_ready(out)

    ref = affine_modulate_ref(image_feature, tp_map, raw)
    assert out.shape == (B, C, H, W)
    err = float(jnp.max(jnp.abs(out - ref)))
    assert err < 1e-3, err
    print("KERNEL_OK")
</pallas_src>

<mosaic_0001>
module attributes {stable_mosaic.version = 11 : i64} {
  func.func @affine_modulate_kernel(%arg0: i32, %arg1: memref<1x1024x64xf32, #tpu.memory_space<vmem>>, %arg2: memref<1x1024x64xf32, #tpu.memory_space<vmem>>, %arg3: memref<64x192xf32, #tpu.memory_space<vmem>>, %arg4: memref<64x192xf32, #tpu.memory_space<vmem>>, %arg5: memref<1x192xf32, #tpu.memory_space<vmem>>, %arg6: memref<1x192xf32, #tpu.memory_space<vmem>>, %arg7: memref<192x192xf32, #tpu.memory_space<vmem>>, %arg8: memref<1x192xf32, #tpu.memory_space<vmem>>, %arg9: memref<1024x64xf32, #tpu.memory_space<vmem>>, %arg10: memref<1x64xf32, #tpu.memory_space<vmem>>, %arg11: memref<64x64xf32, #tpu.memory_space<vmem>>, %arg12: memref<1x64xf32, #tpu.memory_space<vmem>>, %arg13: memref<64x64xf32, #tpu.memory_space<vmem>>, %arg14: memref<1x64xf32, #tpu.memory_space<vmem>>, %arg15: memref<64x64xf32, #tpu.memory_space<vmem>>, %arg16: memref<1x64xf32, #tpu.memory_space<vmem>>, %arg17: memref<64x64xf32, #tpu.memory_space<vmem>>, %arg18: memref<1x64xf32, #tpu.memory_space<vmem>>, %arg19: memref<1x64xf32, #tpu.memory_space<vmem>>, %arg20: memref<64x64xf32, #tpu.memory_space<vmem>>, %arg21: memref<1x64xf32, #tpu.memory_space<vmem>>, %arg22: memref<1x64xf32, #tpu.memory_space<vmem>>, %arg23: memref<1x64xf32, #tpu.memory_space<vmem>>, %arg24: memref<1x1024x64xf32, #tpu.memory_space<vmem>>) attributes {dimension_semantics = [#tpu.dimension_semantics<parallel>], iteration_bounds = array<i64: 2>, scalar_prefetch = 0 : i64, scratch_operands = 0 : i64, tpu.core_type = #tpu.core_type<tc>, window_params = [{transform_indices = @transform_0, window_bounds = array<i64: 1, 1024, 64>}, {transform_indices = @transform_1, window_bounds = array<i64: 1, 1024, 64>}, {pipeline_mode = #tpu.pipeline_mode<synchronous>, transform_indices = @transform_2, window_bounds = array<i64: 64, 192>}, {pipeline_mode = #tpu.pipeline_mode<synchronous>, transform_indices = @transform_3, window_bounds = array<i64: 64, 192>}, {pipeline_mode = #tpu.pipeline_mode<synchronous>, transform_indices = @transform_4, window_bounds = array<i64: 1, 192>}, {pipeline_mode = #tpu.pipeline_mode<synchronous>, transform_indices = @transform_5, window_bounds = array<i64: 1, 192>}, {pipeline_mode = #tpu.pipeline_mode<synchronous>, transform_indices = @transform_6, window_bounds = array<i64: 192, 192>}, {pipeline_mode = #tpu.pipeline_mode<synchronous>, transform_indices = @transform_7, window_bounds = array<i64: 1, 192>}, {pipeline_mode = #tpu.pipeline_mode<synchronous>, transform_indices = @transform_8, window_bounds = array<i64: 1024, 64>}, {pipeline_mode = #tpu.pipeline_mode<synchronous>, transform_indices = @transform_9, window_bounds = array<i64: 1, 64>}, {pipeline_mode = #tpu.pipeline_mode<synchronous>, transform_indices = @transform_10, window_bounds = array<i64: 64, 64>}, {pipeline_mode = #tpu.pipeline_mode<synchronous>, transform_indices = @transform_11, window_bounds = array<i64: 1, 64>}, {pipeline_mode = #tpu.pipeline_mode<synchronous>, transform_indices = @transform_12, window_bounds = array<i64: 64, 64>}, {pipeline_mode = #tpu.pipeline_mode<synchronous>, transform_indices = @transform_13, window_bounds = array<i64: 1, 64>}, {pipeline_mode = #tpu.pipeline_mode<synchronous>, transform_indices = @transform_14, window_bounds = array<i64: 64, 64>}, {pipeline_mode = #tpu.pipeline_mode<synchronous>, transform_indices = @transform_15, window_bounds = array<i64: 1, 64>}, {pipeline_mode = #tpu.pipeline_mode<synchronous>, transform_indices = @transform_16, window_bounds = array<i64: 64, 64>}, {pipeline_mode = #tpu.pipeline_mode<synchronous>, transform_indices = @transform_17, window_bounds = array<i64: 1, 64>}, {pipeline_mode = #tpu.pipeline_mode<synchronous>, transform_indices = @transform_18, window_bounds = array<i64: 1, 64>}, {pipeline_mode = #tpu.pipeline_mode<synchronous>, transform_indices = @transform_19, window_bounds = array<i64: 64, 64>}, {pipeline_mode = #tpu.pipeline_mode<synchronous>, transform_indices = @transform_20, window_bounds = array<i64: 1, 64>}, {pipeline_mode = #tpu.pipeline_mode<synchronous>, transform_indices = @transform_21, window_bounds = array<i64: 1, 64>}, {pipeline_mode = #tpu.pipeline_mode<synchronous>, transform_indices = @transform_22, window_bounds = array<i64: 1, 64>}, {transform_indices = @transform_23, window_bounds = array<i64: 1, 1024, 64>}]} {
    %c0 = arith.constant 0 : index
    %c0_0 = arith.constant 0 : index
    %c0_1 = arith.constant 0 : index
    %0 = vector.load %arg1[%c0, %c0_0, %c0_1] : memref<1x1024x64xf32, #tpu.memory_space<vmem>>, vector<1x1024x64xf32>
    %1 = vector.shape_cast %0 : vector<1x1024x64xf32> to vector<1024x64xf32>
    %c0_2 = arith.constant 0 : index
    %c0_3 = arith.constant 0 : index
    %c0_4 = arith.constant 0 : index
    %2 = vector.load %arg2[%c0_2, %c0_3, %c0_4] : memref<1x1024x64xf32, #tpu.memory_space<vmem>>, vector<1x1024x64xf32>
    %3 = vector.shape_cast %2 : vector<1x1024x64xf32> to vector<1024x64xf32>
    %c0_5 = arith.constant 0 : index
    %c0_6 = arith.constant 0 : index
    %4 = vector.load %arg3[%c0_5, %c0_6] : memref<64x192xf32, #tpu.memory_space<vmem>>, vector<64x192xf32>
    %cst = arith.constant dense<0.000000e+00> : vector<1024x192xf32>
    %5 = tpu.matmul %1, %4, %cst {dimension_numbers = #tpu.dot_dimension_numbers<[1], [0], [0], [1], [0, 0, 1, 1], [], []>} : vector<1024x64xf32>, vector<64x192xf32>, vector<1024x192xf32> -> vector<1024x192xf32>
    %c0_7 = arith.constant 0 : index
    %c0_8 = arith.constant 0 : index
    %6 = vector.load %arg4[%c0_7, %c0_8] : memref<64x192xf32, #tpu.memory_space<vmem>>, vector<64x192xf32>
    %cst_9 = arith.constant dense<0.000000e+00> : vector<1024x192xf32>
    %7 = tpu.matmul %3, %6, %cst_9 {dimension_numbers = #tpu.dot_dimension_numbers<[1], [0], [0], [1], [0, 0, 1, 1], [], []>} : vector<1024x64xf32>, vector<64x192xf32>, vector<1024x192xf32> -> vector<1024x192xf32>
    %8 = arith.addf %5, %7 : vector<1024x192xf32>
    %c0_10 = arith.constant 0 : index
    %c0_11 = arith.constant 0 : index
    %9 = vector.load %arg5[%c0_10, %c0_11] : memref<1x192xf32, #tpu.memory_space<vmem>>, vector<1x192xf32>
    %10 = vector.broadcast %9 : vector<1x192xf32> to vector<1024x192xf32>
    %11 = arith.addf %8, %10 : vector<1024x192xf32>
    %cst_12 = arith.constant 0.000000e+00 : f32
    %12 = vector.broadcast %cst_12 : f32 to vector<1024x192xf32>
    %13 = arith.cmpf ogt, %11, %12 : vector<1024x192xf32>
    %c0_13 = arith.constant 0 : index
    %c0_14 = arith.constant 0 : index
    %14 = vector.load %arg6[%c0_13, %c0_14] : memref<1x192xf32, #tpu.memory_space<vmem>>, vector<1x192xf32>
    %15 = vector.broadcast %14 : vector<1x192xf32> to vector<1024x192xf32>
    %16 = arith.mulf %15, %11 : vector<1024x192xf32>
    %17 = arith.select %13, %11, %16 : vector<1024x192xi1>, vector<1024x192xf32>
    %c0_15 = arith.constant 0 : index
    %c0_16 = arith.constant 0 : index
    %18 = vector.load %arg7[%c0_15, %c0_16] : memref<192x192xf32, #tpu.memory_space<vmem>>, vector<192x192xf32>
    %cst_17 = arith.constant dense<0.000000e+00> : vector<1024x192xf32>
    %19 = tpu.matmul %17, %18, %cst_17 {dimension_numbers = #tpu.dot_dimension_numbers<[1], [0], [0], [1], [0, 0, 1, 1], [], []>} : vector<1024x192xf32>, vector<192x192xf32>, vector<1024x192xf32> -> vector<1024x192xf32>
    %c0_18 = arith.constant 0 : index
    %c0_19 = arith.constant 0 : index
    %20 = vector.load %arg8[%c0_18, %c0_19] : memref<1x192xf32, #tpu.memory_space<vmem>>, vector<1x192xf32>
    %21 = vector.broadcast %20 : vector<1x192xf32> to vector<1024x192xf32>
    %22 = arith.addf %19, %21 : vector<1024x192xf32>
    %23 = vector.extract_strided_slice %22 {offsets = [0, 0], sizes = [1024, 64], strides = [1, 1]} : vector<1024x192xf32> to vector<1024x64xf32>
    %24 = vector.extract_strided_slice %22 {offsets = [0, 64], sizes = [1024, 64], strides = [1, 1]} : vector<1024x192xf32> to vector<1024x64xf32>
    %25 = vector.extract_strided_slice %22 {offsets = [0, 128], sizes = [1024, 64], strides = [1, 1]} : vector<1024x192xf32> to vector<1024x64xf32>
    %c0_20 = arith.constant 0 : index
    %c0_21 = arith.constant 0 : index
    %26 = vector.load %arg9[%c0_20, %c0_21] : memref<1024x64xf32, #tpu.memory_space<vmem>>, vector<1024x64xf32>
    %27 = arith.mulf %23, %26 : vector<1024x64xf32>
    %cst_22 = arith.constant dense<0.000000e+00> : vector<64xf32>
    %28 = vector.multi_reduction <add>, %27, %cst_22 [0] : vector<1024x64xf32> to vector<64xf32>
    %29 = vector.shape_cast %28 : vector<64xf32> to vector<1x64xf32>
    %c0_23 = arith.constant 0 : index
    %c0_24 = arith.constant 0 : index
    %30 = vector.load %arg10[%c0_23, %c0_24] : memref<1x64xf32, #tpu.memory_space<vmem>>, vector<1x64xf32>
    %31 = arith.addf %29, %30 : vector<1x64xf32>
    %c0_25 = arith.constant 0 : index
    %c0_26 = arith.constant 0 : index
    %32 = vector.load %arg11[%c0_25, %c0_26] : memref<64x64xf32, #tpu.memory_space<vmem>>, vector<64x64xf32>
    %cst_27 = arith.constant dense<0.000000e+00> : vector<1x64xf32>
    %33 = tpu.matmul %31, %32, %cst_27 {dimension_numbers = #tpu.dot_dimension_numbers<[1], [0], [0], [1], [0, 0, 1, 1], [], []>} : vector<1x64xf32>, vector<64x64xf32>, vector<1x64xf32> -> vector<1x64xf32>
    %c0_28 = arith.constant 0 : index
    %c0_29 = arith.constant 0 : index
    %34 = vector.load %arg12[%c0_28, %c0_29] : memref<1x64xf32, #tpu.memory_space<vmem>>, vector<1x64xf32>
    %35 = arith.addf %33, %34 : vector<1x64xf32>
    %cst_30 = arith.constant 0.000000e+00 : f32
    %36 = vector.broadcast %cst_30 : f32 to vector<1x64xf32>
    %37 = arith.maximumf %35, %36 : vector<1x64xf32>
    %c0_31 = arith.constant 0 : index
    %c0_32 = arith.constant 0 : index
    %38 = vector.load %arg13[%c0_31, %c0_32] : memref<64x64xf32, #tpu.memory_space<vmem>>, vector<64x64xf32>
    %cst_33 = arith.constant dense<0.000000e+00> : vector<1x64xf32>
    %39 = tpu.matmul %37, %38, %cst_33 {dimension_numbers = #tpu.dot_dimension_numbers<[1], [0], [0], [1], [0, 0, 1, 1], [], []>} : vector<1x64xf32>, vector<64x64xf32>, vector<1x64xf32> -> vector<1x64xf32>
    %c0_34 = arith.constant 0 : index
    %c0_35 = arith.constant 0 : index
    %40 = vector.load %arg14[%c0_34, %c0_35] : memref<1x64xf32, #tpu.memory_space<vmem>>, vector<1x64xf32>
    %41 = arith.addf %39, %40 : vector<1x64xf32>
    %cst_36 = arith.constant 0.000000e+00 : f32
    %42 = vector.broadcast %cst_36 : f32 to vector<1x64xf32>
    %43 = arith.maximumf %41, %42 : vector<1x64xf32>
    %c0_37 = arith.constant 0 : index
    %c0_38 = arith.constant 0 : index
    %44 = vector.load %arg15[%c0_37, %c0_38] : memref<64x64xf32, #tpu.memory_space<vmem>>, vector<64x64xf32>
    %cst_39 = arith.constant dense<0.000000e+00> : vector<1x64xf32>
    %45 = tpu.matmul %43, %44, %cst_39 {dimension_numbers = #tpu.dot_dimension_numbers<[1], [0], [0], [1], [0, 0, 1, 1], [], []>} : vector<1x64xf32>, vector<64x64xf32>, vector<1x64xf32> -> vector<1x64xf32>
    %c0_40 = arith.constant 0 : index
    %c0_41 = arith.constant 0 : index
    %46 = vector.load %arg16[%c0_40, %c0_41] : memref<1x64xf32, #tpu.memory_space<vmem>>, vector<1x64xf32>
    %47 = arith.addf %45, %46 : vector<1x64xf32>
    %48 = arith.negf %47 : vector<1x64xf32>
    %49 = math.exp %48 : vector<1x64xf32>
    %cst_42 = arith.constant 1.000000e+00 : f32
    %50 = vector.broadcast %cst_42 : f32 to vector<1x64xf32>
    %51 = arith.addf %50, %49 : vector<1x64xf32>
    %52 = arith.divf %50, %51 : vector<1x64xf32>
    %53 = vector.broadcast %52 : vector<1x64xf32> to vector<1024x64xf32>
    %54 = arith.mulf %24, %53 : vector<1024x64xf32>
    %c0_43 = arith.constant 0 : index
    %c0_44 = arith.constant 0 : index
    %55 = vector.load %arg17[%c0_43, %c0_44] : memref<64x64xf32, #tpu.memory_space<vmem>>, vector<64x64xf32>
    %cst_45 = arith.constant dense<0.000000e+00> : vector<1024x64xf32>
    %56 = tpu.matmul %54, %55, %cst_45 {dimension_numbers = #tpu.dot_dimension_numbers<[1], [0], [0], [1], [0, 0, 1, 1], [], []>} : vector<1024x64xf32>, vector<64x64xf32>, vector<1024x64xf32> -> vector<1024x64xf32>
    %c0_46 = arith.constant 0 : index
    %c0_47 = arith.constant 0 : index
    %57 = vector.load %arg18[%c0_46, %c0_47] : memref<1x64xf32, #tpu.memory_space<vmem>>, vector<1x64xf32>
    %58 = vector.broadcast %57 : vector<1x64xf32> to vector<1024x64xf32>
    %59 = arith.addf %56, %58 : vector<1024x64xf32>
    %cst_48 = arith.constant 0.000000e+00 : f32
    %60 = vector.broadcast %cst_48 : f32 to vector<1024x64xf32>
    %61 = arith.cmpf ogt, %59, %60 : vector<1024x64xf32>
    %c0_49 = arith.constant 0 : index
    %c0_50 = arith.constant 0 : index
    %62 = vector.load %arg19[%c0_49, %c0_50] : memref<1x64xf32, #tpu.memory_space<vmem>>, vector<1x64xf32>
    %63 = vector.broadcast %62 : vector<1x64xf32> to vector<1024x64xf32>
    %64 = arith.mulf %63, %59 : vector<1024x64xf32>
    %65 = arith.select %61, %59, %64 : vector<1024x64xi1>, vector<1024x64xf32>
    %c0_51 = arith.constant 0 : index
    %c0_52 = arith.constant 0 : index
    %66 = vector.load %arg20[%c0_51, %c0_52] : memref<64x64xf32, #tpu.memory_space<vmem>>, vector<64x64xf32>
    %cst_53 = arith.constant dense<0.000000e+00> : vector<1024x64xf32>
    %67 = tpu.matmul %65, %66, %cst_53 {dimension_numbers = #tpu.dot_dimension_numbers<[1], [0], [0], [1], [0, 0, 1, 1], [], []>} : vector<1024x64xf32>, vector<64x64xf32>, vector<1024x64xf32> -> vector<1024x64xf32>
    %c0_54 = arith.constant 0 : index
    %c0_55 = arith.constant 0 : index
    %68 = vector.load %arg21[%c0_54, %c0_55] : memref<1x64xf32, #tpu.memory_space<vmem>>, vector<1x64xf32>
    %69 = vector.broadcast %68 : vector<1x64xf32> to vector<1024x64xf32>
    %70 = arith.addf %67, %69 : vector<1024x64xf32>
    %71 = arith.addf %25, %70 : vector<1024x64xf32>
    %c0_56 = arith.constant 0 : index
    %c0_57 = arith.constant 0 : index
    %72 = vector.load %arg22[%c0_56, %c0_57] : memref<1x64xf32, #tpu.memory_space<vmem>>, vector<1x64xf32>
    %73 = vector.broadcast %72 : vector<1x64xf32> to vector<1024x64xf32>
    %74 = arith.mulf %71, %73 : vector<1024x64xf32>
    %c0_58 = arith.constant 0 : index
    %c0_59 = arith.constant 0 : index
    %75 = vector.load %arg23[%c0_58, %c0_59] : memref<1x64xf32, #tpu.memory_space<vmem>>, vector<1x64xf32>
    %76 = vector.broadcast %75 : vector<1x64xf32> to vector<1024x64xf32>
    %77 = arith.addf %74, %76 : vector<1024x64xf32>
    %c0_60 = arith.constant 0 : index
    %c0_61 = arith.constant 0 : index
    %c0_62 = arith.constant 0 : index
    %78 = vector.load %arg24[%c0_60, %c0_61, %c0_62] : memref<1x1024x64xf32, #tpu.memory_space<vmem>>, vector<1x1024x64xf32>
    %79 = vector.shape_cast %78 : vector<1x1024x64xf32> to vector<1024x64xf32>
    %80 = vector.shape_cast %77 : vector<1024x64xf32> to vector<1x1024x64xf32>
    tpu.vector_store %arg24[%c0_60, %c0_61, %c0_62], %80 {strides = array<i32>} : memref<1x1024x64xf32, #tpu.memory_space<vmem>>, vector<1x1024x64xf32>,
    return
  }
  func.func @transform_0(%arg0: i32) -> (i32, i32, i32) {
    %c0_i32 = arith.constant 0 : i32
    %c0_i32_0 = arith.constant 0 : i32
    %c0_i32_1 = arith.constant 0 : i32
    return %arg0, %c0_i32, %c0_i32_0 : i32, i32, i32
  }
  func.func @transform_1(%arg0: i32) -> (i32, i32, i32) {
    %c0_i32 = arith.constant 0 : i32
    %c0_i32_0 = arith.constant 0 : i32
    %c0_i32_1 = arith.constant 0 : i32
    return %arg0, %c0_i32, %c0_i32_0 : i32, i32, i32
  }
  func.func @transform_2(%arg0: i32) -> (i32, i32) {
    %c0_i32 = arith.constant 0 : i32
    %c0_i32_0 = arith.constant 0 : i32
    %c0_i32_1 = arith.constant 0 : i32
    return %c0_i32, %c0_i32_0 : i32, i32
  }
  func.func @transform_3(%arg0: i32) -> (i32, i32) {
    %c0_i32 = arith.constant 0 : i32
    %c0_i32_0 = arith.constant 0 : i32
    %c0_i32_1 = arith.constant 0 : i32
    return %c0_i32, %c0_i32_0 : i32, i32
  }
  func.func @transform_4(%arg0: i32) -> (i32, i32) {
    %c0_i32 = arith.constant 0 : i32
    %c0_i32_0 = arith.constant 0 : i32
    %c0_i32_1 = arith.constant 0 : i32
    return %c0_i32, %c0_i32_0 : i32, i32
  }
  func.func @transform_5(%arg0: i32) -> (i32, i32) {
    %c0_i32 = arith.constant 0 : i32
    %c0_i32_0 = arith.constant 0 : i32
    %c0_i32_1 = arith.constant 0 : i32
    return %c0_i32, %c0_i32_0 : i32, i32
  }
  func.func @transform_6(%arg0: i32) -> (i32, i32) {
    %c0_i32 = arith.constant 0 : i32
    %c0_i32_0 = arith.constant 0 : i32
    %c0_i32_1 = arith.constant 0 : i32
    return %c0_i32, %c0_i32_0 : i32, i32
  }
  func.func @transform_7(%arg0: i32) -> (i32, i32) {
    %c0_i32 = arith.constant 0 : i32
    %c0_i32_0 = arith.constant 0 : i32
    %c0_i32_1 = arith.constant 0 : i32
    return %c0_i32, %c0_i32_0 : i32, i32
  }
  func.func @transform_8(%arg0: i32) -> (i32, i32) {
    %c0_i32 = arith.constant 0 : i32
    %c0_i32_0 = arith.constant 0 : i32
    %c0_i32_1 = arith.constant 0 : i32
    return %c0_i32, %c0_i32_0 : i32, i32
  }
  func.func @transform_9(%arg0: i32) -> (i32, i32) {
    %c0_i32 = arith.constant 0 : i32
    %c0_i32_0 = arith.constant 0 : i32
    %c0_i32_1 = arith.constant 0 : i32
    return %c0_i32, %c0_i32_0 : i32, i32
  }
  func.func @transform_10(%arg0: i32) -> (i32, i32) {
    %c0_i32 = arith.constant 0 : i32
    %c0_i32_0 = arith.constant 0 : i32
    %c0_i32_1 = arith.constant 0 : i32
    return %c0_i32, %c0_i32_0 : i32, i32
  }
  func.func @transform_11(%arg0: i32) -> (i32, i32) {
    %c0_i32 = arith.constant 0 : i32
    %c0_i32_0 = arith.constant 0 : i32
    %c0_i32_1 = arith.constant 0 : i32
    return %c0_i32, %c0_i32_0 : i32, i32
  }
  func.func @transform_12(%arg0: i32) -> (i32, i32) {
    %c0_i32 = arith.constant 0 : i32
    %c0_i32_0 = arith.constant 0 : i32
    %c0_i32_1 = arith.constant 0 : i32
    return %c0_i32, %c0_i32_0 : i32, i32
  }
  func.func @transform_13(%arg0: i32) -> (i32, i32) {
    %c0_i32 = arith.constant 0 : i32
    %c0_i32_0 = arith.constant 0 : i32
    %c0_i32_1 = arith.constant 0 : i32
    return %c0_i32, %c0_i32_0 : i32, i32
  }
  func.func @transform_14(%arg0: i32) -> (i32, i32) {
    %c0_i32 = arith.constant 0 : i32
    %c0_i32_0 = arith.constant 0 : i32
    %c0_i32_1 = arith.constant 0 : i32
    return %c0_i32, %c0_i32_0 : i32, i32
  }
  func.func @transform_15(%arg0: i32) -> (i32, i32) {
    %c0_i32 = arith.constant 0 : i32
    %c0_i32_0 = arith.constant 0 : i32
    %c0_i32_1 = arith.constant 0 : i32
    return %c0_i32, %c0_i32_0 : i32, i32
  }
  func.func @transform_16(%arg0: i32) -> (i32, i32) {
    %c0_i32 = arith.constant 0 : i32
    %c0_i32_0 = arith.constant 0 : i32
    %c0_i32_1 = arith.constant 0 : i32
    return %c0_i32, %c0_i32_0 : i32, i32
  }
  func.func @transform_17(%arg0: i32) -> (i32, i32) {
    %c0_i32 = arith.constant 0 : i32
    %c0_i32_0 = arith.constant 0 : i32
    %c0_i32_1 = arith.constant 0 : i32
    return %c0_i32, %c0_i32_0 : i32, i32
  }
  func.func @transform_18(%arg0: i32) -> (i32, i32) {
    %c0_i32 = arith.constant 0 : i32
    %c0_i32_0 = arith.constant 0 : i32
    %c0_i32_1 = arith.constant 0 : i32
    return %c0_i32, %c0_i32_0 : i32, i32
  }
  func.func @transform_19(%arg0: i32) -> (i32, i32) {
    %c0_i32 = arith.constant 0 : i32
    %c0_i32_0 = arith.constant 0 : i32
    %c0_i32_1 = arith.constant 0 : i32
    return %c0_i32, %c0_i32_0 : i32, i32
  }
  func.func @transform_20(%arg0: i32) -> (i32, i32) {
    %c0_i32 = arith.constant 0 : i32
    %c0_i32_0 = arith.constant 0 : i32
    %c0_i32_1 = arith.constant 0 : i32
    return %c0_i32, %c0_i32_0 : i32, i32
  }
  func.func @transform_21(%arg0: i32) -> (i32, i32) {
    %c0_i32 = arith.constant 0 : i32
    %c0_i32_0 = arith.constant 0 : i32
    %c0_i32_1 = arith.constant 0 : i32
    return %c0_i32, %c0_i32_0 : i32, i32
  }
  func.func @transform_22(%arg0: i32) -> (i32, i32) {
    %c0_i32 = arith.constant 0 : i32
    %c0_i32_0 = arith.constant 0 : i32
    %c0_i32_1 = arith.constant 0 : i32
    return %c0_i32, %c0_i32_0 : i32, i32
  }
  func.func @transform_23(%arg0: i32) -> (i32, i32, i32) {
    %c0_i32 = arith.constant 0 : i32
    %c0_i32_0 = arith.constant 0 : i32
    %c0_i32_1 = arith.constant 0 : i32
    return %arg0, %c0_i32, %c0_i32_0 : i32, i32, i32
  }
}

</mosaic_0001>

<llo_original>
// kernel: tpu_custom_call.1
$region0: #{tpu_custom_call.1}
  #allocation0 [shape = 'u32[]', space=smem, size = 0x4, offset = 0x4, fixed_abs, tag = 'smem constant byte address 0x4 - core index']
  #allocation1 [shape = 'u32[144,128]{1,0:T(1,128)}', space=vmem, size = 0x12000, scoped, tag = 'internal scratch']
  %s0 = inlined_call_operand.vmem [shape: f32[2,1024,64], index: 0, kind: input, shape index: {}]
  %s1 = inlined_call_operand.vmem [shape: f32[2,1024,64], index: 1, kind: input, shape index: {}]
  %s2 = inlined_call_operand.vmem [shape: f32[64,192], index: 2, kind: input, shape index: {}]
  %s3 = inlined_call_operand.vmem [shape: f32[64,192], index: 3, kind: input, shape index: {}]
  %s4 = inlined_call_operand.vmem [shape: f32[1,192], index: 4, kind: input, shape index: {}]
  %s5 = inlined_call_operand.vmem [shape: f32[1,192], index: 5, kind: input, shape index: {}]
  %s6 = inlined_call_operand.vmem [shape: f32[192,192], index: 6, kind: input, shape index: {}]
  %s7 = inlined_call_operand.vmem [shape: f32[1,192], index: 7, kind: input, shape index: {}]
  %s8 = inlined_call_operand.vmem [shape: f32[1024,64], index: 8, kind: input, shape index: {}]
  %s9 = inlined_call_operand.vmem [shape: f32[1,64], index: 9, kind: input, shape index: {}]
  %s10 = inlined_call_operand.vmem [shape: f32[64,64], index: 10, kind: input, shape index: {}]
  %s11 = inlined_call_operand.vmem [shape: f32[1,64], index: 11, kind: input, shape index: {}]
  %s12 = inlined_call_operand.vmem [shape: f32[64,64], index: 12, kind: input, shape index: {}]
  %s13 = inlined_call_operand.vmem [shape: f32[1,64], index: 13, kind: input, shape index: {}]
  %s14 = inlined_call_operand.vmem [shape: f32[64,64], index: 14, kind: input, shape index: {}]
  %s15 = inlined_call_operand.vmem [shape: f32[1,64], index: 15, kind: input, shape index: {}]
  %s16 = inlined_call_operand.vmem [shape: f32[64,64], index: 16, kind: input, shape index: {}]
  %s17 = inlined_call_operand.vmem [shape: f32[1,64], index: 17, kind: input, shape index: {}]
  %s18 = inlined_call_operand.vmem [shape: f32[1,64], index: 18, kind: input, shape index: {}]
  %s19 = inlined_call_operand.vmem [shape: f32[64,64], index: 19, kind: input, shape index: {}]
  %s20 = inlined_call_operand.vmem [shape: f32[1,64], index: 20, kind: input, shape index: {}]
  %s21 = inlined_call_operand.vmem [shape: f32[1,64], index: 21, kind: input, shape index: {}]
  %s22 = inlined_call_operand.vmem [shape: f32[1,64], index: 22, kind: input, shape index: {}]
  %s23 = inlined_call_operand.vmem [shape: f32[2,1024,64], index: 23, kind: output, shape index: {}]
  %s24 = sld [smem:[#allocation0]]
  $region125: #{tpu_custom_call.1} parent=0
    _
  %s26 = ssub.s32 1, %s24
  %s27 = scalar_select 0, %s26, %s24
  loop: start=0, step=1, limit=4
  $region2: #{tpu_custom_call.1} parent=0 // loop_pre_header
    _
  $region3: #{tpu_custom_call.1} parent=0 // loop_header
    %s29 = sphi 0, %s33
    %p30 = scmp.ge.s32.totalorder %s29, 4
    %s39 = sphi 0, %s41
    %s42 = sphi 0, %s39
    %s43 = sphi 0, %s42
    %s59 = sphi 0, %s43
    %s65 = sphi 0, %s67
    %s68 = sphi 0, %s65
    %s69 = sphi 0, %s68
    %s85 = sphi 0, %s69
    %s89 = sphi 0, %s89
    %s91 = sphi 0, %s89
    %s92 = sphi 0, %s91
    %s106 = sphi 0, %s92
    %s110 = sphi 0, %s110
    %s112 = sphi 0, %s110
    %s113 = sphi 0, %s112
    %s127 = sphi 0, %s113
    %s131 = sphi 0, %s131
    %s133 = sphi 0, %s131
    %s134 = sphi 0, %s133
    %s148 = sphi 0, %s134
    %s152 = sphi 0, %s152
    %s154 = sphi 0, %s152
    %s155 = sphi 0, %s154
    %s169 = sphi 0, %s155
    %s173 = sphi 0, %s173
    %s175 = sphi 0, %s173
    %s176 = sphi 0, %s175
    %s190 = sphi 0, %s176
    %s194 = sphi 0, %s194
    %s196 = sphi 0, %s194
    %s197 = sphi 0, %s196
    %s211 = sphi 0, %s197
    %s215 = sphi 0, %s215
    %s217 = sphi 0, %s215
    %s218 = sphi 0, %s217
    %s232 = sphi 0, %s218
    %s236 = sphi 0, %s236
    %s238 = sphi 0, %s236
    %s239 = sphi 0, %s238
    %s253 = sphi 0, %s239
    %s257 = sphi 0, %s257
    %s259 = sphi 0, %s257
    %s260 = sphi 0, %s259
    %s274 = sphi 0, %s260
    %s278 = sphi 0, %s278
    %s280 = sphi 0, %s278
    %s281 = sphi 0, %s280
    %s295 = sphi 0, %s281
    %s299 = sphi 0, %s299
    %s301 = sphi 0, %s299
    %s302 = sphi 0, %s301
    %s316 = sphi 0, %s302
    %s320 = sphi 0, %s320
    %s322 = sphi 0, %s320
    %s323 = sphi 0, %s322
    %s337 = sphi 0, %s323
    %s341 = sphi 0, %s341
    %s343 = sphi 0, %s341
    %s344 = sphi 0, %s343
    %s358 = sphi 0, %s344
    %s362 = sphi 0, %s362
    %s364 = sphi 0, %s362
    %s365 = sphi 0, %s364
    %s379 = sphi 0, %s365
    %s383 = sphi 0, %s383
    %s385 = sphi 0, %s383
    %s386 = sphi 0, %s385
    %s400 = sphi 0, %s386
    %s404 = sphi 0, %s404
    %s406 = sphi 0, %s404
    %s407 = sphi 0, %s406
    %s421 = sphi 0, %s407
    %s425 = sphi 0, %s425
    %s427 = sphi 0, %s425
    %s428 = sphi 0, %s427
    %s442 = sphi 0, %s428
    %s446 = sphi 0, %s446
    %s448 = sphi 0, %s446
    %s449 = sphi 0, %s448
    %s463 = sphi 0, %s449
    %s467 = sphi 0, %s467
    %s469 = sphi 0, %s467
    %s470 = sphi 0, %s469
    %s484 = sphi 0, %s470
    %s488 = sphi 0, %s488
    %s490 = sphi 0, %s488
    %s491 = sphi 0, %s490
    %s505 = sphi 0, %s491
    %s509 = sphi 0, %s509
    %s511 = sphi 0, %s509
    %s512 = sphi 0, %s511
    %s526 = sphi 0, %s512
    %s532 = sphi 0, %s534
    %s535 = sphi 0, %s532
    %s536 = sphi 0, %s535
    %s552 = sphi 0, %s536
  $region4: #{tpu_custom_call.1} parent=0 // loop_header_branch
    %32 = sbr.rel (%p30) target = $region8
  $region5: #{tpu_custom_call.1} parent=0 // loop_body
    %s34 = ssub.s32 %s29, 1
    %s35 = ssub.s32 %s29, 2
    %s36 = sadd.s32 %s29, 1
    %s37 = ssub.s32 %s29, %s36
    %p38 = scmp.eq.s32.totalorder %s37, 0
    %s40 = sadd.s32 %s39, 1
    %s41 = scalar_select %p38, %s39, %s40
    %p44 = pneg %p38
    %p45 = scmp.eq.s32.totalorder %s29, 1
    %p46 = por %p44, %p45
    %p47 = scmp.ne.s32.totalorder %s39, %s42
    %p48 = scmp.eq.s32.totalorder %s29, 0
    %p49 = por %p47, %p48
    %p50 = scmp.ne.s32.totalorder %s39, %s42
    %p51 = scmp.eq.s32.totalorder %s34, 1
    %p52 = por %p50, %p51
    %p53 = scmp.ne.s32.totalorder %s42, %s43
    %p54 = scmp.eq.s32.totalorder %s34, 0
    %p55 = por %p53, %p54
    %p56 = scmp.ne.s32.totalorder %s42, %s43
    %p57 = scmp.eq.s32.totalorder %s35, 1
    %p58 = por %p56, %p57
    %p60 = scmp.ne.s32.totalorder %s43, %s59
    %p61 = scmp.eq.s32.totalorder %s35, 0
    %p62 = por %p60, %p61
    %s63 = ssub.s32 %s29, %s36
    %p64 = scmp.eq.s32.totalorder %s63, 0
    %s66 = sadd.s32 %s65, 1
    %s67 = scalar_select %p64, %s65, %s66
    %p70 = pneg %p64
    %p71 = scmp.eq.s32.totalorder %s29, 1
    %p72 = por %p70, %p71
    %p73 = scmp.ne.s32.totalorder %s65, %s68
    %p74 = scmp.eq.s32.totalorder %s29, 0
    %p75 = por %p73, %p74
    %p76 = scmp.ne.s32.totalorder %s65, %s68
    %p77 = scmp.eq.s32.totalorder %s34, 1
    %p78 = por %p76, %p77
    %p79 = scmp.ne.s32.totalorder %s68, %s69
    %p80 = scmp.eq.s32.totalorder %s34, 0
    %p81 = por %p79, %p80
    %p82 = scmp.ne.s32.totalorder %s68, %s69
    %p83 = scmp.eq.s32.totalorder %s35, 1
    %p84 = por %p82, %p83
    %p86 = scmp.ne.s32.totalorder %s69, %s85
    %p87 = scmp.eq.s32.totalorder %s35, 0
    %p88 = por %p86, %p87
    %s90 = sadd.s32 %s89, 1
    %p93 = scmp.eq.s32.totalorder %s29, 1
    %p94 = scmp.ne.s32.totalorder %s89, %s91
    %p95 = scmp.eq.s32.totalorder %s29, 0
    %p96 = por %p94, %p95
    %p97 = scmp.ne.s32.totalorder %s89, %s91
    %p98 = scmp.eq.s32.totalorder %s34, 1
    %p99 = por %p97, %p98
    %p100 = scmp.ne.s32.totalorder %s91, %s92
    %p101 = scmp.eq.s32.totalorder %s34, 0
    %p102 = por %p100, %p101
    %p103 = scmp.ne.s32.totalorder %s91, %s92
    %p104 = scmp.eq.s32.totalorder %s35, 1
    %p105 = por %p103, %p104
    %p107 = scmp.ne.s32.totalorder %s92, %s106
    %p108 = scmp.eq.s32.totalorder %s35, 0
    %p109 = por %p107, %p108
    %s111 = sadd.s32 %s110, 1
    %p114 = scmp.eq.s32.totalorder %s29, 1
    %p115 = scmp.ne.s32.totalorder %s110, %s112
    %p116 = scmp.eq.s32.totalorder %s29, 0
    %p117 = por %p115, %p116
    %p118 = scmp.ne.s32.totalorder %s110, %s112
    %p119 = scmp.eq.s32.totalorder %s34, 1
    %p120 = por %p118, %p119
    %p121 = scmp.ne.s32.totalorder %s112, %s113
    %p122 = scmp.eq.s32.totalorder %s34, 0
    %p123 = por %p121, %p122
    %p124 = scmp.ne.s32.totalorder %s112, %s113
    %p125 = scmp.eq.s32.totalorder %s35, 1
    %p126 = por %p124, %p125
    %p128 = scmp.ne.s32.totalorder %s113, %s127
    %p129 = scmp.eq.s32.totalorder %s35, 0
    %p130 = por %p128, %p129
    %s132 = sadd.s32 %s131, 1
    %p135 = scmp.eq.s32.totalorder %s29, 1
    %p136 = scmp.ne.s32.totalorder %s131, %s133
    %p137 = scmp.eq.s32.totalorder %s29, 0
    %p138 = por %p136, %p137
    %p139 = scmp.ne.s32.totalorder %s131, %s133
    %p140 = scmp.eq.s32.totalorder %s34, 1
    %p141 = por %p139, %p140
    %p142 = scmp.ne.s32.totalorder %s133, %s134
    %p143 = scmp.eq.s32.totalorder %s34, 0
    %p144 = por %p142, %p143
    %p145 = scmp.ne.s32.totalorder %s133, %s134
    %p146 = scmp.eq.s32.totalorder %s35, 1
    %p147 = por %p145, %p146
    %p149 = scmp.ne.s32.totalorder %s134, %s148
    %p150 = scmp.eq.s32.totalorder %s35, 0
    %p151 = por %p149, %p150
    %s153 = sadd.s32 %s152, 1
    %p156 = scmp.eq.s32.totalorder %s29, 1
    %p157 = scmp.ne.s32.totalorder %s152, %s154
    %p158 = scmp.eq.s32.totalorder %s29, 0
    %p159 = por %p157, %p158
    %p160 = scmp.ne.s32.totalorder %s152, %s154
    %p161 = scmp.eq.s32.totalorder %s34, 1
    %p162 = por %p160, %p161
    %p163 = scmp.ne.s32.totalorder %s154, %s155
    %p164 = scmp.eq.s32.totalorder %s34, 0
    %p165 = por %p163, %p164
    %p166 = scmp.ne.s32.totalorder %s154, %s155
    %p167 = scmp.eq.s32.totalorder %s35, 1
    %p168 = por %p166, %p167
    %p170 = scmp.ne.s32.totalorder %s155, %s169
    %p171 = scmp.eq.s32.totalorder %s35, 0
    %p172 = por %p170, %p171
    %s174 = sadd.s32 %s173, 1
    %p177 = scmp.eq.s32.totalorder %s29, 1
    %p178 = scmp.ne.s32.totalorder %s173, %s175
    %p179 = scmp.eq.s32.totalorder %s29, 0
    %p180 = por %p178, %p179
    %p181 = scmp.ne.s32.totalorder %s173, %s175
    %p182 = scmp.eq.s32.totalorder %s34, 1
    %p183 = por %p181, %p182
    %p184 = scmp.ne.s32.totalorder %s175, %s176
    %p185 = scmp.eq.s32.totalorder %s34, 0
    %p186 = por %p184, %p185
    %p187 = scmp.ne.s32.totalorder %s175, %s176
    %p188 = scmp.eq.s32.totalorder %s35, 1
    %p189 = por %p187, %p188
    %p191 = scmp.ne.s32.totalorder %s176, %s190
    %p192 = scmp.eq.s32.totalorder %s35, 0
    %p193 = por %p191, %p192
    %s195 = sadd.s32 %s194, 1
    %p198 = scmp.eq.s32.totalorder %s29, 1
    %p199 = scmp.ne.s32.totalorder %s194, %s196
    %p200 = scmp.eq.s32.totalorder %s29, 0
    %p201 = por %p199, %p200
    %p202 = scmp.ne.s32.totalorder %s194, %s196
    %p203 = scmp.eq.s32.totalorder %s34, 1
    %p204 = por %p202, %p203
    %p205 = scmp.ne.s32.totalorder %s196, %s197
    %p206 = scmp.eq.s32.totalorder %s34, 0
    %p207 = por %p205, %p206
    %p208 = scmp.ne.s32.totalorder %s196, %s197
    %p209 = scmp.eq.s32.totalorder %s35, 1
    %p210 = por %p208, %p209
    %p212 = scmp.ne.s32.totalorder %s197, %s211
    %p213 = scmp.eq.s32.totalorder %s35, 0
    %p214 = por %p212, %p213
    %s216 = sadd.s32 %s215, 1
    %p219 = scmp.eq.s32.totalorder %s29, 1
    %p220 = scmp.ne.s32.totalorder %s215, %s217
    %p221 = scmp.eq.s32.totalorder %s29, 0
    %p222 = por %p220, %p221
    %p223 = scmp.ne.s32.totalorder %s215, %s217
    %p224 = scmp.eq.s32.totalorder %s34, 1
    %p225 = por %p223, %p224
    %p226 = scmp.ne.s32.totalorder %s217, %s218
    %p227 = scmp.eq.s32.totalorder %s34, 0
    %p228 = por %p226, %p227
    %p229 = scmp.ne.s32.totalorder %s217, %s218
    %p230 = scmp.eq.s32.totalorder %s35, 1
    %p231 = por %p229, %p230
    %p233 = scmp.ne.s32.totalorder %s218, %s232
    %p234 = scmp.eq.s32.totalorder %s35, 0
    %p235 = por %p233, %p234
    %s237 = sadd.s32 %s236, 1
    %p240 = scmp.eq.s32.totalorder %s29, 1
    %p241 = scmp.ne.s32.totalorder %s236, %s238
    %p242 = scmp.eq.s32.totalorder %s29, 0
    %p243 = por %p241, %p242
    %p244 = scmp.ne.s32.totalorder %s236, %s238
    %p245 = scmp.eq.s32.totalorder %s34, 1
    %p246 = por %p244, %p245
    %p247 = scmp.ne.s32.totalorder %s238, %s239
    %p248 = scmp.eq.s32.totalorder %s34, 0
    %p249 = por %p247, %p248
    %p250 = scmp.ne.s32.totalorder %s238, %s239
    %p251 = scmp.eq.s32.totalorder %s35, 1
    %p252 = por %p250, %p251
    %p254 = scmp.ne.s32.totalorder %s239, %s253
    %p255 = scmp.eq.s32.totalorder %s35, 0
    %p256 = por %p254, %p255
    %s258 = sadd.s32 %s257, 1
    %p261 = scmp.eq.s32.totalorder %s29, 1
    %p262 = scmp.ne.s32.totalorder %s257, %s259
    %p263 = scmp.eq.s32.totalorder %s29, 0
    %p264 = por %p262, %p263
    %p265 = scmp.ne.s32.totalorder %s257, %s259
    %p266 = scmp.eq.s32.totalorder %s34, 1
    %p267 = por %p265, %p266
    %p268 = scmp.ne.s32.totalorder %s259, %s260
    %p269 = scmp.eq.s32.totalorder %s34, 0
    %p270 = por %p268, %p269
    %p271 = scmp.ne.s32.totalorder %s259, %s260
    %p272 = scmp.eq.s32.totalorder %s35, 1
    %p273 = por %p271, %p272
    %p275 = scmp.ne.s32.totalorder %s260, %s274
    %p276 = scmp.eq.s32.totalorder %s35, 0
    %p277 = por %p275, %p276
    %s279 = sadd.s32 %s278, 1
    %p282 = scmp.eq.s32.totalorder %s29, 1
    %p283 = scmp.ne.s32.totalorder %s278, %s280
    %p284 = scmp.eq.s32.totalorder %s29, 0
    %p285 = por %p283, %p284
    %p286 = scmp.ne.s32.totalorder %s278, %s280
    %p287 = scmp.eq.s32.totalorder %s34, 1
    %p288 = por %p286, %p287
    %p289 = scmp.ne.s32.totalorder %s280, %s281
    %p290 = scmp.eq.s32.totalorder %s34, 0
    %p291 = por %p289, %p290
    %p292 = scmp.ne.s32.totalorder %s280, %s281
    %p293 = scmp.eq.s32.totalorder %s35, 1
    %p294 = por %p292, %p293
    %p296 = scmp.ne.s32.totalorder %s281, %s295
    %p297 = scmp.eq.s32.totalorder %s35, 0
    %p298 = por %p296, %p297
    %s300 = sadd.s32 %s299, 1
    %p303 = scmp.eq.s32.totalorder %s29, 1
    %p304 = scmp.ne.s32.totalorder %s299, %s301
    %p305 = scmp.eq.s32.totalorder %s29, 0
    %p306 = por %p304, %p305
    %p307 = scmp.ne.s32.totalorder %s299, %s301
    %p308 = scmp.eq.s32.totalorder %s34, 1
    %p309 = por %p307, %p308
    %p310 = scmp.ne.s32.totalorder %s301, %s302
    %p311 = scmp.eq.s32.totalorder %s34, 0
    %p312 = por %p310, %p311
    %p313 = scmp.ne.s32.totalorder %s301, %s302
    %p314 = scmp.eq.s32.totalorder %s35, 1
    %p315 = por %p313, %p314
    %p317 = scmp.ne.s32.totalorder %s302, %s316
    %p318 = scmp.eq.s32.totalorder %s35, 0
    %p319 = por %p317, %p318
    %s321 = sadd.s32 %s320, 1
    %p324 = scmp.eq.s32.totalorder %s29, 1
    %p325 = scmp.ne.s32.totalorder %s320, %s322
    %p326 = scmp.eq.s32.totalorder %s29, 0
    %p327 = por %p325, %p326
    %p328 = scmp.ne.s32.totalorder %s320, %s322
    %p329 = scmp.eq.s32.totalorder %s34, 1
    %p330 = por %p328, %p329
    %p331 = scmp.ne.s32.totalorder %s322, %s323
    %p332 = scmp.eq.s32.totalorder %s34, 0
    %p333 = por %p331, %p332
    %p334 = scmp.ne.s32.totalorder %s322, %s323
    %p335 = scmp.eq.s32.totalorder %s35, 1
    %p336 = por %p334, %p335
    %p338 = scmp.ne.s32.totalorder %s323, %s337
    %p339 = scmp.eq.s32.totalorder %s35, 0
    %p340 = por %p338, %p339
    %s342 = sadd.s32 %s341, 1
    %p345 = scmp.eq.s32.totalorder %s29, 1
    %p346 = scmp.ne.s32.totalorder %s341, %s343
    %p347 = scmp.eq.s32.totalorder %s29, 0
    %p348 = por %p346, %p347
    %p349 = scmp.ne.s32.totalorder %s341, %s343
    %p350 = scmp.eq.s32.totalorder %s34, 1
    %p351 = por %p349, %p350
    %p352 = scmp.ne.s32.totalorder %s343, %s344
    %p353 = scmp.eq.s32.totalorder %s34, 0
    %p354 = por %p352, %p353
    %p355 = scmp.ne.s32.totalorder %s343, %s344
    %p356 = scmp.eq.s32.totalorder %s35, 1
    %p357 = por %p355, %p356
    %p359 = scmp.ne.s32.totalorder %s344, %s358
    %p360 = scmp.eq.s32.totalorder %s35, 0
    %p361 = por %p359, %p360
    %s363 = sadd.s32 %s362, 1
    %p366 = scmp.eq.s32.totalorder %s29, 1
    %p367 = scmp.ne.s32.totalorder %s362, %s364
    %p368 = scmp.eq.s32.totalorder %s29, 0
    %p369 = por %p367, %p368
    %p370 = scmp.ne.s32.totalorder %s362, %s364
    %p371 = scmp.eq.s32.totalorder %s34, 1
    %p372 = por %p370, %p371
    %p373 = scmp.ne.s32.totalorder %s364, %s365
    %p374 = scmp.eq.s32.totalorder %s34, 0
    %p375 = por %p373, %p374
    %p376 = scmp.ne.s32.totalorder %s364, %s365
    %p377 = scmp.eq.s32.totalorder %s35, 1
    %p378 = por %p376, %p377
    %p380 = scmp.ne.s32.totalorder %s365, %s379
    %p381 = scmp.eq.s32.totalorder %s35, 0
    %p382 = por %p380, %p381
    %s384 = sadd.s32 %s383, 1
    %p387 = scmp.eq.s32.totalorder %s29, 1
    %p388 = scmp.ne.s32.totalorder %s383, %s385
    %p389 = scmp.eq.s32.totalorder %s29, 0
    %p390 = por %p388, %p389
    %p391 = scmp.ne.s32.totalorder %s383, %s385
    %p392 = scmp.eq.s32.totalorder %s34, 1
    %p393 = por %p391, %p392
    %p394 = scmp.ne.s32.totalorder %s385, %s386
    %p395 = scmp.eq.s32.totalorder %s34, 0
    %p396 = por %p394, %p395
    %p397 = scmp.ne.s32.totalorder %s385, %s386
    %p398 = scmp.eq.s32.totalorder %s35, 1
    %p399 = por %p397, %p398
    %p401 = scmp.ne.s32.totalorder %s386, %s400
    %p402 = scmp.eq.s32.totalorder %s35, 0
    %p403 = por %p401, %p402
    %s405 = sadd.s32 %s404, 1
    %p408 = scmp.eq.s32.totalorder %s29, 1
    %p409 = scmp.ne.s32.totalorder %s404, %s406
    %p410 = scmp.eq.s32.totalorder %s29, 0
    %p411 = por %p409, %p410
    %p412 = scmp.ne.s32.totalorder %s404, %s406
    %p413 = scmp.eq.s32.totalorder %s34, 1
    %p414 = por %p412, %p413
    %p415 = scmp.ne.s32.totalorder %s406, %s407
    %p416 = scmp.eq.s32.totalorder %s34, 0
    %p417 = por %p415, %p416
    %p418 = scmp.ne.s32.totalorder %s406, %s407
    %p419 = scmp.eq.s32.totalorder %s35, 1
    %p420 = por %p418, %p419
    %p422 = scmp.ne.s32.totalorder %s407, %s421
    %p423 = scmp.eq.s32.totalorder %s35, 0
    %p424 = por %p422, %p423
    %s426 = sadd.s32 %s425, 1
    %p429 = scmp.eq.s32.totalorder %s29, 1
    %p430 = scmp.ne.s32.totalorder %s425, %s427
    %p431 = scmp.eq.s32.totalorder %s29, 0
    %p432 = por %p430, %p431
    %p433 = scmp.ne.s32.totalorder %s425, %s427
    %p434 = scmp.eq.s32.totalorder %s34, 1
    %p435 = por %p433, %p434
    %p436 = scmp.ne.s32.totalorder %s427, %s428
    %p437 = scmp.eq.s32.totalorder %s34, 0
    %p438 = por %p436, %p437
    %p439 = scmp.ne.s32.totalorder %s427, %s428
    %p440 = scmp.eq.s32.totalorder %s35, 1
    %p441 = por %p439, %p440
    %p443 = scmp.ne.s32.totalorder %s428, %s442
    %p444 = scmp.eq.s32.totalorder %s35, 0
    %p445 = por %p443, %p444
    %s447 = sadd.s32 %s446, 1
    %p450 = scmp.eq.s32.totalorder %s29, 1
    %p451 = scmp.ne.s32.totalorder %s446, %s448
    %p452 = scmp.eq.s32.totalorder %s29, 0
    %p453 = por %p451, %p452
    %p454 = scmp.ne.s32.totalorder %s446, %s448
    %p455 = scmp.eq.s32.totalorder %s34, 1
    %p456 = por %p454, %p455
    %p457 = scmp.ne.s32.totalorder %s448, %s449
    %p458 = scmp.eq.s32.totalorder %s34, 0
    %p459 = por %p457, %p458
    %p460 = scmp.ne.s32.totalorder %s448, %s449
    %p461 = scmp.eq.s32.totalorder %s35, 1
    %p462 = por %p460, %p461
    %p464 = scmp.ne.s32.totalorder %s449, %s463
    %p465 = scmp.eq.s32.totalorder %s35, 0
    %p466 = por %p464, %p465
    %s468 = sadd.s32 %s467, 1
    %p471 = scmp.eq.s32.totalorder %s29, 1
    %p472 = scmp.ne.s32.totalorder %s467, %s469
    %p473 = scmp.eq.s32.totalorder %s29, 0
    %p474 = por %p472, %p473
    %p475 = scmp.ne.s32.totalorder %s467, %s469
    %p476 = scmp.eq.s32.totalorder %s34, 1
    %p477 = por %p475, %p476
    %p478 = scmp.ne.s32.totalorder %s469, %s470
    %p479 = scmp.eq.s32.totalorder %s34, 0
    %p480 = por %p478, %p479
    %p481 = scmp.ne.s32.totalorder %s469, %s470
    %p482 = scmp.eq.s32.totalorder %s35, 1
    %p483 = por %p481, %p482
    %p485 = scmp.ne.s32.totalorder %s470, %s484
    %p486 = scmp.eq.s32.totalorder %s35, 0
    %p487 = por %p485, %p486
    %s489 = sadd.s32 %s488, 1
    %p492 = scmp.eq.s32.totalorder %s29, 1
    %p493 = scmp.ne.s32.totalorder %s488, %s490
    %p494 = scmp.eq.s32.totalorder %s29, 0
    %p495 = por %p493, %p494
    %p496 = scmp.ne.s32.totalorder %s488, %s490
    %p497 = scmp.eq.s32.totalorder %s34, 1
    %p498 = por %p496, %p497
    %p499 = scmp.ne.s32.totalorder %s490, %s491
    %p500 = scmp.eq.s32.totalorder %s34, 0
    %p501 = por %p499, %p500
    %p502 = scmp.ne.s32.totalorder %s490, %s491
    %p503 = scmp.eq.s32.totalorder %s35, 1
    %p504 = por %p502, %p503
    %p506 = scmp.ne.s32.totalorder %s491, %s505
    %p507 = scmp.eq.s32.totalorder %s35, 0
    %p508 = por %p506, %p507
    %s510 = sadd.s32 %s509, 1
    %p513 = scmp.eq.s32.totalorder %s29, 1
    %p514 = scmp.ne.s32.totalorder %s509, %s511
    %p515 = scmp.eq.s32.totalorder %s29, 0
    %p516 = por %p514, %p515
    %p517 = scmp.ne.s32.totalorder %s509, %s511
    %p518 = scmp.eq.s32.totalorder %s34, 1
    %p519 = por %p517, %p518
    %p520 = scmp.ne.s32.totalorder %s511, %s512
    %p521 = scmp.eq.s32.totalorder %s34, 0
    %p522 = por %p520, %p521
    %p523 = scmp.ne.s32.totalorder %s511, %s512
    %p524 = scmp.eq.s32.totalorder %s35, 1
    %p525 = por %p523, %p524
    %p527 = scmp.ne.s32.totalorder %s512, %s526
    %p528 = scmp.eq.s32.totalorder %s35, 0
    %p529 = por %p527, %p528
    %s530 = ssub.s32 %s29, %s36
    %p531 = scmp.eq.s32.totalorder %s530, 0
    %s533 = sadd.s32 %s532, 1
    %s534 = scalar_select %p531, %s532, %s533
    %p537 = pneg %p531
    %p538 = scmp.eq.s32.totalorder %s29, 1
    %p539 = por %p537, %p538
    %p540 = scmp.ne.s32.totalorder %s532, %s535
    %p541 = scmp.eq.s32.totalorder %s29, 0
    %p542 = por %p540, %p541
    %p543 = scmp.ne.s32.totalorder %s532, %s535
    %p544 = scmp.eq.s32.totalorder %s34, 1
    %p545 = por %p543, %p544
    %p546 = scmp.ne.s32.totalorder %s535, %s536
    %p547 = scmp.eq.s32.totalorder %s34, 0
    %p548 = por %p546, %p547
    %p549 = scmp.ne.s32.totalorder %s535, %s536
    %p550 = scmp.eq.s32.totalorder %s35, 1
    %p551 = por %p549, %p550
    %p553 = scmp.ne.s32.totalorder %s536, %s552
    %p554 = scmp.eq.s32.totalorder %s35, 0
    %p555 = por %p553, %p554
    %p556 = scmp.le.s32.totalorder 1, %s29
    %p557 = scmp.lt.s32.totalorder %s29, 3
    %p558 = pnand %p556, %p557
    %p559 = pneg %p558
    // Predicated region
    $region9: #{tpu_custom_call.1} parent=5 // pred_check
      _
    $region10: #{tpu_custom_call.1} parent=5 // pred_check_branch
      %561 = sbr.rel (%p558) target = $region12
    $region11: #{tpu_custom_call.1} parent=5 // pred_region
      %s562 = ssub.s32 %s29, 1
      // Predicated region
      $region13: #{tpu_custom_call.1} parent=11 // pred_check
        %p563 = pneg %p102
      $region14: #{tpu_custom_call.1} parent=11 // pred_check_branch
        %565 = sbr.rel (%p563) target = $region16
      $region15: #{tpu_custom_call.1} parent=11 // pred_region
        _
      $region16: #{tpu_custom_call.1} parent=11 // pred_fallthru
        _
      // Predicated region
      $region17: #{tpu_custom_call.1} parent=11 // pred_check
        %p566 = pneg %p123
      $region18: #{tpu_custom_call.1} parent=11 // pred_check_branch
        %568 = sbr.rel (%p566) target = $region20
      $region19: #{tpu_custom_call.1} parent=11 // pred_region
        _
      $region20: #{tpu_custom_call.1} parent=11 // pred_fallthru
        _
      // Predicated region
      $region21: #{tpu_custom_call.1} parent=11 // pred_check
        %p569 = pneg %p144
      $region22: #{tpu_custom_call.1} parent=11 // pred_check_branch
        %571 = sbr.rel (%p569) target = $region24
      $region23: #{tpu_custom_call.1} parent=11 // pred_region
        _
      $region24: #{tpu_custom_call.1} parent=11 // pred_fallthru
        _
      // Predicated region
      $region25: #{tpu_custom_call.1} parent=11 // pred_check
        %p572 = pneg %p165
      $region26: #{tpu_custom_call.1} parent=11 // pred_check_branch
        %574 = sbr.rel (%p572) target = $region28
      $region27: #{tpu_custom_call.1} parent=11 // pred_region
        _
      $region28: #{tpu_custom_call.1} parent=11 // pred_fallthru
        _
      // Predicated region
      $region29: #{tpu_custom_call.1} parent=11 // pred_check
        %p575 = pneg %p186
      $region30: #{tpu_custom_call.1} parent=11 // pred_check_branch
        %577 = sbr.rel (%p575) target = $region32
      $region31: #{tpu_custom_call.1} parent=11 // pred_region
        _
      $region32: #{tpu_custom_call.1} parent=11 // pred_fallthru
        _
      // Predicated region
      $region33: #{tpu_custom_call.1} parent=11 // pred_check
        %p578 = pneg %p207
      $region34: #{tpu_custom_call.1} parent=11 // pred_check_branch
        %580 = sbr.rel (%p578) target = $region36
      $region35: #{tpu_custom_call.1} parent=11 // pred_region
        _
      $region36: #{tpu_custom_call.1} parent=11 // pred_fallthru
        _
      // Predicated region
      $region37: #{tpu_custom_call.1} parent=11 // pred_check
        %p581 = pneg %p228
      $region38: #{tpu_custom_call.1} parent=11 // pred_check_branch
        %583 = sbr.rel (%p581) target = $region40
      $region39: #{tpu_custom_call.1} parent=11 // pred_region
        _
      $region40: #{tpu_custom_call.1} parent=11 // pred_fallthru
        _
      // Predicated region
      $region41: #{tpu_custom_call.1} parent=11 // pred_check
        %p584 = pneg %p249
      $region42: #{tpu_custom_call.1} parent=11 // pred_check_branch
        %586 = sbr.rel (%p584) target = $region44
      $region43: #{tpu_custom_call.1} parent=11 // pred_region
        _
      $region44: #{tpu_custom_call.1} parent=11 // pred_fallthru
        _
      // Predicated region
      $region45: #{tpu_custom_call.1} parent=11 // pred_check
        %p587 = pneg %p270
      $region46: #{tpu_custom_call.1} parent=11 // pred_check_branch
        %589 = sbr.rel (%p587) target = $region48
      $region47: #{tpu_custom_call.1} parent=11 // pred_region
        _
      $region48: #{tpu_custom_call.1} parent=11 // pred_fallthru
        _
      // Predicated region
      $region49: #{tpu_custom_call.1} parent=11 // pred_check
        %p590 = pneg %p291
      $region50: #{tpu_custom_call.1} parent=11 // pred_check_branch
        %592 = sbr.rel (%p590) target = $region52
      $region51: #{tpu_custom_call.1} parent=11 // pred_region
        _
      $region52: #{tpu_custom_call.1} parent=11 // pred_fallthru
        _
      // Predicated region
      $region53: #{tpu_custom_call.1} parent=11 // pred_check
        %p593 = pneg %p312
      $region54: #{tpu_custom_call.1} parent=11 // pred_check_branch
        %595 = sbr.rel (%p593) target = $region56
      $region55: #{tpu_custom_call.1} parent=11 // pred_region
        _
      $region56: #{tpu_custom_call.1} parent=11 // pred_fallthru
        _
      // Predicated region
      $region57: #{tpu_custom_call.1} parent=11 // pred_check
        %p596 = pneg %p333
      $region58: #{tpu_custom_call.1} parent=11 // pred_check_branch
        %598 = sbr.rel (%p596) target = $region60
      $region59: #{tpu_custom_call.1} parent=11 // pred_region
        _
      $region60: #{tpu_custom_call.1} parent=11 // pred_fallthru
        _
      // Predicated region
      $region61: #{tpu_custom_call.1} parent=11 // pred_check
        %p599 = pneg %p354
      $region62: #{tpu_custom_call.1} parent=11 // pred_check_branch
        %601 = sbr.rel (%p599) target = $region64
      $region63: #{tpu_custom_call.1} parent=11 // pred_region
        _
      $region64: #{tpu_custom_call.1} parent=11 // pred_fallthru
        _
      // Predicated region
      $region65: #{tpu_custom_call.1} parent=11 // pred_check
        %p602 = pneg %p375
      $region66: #{tpu_custom_call.1} parent=11 // pred_check_branch
        %604 = sbr.rel (%p602) target = $region68
      $region67: #{tpu_custom_call.1} parent=11 // pred_region
        _
      $region68: #{tpu_custom_call.1} parent=11 // pred_fallthru
        _
      // Predicated region
      $region69: #{tpu_custom_call.1} parent=11 // pred_check
        %p605 = pneg %p396
      $region70: #{tpu_custom_call.1} parent=11 // pred_check_branch
        %607 = sbr.rel (%p605) target = $region72
      $region71: #{tpu_custom_call.1} parent=11 // pred_region
        _
      $region72: #{tpu_custom_call.1} parent=11 // pred_fallthru
        _
      // Predicated region
      $region73: #{tpu_custom_call.1} parent=11 // pred_check
        %p608 = pneg %p417
      $region74: #{tpu_custom_call.1} parent=11 // pred_check_branch
        %610 = sbr.rel (%p608) target = $region76
      $region75: #{tpu_custom_call.1} parent=11 // pred_region
        _
      $region76: #{tpu_custom_call.1} parent=11 // pred_fallthru
        _
      // Predicated region
      $region77: #{tpu_custom_call.1} parent=11 // pred_check
        %p611 = pneg %p438
      $region78: #{tpu_custom_call.1} parent=11 // pred_check_branch
        %613 = sbr.rel (%p611) target = $region80
      $region79: #{tpu_custom_call.1} parent=11 // pred_region
        _
      $region80: #{tpu_custom_call.1} parent=11 // pred_fallthru
        _
      // Predicated region
      $region81: #{tpu_custom_call.1} parent=11 // pred_check
        %p614 = pneg %p459
      $region82: #{tpu_custom_call.1} parent=11 // pred_check_branch
        %616 = sbr.rel (%p614) target = $region84
      $region83: #{tpu_custom_call.1} parent=11 // pred_region
        _
      $region84: #{tpu_custom_call.1} parent=11 // pred_fallthru
        _
      // Predicated region
      $region85: #{tpu_custom_call.1} parent=11 // pred_check
        %p617 = pneg %p480
      $region86: #{tpu_custom_call.1} parent=11 // pred_check_branch
        %619 = sbr.rel (%p617) target = $region88
      $region87: #{tpu_custom_call.1} parent=11 // pred_region
        _
      $region88: #{tpu_custom_call.1} parent=11 // pred_fallthru
        _
      // Predicated region
      $region89: #{tpu_custom_call.1} parent=11 // pred_check
        %p620 = pneg %p501
      $region90: #{tpu_custom_call.1} parent=11 // pred_check_branch
        %622 = sbr.rel (%p620) target = $region92
      $region91: #{tpu_custom_call.1} parent=11 // pred_region
        _
      $region92: #{tpu_custom_call.1} parent=11 // pred_fallthru
        _
      // Predicated region
      $region93: #{tpu_custom_call.1} parent=11 // pred_check
        %p623 = pneg %p522
      $region94: #{tpu_custom_call.1} parent=11 // pred_check_branch
        %625 = sbr.rel (%p623) target = $region96
      $region95: #{tpu_custom_call.1} parent=11 // pred_region
        _
      $region96: #{tpu_custom_call.1} parent=11 // pred_fallthru
        _
    $region12: #{tpu_custom_call.1} parent=5 // pred_fallthru
      _
    %p626 = scmp.lt.s32.totalorder %s29, 2
    // Predicated region
    $region97: #{tpu_custom_call.1} parent=5 // pred_check
      %p627 = pneg %p626
    $region98: #{tpu_custom_call.1} parent=5 // pred_check_branch
      %629 = sbr.rel (%p627) target = $region100
    $region99: #{tpu_custom_call.1} parent=5 // pred_region
      // Predicated region
      $region101: #{tpu_custom_call.1} parent=99 // pred_check
        %p630 = pneg %p49
      $region102: #{tpu_custom_call.1} parent=99 // pred_check_branch
        %632 = sbr.rel (%p630) target = $region104
      $region103: #{tpu_custom_call.1} parent=99 // pred_region
        %p633 = scmp.lt.s32.totalorder %s29, 1
        %s634 = scalar_select %p633, %s29, 1
        %s635 = smul.addr %s634, 128
        %s636 = smul.addr %s635, 8
        %s637 = scalar_lea.vmem %s0, %s636
      $region104: #{tpu_custom_call.1} parent=99 // pred_fallthru
        _
      // Predicated region
      $region105: #{tpu_custom_call.1} parent=99 // pred_check
        %p638 = pneg %p75
      $region106: #{tpu_custom_call.1} parent=99 // pred_check_branch
        %640 = sbr.rel (%p638) target = $region108
      $region107: #{tpu_custom_call.1} parent=99 // pred_region
        %p641 = scmp.lt.s32.totalorder %s29, 1
        %s642 = scalar_select %p641, %s29, 1
        %s643 = smul.addr %s642, 128
        %s644 = smul.addr %s643, 8
        %s645 = scalar_lea.vmem %s1, %s644
      $region108: #{tpu_custom_call.1} parent=99 // pred_fallthru
        _
    $region100: #{tpu_custom_call.1} parent=5 // pred_fallthru
      _
    %p646 = scmp.le.s32.totalorder 1, %s29
    %p647 = scmp.lt.s32.totalorder %s29, 3
    %p648 = pnand %p646, %p647
    %p649 = pneg %p648
    // Predicated region
    $region109: #{tpu_custom_call.1} parent=5 // pred_check
      _
    $region110: #{tpu_custom_call.1} parent=5 // pred_check_branch
      %651 = sbr.rel (%p648) target = $region112
    $region111: #{tpu_custom_call.1} parent=5 // pred_region
      %s652 = ssub.s32 %s29, 1
      %p653 = scmp.lt.s32.totalorder %s34, 1
      %s654 = scalar_select %p653, %s34, 1
      %s655 = smul.addr %s654, 128
      %s656 = smul.addr %s655, 8
      %s657 = scalar_lea.vmem %s0, %s656
      %p658 = pneg %p55
      %p659 = pneg %p52
      %p660 = scmp.lt.s32.totalorder %s34, 1
      %s661 = scalar_select %p660, %s34, 1
      %s662 = smul.addr %s661, 128
      %s663 = smul.addr %s662, 8
      %s664 = scalar_lea.vmem %s1, %s663
      %p665 = pneg %p81
      %p666 = pneg %p78
      %p667 = pneg %p102
      %p668 = pneg %p99
      %p669 = pneg %p123
      %p670 = pneg %p120
      %p671 = pneg %p144
      %p672 = pneg %p141
      %p673 = pneg %p165
      %p674 = pneg %p162
      %p675 = pneg %p186
      %p676 = pneg %p183
      %p677 = pneg %p207
      %p678 = pneg %p204
      %p679 = pneg %p228
      %p680 = pneg %p225
      %p681 = pneg %p249
      %p682 = pneg %p246
      %p683 = pneg %p270
      %p684 = pneg %p267
      %p685 = pneg %p291
      %p686 = pneg %p288
      %p687 = pneg %p312
      %p688 = pneg %p309
      %p689 = pneg %p333
      %p690 = pneg %p330
      %p691 = pneg %p354
      %p692 = pneg %p351
      %p693 = pneg %p375
      %p694 = pneg %p372
      %p695 = pneg %p396
      %p696 = pneg %p393
      %p697 = pneg %p417
      %p698 = pneg %p414
      %p699 = pneg %p438
      %p700 = pneg %p435
      %p701 = pneg %p459
      %p702 = pneg %p456
      %p703 = pneg %p480
      %p704 = pneg %p477
      %p705 = pneg %p501
      %p706 = pneg %p498
      %p707 = pneg %p522
      %p708 = pneg %p519
      %p709 = pneg %p548
      %p710 = pneg %p545
      %p711 = scmp.lt.s32.totalorder %s34, 1
      %s712 = scalar_select %p711, %s34, 1
      %s713 = smul.addr %s712, 128
      %s714 = smul.addr %s713, 8
      %s715 = scalar_lea.vmem %s23, %s714
      %p716 = scmp.lt.s32.totalorder %s34, 1
      %s717 = scalar_select %p716, %s34, 1
      %s718 = smul.addr %s717, 128
      %s719 = smul.addr %s718, 8
      %s720 = scalar_lea.vmem %s0, %s719
      %p721 = scmp.lt.s32.totalorder %s34, 1
      %s722 = scalar_select %p721, %s34, 1
      %s723 = smul.addr %s722, 128
      %s724 = smul.addr %s723, 8
      %s725 = scalar_lea.vmem %s1, %s724
      %p726 = scmp.lt.s32.totalorder %s34, 1
      %s727 = scalar_select %p726, %s34, 1
      %s728 = smul.addr %s727, 128
      %s729 = smul.addr %s728, 8
      %s730 = scalar_lea.vmem %s23, %s729
      %v731 = vld [vmem:[%s720] sm:$0xff]
      %v732 = vld [vmem:[%s720 + $0x8] sm:$0xff]
      %v733 = vld [vmem:[%s720 + $0x10] sm:$0xff]
      %v734 = vld [vmem:[%s720 + $0x18] sm:$0xff]
      %v735 = vld [vmem:[%s720 + $0x20] sm:$0xff]
      %v736 = vld [vmem:[%s720 + $0x28] sm:$0xff]
      %v737 = vld [vmem:[%s720 + $0x30] sm:$0xff]
      %v738 = vld [vmem:[%s720 + $0x38] sm:$0xff]
      %v739 = vld [vmem:[%s720 + $0x40] sm:$0xff]
      %v740 = vld [vmem:[%s720 + $0x48] sm:$0xff]
      %v741 = vld [vmem:[%s720 + $0x50] sm:$0xff]
      %v742 = vld [vmem:[%s720 + $0x58] sm:$0xff]
      %v743 = vld [vmem:[%s720 + $0x60] sm:$0xff]
      %v744 = vld [vmem:[%s720 + $0x68] sm:$0xff]
      %v745 = vld [vmem:[%s720 + $0x70] sm:$0xff]
      %v746 = vld [vmem:[%s720 + $0x78] sm:$0xff]
      %v747 = vld [vmem:[%s720 + $0x80] sm:$0xff]
      %v748 = vld [vmem:[%s720 + $0x88] sm:$0xff]
      %v749 = vld [vmem:[%s720 + $0x90] sm:$0xff]
      %v750 = vld [vmem:[%s720 + $0x98] sm:$0xff]
      %v751 = vld [vmem:[%s720 + $0xa0] sm:$0xff]
      %v752 = vld [vmem:[%s720 + $0xa8] sm:$0xff]
      %v753 = vld [vmem:[%s720 + $0xb0] sm:$0xff]
      %v754 = vld [vmem:[%s720 + $0xb8] sm:$0xff]
      %v755 = vld [vmem:[%s720 + $0xc0] sm:$0xff]
      %v756 = vld [vmem:[%s720 + $0xc8] sm:$0xff]
      %v757 = vld [vmem:[%s720 + $0xd0] sm:$0xff]
      %v758 = vld [vmem:[%s720 + $0xd8] sm:$0xff]
      %v759 = vld [vmem:[%s720 + $0xe0] sm:$0xff]
      %v760 = vld [vmem:[%s720 + $0xe8] sm:$0xff]
      %v761 = vld [vmem:[%s720 + $0xf0] sm:$0xff]
      %v762 = vld [vmem:[%s720 + $0xf8] sm:$0xff]
      %v763 = vld [vmem:[%s720 + $0x100] sm:$0xff]
      %v764 = vld [vmem:[%s720 + $0x108] sm:$0xff]
      %v765 = vld [vmem:[%s720 + $0x110] sm:$0xff]
      %v766 = vld [vmem:[%s720 + $0x118] sm:$0xff]
      %v767 = vld [vmem:[%s720 + $0x120] sm:$0xff]
      %v768 = vld [vmem:[%s720 + $0x128] sm:$0xff]
      %v769 = vld [vmem:[%s720 + $0x130] sm:$0xff]
      %v770 = vld [vmem:[%s720 + $0x138] sm:$0xff]
      %v771 = vld [vmem:[%s720 + $0x140] sm:$0xff]
      %v772 = vld [vmem:[%s720 + $0x148] sm:$0xff]
      %v773 = vld [vmem:[%s720 + $0x150] sm:$0xff]
      %v774 = vld [vmem:[%s720 + $0x158] sm:$0xff]
      %v775 = vld [vmem:[%s720 + $0x160] sm:$0xff]
      %v776 = vld [vmem:[%s720 + $0x168] sm:$0xff]
      %v777 = vld [vmem:[%s720 + $0x170] sm:$0xff]
      %v778 = vld [vmem:[%s720 + $0x178] sm:$0xff]
      %v779 = vld [vmem:[%s720 + $0x180] sm:$0xff]
      %v780 = vld [vmem:[%s720 + $0x188] sm:$0xff]
      %v781 = vld [vmem:[%s720 + $0x190] sm:$0xff]
      %v782 = vld [vmem:[%s720 + $0x198] sm:$0xff]
      %v783 = vld [vmem:[%s720 + $0x1a0] sm:$0xff]
      %v784 = vld [vmem:[%s720 + $0x1a8] sm:$0xff]
      %v785 = vld [vmem:[%s720 + $0x1b0] sm:$0xff]
      %v786 = vld [vmem:[%s720 + $0x1b8] sm:$0xff]
      %v787 = vld [vmem:[%s720 + $0x1c0] sm:$0xff]
      %v788 = vld [vmem:[%s720 + $0x1c8] sm:$0xff]
      %v789 = vld [vmem:[%s720 + $0x1d0] sm:$0xff]
      %v790 = vld [vmem:[%s720 + $0x1d8] sm:$0xff]
      %v791 = vld [vmem:[%s720 + $0x1e0] sm:$0xff]
      %v792 = vld [vmem:[%s720 + $0x1e8] sm:$0xff]
      %v793 = vld [vmem:[%s720 + $0x1f0] sm:$0xff]
      %v794 = vld [vmem:[%s720 + $0x1f8] sm:$0xff]
      %v795 = vld [vmem:[%s720 + $0x200] sm:$0xff]
      %v796 = vld [vmem:[%s720 + $0x208] sm:$0xff]
      %v797 = vld [vmem:[%s720 + $0x210] sm:$0xff]
      %v798 = vld [vmem:[%s720 + $0x218] sm:$0xff]
      %v799 = vld [vmem:[%s720 + $0x220] sm:$0xff]
      %v800 = vld [vmem:[%s720 + $0x228] sm:$0xff]
      %v801 = vld [vmem:[%s720 + $0x230] sm:$0xff]
      %v802 = vld [vmem:[%s720 + $0x238] sm:$0xff]
      %v803 = vld [vmem:[%s720 + $0x240] sm:$0xff]
      %v804 = vld [vmem:[%s720 + $0x248] sm:$0xff]
      %v805 = vld [vmem:[%s720 + $0x250] sm:$0xff]
      %v806 = vld [vmem:[%s720 + $0x258] sm:$0xff]
      %v807 = vld [vmem:[%s720 + $0x260] sm:$0xff]
      %v808 = vld [vmem:[%s720 + $0x268] sm:$0xff]
      %v809 = vld [vmem:[%s720 + $0x270] sm:$0xff]
      %v810 = vld [vmem:[%s720 + $0x278] sm:$0xff]
      %v811 = vld [vmem:[%s720 + $0x280] sm:$0xff]
      %v812 = vld [vmem:[%s720 + $0x288] sm:$0xff]
      %v813 = vld [vmem:[%s720 + $0x290] sm:$0xff]
      %v814 = vld [vmem:[%s720 + $0x298] sm:$0xff]
      %v815 = vld [vmem:[%s720 + $0x2a0] sm:$0xff]
      %v816 = vld [vmem:[%s720 + $0x2a8] sm:$0xff]
      %v817 = vld [vmem:[%s720 + $0x2b0] sm:$0xff]
      %v818 = vld [vmem:[%s720 + $0x2b8] sm:$0xff]
      %v819 = vld [vmem:[%s720 + $0x2c0] sm:$0xff]
      %v820 = vld [vmem:[%s720 + $0x2c8] sm:$0xff]
      %v821 = vld [vmem:[%s720 + $0x2d0] sm:$0xff]
      %v822 = vld [vmem:[%s720 + $0x2d8] sm:$0xff]
      %v823 = vld [vmem:[%s720 + $0x2e0] sm:$0xff]
      %v824 = vld [vmem:[%s720 + $0x2e8] sm:$0xff]
      %v825 = vld [vmem:[%s720 + $0x2f0] sm:$0xff]
      %v826 = vld [vmem:[%s720 + $0x2f8] sm:$0xff]
      %v827 = vld [vmem:[%s720 + $0x300] sm:$0xff]
      %v828 = vld [vmem:[%s720 + $0x308] sm:$0xff]
      %v829 = vld [vmem:[%s720 + $0x310] sm:$0xff]
      %v830 = vld [vmem:[%s720 + $0x318] sm:$0xff]
      %v831 = vld [vmem:[%s720 + $0x320] sm:$0xff]
      %v832 = vld [vmem:[%s720 + $0x328] sm:$0xff]
      %v833 = vld [vmem:[%s720 + $0x330] sm:$0xff]
      %v834 = vld [vmem:[%s720 + $0x338] sm:$0xff]
      %v835 = vld [vmem:[%s720 + $0x340] sm:$0xff]
      %v836 = vld [vmem:[%s720 + $0x348] sm:$0xff]
      %v837 = vld [vmem:[%s720 + $0x350] sm:$0xff]
      %v838 = vld [vmem:[%s720 + $0x358] sm:$0xff]
      %v839 = vld [vmem:[%s720 + $0x360] sm:$0xff]
      %v840 = vld [vmem:[%s720 + $0x368] sm:$0xff]
      %v841 = vld [vmem:[%s720 + $0x370] sm:$0xff]
      %v842 = vld [vmem:[%s720 + $0x378] sm:$0xff]
      %v843 = vld [vmem:[%s720 + $0x380] sm:$0xff]
      %v844 = vld [vmem:[%s720 + $0x388] sm:$0xff]
      %v845 = vld [vmem:[%s720 + $0x390] sm:$0xff]
      %v846 = vld [vmem:[%s720 + $0x398] sm:$0xff]
      %v847 = vld [vmem:[%s720 + $0x3a0] sm:$0xff]
      %v848 = vld [vmem:[%s720 + $0x3a8] sm:$0xff]
      %v849 = vld [vmem:[%s720 + $0x3b0] sm:$0xff]
      %v850 = vld [vmem:[%s720 + $0x3b8] sm:$0xff]
      %v851 = vld [vmem:[%s720 + $0x3c0] sm:$0xff]
      %v852 = vld [vmem:[%s720 + $0x3c8] sm:$0xff]
      %v853 = vld [vmem:[%s720 + $0x3d0] sm:$0xff]
      %v854 = vld [vmem:[%s720 + $0x3d8] sm:$0xff]
      %v855 = vld [vmem:[%s720 + $0x3e0] sm:$0xff]
      %v856 = vld [vmem:[%s720 + $0x3e8] sm:$0xff]
      %v857 = vld [vmem:[%s720 + $0x3f0] sm:$0xff]
      %v858 = vld [vmem:[%s720 + $0x3f8] sm:$0xff]
      %v859 = vld [vmem:[%s725] sm:$0xff]
      %v860 = vld [vmem:[%s725 + $0x8] sm:$0xff]
      %v861 = vld [vmem:[%s725 + $0x10] sm:$0xff]
      %v862 = vld [vmem:[%s725 + $0x18] sm:$0xff]
      %v863 = vld [vmem:[%s725 + $0x20] sm:$0xff]
      %v864 = vld [vmem:[%s725 + $0x28] sm:$0xff]
      %v865 = vld [vmem:[%s725 + $0x30] sm:$0xff]
      %v866 = vld [vmem:[%s725 + $0x38] sm:$0xff]
      %v867 = vld [vmem:[%s725 + $0x40] sm:$0xff]
      %v868 = vld [vmem:[%s725 + $0x48] sm:$0xff]
      %v869 = vld [vmem:[%s725 + $0x50] sm:$0xff]
      %v870 = vld [vmem:[%s725 + $0x58] sm:$0xff]
      %v871 = vld [vmem:[%s725 + $0x60] sm:$0xff]
      %v872 = vld [vmem:[%s725 + $0x68] sm:$0xff]
      %v873 = vld [vmem:[%s725 + $0x70] sm:$0xff]
      %v874 = vld [vmem:[%s725 + $0x78] sm:$0xff]
      %v875 = vld [vmem:[%s725 + $0x80] sm:$0xff]
      %v876 = vld [vmem:[%s725 + $0x88] sm:$0xff]
      %v877 = vld [vmem:[%s725 + $0x90] sm:$0xff]
      %v878 = vld [vmem:[%s725 + $0x98] sm:$0xff]
      %v879 = vld [vmem:[%s725 + $0xa0] sm:$0xff]
      %v880 = vld [vmem:[%s725 + $0xa8] sm:$0xff]
      %v881 = vld [vmem:[%s725 + $0xb0] sm:$0xff]
      %v882 = vld [vmem:[%s725 + $0xb8] sm:$0xff]
      %v883 = vld [vmem:[%s725 + $0xc0] sm:$0xff]
      %v884 = vld [vmem:[%s725 + $0xc8] sm:$0xff]
      %v885 = vld [vmem:[%s725 + $0xd0] sm:$0xff]
      %v886 = vld [vmem:[%s725 + $0xd8] sm:$0xff]
      %v887 = vld [vmem:[%s725 + $0xe0] sm:$0xff]
      %v888 = vld [vmem:[%s725 + $0xe8] sm:$0xff]
      %v889 = vld [vmem:[%s725 + $0xf0] sm:$0xff]
      %v890 = vld [vmem:[%s725 + $0xf8] sm:$0xff]
      %v891 = vld [vmem:[%s725 + $0x100] sm:$0xff]
      %v892 = vld [vmem:[%s725 + $0x108] sm:$0xff]
      %v893 = vld [vmem:[%s725 + $0x110] sm:$0xff]
      %v894 = vld [vmem:[%s725 + $0x118] sm:$0xff]
      %v895 = vld [vmem:[%s725 + $0x120] sm:$0xff]
      %v896 = vld [vmem:[%s725 + $0x128] sm:$0xff]
      %v897 = vld [vmem:[%s725 + $0x130] sm:$0xff]
      %v898 = vld [vmem:[%s725 + $0x138] sm:$0xff]
      %v899 = vld [vmem:[%s725 + $0x140] sm:$0xff]
      %v900 = vld [vmem:[%s725 + $0x148] sm:$0xff]
      %v901 = vld [vmem:[%s725 + $0x150] sm:$0xff]
      %v902 = vld [vmem:[%s725 + $0x158] sm:$0xff]
      %v903 = vld [vmem:[%s725 + $0x160] sm:$0xff]
      %v904 = vld [vmem:[%s725 + $0x168] sm:$0xff]
      %v905 = vld [vmem:[%s725 + $0x170] sm:$0xff]
      %v906 = vld [vmem:[%s725 + $0x178] sm:$0xff]
      %v907 = vld [vmem:[%s725 + $0x180] sm:$0xff]
      %v908 = vld [vmem:[%s725 + $0x188] sm:$0xff]
      %v909 = vld [vmem:[%s725 + $0x190] sm:$0xff]
      %v910 = vld [vmem:[%s725 + $0x198] sm:$0xff]
      %v911 = vld [vmem:[%s725 + $0x1a0] sm:$0xff]
      %v912 = vld [vmem:[%s725 + $0x1a8] sm:$0xff]
      %v913 = vld [vmem:[%s725 + $0x1b0] sm:$0xff]
      %v914 = vld [vmem:[%s725 + $0x1b8] sm:$0xff]
      %v915 = vld [vmem:[%s725 + $0x1c0] sm:$0xff]
      %v916 = vld [vmem:[%s725 + $0x1c8] sm:$0xff]
      %v917 = vld [vmem:[%s725 + $0x1d0] sm:$0xff]
      %v918 = vld [vmem:[%s725 + $0x1d8] sm:$0xff]
      %v919 = vld [vmem:[%s725 + $0x1e0] sm:$0xff]
      %v920 = vld [vmem:[%s725 + $0x1e8] sm:$0xff]
      %v921 = vld [vmem:[%s725 + $0x1f0] sm:$0xff]
      %v922 = vld [vmem:[%s725 + $0x1f8] sm:$0xff]
      %v923 = vld [vmem:[%s725 + $0x200] sm:$0xff]
      %v924 = vld [vmem:[%s725 + $0x208] sm:$0xff]
      %v925 = vld [vmem:[%s725 + $0x210] sm:$0xff]
      %v926 = vld [vmem:[%s725 + $0x218] sm:$0xff]
      %v927 = vld [vmem:[%s725 + $0x220] sm:$0xff]
      %v928 = vld [vmem:[%s725 + $0x228] sm:$0xff]
      %v929 = vld [vmem:[%s725 + $0x230] sm:$0xff]
      %v930 = vld [vmem:[%s725 + $0x238] sm:$0xff]
      %v931 = vld [vmem:[%s725 + $0x240] sm:$0xff]
      %v932 = vld [vmem:[%s725 + $0x248] sm:$0xff]
      %v933 = vld [vmem:[%s725 + $0x250] sm:$0xff]
      %v934 = vld [vmem:[%s725 + $0x258] sm:$0xff]
      %v935 = vld [vmem:[%s725 + $0x260] sm:$0xff]
      %v936 = vld [vmem:[%s725 + $0x268] sm:$0xff]
      %v937 = vld [vmem:[%s725 + $0x270] sm:$0xff]
      %v938 = vld [vmem:[%s725 + $0x278] sm:$0xff]
      %v939 = vld [vmem:[%s725 + $0x280] sm:$0xff]
      %v940 = vld [vmem:[%s725 + $0x288] sm:$0xff]
      %v941 = vld [vmem:[%s725 + $0x290] sm:$0xff]
      %v942 = vld [vmem:[%s725 + $0x298] sm:$0xff]
      %v943 = vld [vmem:[%s725 + $0x2a0] sm:$0xff]
      %v944 = vld [vmem:[%s725 + $0x2a8] sm:$0xff]
      %v945 = vld [vmem:[%s725 + $0x2b0] sm:$0xff]
      %v946 = vld [vmem:[%s725 + $0x2b8] sm:$0xff]
      %v947 = vld [vmem:[%s725 + $0x2c0] sm:$0xff]
      %v948 = vld [vmem:[%s725 + $0x2c8] sm:$0xff]
      %v949 = vld [vmem:[%s725 + $0x2d0] sm:$0xff]
      %v950 = vld [vmem:[%s725 + $0x2d8] sm:$0xff]
      %v951 = vld [vmem:[%s725 + $0x2e0] sm:$0xff]
      %v952 = vld [vmem:[%s725 + $0x2e8] sm:$0xff]
      %v953 = vld [vmem:[%s725 + $0x2f0] sm:$0xff]
      %v954 = vld [vmem:[%s725 + $0x2f8] sm:$0xff]
      %v955 = vld [vmem:[%s725 + $0x300] sm:$0xff]
      %v956 = vld [vmem:[%s725 + $0x308] sm:$0xff]
      %v957 = vld [vmem:[%s725 + $0x310] sm:$0xff]
      %v958 = vld [vmem:[%s725 + $0x318] sm:$0xff]
      %v959 = vld [vmem:[%s725 + $0x320] sm:$0xff]
      %v960 = vld [vmem:[%s725 + $0x328] sm:$0xff]
      %v961 = vld [vmem:[%s725 + $0x330] sm:$0xff]
      %v962 = vld [vmem:[%s725 + $0x338] sm:$0xff]
      %v963 = vld [vmem:[%s725 + $0x340] sm:$0xff]
      %v964 = vld [vmem:[%s725 + $0x348] sm:$0xff]
      %v965 = vld [vmem:[%s725 + $0x350] sm:$0xff]
      %v966 = vld [vmem:[%s725 + $0x358] sm:$0xff]
      %v967 = vld [vmem:[%s725 + $0x360] sm:$0xff]
      %v968 = vld [vmem:[%s725 + $0x368] sm:$0xff]
      %v969 = vld [vmem:[%s725 + $0x370] sm:$0xff]
      %v970 = vld [vmem:[%s725 + $0x378] sm:$0xff]
      %v971 = vld [vmem:[%s725 + $0x380] sm:$0xff]
      %v972 = vld [vmem:[%s725 + $0x388] sm:$0xff]
      %v973 = vld [vmem:[%s725 + $0x390] sm:$0xff]
      %v974 = vld [vmem:[%s725 + $0x398] sm:$0xff]
      %v975 = vld [vmem:[%s725 + $0x3a0] sm:$0xff]
      %v976 = vld [vmem:[%s725 + $0x3a8] sm:$0xff]
      %v977 = vld [vmem:[%s725 + $0x3b0] sm:$0xff]
      %v978 = vld [vmem:[%s725 + $0x3b8] sm:$0xff]
      %v979 = vld [vmem:[%s725 + $0x3c0] sm:$0xff]
      %v980 = vld [vmem:[%s725 + $0x3c8] sm:$0xff]
      %v981 = vld [vmem:[%s725 + $0x3d0] sm:$0xff]
      %v982 = vld [vmem:[%s725 + $0x3d8] sm:$0xff]
      %v983 = vld [vmem:[%s725 + $0x3e0] sm:$0xff]
      %v984 = vld [vmem:[%s725 + $0x3e8] sm:$0xff]
      %v985 = vld [vmem:[%s725 + $0x3f0] sm:$0xff]
      %v986 = vld [vmem:[%s725 + $0x3f8] sm:$0xff]
      %v987 = vld [vmem:[%s2] sm:$0xff]
      %v988 = vld [vmem:[%s2 + $0x8] sm:$0xff]
      %v989 = vld [vmem:[%s2 + $0x10] sm:$0xff]
      %v990 = vld [vmem:[%s2 + $0x18] sm:$0xff]
      %v991 = vld [vmem:[%s2 + $0x20] sm:$0xff]
      %v992 = vld [vmem:[%s2 + $0x28] sm:$0xff]
      %v993 = vld [vmem:[%s2 + $0x30] sm:$0xff]
      %v994 = vld [vmem:[%s2 + $0x38] sm:$0xff]
      %v995 = vld [vmem:[%s2 + $0x40] sm:$0xff]
      %v996 = vld [vmem:[%s2 + $0x48] sm:$0xff]
      %v997 = vld [vmem:[%s2 + $0x50] sm:$0xff]
      %v998 = vld [vmem:[%s2 + $0x58] sm:$0xff]
      %v999 = vld [vmem:[%s2 + $0x60] sm:$0xff]
      %v1000 = vld [vmem:[%s2 + $0x68] sm:$0xff]
      %v1001 = vld [vmem:[%s2 + $0x70] sm:$0xff]
      %v1002 = vld [vmem:[%s2 + $0x78] sm:$0xff]
      %v1003 = vld [vmem:[%s3] sm:$0xff]
      %v1004 = vld [vmem:[%s3 + $0x8] sm:$0xff]
      %v1005 = vld [vmem:[%s3 + $0x10] sm:$0xff]
      %v1006 = vld [vmem:[%s3 + $0x18] sm:$0xff]
      %v1007 = vld [vmem:[%s3 + $0x20] sm:$0xff]
      %v1008 = vld [vmem:[%s3 + $0x28] sm:$0xff]
      %v1009 = vld [vmem:[%s3 + $0x30] sm:$0xff]
      %v1010 = vld [vmem:[%s3 + $0x38] sm:$0xff]
      %v1011 = vld [vmem:[%s3 + $0x40] sm:$0xff]
      %v1012 = vld [vmem:[%s3 + $0x48] sm:$0xff]
      %v1013 = vld [vmem:[%s3 + $0x50] sm:$0xff]
      %v1014 = vld [vmem:[%s3 + $0x58] sm:$0xff]
      %v1015 = vld [vmem:[%s3 + $0x60] sm:$0xff]
      %v1016 = vld [vmem:[%s3 + $0x68] sm:$0xff]
      %v1017 = vld [vmem:[%s3 + $0x70] sm:$0xff]
      %v1018 = vld [vmem:[%s3 + $0x78] sm:$0xff]
      %vm1019 = vcmask 523264
      %v1021 = vsel %vm1019, %v859, 0
      %v1024 = vsel %vm1019, %v860, 0
      %v1027 = vsel %vm1019, %v861, 0
      %v1030 = vsel %vm1019, %v862, 0
      %v1033 = vsel %vm1019, %v863, 0
      %v1036 = vsel %vm1019, %v864, 0
      %v1039 = vsel %vm1019, %v865, 0
      %v1042 = vsel %vm1019, %v866, 0
      %v1045 = vsel %vm1019, %v867, 0
      %v1048 = vsel %vm1019, %v868, 0
      %v1051 = vsel %vm1019, %v869, 0
      %v1054 = vsel %vm1019, %v870, 0
      %v1057 = vsel %vm1019, %v871, 0
      %v1060 = vsel %vm1019, %v872, 0
      %v1063 = vsel %vm1019, %v873, 0
      %v1066 = vsel %vm1019, %v874, 0
      %v1069 = vsel %vm1019, %v875, 0
      %v1072 = vsel %vm1019, %v876, 0
      %v1075 = vsel %vm1019, %v877, 0
      %v1078 = vsel %vm1019, %v878, 0
      %v1081 = vsel %vm1019, %v879, 0
      %v1084 = vsel %vm1019, %v880, 0
      %v1087 = vsel %vm1019, %v881, 0
      %v1090 = vsel %vm1019, %v882, 0
      %v1093 = vsel %vm1019, %v883, 0
      %v1096 = vsel %vm1019, %v884, 0
      %v1099 = vsel %vm1019, %v885, 0
      %v1102 = vsel %vm1019, %v886, 0
      %v1105 = vsel %vm1019, %v887, 0
      %v1108 = vsel %vm1019, %v888, 0
      %v1111 = vsel %vm1019, %v889, 0
      %v1114 = vsel %vm1019, %v890, 0
      %v1117 = vsel %vm1019, %v891, 0
      %v1120 = vsel %vm1019, %v892, 0
      %v1123 = vsel %vm1019, %v893, 0
      %v1126 = vsel %vm1019, %v894, 0
      %v1129 = vsel %vm1019, %v895, 0
      %v1132 = vsel %vm1019, %v896, 0
      %v1135 = vsel %vm1019, %v897, 0
      %v1138 = vsel %vm1019, %v898, 0
      %v1141 = vsel %vm1019, %v899, 0
      %v1144 = vsel %vm1019, %v900, 0
      %v1147 = vsel %vm1019, %v901, 0
      %v1150 = vsel %vm1019, %v902, 0
      %v1153 = vsel %vm1019, %v903, 0
      %v1156 = vsel %vm1019, %v904, 0
      %v1159 = vsel %vm1019, %v905, 0
      %v1162 = vsel %vm1019, %v906, 0
      %v1165 = vsel %vm1019, %v907, 0
      %v1168 = vsel %vm1019, %v908, 0
      %v1171 = vsel %vm1019, %v909, 0
      %v1174 = vsel %vm1019, %v910, 0
      %v1177 = vsel %vm1019, %v911, 0
      %v1180 = vsel %vm1019, %v912, 0
      %v1183 = vsel %vm1019, %v913, 0
      %v1186 = vsel %vm1019, %v914, 0
      %v1189 = vsel %vm1019, %v915, 0
      %v1192 = vsel %vm1019, %v916, 0
      %v1195 = vsel %vm1019, %v917, 0
      %v1198 = vsel %vm1019, %v918, 0
      %v1201 = vsel %vm1019, %v919, 0
      %v1204 = vsel %vm1019, %v920, 0
      %v1207 = vsel %vm1019, %v921, 0
      %v1210 = vsel %vm1019, %v922, 0
      %v1213 = vsel %vm1019, %v923, 0
      %v1216 = vsel %vm1019, %v924, 0
      %v1219 = vsel %vm1019, %v925, 0
      %v1222 = vsel %vm1019, %v926, 0
      %v1225 = vsel %vm1019, %v927, 0
      %v1228 = vsel %vm1019, %v928, 0
      %v1231 = vsel %vm1019, %v929, 0
      %v1234 = vsel %vm1019, %v930, 0
      %v1237 = vsel %vm1019, %v931, 0
      %v1240 = vsel %vm1019, %v932, 0
      %v1243 = vsel %vm1019, %v933, 0
      %v1246 = vsel %vm1019, %v934, 0
      %v1249 = vsel %vm1019, %v935, 0
      %v1252 = vsel %vm1019, %v936, 0
      %v1255 = vsel %vm1019, %v937, 0
      %v1258 = vsel %vm1019, %v938, 0
      %v1261 = vsel %vm1019, %v939, 0
      %v1264 = vsel %vm1019, %v940, 0
      %v1267 = vsel %vm1019, %v941, 0
      %v1270 = vsel %vm1019, %v942, 0
      %v1273 = vsel %vm1019, %v943, 0
      %v1276 = vsel %vm1019, %v944, 0
      %v1279 = vsel %vm1019, %v945, 0
      %v1282 = vsel %vm1019, %v946, 0
      %v1285 = vsel %vm1019, %v947, 0
      %v1288 = vsel %vm1019, %v948, 0
      %v1291 = vsel %vm1019, %v949, 0
      %v1294 = vsel %vm1019, %v950, 0
      %v1297 = vsel %vm1019, %v951, 0
      %v1300 = vsel %vm1019, %v952, 0
      %v1303 = vsel %vm1019, %v953, 0
      %v1306 = vsel %vm1019, %v954, 0
      %v1309 = vsel %vm1019, %v955, 0
      %v1312 = vsel %vm1019, %v956, 0
      %v1315 = vsel %vm1019, %v957, 0
      %v1318 = vsel %vm1019, %v958, 0
      %v1321 = vsel %vm1019, %v959, 0
      %v1324 = vsel %vm1019, %v960, 0
      %v1327 = vsel %vm1019, %v961, 0
      %v1330 = vsel %vm1019, %v962, 0
      %v1333 = vsel %vm1019, %v963, 0
      %v1336 = vsel %vm1019, %v964, 0
      %v1339 = vsel %vm1019, %v965, 0
      %v1342 = vsel %vm1019, %v966, 0
      %v1345 = vsel %vm1019, %v967, 0
      %v1348 = vsel %vm1019, %v968, 0
      %v1351 = vsel %vm1019, %v969, 0
      %v1354 = vsel %vm1019, %v970, 0
      %v1357 = vsel %vm1019, %v971, 0
      %v1360 = vsel %vm1019, %v972, 0
      %v1363 = vsel %vm1019, %v973, 0
      %v1366 = vsel %vm1019, %v974, 0
      %v1369 = vsel %vm1019, %v975, 0
      %v1372 = vsel %vm1019, %v976, 0
      %v1375 = vsel %vm1019, %v977, 0
      %v1378 = vsel %vm1019, %v978, 0
      %v1381 = vsel %vm1019, %v979, 0
      %v1384 = vsel %vm1019, %v980, 0
      %v1387 = vsel %vm1019, %v981, 0
      %v1390 = vsel %vm1019, %v982, 0
      %v1393 = vsel %vm1019, %v983, 0
      %v1396 = vsel %vm1019, %v984, 0
      %v1399 = vsel %vm1019, %v985, 0
      %v1402 = vsel %vm1019, %v986, 0
      %1404 = vmatprep.subr.mxu0 %v1004
      %1405 = vmatpush1.msra.mxu0 %v1003
      %1406 = vmatprep.subr.mxu0 %v1006
      %1407 = vmatpush1.msra.mxu0 %v1005
      %1408 = vmatprep.subr.mxu0 %v1008
      %1409 = vmatpush1.msra.mxu0 %v1007
      %1410 = vmatprep.subr.mxu0 %v1010
      %1411 = vmatpush1.msra.mxu0 %v1009
      %1412 = vmatprep.subr.mxu0 %v1012
      %1413 = vmatpush1.msra.mxu0 %v1011
      %1414 = vmatprep.subr.mxu0 %v1014
      %1415 = vmatpush1.msra.mxu0 %v1013
      %1416 = vmatprep.subr.mxu0 %v1016
      %1417 = vmatpush1.msra.mxu0 %v1015
      %1418 = vmatprep.subr.mxu0 %v1018
      %1419 = vmatpush1.msra.mxu0 %v1017
      %1420 = vmatprep.subr.mxu0 0.0
      %1421 = vmatpush1.msra.mxu0 0.0
      %1422 = vmatprep.subr.mxu0 0.0
      %1423 = vmatpush1.msra.mxu0 0.0
      %1424 = vmatprep.subr.mxu0 0.0
      %1425 = vmatpush1.msra.mxu0 0.0
      %1426 = vmatprep.subr.mxu0 0.0
      %1427 = vmatpush1.msra.mxu0 0.0
      %1428 = vmatprep.subr.mxu0 0.0
      %1429 = vmatpush1.msra.mxu0 0.0
      %1430 = vmatprep.subr.mxu0 0.0
      %1431 = vmatpush1.msra.mxu0 0.0
      %1432 = vmatprep.subr.mxu0 0.0
      %1433 = vmatpush1.msra.mxu0 0.0
      %1434 = vmatprep.subr.mxu0 0.0
      %1435 = vmatpush1.msra.mxu0 0.0
      %1436 = vmatprep.subr.mxu0 0.0
      %1437 = vmatpush1.msra.mxu0 0.0
      %1438 = vmatprep.subr.mxu0 0.0
      %1439 = vmatpush1.msra.mxu0 0.0
      %1440 = vmatprep.subr.mxu0 0.0
      %1441 = vmatpush1.msra.mxu0 0.0
      %1442 = vmatprep.subr.mxu0 0.0
      %1443 = vmatpush1.msra.mxu0 0.0
      %1444 = vmatprep.subr.mxu0 0.0
      %1445 = vmatpush1.msra.mxu0 0.0
      %1446 = vmatprep.subr.mxu0 0.0
      %1447 = vmatpush1.msra.mxu0 0.0
      %1448 = vmatprep.subr.mxu0 0.0
      %1449 = vmatpush1.msra.mxu0 0.0
      %1450 = vmatprep.subr.mxu0 0.0
      %1451 = vmatpush1.msra.mxu0 0.0
      %1452 = vmatprep.subr.mxu0 0.0
      %1453 = vmatpush1.msra.mxu0 0.0
      %1454 = vmatprep.subr.mxu0 0.0
      %1455 = vmatpush1.msra.mxu0 0.0
      %1456 = vmatprep.subr.mxu0 0.0
      %1457 = vmatpush1.msra.mxu0 0.0
      %1458 = vmatprep.subr.mxu0 0.0
      %1459 = vmatpush1.msra.mxu0 0.0
      %1460 = vmatprep.subr.mxu0 0.0
      %1461 = vmatpush1.msra.mxu0 0.0
      %1462 = vmatprep.subr.mxu0 0.0
      %1463 = vmatpush1.msra.mxu0 0.0
      %1464 = vmatprep.subr.mxu0 0.0
      %1465 = vmatpush1.msra.mxu0 0.0
      %1466 = vmatprep.subr.mxu0 0.0
      %1467 = vmatpush1.msra.mxu0 0.0
      %1468 = vmatprep.mubr.f32.mxu0 0.0
      %1469 = vmatmul.mubr.f32.gmra.mrb[0].mxu0 %v1021
      %v1470 = vpop.f32.mrb[0].mxu0
      %v1471 = vadd.f32 0.0, %v1470
      %v1472 = vpop.f32.mrb[0].mxu0
      %v1473 = vadd.f32 0.0, %v1472
      %1474 = vmatprep.mubr.f32.mxu0 0.0
      %1475 = vmatmul.mubr.f32.gmra.mrb[0].mxu0 %v1024
      %v1476 = vpop.f32.mrb[0].mxu0
      %v1477 = vadd.f32 0.0, %v1476
      %v1478 = vpop.f32.mrb[0].mxu0
      %v1479 = vadd.f32 0.0, %v1478
      %1480 = vmatprep.mubr.f32.mxu0 0.0
      %1481 = vmatmul.mubr.f32.gmra.mrb[0].mxu0 %v1027
      %v1482 = vpop.f32.mrb[0].mxu0
      %v1483 = vadd.f32 0.0, %v1482
      %v1484 = vpop.f32.mrb[0].mxu0
      %v1485 = vadd.f32 0.0, %v1484
      %1486 = vmatprep.mubr.f32.mxu0 0.0
      %1487 = vmatmul.mubr.f32.gmra.mrb[0].mxu0 %v1030
      %v1488 = vpop.f32.mrb[0].mxu0
      %v1489 = vadd.f32 0.0, %v1488
      %v1490 = vpop.f32.mrb[0].mxu0
      %v1491 = vadd.f32 0.0, %v1490
      %1492 = vmatprep.mubr.f32.mxu0 0.0
      %1493 = vmatmul.mubr.f32.gmra.mrb[0].mxu0 %v1033
      %v1494 = vpop.f32.mrb[0].mxu0
      %v1495 = vadd.f32 0.0, %v1494
      %v1496 = vpop.f32.mrb[0].mxu0
      %v1497 = vadd.f32 0.0, %v1496
      %1498 = vmatprep.mubr.f32.mxu0 0.0
      %1499 = vmatmul.mubr.f32.gmra.mrb[0].mxu0 %v1036
      %v1500 = vpop.f32.mrb[0].mxu0
      %v1501 = vadd.f32 0.0, %v1500
      %v1502 = vpop.f32.mrb[0].mxu0
      %v1503 = vadd.f32 0.0, %v1502
      %1504 = vmatprep.mubr.f32.mxu0 0.0
      %1505 = vmatmul.mubr.f32.gmra.mrb[0].mxu0 %v1039
      %v1506 = vpop.f32.mrb[0].mxu0
      %v1507 = vadd.f32 0.0, %v1506
      %v1508 = vpop.f32.mrb[0].mxu0
      %v1509 = vadd.f32 0.0, %v1508
      %1510 = vmatprep.mubr.f32.mxu0 0.0
      %1511 = vmatmul.mubr.f32.gmra.mrb[0].mxu0 %v1042
      %v1512 = vpop.f32.mrb[0].mxu0
      %v1513 = vadd.f32 0.0, %v1512
      %v1514 = vpop.f32.mrb[0].mxu0
      %v1515 = vadd.f32 0.0, %v1514
      %1516 = vmatprep.mubr.f32.mxu0 0.0
      %1517 = vmatmul.mubr.f32.gmra.mrb[0].mxu0 %v1045
      %v1518 = vpop.f32.mrb[0].mxu0
      %v1519 = vadd.f32 0.0, %v1518
      %v1520 = vpop.f32.mrb[0].mxu0
      %v1521 = vadd.f32 0.0, %v1520
      %1522 = vmatprep.mubr.f32.mxu0 0.0
      %1523 = vmatmul.mubr.f32.gmra.mrb[0].mxu0 %v1048
      %v1524 = vpop.f32.mrb[0].mxu0
      %v1525 = vadd.f32 0.0, %v1524
      %v1526 = vpop.f32.mrb[0].mxu0
      %v1527 = vadd.f32 0.0, %v1526
      %1528 = vmatprep.mubr.f32.mxu0 0.0
      %1529 = vmatmul.mubr.f32.gmra.mrb[0].mxu0 %v1051
      %v1530 = vpop.f32.mrb[0].mxu0
      %v1531 = vadd.f32 0.0, %v1530
      %v1532 = vpop.f32.mrb[0].mxu0
      %v1533 = vadd.f32 0.0, %v1532
      %1534 = vmatprep.mubr.f32.mxu0 0.0
      %1535 = vmatmul.mubr.f32.gmra.mrb[0].mxu0 %v1054
      %v1536 = vpop.f32.mrb[0].mxu0
      %v1537 = vadd.f32 0.0, %v1536
      %v1538 = vpop.f32.mrb[0].mxu0
      %v1539 = vadd.f32 0.0, %v1538
      %1540 = vmatprep.mubr.f32.mxu0 0.0
      %1541 = vmatmul.mubr.f32.gmra.mrb[0].mxu0 %v1057
      %v1542 = vpop.f32.mrb[0].mxu0
      %v1543 = vadd.f32 0.0, %v1542
      %v1544 = vpop.f32.mrb[0].mxu0
      %v1545 = vadd.f32 0.0, %v1544
      %1546 = vmatprep.mubr.f32.mxu0 0.0
      %1547 = vmatmul.mubr.f32.gmra.mrb[0].mxu0 %v1060
      %v1548 = vpop.f32.mrb[0].mxu0
      %v1549 = vadd.f32 0.0, %v1548
      %v1550 = vpop.f32.mrb[0].mxu0
      %v1551 = vadd.f32 0.0, %v1550
      %1552 = vmatprep.mubr.f32.mxu0 0.0
      %1553 = vmatmul.mubr.f32.gmra.mrb[0].mxu0 %v1063
      %v1554 = vpop.f32.mrb[0].mxu0
      %v1555 = vadd.f32 0.0, %v1554
      %v1556 = vpop.f32.mrb[0].mxu0
      %v1557 = vadd.f32 0.0, %v1556
      %1558 = vmatprep.mubr.f32.mxu0 0.0
      %1559 = vmatmul.mubr.f32.gmra.mrb[0].mxu0 %v1066
      %v1560 = vpop.f32.mrb[0].mxu0
      %v1561 = vadd.f32 0.0, %v1560
      %v1562 = vpop.f32.mrb[0].mxu0
      %v1563 = vadd.f32 0.0, %v1562
      %1564 = vmatprep.mubr.f32.mxu0 0.0
      %1565 = vmatmul.mubr.f32.gmra.mrb[0].mxu0 %v1069
      %v1566 = vpop.f32.mrb[0].mxu0
      %v1567 = vadd.f32 0.0, %v1566
      %v1568 = vpop.f32.mrb[0].mxu0
      %v1569 = vadd.f32 0.0, %v1568
      %1570 = vmatprep.mubr.f32.mxu0 0.0
      %1571 = vmatmul.mubr.f32.gmra.mrb[0].mxu0 %v1072
      %v1572 = vpop.f32.mrb[0].mxu0
      %v1573 = vadd.f32 0.0, %v1572
      %v1574 = vpop.f32.mrb[0].mxu0
      %v1575 = vadd.f32 0.0, %v1574
      %1576 = vmatprep.mubr.f32.mxu0 0.0
      %1577 = vmatmul.mubr.f32.gmra.mrb[0].mxu0 %v1075
      %v1578 = vpop.f32.mrb[0].mxu0
      %v1579 = vadd.f32 0.0, %v1578
      %v1580 = vpop.f32.mrb[0].mxu0
      %v1581 = vadd.f32 0.0, %v1580
      %1582 = vmatprep.mubr.f32.mxu0 0.0
      %1583 = vmatmul.mubr.f32.gmra.mrb[0].mxu0 %v1078
      %v1584 = vpop.f32.mrb[0].mxu0
      %v1585 = vadd.f32 0.0, %v1584
      %v1586 = vpop.f32.mrb[0].mxu0
      %v1587 = vadd.f32 0.0, %v1586
      %1588 = vmatprep.mubr.f32.mxu0 0.0
      %1589 = vmatmul.mubr.f32.gmra.mrb[0].mxu0 %v1081
      %v1590 = vpop.f32.mrb[0].mxu0
      %v1591 = vadd.f32 0.0, %v1590
      %v1592 = vpop.f32.mrb[0].mxu0
      %v1593 = vadd.f32 0.0, %v1592
      %1594 = vmatprep.mubr.f32.mxu0 0.0
      %1595 = vmatmul.mubr.f32.gmra.mrb[0].mxu0 %v1084
      %v1596 = vpop.f32.mrb[0].mxu0
      %v1597 = vadd.f32 0.0, %v1596
      %v1598 = vpop.f32.mrb[0].mxu0
      %v1599 = vadd.f32 0.0, %v1598
      %1600 = vmatprep.mubr.f32.mxu0 0.0
      %1601 = vmatmul.mubr.f32.gmra.mrb[0].mxu0 %v1087
      %v1602 = vpop.f32.mrb[0].mxu0
      %v1603 = vadd.f32 0.0, %v1602
      %v1604 = vpop.f32.mrb[0].mxu0
      %v1605 = vadd.f32 0.0, %v1604
      %1606 = vmatprep.mubr.f32.mxu0 0.0
      %1607 = vmatmul.mubr.f32.gmra.mrb[0].mxu0 %v1090
      %v1608 = vpop.f32.mrb[0].mxu0
      %v1609 = vadd.f32 0.0, %v1608
      %v1610 = vpop.f32.mrb[0].mxu0
      %v1611 = vadd.f32 0.0, %v1610
      %1612 = vmatprep.mubr.f32.mxu0 0.0
      %1613 = vmatmul.mubr.f32.gmra.mrb[0].mxu0 %v1093
      %v1614 = vpop.f32.mrb[0].mxu0
      %v1615 = vadd.f32 0.0, %v1614
      %v1616 = vpop.f32.mrb[0].mxu0
      %v1617 = vadd.f32 0.0, %v1616
      %1618 = vmatprep.mubr.f32.mxu0 0.0
      %1619 = vmatmul.mubr.f32.gmra.mrb[0].mxu0 %v1096
      %v1620 = vpop.f32.mrb[0].mxu0
      %v1621 = vadd.f32 0.0, %v1620
      %v1622 = vpop.f32.mrb[0].mxu0
      %v1623 = vadd.f32 0.0, %v1622
      %1624 = vmatprep.mubr.f32.mxu0 0.0
      %1625 = vmatmul.mubr.f32.gmra.mrb[0].mxu0 %v1099
      %v1626 = vpop.f32.mrb[0].mxu0
      %v1627 = vadd.f32 0.0, %v1626
      %v1628 = vpop.f32.mrb[0].mxu0
      %v1629 = vadd.f32 0.0, %v1628
      %1630 = vmatprep.mubr.f32.mxu0 0.0
      %1631 = vmatmul.mubr.f32.gmra.mrb[0].mxu0 %v1102
      %v1632 = vpop.f32.mrb[0].mxu0
      %v1633 = vadd.f32 0.0, %v1632
      %v1634 = vpop.f32.mrb[0].mxu0
      %v1635 = vadd.f32 0.0, %v1634
      %1636 = vmatprep.mubr.f32.mxu0 0.0
      %1637 = vmatmul.mubr.f32.gmra.mrb[0].mxu0 %v1105
      %v1638 = vpop.f32.mrb[0].mxu0
      %v1639 = vadd.f32 0.0, %v1638
      %v1640 = vpop.f32.mrb[0].mxu0
      %v1641 = vadd.f32 0.0, %v1640
      %1642 = vmatprep.mubr.f32.mxu0 0.0
      %1643 = vmatmul.mubr.f32.gmra.mrb[0].mxu0 %v1108
      %v1644 = vpop.f32.mrb[0].mxu0
      %v1645 = vadd.f32 0.0, %v1644
      %v1646 = vpop.f32.mrb[0].mxu0
      %v1647 = vadd.f32 0.0, %v1646
      %1648 = vmatprep.mubr.f32.mxu0 0.0
      %1649 = vmatmul.mubr.f32.gmra.mrb[0].mxu0 %v1111
      %v1650 = vpop.f32.mrb[0].mxu0
      %v1651 = vadd.f32 0.0, %v1650
      %v1652 = vpop.f32.mrb[0].mxu0
      %v1653 = vadd.f32 0.0, %v1652
      %1654 = vmatprep.mubr.f32.mxu0 0.0
      %1655 = vmatmul.mubr.f32.gmra.mrb[0].mxu0 %v1114
      %v1656 = vpop.f32.mrb[0].mxu0
      %v1657 = vadd.f32 0.0, %v1656
      %v1658 = vpop.f32.mrb[0].mxu0
      %v1659 = vadd.f32 0.0, %v1658
      %1660 = vmatprep.mubr.f32.mxu0 0.0
      %1661 = vmatmul.mubr.f32.gmra.mrb[0].mxu0 %v1117
      %v1662 = vpop.f32.mrb[0].mxu0
      %v1663 = vadd.f32 0.0, %v1662
      %v1664 = vpop.f32.mrb[0].mxu0
      %v1665 = vadd.f32 0.0, %v1664
      %1666 = vmatprep.mubr.f32.mxu0 0.0
      %1667 = vmatmul.mubr.f32.gmra.mrb[0].mxu0 %v1120
      %v1668 = vpop.f32.mrb[0].mxu0
      %v1669 = vadd.f32 0.0, %v1668
      %v1670 = vpop.f32.mrb[0].mxu0
      %v1671 = vadd.f32 0.0, %v1670
      %1672 = vmatprep.mubr.f32.mxu0 0.0
      %1673 = vmatmul.mubr.f32.gmra.mrb[0].mxu0 %v1123
      %v1674 = vpop.f32.mrb[0].mxu0
      %v1675 = vadd.f32 0.0, %v1674
      %v1676 = vpop.f32.mrb[0].mxu0
      %v1677 = vadd.f32 0.0, %v1676
      %1678 = vmatprep.mubr.f32.mxu0 0.0
      %1679 = vmatmul.mubr.f32.gmra.mrb[0].mxu0 %v1126
      %v1680 = vpop.f32.mrb[0].mxu0
      %v1681 = vadd.f32 0.0, %v1680
      %v1682 = vpop.f32.mrb[0].mxu0
      %v1683 = vadd.f32 0.0, %v1682
      %1684 = vmatprep.mubr.f32.mxu0 0.0
      %1685 = vmatmul.mubr.f32.gmra.mrb[0].mxu0 %v1129
      %v1686 = vpop.f32.mrb[0].mxu0
      %v1687 = vadd.f32 0.0, %v1686
      %v1688 = vpop.f32.mrb[0].mxu0
      %v1689 = vadd.f32 0.0, %v1688
      %1690 = vmatprep.mubr.f32.mxu0 0.0
      %1691 = vmatmul.mubr.f32.gmra.mrb[0].mxu0 %v1132
      %v1692 = vpop.f32.mrb[0].mxu0
      %v1693 = vadd.f32 0.0, %v1692
      %v1694 = vpop.f32.mrb[0].mxu0
      %v1695 = vadd.f32 0.0, %v1694
      %1696 = vmatprep.mubr.f32.mxu0 0.0
      %1697 = vmatmul.mubr.f32.gmra.mrb[0].mxu0 %v1135
      %v1698 = vpop.f32.mrb[0].mxu0
      %v1699 = vadd.f32 0.0, %v1698
      %v1700 = vpop.f32.mrb[0].mxu0
      %v1701 = vadd.f32 0.0, %v1700
      %1702 = vmatprep.mubr.f32.mxu0 0.0
      %1703 = vmatmul.mubr.f32.gmra.mrb[0].mxu0 %v1138
      %v1704 = vpop.f32.mrb[0].mxu0
      %v1705 = vadd.f32 0.0, %v1704
      %v1706 = vpop.f32.mrb[0].mxu0
      %v1707 = vadd.f32 0.0, %v1706
      %1708 = vmatprep.mubr.f32.mxu0 0.0
      %1709 = vmatmul.mubr.f32.gmra.mrb[0].mxu0 %v1141
      %v1710 = vpop.f32.mrb[0].mxu0
      %v1711 = vadd.f32 0.0, %v1710
      %v1712 = vpop.f32.mrb[0].mxu0
      %v1713 = vadd.f32 0.0, %v1712
      %1714 = vmatprep.mubr.f32.mxu0 0.0
      %1715 = vmatmul.mubr.f32.gmra.mrb[0].mxu0 %v1144
      %v1716 = vpop.f32.mrb[0].mxu0
      %v1717 = vadd.f32 0.0, %v1716
      %v1718 = vpop.f32.mrb[0].mxu0
      %v1719 = vadd.f32 0.0, %v1718
      %1720 = vmatprep.mubr.f32.mxu0 0.0
      %1721 = vmatmul.mubr.f32.gmra.mrb[0].mxu0 %v1147
      %v1722 = vpop.f32.mrb[0].mxu0
      %v1723 = vadd.f32 0.0, %v1722
      %v1724 = vpop.f32.mrb[0].mxu0
      %v1725 = vadd.f32 0.0, %v1724
      %1726 = vmatprep.mubr.f32.mxu0 0.0
      %1727 = vmatmul.mubr.f32.gmra.mrb[0].mxu0 %v1150
      %v1728 = vpop.f32.mrb[0].mxu0
      %v1729 = vadd.f32 0.0, %v1728
      %v1730 = vpop.f32.mrb[0].mxu0
      %v1731 = vadd.f32 0.0, %v1730
      %1732 = vmatprep.mubr.f32.mxu0 0.0
      %1733 = vmatmul.mubr.f32.gmra.mrb[0].mxu0 %v1153
      %v1734 = vpop.f32.mrb[0].mxu0
      %v1735 = vadd.f32 0.0, %v1734
      %v1736 = vpop.f32.mrb[0].mxu0
      %v1737 = vadd.f32 0.0, %v1736
      %1738 = vmatprep.mubr.f32.mxu0 0.0
      %1739 = vmatmul.mubr.f32.gmra.mrb[0].mxu0 %v1156
      %v1740 = vpop.f32.mrb[0].mxu0
      %v1741 = vadd.f32 0.0, %v1740
      %v1742 = vpop.f32.mrb[0].mxu0
      %v1743 = vadd.f32 0.0, %v1742
      %1744 = vmatprep.mubr.f32.mxu0 0.0
      %1745 = vmatmul.mubr.f32.gmra.mrb[0].mxu0 %v1159
      %v1746 = vpop.f32.mrb[0].mxu0
      %v1747 = vadd.f32 0.0, %v1746
      %v1748 = vpop.f32.mrb[0].mxu0
      %v1749 = vadd.f32 0.0, %v1748
      %1750 = vmatprep.mubr.f32.mxu0 0.0
      %1751 = vmatmul.mubr.f32.gmra.mrb[0].mxu0 %v1162
      %v1752 = vpop.f32.mrb[0].mxu0
      %v1753 = vadd.f32 0.0, %v1752
      %v1754 = vpop.f32.mrb[0].mxu0
      %v1755 = vadd.f32 0.0, %v1754
      %1756 = vmatprep.mubr.f32.mxu0 0.0
      %1757 = vmatmul.mubr.f32.gmra.mrb[0].mxu0 %v1165
      %v1758 = vpop.f32.mrb[0].mxu0
      %v1759 = vadd.f32 0.0, %v1758
      %v1760 = vpop.f32.mrb[0].mxu0
      %v1761 = vadd.f32 0.0, %v1760
      %1762 = vmatprep.mubr.f32.mxu0 0.0
      %1763 = vmatmul.mubr.f32.gmra.mrb[0].mxu0 %v1168
      %v1764 = vpop.f32.mrb[0].mxu0
      %v1765 = vadd.f32 0.0, %v1764
      %v1766 = vpop.f32.mrb[0].mxu0
      %v1767 = vadd.f32 0.0, %v1766
      %1768 = vmatprep.mubr.f32.mxu0 0.0
      %1769 = vmatmul.mubr.f32.gmra.mrb[0].mxu0 %v1171
      %v1770 = vpop.f32.mrb[0].mxu0
      %v1771 = vadd.f32 0.0, %v1770
      %v1772 = vpop.f32.mrb[0].mxu0
      %v1773 = vadd.f32 0.0, %v1772
      %1774 = vmatprep.mubr.f32.mxu0 0.0
      %1775 = vmatmul.mubr.f32.gmra.mrb[0].mxu0 %v1174
      %v1776 = vpop.f32.mrb[0].mxu0
      %v1777 = vadd.f32 0.0, %v1776
      %v1778 = vpop.f32.mrb[0].mxu0
      %v1779 = vadd.f32 0.0, %v1778
      %1780 = vmatprep.mubr.f32.mxu0 0.0
      %1781 = vmatmul.mubr.f32.gmra.mrb[0].mxu0 %v1177
      %v1782 = vpop.f32.mrb[0].mxu0
      %v1783 = vadd.f32 0.0, %v1782
      %v1784 = vpop.f32.mrb[0].mxu0
      %v1785 = vadd.f32 0.0, %v1784
      %1786 = vmatprep.mubr.f32.mxu0 0.0
      %1787 = vmatmul.mubr.f32.gmra.mrb[0].mxu0 %v1180
      %v1788 = vpop.f32.mrb[0].mxu0
      %v1789 = vadd.f32 0.0, %v1788
      %v1790 = vpop.f32.mrb[0].mxu0
      %v1791 = vadd.f32 0.0, %v1790
      %1792 = vmatprep.mubr.f32.mxu0 0.0
      %1793 = vmatmul.mubr.f32.gmra.mrb[0].mxu0 %v1183
      %v1794 = vpop.f32.mrb[0].mxu0
      %v1795 = vadd.f32 0.0, %v1794
      %v1796 = vpop.f32.mrb[0].mxu0
      %v1797 = vadd.f32 0.0, %v1796
      %1798 = vmatprep.mubr.f32.mxu0 0.0
      %1799 = vmatmul.mubr.f32.gmra.mrb[0].mxu0 %v1186
      %v1800 = vpop.f32.mrb[0].mxu0
      %v1801 = vadd.f32 0.0, %v1800
      %v1802 = vpop.f32.mrb[0].mxu0
      %v1803 = vadd.f32 0.0, %v1802
      %1804 = vmatprep.mubr.f32.mxu0 0.0
      %1805 = vmatmul.mubr.f32.gmra.mrb[0].mxu0 %v1189
      %v1806 = vpop.f32.mrb[0].mxu0
      %v1807 = vadd.f32 0.0, %v1806
      %v1808 = vpop.f32.mrb[0].mxu0
      %v1809 = vadd.f32 0.0, %v1808
      %1810 = vmatprep.mubr.f32.mxu0 0.0
      %1811 = vmatmul.mubr.f32.gmra.mrb[0].mxu0 %v1192
      %v1812 = vpop.f32.mrb[0].mxu0
      %v1813 = vadd.f32 0.0, %v1812
      %v1814 = vpop.f32.mrb[0].mxu0
      %v1815 = vadd.f32 0.0, %v1814
      %1816 = vmatprep.mubr.f32.mxu0 0.0
      %1817 = vmatmul.mubr.f32.gmra.mrb[0].mxu0 %v1195
      %v1818 = vpop.f32.mrb[0].mxu0
      %v1819 = vadd.f32 0.0, %v1818
      %v1820 = vpop.f32.mrb[0].mxu0
      %v1821 = vadd.f32 0.0, %v1820
      %1822 = vmatprep.mubr.f32.mxu0 0.0
      %1823 = vmatmul.mubr.f32.gmra.mrb[0].mxu0 %v1198
      %v1824 = vpop.f32.mrb[0].mxu0
      %v1825 = vadd.f32 0.0, %v1824
      %v1826 = vpop.f32.mrb[0].mxu0
      %v1827 = vadd.f32 0.0, %v1826
      %1828 = vmatprep.mubr.f32.mxu0 0.0
      %1829 = vmatmul.mubr.f32.gmra.mrb[0].mxu0 %v1201
      %v1830 = vpop.f32.mrb[0].mxu0
      %v1831 = vadd.f32 0.0, %v1830
      %v1832 = vpop.f32.mrb[0].mxu0
      %v1833 = vadd.f32 0.0, %v1832
      %1834 = vmatprep.mubr.f32.mxu0 0.0
      %1835 = vmatmul.mubr.f32.gmra.mrb[0].mxu0 %v1204
      %v1836 = vpop.f32.mrb[0].mxu0
      %v1837 = vadd.f32 0.0, %v1836
      %v1838 = vpop.f32.mrb[0].mxu0
      %v1839 = vadd.f32 0.0, %v1838
      %1840 = vmatprep.mubr.f32.mxu0 0.0
      %1841 = vmatmul.mubr.f32.gmra.mrb[0].mxu0 %v1207
      %v1842 = vpop.f32.mrb[0].mxu0
      %v1843 = vadd.f32 0.0, %v1842
      %v1844 = vpop.f32.mrb[0].mxu0
      %v1845 = vadd.f32 0.0, %v1844
      %1846 = vmatprep.mubr.f32.mxu0 0.0
      %1847 = vmatmul.mubr.f32.gmra.mrb[0].mxu0 %v1210
      %v1848 = vpop.f32.mrb[0].mxu0
      %v1849 = vadd.f32 0.0, %v1848
      %v1850 = vpop.f32.mrb[0].mxu0
      %v1851 = vadd.f32 0.0, %v1850
      %1852 = vmatprep.mubr.f32.mxu0 0.0
      %1853 = vmatmul.mubr.f32.gmra.mrb[0].mxu0 %v1213
      %v1854 = vpop.f32.mrb[0].mxu0
      %v1855 = vadd.f32 0.0, %v1854
      %v1856 = vpop.f32.mrb[0].mxu0
      %v1857 = vadd.f32 0.0, %v1856
      %1858 = vmatprep.mubr.f32.mxu0 0.0
      %1859 = vmatmul.mubr.f32.gmra.mrb[0].mxu0 %v1216
      %v1860 = vpop.f32.mrb[0].mxu0
      %v1861 = vadd.f32 0.0, %v1860
      %v1862 = vpop.f32.mrb[0].mxu0
      %v1863 = vadd.f32 0.0, %v1862
      %1864 = vmatprep.mubr.f32.mxu0 0.0
      %1865 = vmatmul.mubr.f32.gmra.mrb[0].mxu0 %v1219
      %v1866 = vpop.f32.mrb[0].mxu0
      %v1867 = vadd.f32 0.0, %v1866
      %v1868 = vpop.f32.mrb[0].mxu0
      %v1869 = vadd.f32 0.0, %v1868
      %1870 = vmatprep.mubr.f32.mxu0 0.0
      %1871 = vmatmul.mubr.f32.gmra.mrb[0].mxu0 %v1222
      %v1872 = vpop.f32.mrb[0].mxu0
      %v1873 = vadd.f32 0.0, %v1872
      %v1874 = vpop.f32.mrb[0].mxu0
      %v1875 = vadd.f32 0.0, %v1874
      %1876 = vmatprep.mubr.f32.mxu0 0.0
      %1877 = vmatmul.mubr.f32.gmra.mrb[0].mxu0 %v1225
      %v1878 = vpop.f32.mrb[0].mxu0
      %v1879 = vadd.f32 0.0, %v1878
      %v1880 = vpop.f32.mrb[0].mxu0
      %v1881 = vadd.f32 0.0, %v1880
      %1882 = vmatprep.mubr.f32.mxu0 0.0
      %1883 = vmatmul.mubr.f32.gmra.mrb[0].mxu0 %v1228
      %v1884 = vpop.f32.mrb[0].mxu0
      %v1885 = vadd.f32 0.0, %v1884
      %v1886 = vpop.f32.mrb[0].mxu0
      %v1887 = vadd.f32 0.0, %v1886
      %1888 = vmatprep.mubr.f32.mxu0 0.0
      %1889 = vmatmul.mubr.f32.gmra.mrb[0].mxu0 %v1231
      %v1890 = vpop.f32.mrb[0].mxu0
      %v1891 = vadd.f32 0.0, %v1890
      %v1892 = vpop.f32.mrb[0].mxu0
      %v1893 = vadd.f32 0.0, %v1892
      %1894 = vmatprep.mubr.f32.mxu0 0.0
      %1895 = vmatmul.mubr.f32.gmra.mrb[0].mxu0 %v1234
      %v1896 = vpop.f32.mrb[0].mxu0
      %v1897 = vadd.f32 0.0, %v1896
      %v1898 = vpop.f32.mrb[0].mxu0
      %v1899 = vadd.f32 0.0, %v1898
      %1900 = vmatprep.mubr.f32.mxu0 0.0
      %1901 = vmatmul.mubr.f32.gmra.mrb[0].mxu0 %v1237
      %v1902 = vpop.f32.mrb[0].mxu0
      %v1903 = vadd.f32 0.0, %v1902
      %v1904 = vpop.f32.mrb[0].mxu0
      %v1905 = vadd.f32 0.0, %v1904
      %1906 = vmatprep.mubr.f32.mxu0 0.0
      %1907 = vmatmul.mubr.f32.gmra.mrb[0].mxu0 %v1240
      %v1908 = vpop.f32.mrb[0].mxu0
      %v1909 = vadd.f32 0.0, %v1908
      %v1910 = vpop.f32.mrb[0].mxu0
      %v1911 = vadd.f32 0.0, %v1910
      %1912 = vmatprep.mubr.f32.mxu0 0.0
      %1913 = vmatmul.mubr.f32.gmra.mrb[0].mxu0 %v1243
      %v1914 = vpop.f32.mrb[0].mxu0
      %v1915 = vadd.f32 0.0, %v1914
      %v1916 = vpop.f32.mrb[0].mxu0
      %v1917 = vadd.f32 0.0, %v1916
      %1918 = vmatprep.mubr.f32.mxu0 0.0
      %1919 = vmatmul.mubr.f32.gmra.mrb[0].mxu0 %v1246
      %v1920 = vpop.f32.mrb[0].mxu0
      %v1921 = vadd.f32 0.0, %v1920
      %v1922 = vpop.f32.mrb[0].mxu0
      %v1923 = vadd.f32 0.0, %v1922
      %1924 = vmatprep.mubr.f32.mxu0 0.0
      %1925 = vmatmul.mubr.f32.gmra.mrb[0].mxu0 %v1249
      %v1926 = vpop.f32.mrb[0].mxu0
      %v1927 = vadd.f32 0.0, %v1926
      %v1928 = vpop.f32.mrb[0].mxu0
      %v1929 = vadd.f32 0.0, %v1928
      %1930 = vmatprep.mubr.f32.mxu0 0.0
      %1931 = vmatmul.mubr.f32.gmra.mrb[0].mxu0 %v1252
      %v1932 = vpop.f32.mrb[0].mxu0
      %v1933 = vadd.f32 0.0, %v1932
      %v1934 = vpop.f32.mrb[0].mxu0
      %v1935 = vadd.f32 0.0, %v1934
      %1936 = vmatprep.mubr.f32.mxu0 0.0
      %1937 = vmatmul.mubr.f32.gmra.mrb[0].mxu0 %v1255
      %v1938 = vpop.f32.mrb[0].mxu0
      %v1939 = vadd.f32 0.0, %v1938
      %v1940 = vpop.f32.mrb[0].mxu0
      %v1941 = vadd.f32 0.0, %v1940
      %1942 = vmatprep.mubr.f32.mxu0 0.0
      %1943 = vmatmul.mubr.f32.gmra.mrb[0].mxu0 %v1258
      %v1944 = vpop.f32.mrb[0].mxu0
      %v1945 = vadd.f32 0.0, %v1944
      %v1946 = vpop.f32.mrb[0].mxu0
      %v1947 = vadd.f32 0.0, %v1946
      %1948 = vmatprep.mubr.f32.mxu0 0.0
      %1949 = vmatmul.mubr.f32.gmra.mrb[0].mxu0 %v1261
      %v1950 = vpop.f32.mrb[0].mxu0
      %v1951 = vadd.f32 0.0, %v1950
      %v1952 = vpop.f32.mrb[0].mxu0
      %v1953 = vadd.f32 0.0, %v1952
      %1954 = vmatprep.mubr.f32.mxu0 0.0
      %1955 = vmatmul.mubr.f32.gmra.mrb[0].mxu0 %v1264
      %v1956 = vpop.f32.mrb[0].mxu0
      %v1957 = vadd.f32 0.0, %v1956
      %v1958 = vpop.f32.mrb[0].mxu0
      %v1959 = vadd.f32 0.0, %v1958
      %1960 = vmatprep.mubr.f32.mxu0 0.0
      %1961 = vmatmul.mubr.f32.gmra.mrb[0].mxu0 %v1267
      %v1962 = vpop.f32.mrb[0].mxu0
      %v1963 = vadd.f32 0.0, %v1962
      %v1964 = vpop.f32.mrb[0].mxu0
      %v1965 = vadd.f32 0.0, %v1964
      %1966 = vmatprep.mubr.f32.mxu0 0.0
      %1967 = vmatmul.mubr.f32.gmra.mrb[0].mxu0 %v1270
      %v1968 = vpop.f32.mrb[0].mxu0
      %v1969 = vadd.f32 0.0, %v1968
      %v1970 = vpop.f32.mrb[0].mxu0
      %v1971 = vadd.f32 0.0, %v1970
      %1972 = vmatprep.mubr.f32.mxu0 0.0
      %1973 = vmatmul.mubr.f32.gmra.mrb[0].mxu0 %v1273
      %v1974 = vpop.f32.mrb[0].mxu0
      %v1975 = vadd.f32 0.0, %v1974
      %v1976 = vpop.f32.mrb[0].mxu0
      %v1977 = vadd.f32 0.0, %v1976
      %1978 = vmatprep.mubr.f32.mxu0 0.0
      %1979 = vmatmul.mubr.f32.gmra.mrb[0].mxu0 %v1276
      %v1980 = vpop.f32.mrb[0].mxu0
      %v1981 = vadd.f32 0.0, %v1980
      %v1982 = vpop.f32.mrb[0].mxu0
      %v1983 = vadd.f32 0.0, %v1982
      %1984 = vmatprep.mubr.f32.mxu0 0.0
      %1985 = vmatmul.mubr.f32.gmra.mrb[0].mxu0 %v1279
      %v1986 = vpop.f32.mrb[0].mxu0
      %v1987 = vadd.f32 0.0, %v1986
      %v1988 = vpop.f32.mrb[0].mxu0
      %v1989 = vadd.f32 0.0, %v1988
      %1990 = vmatprep.mubr.f32.mxu0 0.0
      %1991 = vmatmul.mubr.f32.gmra.mrb[0].mxu0 %v1282
      %v1992 = vpop.f32.mrb[0].mxu0
      %v1993 = vadd.f32 0.0, %v1992
      %v1994 = vpop.f32.mrb[0].mxu0
      %v1995 = vadd.f32 0.0, %v1994
      %1996 = vmatprep.mubr.f32.mxu0 0.0
      %1997 = vmatmul.mubr.f32.gmra.mrb[0].mxu0 %v1285
      %v1998 = vpop.f32.mrb[0].mxu0
      %v1999 = vadd.f32 0.0, %v1998
      %v2000 = vpop.f32.mrb[0].mxu0
      %v2001 = vadd.f32 0.0, %v2000
      %2002 = vmatprep.mubr.f32.mxu0 0.0
      %2003 = vmatmul.mubr.f32.gmra.mrb[0].mxu0 %v1288
      %v2004 = vpop.f32.mrb[0].mxu0
      %v2005 = vadd.f32 0.0, %v2004
      %v2006 = vpop.f32.mrb[0].mxu0
      %v2007 = vadd.f32 0.0, %v2006
      %2008 = vmatprep.mubr.f32.mxu0 0.0
      %2009 = vmatmul.mubr.f32.gmra.mrb[0].mxu0 %v1291
      %v2010 = vpop.f32.mrb[0].mxu0
      %v2011 = vadd.f32 0.0, %v2010
      %v2012 = vpop.f32.mrb[0].mxu0
      %v2013 = vadd.f32 0.0, %v2012
      %2014 = vmatprep.mubr.f32.mxu0 0.0
      %2015 = vmatmul.mubr.f32.gmra.mrb[0].mxu0 %v1294
      %v2016 = vpop.f32.mrb[0].mxu0
      %v2017 = vadd.f32 0.0, %v2016
      %v2018 = vpop.f32.mrb[0].mxu0
      %v2019 = vadd.f32 0.0, %v2018
      %2020 = vmatprep.mubr.f32.mxu0 0.0
      %2021 = vmatmul.mubr.f32.gmra.mrb[0].mxu0 %v1297
      %v2022 = vpop.f32.mrb[0].mxu0
      %v2023 = vadd.f32 0.0, %v2022
      %v2024 = vpop.f32.mrb[0].mxu0
      %v2025 = vadd.f32 0.0, %v2024
      %2026 = vmatprep.mubr.f32.mxu0 0.0
      %2027 = vmatmul.mubr.f32.gmra.mrb[0].mxu0 %v1300
      %v2028 = vpop.f32.mrb[0].mxu0
      %v2029 = vadd.f32 0.0, %v2028
      %v2030 = vpop.f32.mrb[0].mxu0
      %v2031 = vadd.f32 0.0, %v2030
      %2032 = vmatprep.mubr.f32.mxu0 0.0
      %2033 = vmatmul.mubr.f32.gmra.mrb[0].mxu0 %v1303
      %v2034 = vpop.f32.mrb[0].mxu0
      %v2035 = vadd.f32 0.0, %v2034
      %v2036 = vpop.f32.mrb[0].mxu0
      %v2037 = vadd.f32 0.0, %v2036
      %2038 = vmatprep.mubr.f32.mxu0 0.0
      %2039 = vmatmul.mubr.f32.gmra.mrb[0].mxu0 %v1306
      %v2040 = vpop.f32.mrb[0].mxu0
      %v2041 = vadd.f32 0.0, %v2040
      %v2042 = vpop.f32.mrb[0].mxu0
      %v2043 = vadd.f32 0.0, %v2042
      %2044 = vmatprep.mubr.f32.mxu0 0.0
      %2045 = vmatmul.mubr.f32.gmra.mrb[0].mxu0 %v1309
      %v2046 = vpop.f32.mrb[0].mxu0
      %v2047 = vadd.f32 0.0, %v2046
      %v2048 = vpop.f32.mrb[0].mxu0
      %v2049 = vadd.f32 0.0, %v2048
      %2050 = vmatprep.mubr.f32.mxu0 0.0
      %2051 = vmatmul.mubr.f32.gmra.mrb[0].mxu0 %v1312
      %v2052 = vpop.f32.mrb[0].mxu0
      %v2053 = vadd.f32 0.0, %v2052
      %v2054 = vpop.f32.mrb[0].mxu0
      %v2055 = vadd.f32 0.0, %v2054
      %2056 = vmatprep.mubr.f32.mxu0 0.0
      %2057 = vmatmul.mubr.f32.gmra.mrb[0].mxu0 %v1315
      %v2058 = vpop.f32.mrb[0].mxu0
      %v2059 = vadd.f32 0.0, %v2058
      %v2060 = vpop.f32.mrb[0].mxu0
      %v2061 = vadd.f32 0.0, %v2060
      %2062 = vmatprep.mubr.f32.mxu0 0.0
      %2063 = vmatmul.mubr.f32.gmra.mrb[0].mxu0 %v1318
      %v2064 = vpop.f32.mrb[0].mxu0
      %v2065 = vadd.f32 0.0, %v2064
      %v2066 = vpop.f32.mrb[0].mxu0
      %v2067 = vadd.f32 0.0, %v2066
      %2068 = vmatprep.mubr.f32.mxu0 0.0
      %2069 = vmatmul.mubr.f32.gmra.mrb[0].mxu0 %v1321
      %v2070 = vpop.f32.mrb[0].mxu0
      %v2071 = vadd.f32 0.0, %v2070
      %v2072 = vpop.f32.mrb[0].mxu0
      %v2073 = vadd.f32 0.0, %v2072
      %2074 = vmatprep.mubr.f32.mxu0 0.0
      %2075 = vmatmul.mubr.f32.gmra.mrb[0].mxu0 %v1324
      %v2076 = vpop.f32.mrb[0].mxu0
      %v2077 = vadd.f32 0.0, %v2076
      %v2078 = vpop.f32.mrb[0].mxu0
      %v2079 = vadd.f32 0.0, %v2078
      %2080 = vmatprep.mubr.f32.mxu0 0.0
      %2081 = vmatmul.mubr.f32.gmra.mrb[0].mxu0 %v1327
      %v2082 = vpop.f32.mrb[0].mxu0
      %v2083 = vadd.f32 0.0, %v2082
      %v2084 = vpop.f32.mrb[0].mxu0
      %v2085 = vadd.f32 0.0, %v2084
      %2086 = vmatprep.mubr.f32.mxu0 0.0
      %2087 = vmatmul.mubr.f32.gmra.mrb[0].mxu0 %v1330
      %v2088 = vpop.f32.mrb[0].mxu0
      %v2089 = vadd.f32 0.0, %v2088
      %v2090 = vpop.f32.mrb[0].mxu0
      %v2091 = vadd.f32 0.0, %v2090
      %2092 = vmatprep.mubr.f32.mxu0 0.0
      %2093 = vmatmul.mubr.f32.gmra.mrb[0].mxu0 %v1333
      %v2094 = vpop.f32.mrb[0].mxu0
      %v2095 = vadd.f32 0.0, %v2094
      %v2096 = vpop.f32.mrb[0].mxu0
      %v2097 = vadd.f32 0.0, %v2096
      %2098 = vmatprep.mubr.f32.mxu0 0.0
      %2099 = vmatmul.mubr.f32.gmra.mrb[0].mxu0 %v1336
      %v2100 = vpop.f32.mrb[0].mxu0
      %v2101 = vadd.f32 0.0, %v2100
      %v2102 = vpop.f32.mrb[0].mxu0
      %v2103 = vadd.f32 0.0, %v2102
      %2104 = vmatprep.mubr.f32.mxu0 0.0
      %2105 = vmatmul.mubr.f32.gmra.mrb[0].mxu0 %v1339
      %v2106 = vpop.f32.mrb[0].mxu0
      %v2107 = vadd.f32 0.0, %v2106
      %v2108 = vpop.f32.mrb[0].mxu0
      %v2109 = vadd.f32 0.0, %v2108
      %2110 = vmatprep.mubr.f32.mxu0 0.0
      %2111 = vmatmul.mubr.f32.gmra.mrb[0].mxu0 %v1342
      %v2112 = vpop.f32.mrb[0].mxu0
      %v2113 = vadd.f32 0.0, %v2112
      %v2114 = vpop.f32.mrb[0].mxu0
      %v2115 = vadd.f32 0.0, %v2114
      %2116 = vmatprep.mubr.f32.mxu0 0.0
      %2117 = vmatmul.mubr.f32.gmra.mrb[0].mxu0 %v1345
      %v2118 = vpop.f32.mrb[0].mxu0
      %v2119 = vadd.f32 0.0, %v2118
      %v2120 = vpop.f32.mrb[0].mxu0
      %v2121 = vadd.f32 0.0, %v2120
      %2122 = vmatprep.mubr.f32.mxu0 0.0
      %2123 = vmatmul.mubr.f32.gmra.mrb[0].mxu0 %v1348
      %v2124 = vpop.f32.mrb[0].mxu0
      %v2125 = vadd.f32 0.0, %v2124
      %v2126 = vpop.f32.mrb[0].mxu0
      %v2127 = vadd.f32 0.0, %v2126
      %2128 = vmatprep.mubr.f32.mxu0 0.0
      %2129 = vmatmul.mubr.f32.gmra.mrb[0].mxu0 %v1351
      %v2130 = vpop.f32.mrb[0].mxu0
      %v2131 = vadd.f32 0.0, %v2130
      %v2132 = vpop.f32.mrb[0].mxu0
      %v2133 = vadd.f32 0.0, %v2132
      %2134 = vmatprep.mubr.f32.mxu0 0.0
      %2135 = vmatmul.mubr.f32.gmra.mrb[0].mxu0 %v1354
      %v2136 = vpop.f32.mrb[0].mxu0
      %v2137 = vadd.f32 0.0, %v2136
      %v2138 = vpop.f32.mrb[0].mxu0
      %v2139 = vadd.f32 0.0, %v2138
      %2140 = vmatprep.mubr.f32.mxu0 0.0
      %2141 = vmatmul.mubr.f32.gmra.mrb[0].mxu0 %v1357
      %v2142 = vpop.f32.mrb[0].mxu0
      %v2143 = vadd.f32 0.0, %v2142
      %v2144 = vpop.f32.mrb[0].mxu0
      %v2145 = vadd.f32 0.0, %v2144
      %2146 = vmatprep.mubr.f32.mxu0 0.0
      %2147 = vmatmul.mubr.f32.gmra.mrb[0].mxu0 %v1360
      %v2148 = vpop.f32.mrb[0].mxu0
      %v2149 = vadd.f32 0.0, %v2148
      %v2150 = vpop.f32.mrb[0].mxu0
      %v2151 = vadd.f32 0.0, %v2150
      %2152 = vmatprep.mubr.f32.mxu0 0.0
      %2153 = vmatmul.mubr.f32.gmra.mrb[0].mxu0 %v1363
      %v2154 = vpop.f32.mrb[0].mxu0
      %v2155 = vadd.f32 0.0, %v2154
      %v2156 = vpop.f32.mrb[0].mxu0
      %v2157 = vadd.f32 0.0, %v2156
      %2158 = vmatprep.mubr.f32.mxu0 0.0
      %2159 = vmatmul.mubr.f32.gmra.mrb[0].mxu0 %v1366
      %v2160 = vpop.f32.mrb[0].mxu0
      %v2161 = vadd.f32 0.0, %v2160
      %v2162 = vpop.f32.mrb[0].mxu0
      %v2163 = vadd.f32 0.0, %v2162
      %2164 = vmatprep.mubr.f32.mxu0 0.0
      %2165 = vmatmul.mubr.f32.gmra.mrb[0].mxu0 %v1369
      %v2166 = vpop.f32.mrb[0].mxu0
      %v2167 = vadd.f32 0.0, %v2166
      %v2168 = vpop.f32.mrb[0].mxu0
      %v2169 = vadd.f32 0.0, %v2168
      %2170 = vmatprep.mubr.f32.mxu0 0.0
      %2171 = vmatmul.mubr.f32.gmra.mrb[0].mxu0 %v1372
      %v2172 = vpop.f32.mrb[0].mxu0
      %v2173 = vadd.f32 0.0, %v2172
      %v2174 = vpop.f32.mrb[0].mxu0
      %v2175 = vadd.f32 0.0, %v2174
      %2176 = vmatprep.mubr.f32.mxu0 0.0
      %2177 = vmatmul.mubr.f32.gmra.mrb[0].mxu0 %v1375
      %v2178 = vpop.f32.mrb[0].mxu0
      %v2179 = vadd.f32 0.0, %v2178
      %v2180 = vpop.f32.mrb[0].mxu0
      %v2181 = vadd.f32 0.0, %v2180
      %2182 = vmatprep.mubr.f32.mxu0 0.0
      %2183 = vmatmul.mubr.f32.gmra.mrb[0].mxu0 %v1378
      %v2184 = vpop.f32.mrb[0].mxu0
      %v2185 = vadd.f32 0.0, %v2184
      %v2186 = vpop.f32.mrb[0].mxu0
      %v2187 = vadd.f32 0.0, %v2186
      %2188 = vmatprep.mubr.f32.mxu0 0.0
      %2189 = vmatmul.mubr.f32.gmra.mrb[0].mxu0 %v1381
      %v2190 = vpop.f32.mrb[0].mxu0
      %v2191 = vadd.f32 0.0, %v2190
      %v2192 = vpop.f32.mrb[0].mxu0
      %v2193 = vadd.f32 0.0, %v2192
      %2194 = vmatprep.mubr.f32.mxu0 0.0
      %2195 = vmatmul.mubr.f32.gmra.mrb[0].mxu0 %v1384
      %v2196 = vpop.f32.mrb[0].mxu0
      %v2197 = vadd.f32 0.0, %v2196
      %v2198 = vpop.f32.mrb[0].mxu0
      %v2199 = vadd.f32 0.0, %v2198
      %2200 = vmatprep.mubr.f32.mxu0 0.0
      %2201 = vmatmul.mubr.f32.gmra.mrb[0].mxu0 %v1387
      %v2202 = vpop.f32.mrb[0].mxu0
      %v2203 = vadd.f32 0.0, %v2202
      %v2204 = vpop.f32.mrb[0].mxu0
      %v2205 = vadd.f32 0.0, %v2204
      %2206 = vmatprep.mubr.f32.mxu0 0.0
      %2207 = vmatmul.mubr.f32.gmra.mrb[0].mxu0 %v1390
      %v2208 = vpop.f32.mrb[0].mxu0
      %v2209 = vadd.f32 0.0, %v2208
      %v2210 = vpop.f32.mrb[0].mxu0
      %v2211 = vadd.f32 0.0, %v2210
      %2212 = vmatprep.mubr.f32.mxu0 0.0
      %2213 = vmatmul.mubr.f32.gmra.mrb[0].mxu0 %v1393
      %v2214 = vpop.f32.mrb[0].mxu0
      %v2215 = vadd.f32 0.0, %v2214
      %v2216 = vpop.f32.mrb[0].mxu0
      %v2217 = vadd.f32 0.0, %v2216
      %2218 = vmatprep.mubr.f32.mxu0 0.0
      %2219 = vmatmul.mubr.f32.gmra.mrb[0].mxu0 %v1396
      %v2220 = vpop.f32.mrb[0].mxu0
      %v2221 = vadd.f32 0.0, %v2220
      %v2222 = vpop.f32.mrb[0].mxu0
      %v2223 = vadd.f32 0.0, %v2222
      %2224 = vmatprep.mubr.f32.mxu0 0.0
      %2225 = vmatmul.mubr.f32.gmra.mrb[0].mxu0 %v1399
      %v2226 = vpop.f32.mrb[0].mxu0
      %v2227 = vadd.f32 0.0, %v2226
      %v2228 = vpop.f32.mrb[0].mxu0
      %v2229 = vadd.f32 0.0, %v2228
      %2230 = vmatprep.mubr.f32.mxu0 0.0
      %2231 = vmatmul.mubr.f32.gmra.mrb[0].mxu0 %v1402
      %v2232 = vpop.f32.mrb[0].mxu0
      %v2233 = vadd.f32 0.0, %v2232
      %v2234 = vpop.f32.mrb[0].mxu0
      %v2235 = vadd.f32 0.0, %v2234
      %2236 = vdwg.mxu0
      %v2238 = vsel %vm1019, %v731, 0
      %v2241 = vsel %vm1019, %v732, 0
      %v2244 = vsel %vm1019, %v733, 0
      %v2247 = vsel %vm1019, %v734, 0
      %v2250 = vsel %vm1019, %v735, 0
      %v2253 = vsel %vm1019, %v736, 0
      %v2256 = vsel %vm1019, %v737, 0
      %v2259 = vsel %vm1019, %v738, 0
      %v2262 = vsel %vm1019, %v739, 0
      %v2265 = vsel %vm1019, %v740, 0
      %v2268 = vsel %vm1019, %v741, 0
      %v2271 = vsel %vm1019, %v742, 0
      %v2274 = vsel %vm1019, %v743, 0
      %v2277 = vsel %vm1019, %v744, 0
      %v2280 = vsel %vm1019, %v745, 0
      %v2283 = vsel %vm1019, %v746, 0
      %v2286 = vsel %vm1019, %v747, 0
      %v2289 = vsel %vm1019, %v748, 0
      %v2292 = vsel %vm1019, %v749, 0
      %v2295 = vsel %vm1019, %v750, 0
      %v2298 = vsel %vm1019, %v751, 0
      %v2301 = vsel %vm1019, %v752, 0
      %v2304 = vsel %vm1019, %v753, 0
      %v2307 = vsel %vm1019, %v754, 0
      %v2310 = vsel %vm1019, %v755, 0
      %v2313 = vsel %vm1019, %v756, 0
      %v2316 = vsel %vm1019, %v757, 0
      %v2319 = vsel %vm1019, %v758, 0
      %v2322 = vsel %vm1019, %v759, 0
      %v2325 = vsel %vm1019, %v760, 0
      %v2328 = vsel %vm1019, %v761, 0
      %v2331 = vsel %vm1019, %v762, 0
      %v2334 = vsel %vm1019, %v763, 0
      %v2337 = vsel %vm1019, %v764, 0
      %v2340 = vsel %vm1019, %v765, 0
      %v2343 = vsel %vm1019, %v766, 0
      %v2346 = vsel %vm1019, %v767, 0
      %v2349 = vsel %vm1019, %v768, 0
      %v2352 = vsel %vm1019, %v769, 0
      %v2355 = vsel %vm1019, %v770, 0
      %v2358 = vsel %vm1019, %v771, 0
      %v2361 = vsel %vm1019, %v772, 0
      %v2364 = vsel %vm1019, %v773, 0
      %v2367 = vsel %vm1019, %v774, 0
      %v2370 = vsel %vm1019, %v775, 0
      %v2373 = vsel %vm1019, %v776, 0
      %v2376 = vsel %vm1019, %v777, 0
      %v2379 = vsel %vm1019, %v778, 0
      %v2382 = vsel %vm1019, %v779, 0
      %v2385 = vsel %vm1019, %v780, 0
      %v2388 = vsel %vm1019, %v781, 0
      %v2391 = vsel %vm1019, %v782, 0
      %v2394 = vsel %vm1019, %v783, 0
      %v2397 = vsel %vm1019, %v784, 0
      %v2400 = vsel %vm1019, %v785, 0
      %v2403 = vsel %vm1019, %v786, 0
      %v2406 = vsel %vm1019, %v787, 0
      %v2409 = vsel %vm1019, %v788, 0
      %v2412 = vsel %vm1019, %v789, 0
      %v2415 = vsel %vm1019, %v790, 0
      %v2418 = vsel %vm1019, %v791, 0
      %v2421 = vsel %vm1019, %v792, 0
      %v2424 = vsel %vm1019, %v793, 0
      %v2427 = vsel %vm1019, %v794, 0
      %v2430 = vsel %vm1019, %v795, 0
      %v2433 = vsel %vm1019, %v796, 0
      %v2436 = vsel %vm1019, %v797, 0
      %v2439 = vsel %vm1019, %v798, 0
      %v2442 = vsel %vm1019, %v799, 0
      %v2445 = vsel %vm1019, %v800, 0
      %v2448 = vsel %vm1019, %v801, 0
      %v2451 = vsel %vm1019, %v802, 0
      %v2454 = vsel %vm1019, %v803, 0
      %v2457 = vsel %vm1019, %v804, 0
      %v2460 = vsel %vm1019, %v805, 0
      %v2463 = vsel %vm1019, %v806, 0
      %v2466 = vsel %vm1019, %v807, 0
      %v2469 = vsel %vm1019, %v808, 0
      %v2472 = vsel %vm1019, %v809, 0
      %v2475 = vsel %vm1019, %v810, 0
      %v2478 = vsel %vm1019, %v811, 0
      %v2481 = vsel %vm1019, %v812, 0
      %v2484 = vsel %vm1019, %v813, 0
      %v2487 = vsel %vm1019, %v814, 0
      %v2490 = vsel %vm1019, %v815, 0
      %v2493 = vsel %vm1019, %v816, 0
      %v2496 = vsel %vm1019, %v817, 0
      %v2499 = vsel %vm1019, %v818, 0
      %v2502 = vsel %vm1019, %v819, 0
      %v2505 = vsel %vm1019, %v820, 0
      %v2508 = vsel %vm1019, %v821, 0
      %v2511 = vsel %vm1019, %v822, 0
      %v2514 = vsel %vm1019, %v823, 0
      %v2517 = vsel %vm1019, %v824, 0
      %v2520 = vsel %vm1019, %v825, 0
      %v2523 = vsel %vm1019, %v826, 0
      %v2526 = vsel %vm1019, %v827, 0
      %v2529 = vsel %vm1019, %v828, 0
      %v2532 = vsel %vm1019, %v829, 0
      %v2535 = vsel %vm1019, %v830, 0
      %v2538 = vsel %vm1019, %v831, 0
      %v2541 = vsel %vm1019, %v832, 0
      %v2544 = vsel %vm1019, %v833, 0
      %v2547 = vsel %vm1019, %v834, 0
      %v2550 = vsel %vm1019, %v835, 0
      %v2553 = vsel %vm1019, %v836, 0
      %v2556 = vsel %vm1019, %v837, 0
      %v2559 = vsel %vm1019, %v838, 0
      %v2562 = vsel %vm1019, %v839, 0
      %v2565 = vsel %vm1019, %v840, 0
      %v2568 = vsel %vm1019, %v841, 0
      %v2571 = vsel %vm1019, %v842, 0
      %v2574 = vsel %vm1019, %v843, 0
      %v2577 = vsel %vm1019, %v844, 0
      %v2580 = vsel %vm1019, %v845, 0
      %v2583 = vsel %vm1019, %v846, 0
      %v2586 = vsel %vm1019, %v847, 0
      %v2589 = vsel %vm1019, %v848, 0
      %v2592 = vsel %vm1019, %v849, 0
      %v2595 = vsel %vm1019, %v850, 0
      %v2598 = vsel %vm1019, %v851, 0
      %v2601 = vsel %vm1019, %v852, 0
      %v2604 = vsel %vm1019, %v853, 0
      %v2607 = vsel %vm1019, %v854, 0
      %v2610 = vsel %vm1019, %v855, 0
      %v2613 = vsel %vm1019, %v856, 0
      %v2616 = vsel %vm1019, %v857, 0
      %v2619 = vsel %vm1019, %v858, 0
      %2621 = vmatprep.subr.mxu0 %v988
      %2622 = vmatpush1.msra.mxu0 %v987
      %2623 = vmatprep.subr.mxu0 %v990
      %2624 = vmatpush1.msra.mxu0 %v989
      %2625 = vmatprep.subr.mxu0 %v992
      %2626 = vmatpush1.msra.mxu0 %v991
      %2627 = vmatprep.subr.mxu0 %v994
      %2628 = vmatpush1.msra.mxu0 %v993
      %2629 = vmatprep.subr.mxu0 %v996
      %2630 = vmatpush1.msra.mxu0 %v995
      %2631 = vmatprep.subr.mxu0 %v998
      %2632 = vmatpush1.msra.mxu0 %v997
      %2633 = vmatprep.subr.mxu0 %v1000
      %2634 = vmatpush1.msra.mxu0 %v999
      %2635 = vmatprep.subr.mxu0 %v1002
      %2636 = vmatpush1.msra.mxu0 %v1001
      %2637 = vmatprep.subr.mxu0 0.0
      %2638 = vmatpush1.msra.mxu0 0.0
      %2639 = vmatprep.subr.mxu0 0.0
      %2640 = vmatpush1.msra.mxu0 0.0
      %2641 = vmatprep.subr.mxu0 0.0
      %2642 = vmatpush1.msra.mxu0 0.0
      %2643 = vmatprep.subr.mxu0 0.0
      %2644 = vmatpush1.msra.mxu0 0.0
      %2645 = vmatprep.subr.mxu0 0.0
      %2646 = vmatpush1.msra.mxu0 0.0
      %2647 = vmatprep.subr.mxu0 0.0
      %2648 = vmatpush1.msra.mxu0 0.0
      %2649 = vmatprep.subr.mxu0 0.0
      %2650 = vmatpush1.msra.mxu0 0.0
      %2651 = vmatprep.subr.mxu0 0.0
      %2652 = vmatpush1.msra.mxu0 0.0
      %2653 = vmatprep.subr.mxu0 0.0
      %2654 = vmatpush1.msra.mxu0 0.0
      %2655 = vmatprep.subr.mxu0 0.0
      %2656 = vmatpush1.msra.mxu0 0.0
      %2657 = vmatprep.subr.mxu0 0.0
      %2658 = vmatpush1.msra.mxu0 0.0
      %2659 = vmatprep.subr.mxu0 0.0
      %2660 = vmatpush1.msra.mxu0 0.0
      %2661 = vmatprep.subr.mxu0 0.0
      %2662 = vmatpush1.msra.mxu0 0.0
      %2663 = vmatprep.subr.mxu0 0.0
      %2664 = vmatpush1.msra.mxu0 0.0
      %2665 = vmatprep.subr.mxu0 0.0
      %2666 = vmatpush1.msra.mxu0 0.0
      %2667 = vmatprep.subr.mxu0 0.0
      %2668 = vmatpush1.msra.mxu0 0.0
      %2669 = vmatprep.subr.mxu0 0.0
      %2670 = vmatpush1.msra.mxu0 0.0
      %2671 = vmatprep.subr.mxu0 0.0
      %2672 = vmatpush1.msra.mxu0 0.0
      %2673 = vmatprep.subr.mxu0 0.0
      %2674 = vmatpush1.msra.mxu0 0.0
      %2675 = vmatprep.subr.mxu0 0.0
      %2676 = vmatpush1.msra.mxu0 0.0
      %2677 = vmatprep.subr.mxu0 0.0
      %2678 = vmatpush1.msra.mxu0 0.0
      %2679 = vmatprep.subr.mxu0 0.0
      %2680 = vmatpush1.msra.mxu0 0.0
      %2681 = vmatprep.subr.mxu0 0.0
      %2682 = vmatpush1.msra.mxu0 0.0
      %2683 = vmatprep.subr.mxu0 0.0
      %2684 = vmatpush1.msra.mxu0 0.0
      %2685 = vmatprep.mubr.f32.mxu0 0.0
      %2686 = vmatmul.mubr.f32.gmra.mrb[0].mxu0 %v2238
      %v2687 = vpop.f32.mrb[0].mxu0
      %v2688 = vadd.f32 %v1471, %v2687
      %v2689 = vpop.f32.mrb[0].mxu0
      %v2690 = vadd.f32 %v1473, %v2689
      %2691 = vmatprep.mubr.f32.mxu0 0.0
      %2692 = vmatmul.mubr.f32.gmra.mrb[0].mxu0 %v2241
      %v2693 = vpop.f32.mrb[0].mxu0
      %v2694 = vadd.f32 %v1477, %v2693
      %v2695 = vpop.f32.mrb[0].mxu0
      %v2696 = vadd.f32 %v1479, %v2695
      %2697 = vmatprep.mubr.f32.mxu0 0.0
      %2698 = vmatmul.mubr.f32.gmra.mrb[0].mxu0 %v2244
      %v2699 = vpop.f32.mrb[0].mxu0
      %v2700 = vadd.f32 %v1483, %v2699
      %v2701 = vpop.f32.mrb[0].mxu0
      %v2702 = vadd.f32 %v1485, %v2701
      %2703 = vmatprep.mubr.f32.mxu0 0.0
      %2704 = vmatmul.mubr.f32.gmra.mrb[0].mxu0 %v2247
      %v2705 = vpop.f32.mrb[0].mxu0
      %v2706 = vadd.f32 %v1489, %v2705
      %v2707 = vpop.f32.mrb[0].mxu0
      %v2708 = vadd.f32 %v1491, %v2707
      %2709 = vmatprep.mubr.f32.mxu0 0.0
      %2710 = vmatmul.mubr.f32.gmra.mrb[0].mxu0 %v2250
      %v2711 = vpop.f32.mrb[0].mxu0
      %v2712 = vadd.f32 %v1495, %v2711
      %v2713 = vpop.f32.mrb[0].mxu0
      %v2714 = vadd.f32 %v1497, %v2713
      %2715 = vmatprep.mubr.f32.mxu0 0.0
      %2716 = vmatmul.mubr.f32.gmra.mrb[0].mxu0 %v2253
      %v2717 = vpop.f32.mrb[0].mxu0
      %v2718 = vadd.f32 %v1501, %v2717
      %v2719 = vpop.f32.mrb[0].mxu0
      %v2720 = vadd.f32 %v1503, %v2719
      %2721 = vmatprep.mubr.f32.mxu0 0.0
      %2722 = vmatmul.mubr.f32.gmra.mrb[0].mxu0 %v2256
      %v2723 = vpop.f32.mrb[0].mxu0
      %v2724 = vadd.f32 %v1507, %v2723
      %v2725 = vpop.f32.mrb[0].mxu0
      %v2726 = vadd.f32 %v1509, %v2725
      %2727 = vmatprep.mubr.f32.mxu0 0.0
      %2728 = vmatmul.mubr.f32.gmra.mrb[0].mxu0 %v2259
      %v2729 = vpop.f32.mrb[0].mxu0
      %v2730 = vadd.f32 %v1513, %v2729
      %v2731 = vpop.f32.mrb[0].mxu0
      %v2732 = vadd.f32 %v1515, %v2731
      %2733 = vmatprep.mubr.f32.mxu0 0.0
      %2734 = vmatmul.mubr.f32.gmra.mrb[0].mxu0 %v2262
      %v2735 = vpop.f32.mrb[0].mxu0
      %v2736 = vadd.f32 %v1519, %v2735
      %v2737 = vpop.f32.mrb[0].mxu0
      %v2738 = vadd.f32 %v1521, %v2737
      %2739 = vmatprep.mubr.f32.mxu0 0.0
      %2740 = vmatmul.mubr.f32.gmra.mrb[0].mxu0 %v2265
      %v2741 = vpop.f32.mrb[0].mxu0
      %v2742 = vadd.f32 %v1525, %v2741
      %v2743 = vpop.f32.mrb[0].mxu0
      %v2744 = vadd.f32 %v1527, %v2743
      %2745 = vmatprep.mubr.f32.mxu0 0.0
      %2746 = vmatmul.mubr.f32.gmra.mrb[0].mxu0 %v2268
      %v2747 = vpop.f32.mrb[0].mxu0
      %v2748 = vadd.f32 %v1531, %v2747
      %v2749 = vpop.f32.mrb[0].mxu0
      %v2750 = vadd.f32 %v1533, %v2749
      %2751 = vmatprep.mubr.f32.mxu0 0.0
      %2752 = vmatmul.mubr.f32.gmra.mrb[0].mxu0 %v2271
      %v2753 = vpop.f32.mrb[0].mxu0
      %v2754 = vadd.f32 %v1537, %v2753
      %v2755 = vpop.f32.mrb[0].mxu0
      %v2756 = vadd.f32 %v1539, %v2755
      %2757 = vmatprep.mubr.f32.mxu0 0.0
      %2758 = vmatmul.mubr.f32.gmra.mrb[0].mxu0 %v2274
      %v2759 = vpop.f32.mrb[0].mxu0
      %v2760 = vadd.f32 %v1543, %v2759
      %v2761 = vpop.f32.mrb[0].mxu0
      %v2762 = vadd.f32 %v1545, %v2761
      %2763 = vmatprep.mubr.f32.mxu0 0.0
      %2764 = vmatmul.mubr.f32.gmra.mrb[0].mxu0 %v2277
      %v2765 = vpop.f32.mrb[0].mxu0
      %v2766 = vadd.f32 %v1549, %v2765
      %v2767 = vpop.f32.mrb[0].mxu0
      %v2768 = vadd.f32 %v1551, %v2767
      %2769 = vmatprep.mubr.f32.mxu0 0.0
      %2770 = vmatmul.mubr.f32.gmra.mrb[0].mxu0 %v2280
      %v2771 = vpop.f32.mrb[0].mxu0
      %v2772 = vadd.f32 %v1555, %v2771
      %v2773 = vpop.f32.mrb[0].mxu0
      %v2774 = vadd.f32 %v1557, %v2773
      %2775 = vmatprep.mubr.f32.mxu0 0.0
      %2776 = vmatmul.mubr.f32.gmra.mrb[0].mxu0 %v2283
      %v2777 = vpop.f32.mrb[0].mxu0
      %v2778 = vadd.f32 %v1561, %v2777
      %v2779 = vpop.f32.mrb[0].mxu0
      %v2780 = vadd.f32 %v1563, %v2779
      %2781 = vmatprep.mubr.f32.mxu0 0.0
      %2782 = vmatmul.mubr.f32.gmra.mrb[0].mxu0 %v2286
      %v2783 = vpop.f32.mrb[0].mxu0
      %v2784 = vadd.f32 %v1567, %v2783
      %v2785 = vpop.f32.mrb[0].mxu0
      %v2786 = vadd.f32 %v1569, %v2785
      %2787 = vmatprep.mubr.f32.mxu0 0.0
      %2788 = vmatmul.mubr.f32.gmra.mrb[0].mxu0 %v2289
      %v2789 = vpop.f32.mrb[0].mxu0
      %v2790 = vadd.f32 %v1573, %v2789
      %v2791 = vpop.f32.mrb[0].mxu0
      %v2792 = vadd.f32 %v1575, %v2791
      %2793 = vmatprep.mubr.f32.mxu0 0.0
      %2794 = vmatmul.mubr.f32.gmra.mrb[0].mxu0 %v2292
      %v2795 = vpop.f32.mrb[0].mxu0
      %v2796 = vadd.f32 %v1579, %v2795
      %v2797 = vpop.f32.mrb[0].mxu0
      %v2798 = vadd.f32 %v1581, %v2797
      %2799 = vmatprep.mubr.f32.mxu0 0.0
      %2800 = vmatmul.mubr.f32.gmra.mrb[0].mxu0 %v2295
      %v2801 = vpop.f32.mrb[0].mxu0
      %v2802 = vadd.f32 %v1585, %v2801
      %v2803 = vpop.f32.mrb[0].mxu0
      %v2804 = vadd.f32 %v1587, %v2803
      %2805 = vmatprep.mubr.f32.mxu0 0.0
      %2806 = vmatmul.mubr.f32.gmra.mrb[0].mxu0 %v2298
      %v2807 = vpop.f32.mrb[0].mxu0
      %v2808 = vadd.f32 %v1591, %v2807
      %v2809 = vpop.f32.mrb[0].mxu0
      %v2810 = vadd.f32 %v1593, %v2809
      %2811 = vmatprep.mubr.f32.mxu0 0.0
      %2812 = vmatmul.mubr.f32.gmra.mrb[0].mxu0 %v2301
      %v2813 = vpop.f32.mrb[0].mxu0
      %v2814 = vadd.f32 %v1597, %v2813
      %v2815 = vpop.f32.mrb[0].mxu0
      %v2816 = vadd.f32 %v1599, %v2815
      %2817 = vmatprep.mubr.f32.mxu0 0.0
      %2818 = vmatmul.mubr.f32.gmra.mrb[0].mxu0 %v2304
      %v2819 = vpop.f32.mrb[0].mxu0
      %v2820 = vadd.f32 %v1603, %v2819
      %v2821 = vpop.f32.mrb[0].mxu0
      %v2822 = vadd.f32 %v1605, %v2821
      %2823 = vmatprep.mubr.f32.mxu0 0.0
      %2824 = vmatmul.mubr.f32.gmra.mrb[0].mxu0 %v2307
      %v2825 = vpop.f32.mrb[0].mxu0
      %v2826 = vadd.f32 %v1609, %v2825
      %v2827 = vpop.f32.mrb[0].mxu0
      %v2828 = vadd.f32 %v1611, %v2827
      %2829 = vmatprep.mubr.f32.mxu0 0.0
      %2830 = vmatmul.mubr.f32.gmra.mrb[0].mxu0 %v2310
      %v2831 = vpop.f32.mrb[0].mxu0
      %v2832 = vadd.f32 %v1615, %v2831
      %v2833 = vpop.f32.mrb[0].mxu0
      %v2834 = vadd.f32 %v1617, %v2833
      %2835 = vmatprep.mubr.f32.mxu0 0.0
      %2836 = vmatmul.mubr.f32.gmra.mrb[0].mxu0 %v2313
      %v2837 = vpop.f32.mrb[0].mxu0
      %v2838 = vadd.f32 %v1621, %v2837
      %v2839 = vpop.f32.mrb[0].mxu0
      %v2840 = vadd.f32 %v1623, %v2839
      %2841 = vmatprep.mubr.f32.mxu0 0.0
      %2842 = vmatmul.mubr.f32.gmra.mrb[0].mxu0 %v2316
      %v2843 = vpop.f32.mrb[0].mxu0
      %v2844 = vadd.f32 %v1627, %v2843
      %v2845 = vpop.f32.mrb[0].mxu0
      %v2846 = vadd.f32 %v1629, %v2845
      %2847 = vmatprep.mubr.f32.mxu0 0.0
      %2848 = vmatmul.mubr.f32.gmra.mrb[0].mxu0 %v2319
      %v2849 = vpop.f32.mrb[0].mxu0
      %v2850 = vadd.f32 %v1633, %v2849
      %v2851 = vpop.f32.mrb[0].mxu0
      %v2852 = vadd.f32 %v1635, %v2851
      %2853 = vmatprep.mubr.f32.mxu0 0.0
      %2854 = vmatmul.mubr.f32.gmra.mrb[0].mxu0 %v2322
      %v2855 = vpop.f32.mrb[0].mxu0
      %v2856 = vadd.f32 %v1639, %v2855
      %v2857 = vpop.f32.mrb[0].mxu0
      %v2858 = vadd.f32 %v1641, %v2857
      %2859 = vmatprep.mubr.f32.mxu0 0.0
      %2860 = vmatmul.mubr.f32.gmra.mrb[0].mxu0 %v2325
      %v2861 = vpop.f32.mrb[0].mxu0
      %v2862 = vadd.f32 %v1645, %v2861
      %v2863 = vpop.f32.mrb[0].mxu0
      %v2864 = vadd.f32 %v1647, %v2863
      %2865 = vmatprep.mubr.f32.mxu0 0.0
      %2866 = vmatmul.mubr.f32.gmra.mrb[0].mxu0 %v2328
      %v2867 = vpop.f32.mrb[0].mxu0
      %v2868 = vadd.f32 %v1651, %v2867
      %v2869 = vpop.f32.mrb[0].mxu0
      %v2870 = vadd.f32 %v1653, %v2869
      %2871 = vmatprep.mubr.f32.mxu0 0.0
      %2872 = vmatmul.mubr.f32.gmra.mrb[0].mxu0 %v2331
      %v2873 = vpop.f32.mrb[0].mxu0
      %v2874 = vadd.f32 %v1657, %v2873
      %v2875 = vpop.f32.mrb[0].mxu0
      %v2876 = vadd.f32 %v1659, %v2875
      %2877 = vmatprep.mubr.f32.mxu0 0.0
      %2878 = vmatmul.mubr.f32.gmra.mrb[0].mxu0 %v2334
      %v2879 = vpop.f32.mrb[0].mxu0
      %v2880 = vadd.f32 %v1663, %v2879
      %v2881 = vpop.f32.mrb[0].mxu0
      %v2882 = vadd.f32 %v1665, %v2881
      %2883 = vmatprep.mubr.f32.mxu0 0.0
      %2884 = vmatmul.mubr.f32.gmra.mrb[0].mxu0 %v2337
      %v2885 = vpop.f32.mrb[0].mxu0
      %v2886 = vadd.f32 %v1669, %v2885
      %v2887 = vpop.f32.mrb[0].mxu0
      %v2888 = vadd.f32 %v1671, %v2887
      %2889 = vmatprep.mubr.f32.mxu0 0.0
      %2890 = vmatmul.mubr.f32.gmra.mrb[0].mxu0 %v2340
      %v2891 = vpop.f32.mrb[0].mxu0
      %v2892 = vadd.f32 %v1675, %v2891
      %v2893 = vpop.f32.mrb[0].mxu0
      %v2894 = vadd.f32 %v1677, %v2893
      %2895 = vmatprep.mubr.f32.mxu0 0.0
      %2896 = vmatmul.mubr.f32.gmra.mrb[0].mxu0 %v2343
      %v2897 = vpop.f32.mrb[0].mxu0
      %v2898 = vadd.f32 %v1681, %v2897
      %v2899 = vpop.f32.mrb[0].mxu0
      %v2900 = vadd.f32 %v1683, %v2899
      %2901 = vmatprep.mubr.f32.mxu0 0.0
      %2902 = vmatmul.mubr.f32.gmra.mrb[0].mxu0 %v2346
      %v2903 = vpop.f32.mrb[0].mxu0
      %v2904 = vadd.f32 %v1687, %v2903
      %v2905 = vpop.f32.mrb[0].mxu0
      %v2906 = vadd.f32 %v1689, %v2905
      %2907 = vmatprep.mubr.f32.mxu0 0.0
      %2908 = vmatmul.mubr.f32.gmra.mrb[0].mxu0 %v2349
      %v2909 = vpop.f32.mrb[0].mxu0
      %v2910 = vadd.f32 %v1693, %v2909
      %v2911 = vpop.f32.mrb[0].mxu0
      %v2912 = vadd.f32 %v1695, %v2911
      %2913 = vmatprep.mubr.f32.mxu0 0.0
      %2914 = vmatmul.mubr.f32.gmra.mrb[0].mxu0 %v2352
      %v2915 = vpop.f32.mrb[0].mxu0
      %v2916 = vadd.f32 %v1699, %v2915
      %v2917 = vpop.f32.mrb[0].mxu0
      %v2918 = vadd.f32 %v1701, %v2917
      %2919 = vmatprep.mubr.f32.mxu0 0.0
      %2920 = vmatmul.mubr.f32.gmra.mrb[0].mxu0 %v2355
      %v2921 = vpop.f32.mrb[0].mxu0
      %v2922 = vadd.f32 %v1705, %v2921
      %v2923 = vpop.f32.mrb[0].mxu0
      %v2924 = vadd.f32 %v1707, %v2923
      %2925 = vmatprep.mubr.f32.mxu0 0.0
      %2926 = vmatmul.mubr.f32.gmra.mrb[0].mxu0 %v2358
      %v2927 = vpop.f32.mrb[0].mxu0
      %v2928 = vadd.f32 %v1711, %v2927
      %v2929 = vpop.f32.mrb[0].mxu0
      %v2930 = vadd.f32 %v1713, %v2929
      %2931 = vmatprep.mubr.f32.mxu0 0.0
      %2932 = vmatmul.mubr.f32.gmra.mrb[0].mxu0 %v2361
      %v2933 = vpop.f32.mrb[0].mxu0
      %v2934 = vadd.f32 %v1717, %v2933
      %v2935 = vpop.f32.mrb[0].mxu0
      %v2936 = vadd.f32 %v1719, %v2935
      %2937 = vmatprep.mubr.f32.mxu0 0.0
      %2938 = vmatmul.mubr.f32.gmra.mrb[0].mxu0 %v2364
      %v2939 = vpop.f32.mrb[0].mxu0
      %v2940 = vadd.f32 %v1723, %v2939
      %v2941 = vpop.f32.mrb[0].mxu0
      %v2942 = vadd.f32 %v1725, %v2941
      %2943 = vmatprep.mubr.f32.mxu0 0.0
      %2944 = vmatmul.mubr.f32.gmra.mrb[0].mxu0 %v2367
      %v2945 = vpop.f32.mrb[0].mxu0
      %v2946 = vadd.f32 %v1729, %v2945
      %v2947 = vpop.f32.mrb[0].mxu0
      %v2948 = vadd.f32 %v1731, %v2947
      %2949 = vmatprep.mubr.f32.mxu0 0.0
      %2950 = vmatmul.mubr.f32.gmra.mrb[0].mxu0 %v2370
      %v2951 = vpop.f32.mrb[0].mxu0
      %v2952 = vadd.f32 %v1735, %v2951
      %v2953 = vpop.f32.mrb[0].mxu0
      %v2954 = vadd.f32 %v1737, %v2953
      %2955 = vmatprep.mubr.f32.mxu0 0.0
      %2956 = vmatmul.mubr.f32.gmra.mrb[0].mxu0 %v2373
      %v2957 = vpop.f32.mrb[0].mxu0
      %v2958 = vadd.f32 %v1741, %v2957
      %v2959 = vpop.f32.mrb[0].mxu0
      %v2960 = vadd.f32 %v1743, %v2959
      %2961 = vmatprep.mubr.f32.mxu0 0.0
      %2962 = vmatmul.mubr.f32.gmra.mrb[0].mxu0 %v2376
      %v2963 = vpop.f32.mrb[0].mxu0
      %v2964 = vadd.f32 %v1747, %v2963
      %v2965 = vpop.f32.mrb[0].mxu0
      %v2966 = vadd.f32 %v1749, %v2965
      %2967 = vmatprep.mubr.f32.mxu0 0.0
      %2968 = vmatmul.mubr.f32.gmra.mrb[0].mxu0 %v2379
      %v2969 = vpop.f32.mrb[0].mxu0
      %v2970 = vadd.f32 %v1753, %v2969
      %v2971 = vpop.f32.mrb[0].mxu0
      %v2972 = vadd.f32 %v1755, %v2971
      %2973 = vmatprep.mubr.f32.mxu0 0.0
      %2974 = vmatmul.mubr.f32.gmra.mrb[0].mxu0 %v2382
      %v2975 = vpop.f32.mrb[0].mxu0
      %v2976 = vadd.f32 %v1759, %v2975
      %v2977 = vpop.f32.mrb[0].mxu0
      %v2978 = vadd.f32 %v1761, %v2977
      %2979 = vmatprep.mubr.f32.mxu0 0.0
      %2980 = vmatmul.mubr.f32.gmra.mrb[0].mxu0 %v2385
      %v2981 = vpop.f32.mrb[0].mxu0
      %v2982 = vadd.f32 %v1765, %v2981
      %v2983 = vpop.f32.mrb[0].mxu0
      %v2984 = vadd.f32 %v1767, %v2983
      %2985 = vmatprep.mubr.f32.mxu0 0.0
      %2986 = vmatmul.mubr.f32.gmra.mrb[0].mxu0 %v2388
      %v2987 = vpop.f32.mrb[0].mxu0
      %v2988 = vadd.f32 %v1771, %v2987
      %v2989 = vpop.f32.mrb[0].mxu0
      %v2990 = vadd.f32 %v1773, %v2989
      %2991 = vmatprep.mubr.f32.mxu0 0.0
      %2992 = vmatmul.mubr.f32.gmra.mrb[0].mxu0 %v2391
      %v2993 = vpop.f32.mrb[0].mxu0
      %v2994 = vadd.f32 %v1777, %v2993
      %v2995 = vpop.f32.mrb[0].mxu0
      %v2996 = vadd.f32 %v1779, %v2995
      %2997 = vmatprep.mubr.f32.mxu0 0.0
      %2998 = vmatmul.mubr.f32.gmra.mrb[0].mxu0 %v2394
      %v2999 = vpop.f32.mrb[0].mxu0
      %v3000 = vadd.f32 %v1783, %v2999
      %v3001 = vpop.f32.mrb[0].mxu0
      %v3002 = vadd.f32 %v1785, %v3001
      %3003 = vmatprep.mubr.f32.mxu0 0.0
      %3004 = vmatmul.mubr.f32.gmra.mrb[0].mxu0 %v2397
      %v3005 = vpop.f32.mrb[0].mxu0
      %v3006 = vadd.f32 %v1789, %v3005
      %v3007 = vpop.f32.mrb[0].mxu0
      %v3008 = vadd.f32 %v1791, %v3007
      %3009 = vmatprep.mubr.f32.mxu0 0.0
      %3010 = vmatmul.mubr.f32.gmra.mrb[0].mxu0 %v2400
      %v3011 = vpop.f32.mrb[0].mxu0
      %v3012 = vadd.f32 %v1795, %v3011
      %v3013 = vpop.f32.mrb[0].mxu0
      %v3014 = vadd.f32 %v1797, %v3013
      %3015 = vmatprep.mubr.f32.mxu0 0.0
      %3016 = vmatmul.mubr.f32.gmra.mrb[0].mxu0 %v2403
      %v3017 = vpop.f32.mrb[0].mxu0
      %v3018 = vadd.f32 %v1801, %v3017
      %v3019 = vpop.f32.mrb[0].mxu0
      %v3020 = vadd.f32 %v1803, %v3019
      %3021 = vmatprep.mubr.f32.mxu0 0.0
      %3022 = vmatmul.mubr.f32.gmra.mrb[0].mxu0 %v2406
      %v3023 = vpop.f32.mrb[0].mxu0
      %v3024 = vadd.f32 %v1807, %v3023
      %v3025 = vpop.f32.mrb[0].mxu0
      %v3026 = vadd.f32 %v1809, %v3025
      %3027 = vmatprep.mubr.f32.mxu0 0.0
      %3028 = vmatmul.mubr.f32.gmra.mrb[0].mxu0 %v2409
      %v3029 = vpop.f32.mrb[0].mxu0
      %v3030 = vadd.f32 %v1813, %v3029
      %v3031 = vpop.f32.mrb[0].mxu0
      %v3032 = vadd.f32 %v1815, %v3031
      %3033 = vmatprep.mubr.f32.mxu0 0.0
      %3034 = vmatmul.mubr.f32.gmra.mrb[0].mxu0 %v2412
      %v3035 = vpop.f32.mrb[0].mxu0
      %v3036 = vadd.f32 %v1819, %v3035
      %v3037 = vpop.f32.mrb[0].mxu0
      %v3038 = vadd.f32 %v1821, %v3037
      %3039 = vmatprep.mubr.f32.mxu0 0.0
      %3040 = vmatmul.mubr.f32.gmra.mrb[0].mxu0 %v2415
      %v3041 = vpop.f32.mrb[0].mxu0
      %v3042 = vadd.f32 %v1825, %v3041
      %v3043 = vpop.f32.mrb[0].mxu0
      %v3044 = vadd.f32 %v1827, %v3043
      %3045 = vmatprep.mubr.f32.mxu0 0.0
      %3046 = vmatmul.mubr.f32.gmra.mrb[0].mxu0 %v2418
      %v3047 = vpop.f32.mrb[0].mxu0
      %v3048 = vadd.f32 %v1831, %v3047
      %v3049 = vpop.f32.mrb[0].mxu0
      %v3050 = vadd.f32 %v1833, %v3049
      %3051 = vmatprep.mubr.f32.mxu0 0.0
      %3052 = vmatmul.mubr.f32.gmra.mrb[0].mxu0 %v2421
      %v3053 = vpop.f32.mrb[0].mxu0
      %v3054 = vadd.f32 %v1837, %v3053
      %v3055 = vpop.f32.mrb[0].mxu0
      %v3056 = vadd.f32 %v1839, %v3055
      %3057 = vmatprep.mubr.f32.mxu0 0.0
      %3058 = vmatmul.mubr.f32.gmra.mrb[0].mxu0 %v2424
      %v3059 = vpop.f32.mrb[0].mxu0
      %v3060 = vadd.f32 %v1843, %v3059
      %v3061 = vpop.f32.mrb[0].mxu0
      %v3062 = vadd.f32 %v1845, %v3061
      %3063 = vmatprep.mubr.f32.mxu0 0.0
      %3064 = vmatmul.mubr.f32.gmra.mrb[0].mxu0 %v2427
      %v3065 = vpop.f32.mrb[0].mxu0
      %v3066 = vadd.f32 %v1849, %v3065
      %v3067 = vpop.f32.mrb[0].mxu0
      %v3068 = vadd.f32 %v1851, %v3067
      %3069 = vmatprep.mubr.f32.mxu0 0.0
      %3070 = vmatmul.mubr.f32.gmra.mrb[0].mxu0 %v2430
      %v3071 = vpop.f32.mrb[0].mxu0
      %v3072 = vadd.f32 %v1855, %v3071
      %v3073 = vpop.f32.mrb[0].mxu0
      %v3074 = vadd.f32 %v1857, %v3073
      %3075 = vmatprep.mubr.f32.mxu0 0.0
      %3076 = vmatmul.mubr.f32.gmra.mrb[0].mxu0 %v2433
      %v3077 = vpop.f32.mrb[0].mxu0
      %v3078 = vadd.f32 %v1861, %v3077
      %v3079 = vpop.f32.mrb[0].mxu0
      %v3080 = vadd.f32 %v1863, %v3079
      %3081 = vmatprep.mubr.f32.mxu0 0.0
      %3082 = vmatmul.mubr.f32.gmra.mrb[0].mxu0 %v2436
      %v3083 = vpop.f32.mrb[0].mxu0
      %v3084 = vadd.f32 %v1867, %v3083
      %v3085 = vpop.f32.mrb[0].mxu0
      %v3086 = vadd.f32 %v1869, %v3085
      %3087 = vmatprep.mubr.f32.mxu0 0.0
      %3088 = vmatmul.mubr.f32.gmra.mrb[0].mxu0 %v2439
      %v3089 = vpop.f32.mrb[0].mxu0
      %v3090 = vadd.f32 %v1873, %v3089
      %v3091 = vpop.f32.mrb[0].mxu0
      %v3092 = vadd.f32 %v1875, %v3091
      %3093 = vmatprep.mubr.f32.mxu0 0.0
      %3094 = vmatmul.mubr.f32.gmra.mrb[0].mxu0 %v2442
      %v3095 = vpop.f32.mrb[0].mxu0
      %v3096 = vadd.f32 %v1879, %v3095
      %v3097 = vpop.f32.mrb[0].mxu0
      %v3098 = vadd.f32 %v1881, %v3097
      %3099 = vmatprep.mubr.f32.mxu0 0.0
      %3100 = vmatmul.mubr.f32.gmra.mrb[0].mxu0 %v2445
      %v3101 = vpop.f32.mrb[0].mxu0
      %v3102 = vadd.f32 %v1885, %v3101
      %v3103 = vpop.f32.mrb[0].mxu0
      %v3104 = vadd.f32 %v1887, %v3103
      %3105 = vmatprep.mubr.f32.mxu0 0.0
      %3106 = vmatmul.mubr.f32.gmra.mrb[0].mxu0 %v2448
      %v3107 = vpop.f32.mrb[0].mxu0
      %v3108 = vadd.f32 %v1891, %v3107
      %v3109 = vpop.f32.mrb[0].mxu0
      %v3110 = vadd.f32 %v1893, %v3109
      %3111 = vmatprep.mubr.f32.mxu0 0.0
      %3112 = vmatmul.mubr.f32.gmra.mrb[0].mxu0 %v2451
      %v3113 = vpop.f32.mrb[0].mxu0
      %v3114 = vadd.f32 %v1897, %v3113
      %v3115 = vpop.f32.mrb[0].mxu0
      %v3116 = vadd.f32 %v1899, %v3115
      %3117 = vmatprep.mubr.f32.mxu0 0.0
      %3118 = vmatmul.mubr.f32.gmra.mrb[0].mxu0 %v2454
      %v3119 = vpop.f32.mrb[0].mxu0
      %v3120 = vadd.f32 %v1903, %v3119
      %v3121 = vpop.f32.mrb[0].mxu0
      %v3122 = vadd.f32 %v1905, %v3121
      %3123 = vmatprep.mubr.f32.mxu0 0.0
      %3124 = vmatmul.mubr.f32.gmra.mrb[0].mxu0 %v2457
      %v3125 = vpop.f32.mrb[0].mxu0
      %v3126 = vadd.f32 %v1909, %v3125
      %v3127 = vpop.f32.mrb[0].mxu0
      %v3128 = vadd.f32 %v1911, %v3127
      %3129 = vmatprep.mubr.f32.mxu0 0.0
      %3130 = vmatmul.mubr.f32.gmra.mrb[0].mxu0 %v2460
      %v3131 = vpop.f32.mrb[0].mxu0
      %v3132 = vadd.f32 %v1915, %v3131
      %v3133 = vpop.f32.mrb[0].mxu0
      %v3134 = vadd.f32 %v1917, %v3133
      %3135 = vmatprep.mubr.f32.mxu0 0.0
      %3136 = vmatmul.mubr.f32.gmra.mrb[0].mxu0 %v2463
      %v3137 = vpop.f32.mrb[0].mxu0
      %v3138 = vadd.f32 %v1921, %v3137
      %v3139 = vpop.f32.mrb[0].mxu0
      %v3140 = vadd.f32 %v1923, %v3139
      %3141 = vmatprep.mubr.f32.mxu0 0.0
      %3142 = vmatmul.mubr.f32.gmra.mrb[0].mxu0 %v2466
      %v3143 = vpop.f32.mrb[0].mxu0
      %v3144 = vadd.f32 %v1927, %v3143
      %v3145 = vpop.f32.mrb[0].mxu0
      %v3146 = vadd.f32 %v1929, %v3145
      %3147 = vmatprep.mubr.f32.mxu0 0.0
      %3148 = vmatmul.mubr.f32.gmra.mrb[0].mxu0 %v2469
      %v3149 = vpop.f32.mrb[0].mxu0
      %v3150 = vadd.f32 %v1933, %v3149
      %v3151 = vpop.f32.mrb[0].mxu0
      %v3152 = vadd.f32 %v1935, %v3151
      %3153 = vmatprep.mubr.f32.mxu0 0.0
      %3154 = vmatmul.mubr.f32.gmra.mrb[0].mxu0 %v2472
      %v3155 = vpop.f32.mrb[0].mxu0
      %v3156 = vadd.f32 %v1939, %v3155
      %v3157 = vpop.f32.mrb[0].mxu0
      %v3158 = vadd.f32 %v1941, %v3157
      %3159 = vmatprep.mubr.f32.mxu0 0.0
      %3160 = vmatmul.mubr.f32.gmra.mrb[0].mxu0 %v2475
      %v3161 = vpop.f32.mrb[0].mxu0
      %v3162 = vadd.f32 %v1945, %v3161
      %v3163 = vpop.f32.mrb[0].mxu0
      %v3164 = vadd.f32 %v1947, %v3163
      %3165 = vmatprep.mubr.f32.mxu0 0.0
      %3166 = vmatmul.mubr.f32.gmra.mrb[0].mxu0 %v2478
      %v3167 = vpop.f32.mrb[0].mxu0
      %v3168 = vadd.f32 %v1951, %v3167
      %v3169 = vpop.f32.mrb[0].mxu0
      %v3170 = vadd.f32 %v1953, %v3169
      %3171 = vmatprep.mubr.f32.mxu0 0.0
      %3172 = vmatmul.mubr.f32.gmra.mrb[0].mxu0 %v2481
      %v3173 = vpop.f32.mrb[0].mxu0
      %v3174 = vadd.f32 %v1957, %v3173
      %v3175 = vpop.f32.mrb[0].mxu0
      %v3176 = vadd.f32 %v1959, %v3175
      %3177 = vmatprep.mubr.f32.mxu0 0.0
      %3178 = vmatmul.mubr.f32.gmra.mrb[0].mxu0 %v2484
      %v3179 = vpop.f32.mrb[0].mxu0
      %v3180 = vadd.f32 %v1963, %v3179
      %v3181 = vpop.f32.mrb[0].mxu0
      %v3182 = vadd.f32 %v1965, %v3181
      %3183 = vmatprep.mubr.f32.mxu0 0.0
      %3184 = vmatmul.mubr.f32.gmra.mrb[0].mxu0 %v2487
      %v3185 = vpop.f32.mrb[0].mxu0
      %v3186 = vadd.f32 %v1969, %v3185
      %v3187 = vpop.f32.mrb[0].mxu0
      %v3188 = vadd.f32 %v1971, %v3187
      %3189 = vmatprep.mubr.f32.mxu0 0.0
      %3190 = vmatmul.mubr.f32.gmra.mrb[0].mxu0 %v2490
      %v3191 = vpop.f32.mrb[0].mxu0
      %v3192 = vadd.f32 %v1975, %v3191
      %v3193 = vpop.f32.mrb[0].mxu0
      %v3194 = vadd.f32 %v1977, %v3193
      %3195 = vmatprep.mubr.f32.mxu0 0.0
      %3196 = vmatmul.mubr.f32.gmra.mrb[0].mxu0 %v2493
      %v3197 = vpop.f32.mrb[0].mxu0
      %v3198 = vadd.f32 %v1981, %v3197
      %v3199 = vpop.f32.mrb[0].mxu0
      %v3200 = vadd.f32 %v1983, %v3199
      %3201 = vmatprep.mubr.f32.mxu0 0.0
      %3202 = vmatmul.mubr.f32.gmra.mrb[0].mxu0 %v2496
      %v3203 = vpop.f32.mrb[0].mxu0
      %v3204 = vadd.f32 %v1987, %v3203
      %v3205 = vpop.f32.mrb[0].mxu0
      %v3206 = vadd.f32 %v1989, %v3205
      %3207 = vmatprep.mubr.f32.mxu0 0.0
      %3208 = vmatmul.mubr.f32.gmra.mrb[0].mxu0 %v2499
      %v3209 = vpop.f32.mrb[0].mxu0
      %v3210 = vadd.f32 %v1993, %v3209
      %v3211 = vpop.f32.mrb[0].mxu0
      %v3212 = vadd.f32 %v1995, %v3211
      %3213 = vmatprep.mubr.f32.mxu0 0.0
      %3214 = vmatmul.mubr.f32.gmra.mrb[0].mxu0 %v2502
      %v3215 = vpop.f32.mrb[0].mxu0
      %v3216 = vadd.f32 %v1999, %v3215
      %v3217 = vpop.f32.mrb[0].mxu0
      %v3218 = vadd.f32 %v2001, %v3217
      %3219 = vmatprep.mubr.f32.mxu0 0.0
      %3220 = vmatmul.mubr.f32.gmra.mrb[0].mxu0 %v2505
      %v3221 = vpop.f32.mrb[0].mxu0
      %v3222 = vadd.f32 %v2005, %v3221
      %v3223 = vpop.f32.mrb[0].mxu0
      %v3224 = vadd.f32 %v2007, %v3223
      %3225 = vmatprep.mubr.f32.mxu0 0.0
      %3226 = vmatmul.mubr.f32.gmra.mrb[0].mxu0 %v2508
      %v3227 = vpop.f32.mrb[0].mxu0
      %v3228 = vadd.f32 %v2011, %v3227
      %v3229 = vpop.f32.mrb[0].mxu0
      %v3230 = vadd.f32 %v2013, %v3229
      %3231 = vmatprep.mubr.f32.mxu0 0.0
      %3232 = vmatmul.mubr.f32.gmra.mrb[0].mxu0 %v2511
      %v3233 = vpop.f32.mrb[0].mxu0
      %v3234 = vadd.f32 %v2017, %v3233
      %v3235 = vpop.f32.mrb[0].mxu0
      %v3236 = vadd.f32 %v2019, %v3235
      %3237 = vmatprep.mubr.f32.mxu0 0.0
      %3238 = vmatmul.mubr.f32.gmra.mrb[0].mxu0 %v2514
      %v3239 = vpop.f32.mrb[0].mxu0
      %v3240 = vadd.f32 %v2023, %v3239
      %v3241 = vpop.f32.mrb[0].mxu0
      %v3242 = vadd.f32 %v2025, %v3241
      %3243 = vmatprep.mubr.f32.mxu0 0.0
      %3244 = vmatmul.mubr.f32.gmra.mrb[0].mxu0 %v2517
      %v3245 = vpop.f32.mrb[0].mxu0
      %v3246 = vadd.f32 %v2029, %v3245
      %v3247 = vpop.f32.mrb[0].mxu0
      %v3248 = vadd.f32 %v2031, %v3247
      %3249 = vmatprep.mubr.f32.mxu0 0.0
      %3250 = vmatmul.mubr.f32.gmra.mrb[0].mxu0 %v2520
      %v3251 = vpop.f32.mrb[0].mxu0
      %v3252 = vadd.f32 %v2035, %v3251
      %v3253 = vpop.f32.mrb[0].mxu0
      %v3254 = vadd.f32 %v2037, %v3253
      %3255 = vmatprep.mubr.f32.mxu0 0.0
      %3256 = vmatmul.mubr.f32.gmra.mrb[0].mxu0 %v2523
      %v3257 = vpop.f32.mrb[0].mxu0
      %v3258 = vadd.f32 %v2041, %v3257
      %v3259 = vpop.f32.mrb[0].mxu0
      %v3260 = vadd.f32 %v2043, %v3259
      %3261 = vmatprep.mubr.f32.mxu0 0.0
      %3262 = vmatmul.mubr.f32.gmra.mrb[0].mxu0 %v2526
      %v3263 = vpop.f32.mrb[0].mxu0
      %v3264 = vadd.f32 %v2047, %v3263
      %v3265 = vpop.f32.mrb[0].mxu0
      %v3266 = vadd.f32 %v2049, %v3265
      %3267 = vmatprep.mubr.f32.mxu0 0.0
      %3268 = vmatmul.mubr.f32.gmra.mrb[0].mxu0 %v2529
      %v3269 = vpop.f32.mrb[0].mxu0
      %v3270 = vadd.f32 %v2053, %v3269
      %v3271 = vpop.f32.mrb[0].mxu0
      %v3272 = vadd.f32 %v2055, %v3271
      %3273 = vmatprep.mubr.f32.mxu0 0.0
      %3274 = vmatmul.mubr.f32.gmra.mrb[0].mxu0 %v2532
      %v3275 = vpop.f32.mrb[0].mxu0
      %v3276 = vadd.f32 %v2059, %v3275
      %v3277 = vpop.f32.mrb[0].mxu0
      %v3278 = vadd.f32 %v2061, %v3277
      %3279 = vmatprep.mubr.f32.mxu0 0.0
      %3280 = vmatmul.mubr.f32.gmra.mrb[0].mxu0 %v2535
      %v3281 = vpop.f32.mrb[0].mxu0
      %v3282 = vadd.f32 %v2065, %v3281
      %v3283 = vpop.f32.mrb[0].mxu0
      %v3284 = vadd.f32 %v2067, %v3283
      %3285 = vmatprep.mubr.f32.mxu0 0.0
      %3286 = vmatmul.mubr.f32.gmra.mrb[0].mxu0 %v2538
      %v3287 = vpop.f32.mrb[0].mxu0
      %v3288 = vadd.f32 %v2071, %v3287
      %v3289 = vpop.f32.mrb[0].mxu0
      %v3290 = vadd.f32 %v2073, %v3289
      %3291 = vmatprep.mubr.f32.mxu0 0.0
      %3292 = vmatmul.mubr.f32.gmra.mrb[0].mxu0 %v2541
      %v3293 = vpop.f32.mrb[0].mxu0
      %v3294 = vadd.f32 %v2077, %v3293
      %v3295 = vpop.f32.mrb[0].mxu0
      %v3296 = vadd.f32 %v2079, %v3295
      %3297 = vmatprep.mubr.f32.mxu0 0.0
      %3298 = vmatmul.mubr.f32.gmra.mrb[0].mxu0 %v2544
      %v3299 = vpop.f32.mrb[0].mxu0
      %v3300 = vadd.f32 %v2083, %v3299
      %v3301 = vpop.f32.mrb[0].mxu0
      %v3302 = vadd.f32 %v2085, %v3301
      %3303 = vmatprep.mubr.f32.mxu0 0.0
      %3304 = vmatmul.mubr.f32.gmra.mrb[0].mxu0 %v2547
      %v3305 = vpop.f32.mrb[0].mxu0
      %v3306 = vadd.f32 %v2089, %v3305
      %v3307 = vpop.f32.mrb[0].mxu0
      %v3308 = vadd.f32 %v2091, %v3307
      %3309 = vmatprep.mubr.f32.mxu0 0.0
      %3310 = vmatmul.mubr.f32.gmra.mrb[0].mxu0 %v2550
      %v3311 = vpop.f32.mrb[0].mxu0
      %v3312 = vadd.f32 %v2095, %v3311
      %v3313 = vpop.f32.mrb[0].mxu0
      %v3314 = vadd.f32 %v2097, %v3313
      %3315 = vmatprep.mubr.f32.mxu0 0.0
      %3316 = vmatmul.mubr.f32.gmra.mrb[0].mxu0 %v2553
      %v3317 = vpop.f32.mrb[0].mxu0
      %v3318 = vadd.f32 %v2101, %v3317
      %v3319 = vpop.f32.mrb[0].mxu0
      %v3320 = vadd.f32 %v2103, %v3319
      %3321 = vmatprep.mubr.f32.mxu0 0.0
      %3322 = vmatmul.mubr.f32.gmra.mrb[0].mxu0 %v2556
      %v3323 = vpop.f32.mrb[0].mxu0
      %v3324 = vadd.f32 %v2107, %v3323
      %v3325 = vpop.f32.mrb[0].mxu0
      %v3326 = vadd.f32 %v2109, %v3325
      %3327 = vmatprep.mubr.f32.mxu0 0.0
      %3328 = vmatmul.mubr.f32.gmra.mrb[0].mxu0 %v2559
      %v3329 = vpop.f32.mrb[0].mxu0
      %v3330 = vadd.f32 %v2113, %v3329
      %v3331 = vpop.f32.mrb[0].mxu0
      %v3332 = vadd.f32 %v2115, %v3331
      %3333 = vmatprep.mubr.f32.mxu0 0.0
      %3334 = vmatmul.mubr.f32.gmra.mrb[0].mxu0 %v2562
      %v3335 = vpop.f32.mrb[0].mxu0
      %v3336 = vadd.f32 %v2119, %v3335
      %v3337 = vpop.f32.mrb[0].mxu0
      %v3338 = vadd.f32 %v2121, %v3337
      %3339 = vmatprep.mubr.f32.mxu0 0.0
      %3340 = vmatmul.mubr.f32.gmra.mrb[0].mxu0 %v2565
      %v3341 = vpop.f32.mrb[0].mxu0
      %v3342 = vadd.f32 %v2125, %v3341
      %v3343 = vpop.f32.mrb[0].mxu0
      %v3344 = vadd.f32 %v2127, %v3343
      %3345 = vmatprep.mubr.f32.mxu0 0.0
      %3346 = vmatmul.mubr.f32.gmra.mrb[0].mxu0 %v2568
      %v3347 = vpop.f32.mrb[0].mxu0
      %v3348 = vadd.f32 %v2131, %v3347
      %v3349 = vpop.f32.mrb[0].mxu0
      %v3350 = vadd.f32 %v2133, %v3349
      %3351 = vmatprep.mubr.f32.mxu0 0.0
      %3352 = vmatmul.mubr.f32.gmra.mrb[0].mxu0 %v2571
      %v3353 = vpop.f32.mrb[0].mxu0
      %v3354 = vadd.f32 %v2137, %v3353
      %v3355 = vpop.f32.mrb[0].mxu0
      %v3356 = vadd.f32 %v2139, %v3355
      %3357 = vmatprep.mubr.f32.mxu0 0.0
      %3358 = vmatmul.mubr.f32.gmra.mrb[0].mxu0 %v2574
      %v3359 = vpop.f32.mrb[0].mxu0
      %v3360 = vadd.f32 %v2143, %v3359
      %v3361 = vpop.f32.mrb[0].mxu0
      %v3362 = vadd.f32 %v2145, %v3361
      %3363 = vmatprep.mubr.f32.mxu0 0.0
      %3364 = vmatmul.mubr.f32.gmra.mrb[0].mxu0 %v2577
      %v3365 = vpop.f32.mrb[0].mxu0
      %v3366 = vadd.f32 %v2149, %v3365
      %v3367 = vpop.f32.mrb[0].mxu0
      %v3368 = vadd.f32 %v2151, %v3367
      %3369 = vmatprep.mubr.f32.mxu0 0.0
      %3370 = vmatmul.mubr.f32.gmra.mrb[0].mxu0 %v2580
      %v3371 = vpop.f32.mrb[0].mxu0
      %v3372 = vadd.f32 %v2155, %v3371
      %v3373 = vpop.f32.mrb[0].mxu0
      %v3374 = vadd.f32 %v2157, %v3373
      %3375 = vmatprep.mubr.f32.mxu0 0.0
      %3376 = vmatmul.mubr.f32.gmra.mrb[0].mxu0 %v2583
      %v3377 = vpop.f32.mrb[0].mxu0
      %v3378 = vadd.f32 %v2161, %v3377
      %v3379 = vpop.f32.mrb[0].mxu0
      %v3380 = vadd.f32 %v2163, %v3379
      %3381 = vmatprep.mubr.f32.mxu0 0.0
      %3382 = vmatmul.mubr.f32.gmra.mrb[0].mxu0 %v2586
      %v3383 = vpop.f32.mrb[0].mxu0
      %v3384 = vadd.f32 %v2167, %v3383
      %v3385 = vpop.f32.mrb[0].mxu0
      %v3386 = vadd.f32 %v2169, %v3385
      %3387 = vmatprep.mubr.f32.mxu0 0.0
      %3388 = vmatmul.mubr.f32.gmra.mrb[0].mxu0 %v2589
      %v3389 = vpop.f32.mrb[0].mxu0
      %v3390 = vadd.f32 %v2173, %v3389
      %v3391 = vpop.f32.mrb[0].mxu0
      %v3392 = vadd.f32 %v2175, %v3391
      %3393 = vmatprep.mubr.f32.mxu0 0.0
      %3394 = vmatmul.mubr.f32.gmra.mrb[0].mxu0 %v2592
      %v3395 = vpop.f32.mrb[0].mxu0
      %v3396 = vadd.f32 %v2179, %v3395
      %v3397 = vpop.f32.mrb[0].mxu0
      %v3398 = vadd.f32 %v2181, %v3397
      %3399 = vmatprep.mubr.f32.mxu0 0.0
      %3400 = vmatmul.mubr.f32.gmra.mrb[0].mxu0 %v2595
      %v3401 = vpop.f32.mrb[0].mxu0
      %v3402 = vadd.f32 %v2185, %v3401
      %v3403 = vpop.f32.mrb[0].mxu0
      %v3404 = vadd.f32 %v2187, %v3403
      %3405 = vmatprep.mubr.f32.mxu0 0.0
      %3406 = vmatmul.mubr.f32.gmra.mrb[0].mxu0 %v2598
      %v3407 = vpop.f32.mrb[0].mxu0
      %v3408 = vadd.f32 %v2191, %v3407
      %v3409 = vpop.f32.mrb[0].mxu0
      %v3410 = vadd.f32 %v2193, %v3409
      %3411 = vmatprep.mubr.f32.mxu0 0.0
      %3412 = vmatmul.mubr.f32.gmra.mrb[0].mxu0 %v2601
      %v3413 = vpop.f32.mrb[0].mxu0
      %v3414 = vadd.f32 %v2197, %v3413
      %v3415 = vpop.f32.mrb[0].mxu0
      %v3416 = vadd.f32 %v2199, %v3415
      %3417 = vmatprep.mubr.f32.mxu0 0.0
      %3418 = vmatmul.mubr.f32.gmra.mrb[0].mxu0 %v2604
      %v3419 = vpop.f32.mrb[0].mxu0
      %v3420 = vadd.f32 %v2203, %v3419
      %v3421 = vpop.f32.mrb[0].mxu0
      %v3422 = vadd.f32 %v2205, %v3421
      %3423 = vmatprep.mubr.f32.mxu0 0.0
      %3424 = vmatmul.mubr.f32.gmra.mrb[0].mxu0 %v2607
      %v3425 = vpop.f32.mrb[0].mxu0
      %v3426 = vadd.f32 %v2209, %v3425
      %v3427 = vpop.f32.mrb[0].mxu0
      %v3428 = vadd.f32 %v2211, %v3427
      %3429 = vmatprep.mubr.f32.mxu0 0.0
      %3430 = vmatmul.mubr.f32.gmra.mrb[0].mxu0 %v2610
      %v3431 = vpop.f32.mrb[0].mxu0
      %v3432 = vadd.f32 %v2215, %v3431
      %v3433 = vpop.f32.mrb[0].mxu0
      %v3434 = vadd.f32 %v2217, %v3433
      %3435 = vmatprep.mubr.f32.mxu0 0.0
      %3436 = vmatmul.mubr.f32.gmra.mrb[0].mxu0 %v2613
      %v3437 = vpop.f32.mrb[0].mxu0
      %v3438 = vadd.f32 %v2221, %v3437
      %v3439 = vpop.f32.mrb[0].mxu0
      %v3440 = vadd.f32 %v2223, %v3439
      %3441 = vmatprep.mubr.f32.mxu0 0.0
      %3442 = vmatmul.mubr.f32.gmra.mrb[0].mxu0 %v2616
      %v3443 = vpop.f32.mrb[0].mxu0
      %v3444 = vadd.f32 %v2227, %v3443
      %v3445 = vpop.f32.mrb[0].mxu0
      %v3446 = vadd.f32 %v2229, %v3445
      %3447 = vmatprep.mubr.f32.mxu0 0.0
      %3448 = vmatmul.mubr.f32.gmra.mrb[0].mxu0 %v2619
      %v3449 = vpop.f32.mrb[0].mxu0
      %v3450 = vadd.f32 %v2233, %v3449
      %v3451 = vpop.f32.mrb[0].mxu0
      %v3452 = vadd.f32 %v2235, %v3451
      %3453 = vdwg.mxu0
      %v3454 = vld [vmem:[%s4] sm:$0x3]
      %v3456 = vlaneseq
      %v3457 = vshrl.u32 %v3456, 7
      %v3458 = vsub.s32 0, %v3457
      %v3459 = vrot.slane %v3454, %v3458
      %v3460 = vlaneseq
      %v3461 = vshrl.u32 %v3460, 7
      %v3462 = vsub.s32 1, %v3461
      %v3463 = vrot.slane %v3454, %v3462
      %v3466 = vadd.f32 %v2688, %v3459
      %v3467 = vadd.f32 %v2690, %v3463
      %v3468 = vadd.f32 %v2694, %v3459
      %v3469 = vadd.f32 %v2696, %v3463
      %v3470 = vadd.f32 %v2700, %v3459
      %v3471 = vadd.f32 %v2702, %v3463
      %v3472 = vadd.f32 %v2706, %v3459
      %v3473 = vadd.f32 %v2708, %v3463
      %v3474 = vadd.f32 %v2712, %v3459
      %v3475 = vadd.f32 %v2714, %v3463
      %v3476 = vadd.f32 %v2718, %v3459
      %v3477 = vadd.f32 %v2720, %v3463
      %v3478 = vadd.f32 %v2724, %v3459
      %v3479 = vadd.f32 %v2726, %v3463
      %v3480 = vadd.f32 %v2730, %v3459
      %v3481 = vadd.f32 %v2732, %v3463
      %v3482 = vadd.f32 %v2736, %v3459
      %v3483 = vadd.f32 %v2738, %v3463
      %v3484 = vadd.f32 %v2742, %v3459
      %v3485 = vadd.f32 %v2744, %v3463
      %v3486 = vadd.f32 %v2748, %v3459
      %v3487 = vadd.f32 %v2750, %v3463
      %v3488 = vadd.f32 %v2754, %v3459
      %v3489 = vadd.f32 %v2756, %v3463
      %v3490 = vadd.f32 %v2760, %v3459
      %v3491 = vadd.f32 %v2762, %v3463
      %v3492 = vadd.f32 %v2766, %v3459
      %v3493 = vadd.f32 %v2768, %v3463
      %v3494 = vadd.f32 %v2772, %v3459
      %v3495 = vadd.f32 %v2774, %v3463
      %v3496 = vadd.f32 %v2778, %v3459
      %v3497 = vadd.f32 %v2780, %v3463
      %v3498 = vadd.f32 %v2784, %v3459
      %v3499 = vadd.f32 %v2786, %v3463
      %v3500 = vadd.f32 %v2790, %v3459
      %v3501 = vadd.f32 %v2792, %v3463
      %v3502 = vadd.f32 %v2796, %v3459
      %v3503 = vadd.f32 %v2798, %v3463
      %v3504 = vadd.f32 %v2802, %v3459
      %v3505 = vadd.f32 %v2804, %v3463
      %v3506 = vadd.f32 %v2808, %v3459
      %v3507 = vadd.f32 %v2810, %v3463
      %v3508 = vadd.f32 %v2814, %v3459
      %v3509 = vadd.f32 %v2816, %v3463
      %v3510 = vadd.f32 %v2820, %v3459
      %v3511 = vadd.f32 %v2822, %v3463
      %v3512 = vadd.f32 %v2826, %v3459
      %v3513 = vadd.f32 %v2828, %v3463
      %v3514 = vadd.f32 %v2832, %v3459
      %v3515 = vadd.f32 %v2834, %v3463
      %v3516 = vadd.f32 %v2838, %v3459
      %v3517 = vadd.f32 %v2840, %v3463
      %v3518 = vadd.f32 %v2844, %v3459
      %v3519 = vadd.f32 %v2846, %v3463
      %v3520 = vadd.f32 %v2850, %v3459
      %v3521 = vadd.f32 %v2852, %v3463
      %v3522 = vadd.f32 %v2856, %v3459
      %v3523 = vadd.f32 %v2858, %v3463
      %v3524 = vadd.f32 %v2862, %v3459
      %v3525 = vadd.f32 %v2864, %v3463
      %v3526 = vadd.f32 %v2868, %v3459
      %v3527 = vadd.f32 %v2870, %v3463
      %v3528 = vadd.f32 %v2874, %v3459
      %v3529 = vadd.f32 %v2876, %v3463
      %v3530 = vadd.f32 %v2880, %v3459
      %v3531 = vadd.f32 %v2882, %v3463
      %v3532 = vadd.f32 %v2886, %v3459
      %v3533 = vadd.f32 %v2888, %v3463
      %v3534 = vadd.f32 %v2892, %v3459
      %v3535 = vadd.f32 %v2894, %v3463
      %v3536 = vadd.f32 %v2898, %v3459
      %v3537 = vadd.f32 %v2900, %v3463
      %v3538 = vadd.f32 %v2904, %v3459
      %v3539 = vadd.f32 %v2906, %v3463
      %v3540 = vadd.f32 %v2910, %v3459
      %v3541 = vadd.f32 %v2912, %v3463
      %v3542 = vadd.f32 %v2916, %v3459
      %v3543 = vadd.f32 %v2918, %v3463
      %v3544 = vadd.f32 %v2922, %v3459
      %v3545 = vadd.f32 %v2924, %v3463
      %v3546 = vadd.f32 %v2928, %v3459
      %v3547 = vadd.f32 %v2930, %v3463
      %v3548 = vadd.f32 %v2934, %v3459
      %v3549 = vadd.f32 %v2936, %v3463
      %v3550 = vadd.f32 %v2940, %v3459
      %v3551 = vadd.f32 %v2942, %v3463
      %v3552 = vadd.f32 %v2946, %v3459
      %v3553 = vadd.f32 %v2948, %v3463
      %v3554 = vadd.f32 %v2952, %v3459
      %v3555 = vadd.f32 %v2954, %v3463
      %v3556 = vadd.f32 %v2958, %v3459
      %v3557 = vadd.f32 %v2960, %v3463
      %v3558 = vadd.f32 %v2964, %v3459
      %v3559 = vadd.f32 %v2966, %v3463
      %v3560 = vadd.f32 %v2970, %v3459
      %v3561 = vadd.f32 %v2972, %v3463
      %v3562 = vadd.f32 %v2976, %v3459
      %v3563 = vadd.f32 %v2978, %v3463
      %v3564 = vadd.f32 %v2982, %v3459
      %v3565 = vadd.f32 %v2984, %v3463
      %v3566 = vadd.f32 %v2988, %v3459
      %v3567 = vadd.f32 %v2990, %v3463
      %v3568 = vadd.f32 %v2994, %v3459
      %v3569 = vadd.f32 %v2996, %v3463
      %v3570 = vadd.f32 %v3000, %v3459
      %v3571 = vadd.f32 %v3002, %v3463
      %v3572 = vadd.f32 %v3006, %v3459
      %v3573 = vadd.f32 %v3008, %v3463
      %v3574 = vadd.f32 %v3012, %v3459
      %v3575 = vadd.f32 %v3014, %v3463
      %v3576 = vadd.f32 %v3018, %v3459
      %v3577 = vadd.f32 %v3020, %v3463
      %v3578 = vadd.f32 %v3024, %v3459
      %v3579 = vadd.f32 %v3026, %v3463
      %v3580 = vadd.f32 %v3030, %v3459
      %v3581 = vadd.f32 %v3032, %v3463
      %v3582 = vadd.f32 %v3036, %v3459
      %v3583 = vadd.f32 %v3038, %v3463
      %v3584 = vadd.f32 %v3042, %v3459
      %v3585 = vadd.f32 %v3044, %v3463
      %v3586 = vadd.f32 %v3048, %v3459
      %v3587 = vadd.f32 %v3050, %v3463
      %v3588 = vadd.f32 %v3054, %v3459
      %v3589 = vadd.f32 %v3056, %v3463
      %v3590 = vadd.f32 %v3060, %v3459
      %v3591 = vadd.f32 %v3062, %v3463
      %v3592 = vadd.f32 %v3066, %v3459
      %v3593 = vadd.f32 %v3068, %v3463
      %v3594 = vadd.f32 %v3072, %v3459
      %v3595 = vadd.f32 %v3074, %v3463
      %v3596 = vadd.f32 %v3078, %v3459
      %v3597 = vadd.f32 %v3080, %v3463
      %v3598 = vadd.f32 %v3084, %v3459
      %v3599 = vadd.f32 %v3086, %v3463
      %v3600 = vadd.f32 %v3090, %v3459
      %v3601 = vadd.f32 %v3092, %v3463
      %v3602 = vadd.f32 %v3096, %v3459
      %v3603 = vadd.f32 %v3098, %v3463
      %v3604 = vadd.f32 %v3102, %v3459
      %v3605 = vadd.f32 %v3104, %v3463
      %v3606 = vadd.f32 %v3108, %v3459
      %v3607 = vadd.f32 %v3110, %v3463
      %v3608 = vadd.f32 %v3114, %v3459
      %v3609 = vadd.f32 %v3116, %v3463
      %v3610 = vadd.f32 %v3120, %v3459
      %v3611 = vadd.f32 %v3122, %v3463
      %v3612 = vadd.f32 %v3126, %v3459
      %v3613 = vadd.f32 %v3128, %v3463
      %v3614 = vadd.f32 %v3132, %v3459
      %v3615 = vadd.f32 %v3134, %v3463
      %v3616 = vadd.f32 %v3138, %v3459
      %v3617 = vadd.f32 %v3140, %v3463
      %v3618 = vadd.f32 %v3144, %v3459
      %v3619 = vadd.f32 %v3146, %v3463
      %v3620 = vadd.f32 %v3150, %v3459
      %v3621 = vadd.f32 %v3152, %v3463
      %v3622 = vadd.f32 %v3156, %v3459
      %v3623 = vadd.f32 %v3158, %v3463
      %v3624 = vadd.f32 %v3162, %v3459
      %v3625 = vadd.f32 %v3164, %v3463
      %v3626 = vadd.f32 %v3168, %v3459
      %v3627 = vadd.f32 %v3170, %v3463
      %v3628 = vadd.f32 %v3174, %v3459
      %v3629 = vadd.f32 %v3176, %v3463
      %v3630 = vadd.f32 %v3180, %v3459
      %v3631 = vadd.f32 %v3182, %v3463
      %v3632 = vadd.f32 %v3186, %v3459
      %v3633 = vadd.f32 %v3188, %v3463
      %v3634 = vadd.f32 %v3192, %v3459
      %v3635 = vadd.f32 %v3194, %v3463
      %v3636 = vadd.f32 %v3198, %v3459
      %v3637 = vadd.f32 %v3200, %v3463
      %v3638 = vadd.f32 %v3204, %v3459
      %v3639 = vadd.f32 %v3206, %v3463
      %v3640 = vadd.f32 %v3210, %v3459
      %v3641 = vadd.f32 %v3212, %v3463
      %v3642 = vadd.f32 %v3216, %v3459
      %v3643 = vadd.f32 %v3218, %v3463
      %v3644 = vadd.f32 %v3222, %v3459
      %v3645 = vadd.f32 %v3224, %v3463
      %v3646 = vadd.f32 %v3228, %v3459
      %v3647 = vadd.f32 %v3230, %v3463
      %v3648 = vadd.f32 %v3234, %v3459
      %v3649 = vadd.f32 %v3236, %v3463
      %v3650 = vadd.f32 %v3240, %v3459
      %v3651 = vadd.f32 %v3242, %v3463
      %v3652 = vadd.f32 %v3246, %v3459
      %v3653 = vadd.f32 %v3248, %v3463
      %v3654 = vadd.f32 %v3252, %v3459
      %v3655 = vadd.f32 %v3254, %v3463
      %v3656 = vadd.f32 %v3258, %v3459
      %v3657 = vadd.f32 %v3260, %v3463
      %v3658 = vadd.f32 %v3264, %v3459
      %v3659 = vadd.f32 %v3266, %v3463
      %v3660 = vadd.f32 %v3270, %v3459
      %v3661 = vadd.f32 %v3272, %v3463
      %v3662 = vadd.f32 %v3276, %v3459
      %v3663 = vadd.f32 %v3278, %v3463
      %v3664 = vadd.f32 %v3282, %v3459
      %v3665 = vadd.f32 %v3284, %v3463
      %v3666 = vadd.f32 %v3288, %v3459
      %v3667 = vadd.f32 %v3290, %v3463
      %v3668 = vadd.f32 %v3294, %v3459
      %v3669 = vadd.f32 %v3296, %v3463
      %v3670 = vadd.f32 %v3300, %v3459
      %v3671 = vadd.f32 %v3302, %v3463
      %v3672 = vadd.f32 %v3306, %v3459
      %v3673 = vadd.f32 %v3308, %v3463
      %v3674 = vadd.f32 %v3312, %v3459
      %v3675 = vadd.f32 %v3314, %v3463
      %v3676 = vadd.f32 %v3318, %v3459
      %v3677 = vadd.f32 %v3320, %v3463
      %v3678 = vadd.f32 %v3324, %v3459
      %v3679 = vadd.f32 %v3326, %v3463
      %v3680 = vadd.f32 %v3330, %v3459
      %v3681 = vadd.f32 %v3332, %v3463
      %v3682 = vadd.f32 %v3336, %v3459
      %v3683 = vadd.f32 %v3338, %v3463
      %v3684 = vadd.f32 %v3342, %v3459
      %v3685 = vadd.f32 %v3344, %v3463
      %v3686 = vadd.f32 %v3348, %v3459
      %v3687 = vadd.f32 %v3350, %v3463
      %v3688 = vadd.f32 %v3354, %v3459
      %v3689 = vadd.f32 %v3356, %v3463
      %v3690 = vadd.f32 %v3360, %v3459
      %v3691 = vadd.f32 %v3362, %v3463
      %v3692 = vadd.f32 %v3366, %v3459
      %v3693 = vadd.f32 %v3368, %v3463
      %v3694 = vadd.f32 %v3372, %v3459
      %v3695 = vadd.f32 %v3374, %v3463
      %v3696 = vadd.f32 %v3378, %v3459
      %v3697 = vadd.f32 %v3380, %v3463
      %v3698 = vadd.f32 %v3384, %v3459
      %v3699 = vadd.f32 %v3386, %v3463
      %v3700 = vadd.f32 %v3390, %v3459
      %v3701 = vadd.f32 %v3392, %v3463
      %v3702 = vadd.f32 %v3396, %v3459
      %v3703 = vadd.f32 %v3398, %v3463
      %v3704 = vadd.f32 %v3402, %v3459
      %v3705 = vadd.f32 %v3404, %v3463
      %v3706 = vadd.f32 %v3408, %v3459
      %v3707 = vadd.f32 %v3410, %v3463
      %v3708 = vadd.f32 %v3414, %v3459
      %v3709 = vadd.f32 %v3416, %v3463
      %v3710 = vadd.f32 %v3420, %v3459
      %v3711 = vadd.f32 %v3422, %v3463
      %v3712 = vadd.f32 %v3426, %v3459
      %v3713 = vadd.f32 %v3428, %v3463
      %v3714 = vadd.f32 %v3432, %v3459
      %v3715 = vadd.f32 %v3434, %v3463
      %v3716 = vadd.f32 %v3438, %v3459
      %v3717 = vadd.f32 %v3440, %v3463
      %v3718 = vadd.f32 %v3444, %v3459
      %v3719 = vadd.f32 %v3446, %v3463
      %v3720 = vadd.f32 %v3450, %v3459
      %v3721 = vadd.f32 %v3452, %v3463
      %vm3722 = vcmp.gt.f32.partialorder %v3466, 0.0
      %vm3723 = vcmp.gt.f32.partialorder %v3467, 0.0
      %vm3724 = vcmp.gt.f32.partialorder %v3468, 0.0
      %vm3725 = vcmp.gt.f32.partialorder %v3469, 0.0
      %vm3726 = vcmp.gt.f32.partialorder %v3470, 0.0
      %vm3727 = vcmp.gt.f32.partialorder %v3471, 0.0
      %vm3728 = vcmp.gt.f32.partialorder %v3472, 0.0
      %vm3729 = vcmp.gt.f32.partialorder %v3473, 0.0
      %vm3730 = vcmp.gt.f32.partialorder %v3474, 0.0
      %vm3731 = vcmp.gt.f32.partialorder %v3475, 0.0
      %vm3732 = vcmp.gt.f32.partialorder %v3476, 0.0
      %vm3733 = vcmp.gt.f32.partialorder %v3477, 0.0
      %vm3734 = vcmp.gt.f32.partialorder %v3478, 0.0
      %vm3735 = vcmp.gt.f32.partialorder %v3479, 0.0
      %vm3736 = vcmp.gt.f32.partialorder %v3480, 0.0
      %vm3737 = vcmp.gt.f32.partialorder %v3481, 0.0
      %vm3738 = vcmp.gt.f32.partialorder %v3482, 0.0
      %vm3739 = vcmp.gt.f32.partialorder %v3483, 0.0
      %vm3740 = vcmp.gt.f32.partialorder %v3484, 0.0
      %vm3741 = vcmp.gt.f32.partialorder %v3485, 0.0
      %vm3742 = vcmp.gt.f32.partialorder %v3486, 0.0
      %vm3743 = vcmp.gt.f32.partialorder %v3487, 0.0
      %vm3744 = vcmp.gt.f32.partialorder %v3488, 0.0
      %vm3745 = vcmp.gt.f32.partialorder %v3489, 0.0
      %vm3746 = vcmp.gt.f32.partialorder %v3490, 0.0
      %vm3747 = vcmp.gt.f32.partialorder %v3491, 0.0
      %vm3748 = vcmp.gt.f32.partialorder %v3492, 0.0
      %vm3749 = vcmp.gt.f32.partialorder %v3493, 0.0
      %vm3750 = vcmp.gt.f32.partialorder %v3494, 0.0
      %vm3751 = vcmp.gt.f32.partialorder %v3495, 0.0
      %vm3752 = vcmp.gt.f32.partialorder %v3496, 0.0
      %vm3753 = vcmp.gt.f32.partialorder %v3497, 0.0
      %vm3754 = vcmp.gt.f32.partialorder %v3498, 0.0
      %vm3755 = vcmp.gt.f32.partialorder %v3499, 0.0
      %vm3756 = vcmp.gt.f32.partialorder %v3500, 0.0
      %vm3757 = vcmp.gt.f32.partialorder %v3501, 0.0
      %vm3758 = vcmp.gt.f32.partialorder %v3502, 0.0
      %vm3759 = vcmp.gt.f32.partialorder %v3503, 0.0
      %vm3760 = vcmp.gt.f32.partialorder %v3504, 0.0
      %vm3761 = vcmp.gt.f32.partialorder %v3505, 0.0
      %vm3762 = vcmp.gt.f32.partialorder %v3506, 0.0
      %vm3763 = vcmp.gt.f32.partialorder %v3507, 0.0
      %vm3764 = vcmp.gt.f32.partialorder %v3508, 0.0
      %vm3765 = vcmp.gt.f32.partialorder %v3509, 0.0
      %vm3766 = vcmp.gt.f32.partialorder %v3510, 0.0
      %vm3767 = vcmp.gt.f32.partialorder %v3511, 0.0
      %vm3768 = vcmp.gt.f32.partialorder %v3512, 0.0
      %vm3769 = vcmp.gt.f32.partialorder %v3513, 0.0
      %vm3770 = vcmp.gt.f32.partialorder %v3514, 0.0
      %vm3771 = vcmp.gt.f32.partialorder %v3515, 0.0
      %vm3772 = vcmp.gt.f32.partialorder %v3516, 0.0
      %vm3773 = vcmp.gt.f32.partialorder %v3517, 0.0
      %vm3774 = vcmp.gt.f32.partialorder %v3518, 0.0
      %vm3775 = vcmp.gt.f32.partialorder %v3519, 0.0
      %vm3776 = vcmp.gt.f32.partialorder %v3520, 0.0
      %vm3777 = vcmp.gt.f32.partialorder %v3521, 0.0
      %vm3778 = vcmp.gt.f32.partialorder %v3522, 0.0
      %vm3779 = vcmp.gt.f32.partialorder %v3523, 0.0
      %vm3780 = vcmp.gt.f32.partialorder %v3524, 0.0
      %vm3781 = vcmp.gt.f32.partialorder %v3525, 0.0
      %vm3782 = vcmp.gt.f32.partialorder %v3526, 0.0
      %vm3783 = vcmp.gt.f32.partialorder %v3527, 0.0
      %vm3784 = vcmp.gt.f32.partialorder %v3528, 0.0
      %vm3785 = vcmp.gt.f32.partialorder %v3529, 0.0
      %vm3786 = vcmp.gt.f32.partialorder %v3530, 0.0
      %vm3787 = vcmp.gt.f32.partialorder %v3531, 0.0
      %vm3788 = vcmp.gt.f32.partialorder %v3532, 0.0
      %vm3789 = vcmp.gt.f32.partialorder %v3533, 0.0
      %vm3790 = vcmp.gt.f32.partialorder %v3534, 0.0
      %vm3791 = vcmp.gt.f32.partialorder %v3535, 0.0
      %vm3792 = vcmp.gt.f32.partialorder %v3536, 0.0
      %vm3793 = vcmp.gt.f32.partialorder %v3537, 0.0
      %vm3794 = vcmp.gt.f32.partialorder %v3538, 0.0
      %vm3795 = vcmp.gt.f32.partialorder %v3539, 0.0
      %vm3796 = vcmp.gt.f32.partialorder %v3540, 0.0
      %vm3797 = vcmp.gt.f32.partialorder %v3541, 0.0
      %vm3798 = vcmp.gt.f32.partialorder %v3542, 0.0
      %vm3799 = vcmp.gt.f32.partialorder %v3543, 0.0
      %vm3800 = vcmp.gt.f32.partialorder %v3544, 0.0
      %vm3801 = vcmp.gt.f32.partialorder %v3545, 0.0
      %vm3802 = vcmp.gt.f32.partialorder %v3546, 0.0
      %vm3803 = vcmp.gt.f32.partialorder %v3547, 0.0
      %vm3804 = vcmp.gt.f32.partialorder %v3548, 0.0
      %vm3805 = vcmp.gt.f32.partialorder %v3549, 0.0
      %vm3806 = vcmp.gt.f32.partialorder %v3550, 0.0
      %vm3807 = vcmp.gt.f32.partialorder %v3551, 0.0
      %vm3808 = vcmp.gt.f32.partialorder %v3552, 0.0
      %vm3809 = vcmp.gt.f32.partialorder %v3553, 0.0
      %vm3810 = vcmp.gt.f32.partialorder %v3554, 0.0
      %vm3811 = vcmp.gt.f32.partialorder %v3555, 0.0
      %vm3812 = vcmp.gt.f32.partialorder %v3556, 0.0
      %vm3813 = vcmp.gt.f32.partialorder %v3557, 0.0
      %vm3814 = vcmp.gt.f32.partialorder %v3558, 0.0
      %vm3815 = vcmp.gt.f32.partialorder %v3559, 0.0
      %vm3816 = vcmp.gt.f32.partialorder %v3560, 0.0
      %vm3817 = vcmp.gt.f32.partialorder %v3561, 0.0
      %vm3818 = vcmp.gt.f32.partialorder %v3562, 0.0
      %vm3819 = vcmp.gt.f32.partialorder %v3563, 0.0
      %vm3820 = vcmp.gt.f32.partialorder %v3564, 0.0
      %vm3821 = vcmp.gt.f32.partialorder %v3565, 0.0
      %vm3822 = vcmp.gt.f32.partialorder %v3566, 0.0
      %vm3823 = vcmp.gt.f32.partialorder %v3567, 0.0
      %vm3824 = vcmp.gt.f32.partialorder %v3568, 0.0
      %vm3825 = vcmp.gt.f32.partialorder %v3569, 0.0
      %vm3826 = vcmp.gt.f32.partialorder %v3570, 0.0
      %vm3827 = vcmp.gt.f32.partialorder %v3571, 0.0
      %vm3828 = vcmp.gt.f32.partialorder %v3572, 0.0
      %vm3829 = vcmp.gt.f32.partialorder %v3573, 0.0
      %vm3830 = vcmp.gt.f32.partialorder %v3574, 0.0
      %vm3831 = vcmp.gt.f32.partialorder %v3575, 0.0
      %vm3832 = vcmp.gt.f32.partialorder %v3576, 0.0
      %vm3833 = vcmp.gt.f32.partialorder %v3577, 0.0
      %vm3834 = vcmp.gt.f32.partialorder %v3578, 0.0
      %vm3835 = vcmp.gt.f32.partialorder %v3579, 0.0
      %vm3836 = vcmp.gt.f32.partialorder %v3580, 0.0
      %vm3837 = vcmp.gt.f32.partialorder %v3581, 0.0
      %vm3838 = vcmp.gt.f32.partialorder %v3582, 0.0
      %vm3839 = vcmp.gt.f32.partialorder %v3583, 0.0
      %vm3840 = vcmp.gt.f32.partialorder %v3584, 0.0
      %vm3841 = vcmp.gt.f32.partialorder %v3585, 0.0
      %vm3842 = vcmp.gt.f32.partialorder %v3586, 0.0
      %vm3843 = vcmp.gt.f32.partialorder %v3587, 0.0
      %vm3844 = vcmp.gt.f32.partialorder %v3588, 0.0
      %vm3845 = vcmp.gt.f32.partialorder %v3589, 0.0
      %vm3846 = vcmp.gt.f32.partialorder %v3590, 0.0
      %vm3847 = vcmp.gt.f32.partialorder %v3591, 0.0
      %vm3848 = vcmp.gt.f32.partialorder %v3592, 0.0
      %vm3849 = vcmp.gt.f32.partialorder %v3593, 0.0
      %vm3850 = vcmp.gt.f32.partialorder %v3594, 0.0
      %vm3851 = vcmp.gt.f32.partialorder %v3595, 0.0
      %vm3852 = vcmp.gt.f32.partialorder %v3596, 0.0
      %vm3853 = vcmp.gt.f32.partialorder %v3597, 0.0
      %vm3854 = vcmp.gt.f32.partialorder %v3598, 0.0
      %vm3855 = vcmp.gt.f32.partialorder %v3599, 0.0
      %vm3856 = vcmp.gt.f32.partialorder %v3600, 0.0
      %vm3857 = vcmp.gt.f32.partialorder %v3601, 0.0
      %vm3858 = vcmp.gt.f32.partialorder %v3602, 0.0
      %vm3859 = vcmp.gt.f32.partialorder %v3603, 0.0
      %vm3860 = vcmp.gt.f32.partialorder %v3604, 0.0
      %vm3861 = vcmp.gt.f32.partialorder %v3605, 0.0
      %vm3862 = vcmp.gt.f32.partialorder %v3606, 0.0
      %vm3863 = vcmp.gt.f32.partialorder %v3607, 0.0
      %vm3864 = vcmp.gt.f32.partialorder %v3608, 0.0
      %vm3865 = vcmp.gt.f32.partialorder %v3609, 0.0
      %vm3866 = vcmp.gt.f32.partialorder %v3610, 0.0
      %vm3867 = vcmp.gt.f32.partialorder %v3611, 0.0
      %vm3868 = vcmp.gt.f32.partialorder %v3612, 0.0
      %vm3869 = vcmp.gt.f32.partialorder %v3613, 0.0
      %vm3870 = vcmp.gt.f32.partialorder %v3614, 0.0
      %vm3871 = vcmp.gt.f32.partialorder %v3615, 0.0
      %vm3872 = vcmp.gt.f32.partialorder %v3616, 0.0
      %vm3873 = vcmp.gt.f32.partialorder %v3617, 0.0
      %vm3874 = vcmp.gt.f32.partialorder %v3618, 0.0
      %vm3875 = vcmp.gt.f32.partialorder %v3619, 0.0
      %vm3876 = vcmp.gt.f32.partialorder %v3620, 0.0
      %vm3877 = vcmp.gt.f32.partialorder %v3621, 0.0
      %vm3878 = vcmp.gt.f32.partialorder %v3622, 0.0
      %vm3879 = vcmp.gt.f32.partialorder %v3623, 0.0
      %vm3880 = vcmp.gt.f32.partialorder %v3624, 0.0
      %vm3881 = vcmp.gt.f32.partialorder %v3625, 0.0
      %vm3882 = vcmp.gt.f32.partialorder %v3626, 0.0
      %vm3883 = vcmp.gt.f32.partialorder %v3627, 0.0
      %vm3884 = vcmp.gt.f32.partialorder %v3628, 0.0
      %vm3885 = vcmp.gt.f32.partialorder %v3629, 0.0
      %vm3886 = vcmp.gt.f32.partialorder %v3630, 0.0
      %vm3887 = vcmp.gt.f32.partialorder %v3631, 0.0
      %vm3888 = vcmp.gt.f32.partialorder %v3632, 0.0
      %vm3889 = vcmp.gt.f32.partialorder %v3633, 0.0
      %vm3890 = vcmp.gt.f32.partialorder %v3634, 0.0
      %vm3891 = vcmp.gt.f32.partialorder %v3635, 0.0
      %vm3892 = vcmp.gt.f32.partialorder %v3636, 0.0
      %vm3893 = vcmp.gt.f32.partialorder %v3637, 0.0
      %vm3894 = vcmp.gt.f32.partialorder %v3638, 0.0
      %vm3895 = vcmp.gt.f32.partialorder %v3639, 0.0
      %vm3896 = vcmp.gt.f32.partialorder %v3640, 0.0
      %vm3897 = vcmp.gt.f32.partialorder %v3641, 0.0
      %vm3898 = vcmp.gt.f32.partialorder %v3642, 0.0
      %vm3899 = vcmp.gt.f32.partialorder %v3643, 0.0
      %vm3900 = vcmp.gt.f32.partialorder %v3644, 0.0
      %vm3901 = vcmp.gt.f32.partialorder %v3645, 0.0
      %vm3902 = vcmp.gt.f32.partialorder %v3646, 0.0
      %vm3903 = vcmp.gt.f32.partialorder %v3647, 0.0
      %vm3904 = vcmp.gt.f32.partialorder %v3648, 0.0
      %vm3905 = vcmp.gt.f32.partialorder %v3649, 0.0
      %vm3906 = vcmp.gt.f32.partialorder %v3650, 0.0
      %vm3907 = vcmp.gt.f32.partialorder %v3651, 0.0
      %vm3908 = vcmp.gt.f32.partialorder %v3652, 0.0
      %vm3909 = vcmp.gt.f32.partialorder %v3653, 0.0
      %vm3910 = vcmp.gt.f32.partialorder %v3654, 0.0
      %vm3911 = vcmp.gt.f32.partialorder %v3655, 0.0
      %vm3912 = vcmp.gt.f32.partialorder %v3656, 0.0
      %vm3913 = vcmp.gt.f32.partialorder %v3657, 0.0
      %vm3914 = vcmp.gt.f32.partialorder %v3658, 0.0
      %vm3915 = vcmp.gt.f32.partialorder %v3659, 0.0
      %vm3916 = vcmp.gt.f32.partialorder %v3660, 0.0
      %vm3917 = vcmp.gt.f32.partialorder %v3661, 0.0
      %vm3918 = vcmp.gt.f32.partialorder %v3662, 0.0
      %vm3919 = vcmp.gt.f32.partialorder %v3663, 0.0
      %vm3920 = vcmp.gt.f32.partialorder %v3664, 0.0
      %vm3921 = vcmp.gt.f32.partialorder %v3665, 0.0
      %vm3922 = vcmp.gt.f32.partialorder %v3666, 0.0
      %vm3923 = vcmp.gt.f32.partialorder %v3667, 0.0
      %vm3924 = vcmp.gt.f32.partialorder %v3668, 0.0
      %vm3925 = vcmp.gt.f32.partialorder %v3669, 0.0
      %vm3926 = vcmp.gt.f32.partialorder %v3670, 0.0
      %vm3927 = vcmp.gt.f32.partialorder %v3671, 0.0
      %vm3928 = vcmp.gt.f32.partialorder %v3672, 0.0
      %vm3929 = vcmp.gt.f32.partialorder %v3673, 0.0
      %vm3930 = vcmp.gt.f32.partialorder %v3674, 0.0
      %vm3931 = vcmp.gt.f32.partialorder %v3675, 0.0
      %vm3932 = vcmp.gt.f32.partialorder %v3676, 0.0
      %vm3933 = vcmp.gt.f32.partialorder %v3677, 0.0
      %vm3934 = vcmp.gt.f32.partialorder %v3678, 0.0
      %vm3935 = vcmp.gt.f32.partialorder %v3679, 0.0
      %vm3936 = vcmp.gt.f32.partialorder %v3680, 0.0
      %vm3937 = vcmp.gt.f32.partialorder %v3681, 0.0
      %vm3938 = vcmp.gt.f32.partialorder %v3682, 0.0
      %vm3939 = vcmp.gt.f32.partialorder %v3683, 0.0
      %vm3940 = vcmp.gt.f32.partialorder %v3684, 0.0
      %vm3941 = vcmp.gt.f32.partialorder %v3685, 0.0
      %vm3942 = vcmp.gt.f32.partialorder %v3686, 0.0
      %vm3943 = vcmp.gt.f32.partialorder %v3687, 0.0
      %vm3944 = vcmp.gt.f32.partialorder %v3688, 0.0
      %vm3945 = vcmp.gt.f32.partialorder %v3689, 0.0
      %vm3946 = vcmp.gt.f32.partialorder %v3690, 0.0
      %vm3947 = vcmp.gt.f32.partialorder %v3691, 0.0
      %vm3948 = vcmp.gt.f32.partialorder %v3692, 0.0
      %vm3949 = vcmp.gt.f32.partialorder %v3693, 0.0
      %vm3950 = vcmp.gt.f32.partialorder %v3694, 0.0
      %vm3951 = vcmp.gt.f32.partialorder %v3695, 0.0
      %vm3952 = vcmp.gt.f32.partialorder %v3696, 0.0
      %vm3953 = vcmp.gt.f32.partialorder %v3697, 0.0
      %vm3954 = vcmp.gt.f32.partialorder %v3698, 0.0
      %vm3955 = vcmp.gt.f32.partialorder %v3699, 0.0
      %vm3956 = vcmp.gt.f32.partialorder %v3700, 0.0
      %vm3957 = vcmp.gt.f32.partialorder %v3701, 0.0
      %vm3958 = vcmp.gt.f32.partialorder %v3702, 0.0
      %vm3959 = vcmp.gt.f32.partialorder %v3703, 0.0
      %vm3960 = vcmp.gt.f32.partialorder %v3704, 0.0
      %vm3961 = vcmp.gt.f32.partialorder %v3705, 0.0
      %vm3962 = vcmp.gt.f32.partialorder %v3706, 0.0
      %vm3963 = vcmp.gt.f32.partialorder %v3707, 0.0
      %vm3964 = vcmp.gt.f32.partialorder %v3708, 0.0
      %vm3965 = vcmp.gt.f32.partialorder %v3709, 0.0
      %vm3966 = vcmp.gt.f32.partialorder %v3710, 0.0
      %vm3967 = vcmp.gt.f32.partialorder %v3711, 0.0
      %vm3968 = vcmp.gt.f32.partialorder %v3712, 0.0
      %vm3969 = vcmp.gt.f32.partialorder %v3713, 0.0
      %vm3970 = vcmp.gt.f32.partialorder %v3714, 0.0
      %vm3971 = vcmp.gt.f32.partialorder %v3715, 0.0
      %vm3972 = vcmp.gt.f32.partialorder %v3716, 0.0
      %vm3973 = vcmp.gt.f32.partialorder %v3717, 0.0
      %vm3974 = vcmp.gt.f32.partialorder %v3718, 0.0
      %vm3975 = vcmp.gt.f32.partialorder %v3719, 0.0
      %vm3976 = vcmp.gt.f32.partialorder %v3720, 0.0
      %vm3977 = vcmp.gt.f32.partialorder %v3721, 0.0
      %v3978 = vld [vmem:[%s5] sm:$0x3]
      %v3980 = vlaneseq
      %v3981 = vshrl.u32 %v3980, 7
      %v3982 = vsub.s32 0, %v3981
      %v3983 = vrot.slane %v3978, %v3982
      %v3984 = vlaneseq
      %v3985 = vshrl.u32 %v3984, 7
      %v3986 = vsub.s32 1, %v3985
      %v3987 = vrot.slane %v3978, %v3986
      %v3990 = vmul.f32 %v3983, %v3466
      %v3991 = vmul.f32 %v3987, %v3467
      %v3992 = vmul.f32 %v3983, %v3468
      %v3993 = vmul.f32 %v3987, %v3469
      %v3994 = vmul.f32 %v3983, %v3470
      %v3995 = vmul.f32 %v3987, %v3471
      %v3996 = vmul.f32 %v3983, %v3472
      %v3997 = vmul.f32 %v3987, %v3473
      %v3998 = vmul.f32 %v3983, %v3474
      %v3999 = vmul.f32 %v3987, %v3475
      %v4000 = vmul.f32 %v3983, %v3476
      %v4001 = vmul.f32 %v3987, %v3477
      %v4002 = vmul.f32 %v3983, %v3478
      %v4003 = vmul.f32 %v3987, %v3479
      %v4004 = vmul.f32 %v3983, %v3480
      %v4005 = vmul.f32 %v3987, %v3481
      %v4006 = vmul.f32 %v3983, %v3482
      %v4007 = vmul.f32 %v3987, %v3483
      %v4008 = vmul.f32 %v3983, %v3484
      %v4009 = vmul.f32 %v3987, %v3485
      %v4010 = vmul.f32 %v3983, %v3486
      %v4011 = vmul.f32 %v3987, %v3487
      %v4012 = vmul.f32 %v3983, %v3488
      %v4013 = vmul.f32 %v3987, %v3489
      %v4014 = vmul.f32 %v3983, %v3490
      %v4015 = vmul.f32 %v3987, %v3491
      %v4016 = vmul.f32 %v3983, %v3492
      %v4017 = vmul.f32 %v3987, %v3493
      %v4018 = vmul.f32 %v3983, %v3494
      %v4019 = vmul.f32 %v3987, %v3495
      %v4020 = vmul.f32 %v3983, %v3496
      %v4021 = vmul.f32 %v3987, %v3497
      %v4022 = vmul.f32 %v3983, %v3498
      %v4023 = vmul.f32 %v3987, %v3499
      %v4024 = vmul.f32 %v3983, %v3500
      %v4025 = vmul.f32 %v3987, %v3501
      %v4026 = vmul.f32 %v3983, %v3502
      %v4027 = vmul.f32 %v3987, %v3503
      %v4028 = vmul.f32 %v3983, %v3504
      %v4029 = vmul.f32 %v3987, %v3505
      %v4030 = vmul.f32 %v3983, %v3506
      %v4031 = vmul.f32 %v3987, %v3507
      %v4032 = vmul.f32 %v3983, %v3508
      %v4033 = vmul.f32 %v3987, %v3509
      %v4034 = vmul.f32 %v3983, %v3510
      %v4035 = vmul.f32 %v3987, %v3511
      %v4036 = vmul.f32 %v3983, %v3512
      %v4037 = vmul.f32 %v3987, %v3513
      %v4038 = vmul.f32 %v3983, %v3514
      %v4039 = vmul.f32 %v3987, %v3515
      %v4040 = vmul.f32 %v3983, %v3516
      %v4041 = vmul.f32 %v3987, %v3517
      %v4042 = vmul.f32 %v3983, %v3518
      %v4043 = vmul.f32 %v3987, %v3519
      %v4044 = vmul.f32 %v3983, %v3520
      %v4045 = vmul.f32 %v3987, %v3521
      %v4046 = vmul.f32 %v3983, %v3522
      %v4047 = vmul.f32 %v3987, %v3523
      %v4048 = vmul.f32 %v3983, %v3524
      %v4049 = vmul.f32 %v3987, %v3525
      %v4050 = vmul.f32 %v3983, %v3526
      %v4051 = vmul.f32 %v3987, %v3527
      %v4052 = vmul.f32 %v3983, %v3528
      %v4053 = vmul.f32 %v3987, %v3529
      %v4054 = vmul.f32 %v3983, %v3530
      %v4055 = vmul.f32 %v3987, %v3531
      %v4056 = vmul.f32 %v3983, %v3532
      %v4057 = vmul.f32 %v3987, %v3533
      %v4058 = vmul.f32 %v3983, %v3534
      %v4059 = vmul.f32 %v3987, %v3535
      %v4060 = vmul.f32 %v3983, %v3536
      %v4061 = vmul.f32 %v3987, %v3537
      %v4062 = vmul.f32 %v3983, %v3538
      %v4063 = vmul.f32 %v3987, %v3539
      %v4064 = vmul.f32 %v3983, %v3540
      %v4065 = vmul.f32 %v3987, %v3541
      %v4066 = vmul.f32 %v3983, %v3542
      %v4067 = vmul.f32 %v3987, %v3543
      %v4068 = vmul.f32 %v3983, %v3544
      %v4069 = vmul.f32 %v3987, %v3545
      %v4070 = vmul.f32 %v3983, %v3546
      %v4071 = vmul.f32 %v3987, %v3547
      %v4072 = vmul.f32 %v3983, %v3548
      %v4073 = vmul.f32 %v3987, %v3549
      %v4074 = vmul.f32 %v3983, %v3550
      %v4075 = vmul.f32 %v3987, %v3551
      %v4076 = vmul.f32 %v3983, %v3552
      %v4077 = vmul.f32 %v3987, %v3553
      %v4078 = vmul.f32 %v3983, %v3554
      %v4079 = vmul.f32 %v3987, %v3555
      %v4080 = vmul.f32 %v3983, %v3556
      %v4081 = vmul.f32 %v3987, %v3557
      %v4082 = vmul.f32 %v3983, %v3558
      %v4083 = vmul.f32 %v3987, %v3559
      %v4084 = vmul.f32 %v3983, %v3560
      %v4085 = vmul.f32 %v3987, %v3561
      %v4086 = vmul.f32 %v3983, %v3562
      %v4087 = vmul.f32 %v3987, %v3563
      %v4088 = vmul.f32 %v3983, %v3564
      %v4089 = vmul.f32 %v3987, %v3565
      %v4090 = vmul.f32 %v3983, %v3566
      %v4091 = vmul.f32 %v3987, %v3567
      %v4092 = vmul.f32 %v3983, %v3568
      %v4093 = vmul.f32 %v3987, %v3569
      %v4094 = vmul.f32 %v3983, %v3570
      %v4095 = vmul.f32 %v3987, %v3571
      %v4096 = vmul.f32 %v3983, %v3572
      %v4097 = vmul.f32 %v3987, %v3573
      %v4098 = vmul.f32 %v3983, %v3574
      %v4099 = vmul.f32 %v3987, %v3575
      %v4100 = vmul.f32 %v3983, %v3576
      %v4101 = vmul.f32 %v3987, %v3577
      %v4102 = vmul.f32 %v3983, %v3578
      %v4103 = vmul.f32 %v3987, %v3579
      %v4104 = vmul.f32 %v3983, %v3580
      %v4105 = vmul.f32 %v3987, %v3581
      %v4106 = vmul.f32 %v3983, %v3582
      %v4107 = vmul.f32 %v3987, %v3583
      %v4108 = vmul.f32 %v3983, %v3584
      %v4109 = vmul.f32 %v3987, %v3585
      %v4110 = vmul.f32 %v3983, %v3586
      %v4111 = vmul.f32 %v3987, %v3587
      %v4112 = vmul.f32 %v3983, %v3588
      %v4113 = vmul.f32 %v3987, %v3589
      %v4114 = vmul.f32 %v3983, %v3590
      %v4115 = vmul.f32 %v3987, %v3591
      %v4116 = vmul.f32 %v3983, %v3592
      %v4117 = vmul.f32 %v3987, %v3593
      %v4118 = vmul.f32 %v3983, %v3594
      %v4119 = vmul.f32 %v3987, %v3595
      %v4120 = vmul.f32 %v3983, %v3596
      %v4121 = vmul.f32 %v3987, %v3597
      %v4122 = vmul.f32 %v3983, %v3598
      %v4123 = vmul.f32 %v3987, %v3599
      %v4124 = vmul.f32 %v3983, %v3600
      %v4125 = vmul.f32 %v3987, %v3601
      %v4126 = vmul.f32 %v3983, %v3602
      %v4127 = vmul.f32 %v3987, %v3603
      %v4128 = vmul.f32 %v3983, %v3604
      %v4129 = vmul.f32 %v3987, %v3605
      %v4130 = vmul.f32 %v3983, %v3606
      %v4131 = vmul.f32 %v3987, %v3607
      %v4132 = vmul.f32 %v3983, %v3608
      %v4133 = vmul.f32 %v3987, %v3609
      %v4134 = vmul.f32 %v3983, %v3610
      %v4135 = vmul.f32 %v3987, %v3611
      %v4136 = vmul.f32 %v3983, %v3612
      %v4137 = vmul.f32 %v3987, %v3613
      %v4138 = vmul.f32 %v3983, %v3614
      %v4139 = vmul.f32 %v3987, %v3615
      %v4140 = vmul.f32 %v3983, %v3616
      %v4141 = vmul.f32 %v3987, %v3617
      %v4142 = vmul.f32 %v3983, %v3618
      %v4143 = vmul.f32 %v3987, %v3619
      %v4144 = vmul.f32 %v3983, %v3620
      %v4145 = vmul.f32 %v3987, %v3621
      %v4146 = vmul.f32 %v3983, %v3622
      %v4147 = vmul.f32 %v3987, %v3623
      %v4148 = vmul.f32 %v3983, %v3624
      %v4149 = vmul.f32 %v3987, %v3625
      %v4150 = vmul.f32 %v3983, %v3626
      %v4151 = vmul.f32 %v3987, %v3627
      %v4152 = vmul.f32 %v3983, %v3628
      %v4153 = vmul.f32 %v3987, %v3629
      %v4154 = vmul.f32 %v3983, %v3630
      %v4155 = vmul.f32 %v3987, %v3631
      %v4156 = vmul.f32 %v3983, %v3632
      %v4157 = vmul.f32 %v3987, %v3633
      %v4158 = vmul.f32 %v3983, %v3634
      %v4159 = vmul.f32 %v3987, %v3635
      %v4160 = vmul.f32 %v3983, %v3636
      %v4161 = vmul.f32 %v3987, %v3637
      %v4162 = vmul.f32 %v3983, %v3638
      %v4163 = vmul.f32 %v3987, %v3639
      %v4164 = vmul.f32 %v3983, %v3640
      %v4165 = vmul.f32 %v3987, %v3641
      %v4166 = vmul.f32 %v3983, %v3642
      %v4167 = vmul.f32 %v3987, %v3643
      %v4168 = vmul.f32 %v3983, %v3644
      %v4169 = vmul.f32 %v3987, %v3645
      %v4170 = vmul.f32 %v3983, %v3646
      %v4171 = vmul.f32 %v3987, %v3647
      %v4172 = vmul.f32 %v3983, %v3648
      %v4173 = vmul.f32 %v3987, %v3649
      %v4174 = vmul.f32 %v3983, %v3650
      %v4175 = vmul.f32 %v3987, %v3651
      %v4176 = vmul.f32 %v3983, %v3652
      %v4177 = vmul.f32 %v3987, %v3653
      %v4178 = vmul.f32 %v3983, %v3654
      %v4179 = vmul.f32 %v3987, %v3655
      %v4180 = vmul.f32 %v3983, %v3656
      %v4181 = vmul.f32 %v3987, %v3657
      %v4182 = vmul.f32 %v3983, %v3658
      %v4183 = vmul.f32 %v3987, %v3659
      %v4184 = vmul.f32 %v3983, %v3660
      %v4185 = vmul.f32 %v3987, %v3661
      %v4186 = vmul.f32 %v3983, %v3662
      %v4187 = vmul.f32 %v3987, %v3663
      %v4188 = vmul.f32 %v3983, %v3664
      %v4189 = vmul.f32 %v3987, %v3665
      %v4190 = vmul.f32 %v3983, %v3666
      %v4191 = vmul.f32 %v3987, %v3667
      %v4192 = vmul.f32 %v3983, %v3668
      %v4193 = vmul.f32 %v3987, %v3669
      %v4194 = vmul.f32 %v3983, %v3670
      %v4195 = vmul.f32 %v3987, %v3671
      %v4196 = vmul.f32 %v3983, %v3672
      %v4197 = vmul.f32 %v3987, %v3673
      %v4198 = vmul.f32 %v3983, %v3674
      %v4199 = vmul.f32 %v3987, %v3675
      %v4200 = vmul.f32 %v3983, %v3676
      %v4201 = vmul.f32 %v3987, %v3677
      %v4202 = vmul.f32 %v3983, %v3678
      %v4203 = vmul.f32 %v3987, %v3679
      %v4204 = vmul.f32 %v3983, %v3680
      %v4205 = vmul.f32 %v3987, %v3681
      %v4206 = vmul.f32 %v3983, %v3682
      %v4207 = vmul.f32 %v3987, %v3683
      %v4208 = vmul.f32 %v3983, %v3684
      %v4209 = vmul.f32 %v3987, %v3685
      %v4210 = vmul.f32 %v3983, %v3686
      %v4211 = vmul.f32 %v3987, %v3687
      %v4212 = vmul.f32 %v3983, %v3688
      %v4213 = vmul.f32 %v3987, %v3689
      %v4214 = vmul.f32 %v3983, %v3690
      %v4215 = vmul.f32 %v3987, %v3691
      %v4216 = vmul.f32 %v3983, %v3692
      %v4217 = vmul.f32 %v3987, %v3693
      %v4218 = vmul.f32 %v3983, %v3694
      %v4219 = vmul.f32 %v3987, %v3695
      %v4220 = vmul.f32 %v3983, %v3696
      %v4221 = vmul.f32 %v3987, %v3697
      %v4222 = vmul.f32 %v3983, %v3698
      %v4223 = vmul.f32 %v3987, %v3699
      %v4224 = vmul.f32 %v3983, %v3700
      %v4225 = vmul.f32 %v3987, %v3701
      %v4226 = vmul.f32 %v3983, %v3702
      %v4227 = vmul.f32 %v3987, %v3703
      %v4228 = vmul.f32 %v3983, %v3704
      %v4229 = vmul.f32 %v3987, %v3705
      %v4230 = vmul.f32 %v3983, %v3706
      %v4231 = vmul.f32 %v3987, %v3707
      %v4232 = vmul.f32 %v3983, %v3708
      %v4233 = vmul.f32 %v3987, %v3709
      %v4234 = vmul.f32 %v3983, %v3710
      %v4235 = vmul.f32 %v3987, %v3711
      %v4236 = vmul.f32 %v3983, %v3712
      %v4237 = vmul.f32 %v3987, %v3713
      %v4238 = vmul.f32 %v3983, %v3714
      %v4239 = vmul.f32 %v3987, %v3715
      %v4240 = vmul.f32 %v3983, %v3716
      %v4241 = vmul.f32 %v3987, %v3717
      %v4242 = vmul.f32 %v3983, %v3718
      %v4243 = vmul.f32 %v3987, %v3719
      %v4244 = vmul.f32 %v3983, %v3720
      %v4245 = vmul.f32 %v3987, %v3721
      %v4246 = vsel %vm3722, %v3466, %v3990
      %v4247 = vsel %vm3723, %v3467, %v3991
      %v4248 = vsel %vm3724, %v3468, %v3992
      %v4249 = vsel %vm3725, %v3469, %v3993
      %v4250 = vsel %vm3726, %v3470, %v3994
      %v4251 = vsel %vm3727, %v3471, %v3995
      %v4252 = vsel %vm3728, %v3472, %v3996
      %v4253 = vsel %vm3729, %v3473, %v3997
      %v4254 = vsel %vm3730, %v3474, %v3998
      %v4255 = vsel %vm3731, %v3475, %v3999
      %v4256 = vsel %vm3732, %v3476, %v4000
      %v4257 = vsel %vm3733, %v3477, %v4001
      %v4258 = vsel %vm3734, %v3478, %v4002
      %v4259 = vsel %vm3735, %v3479, %v4003
      %v4260 = vsel %vm3736, %v3480, %v4004
      %v4261 = vsel %vm3737, %v3481, %v4005
      %v4262 = vsel %vm3738, %v3482, %v4006
      %v4263 = vsel %vm3739, %v3483, %v4007
      %v4264 = vsel %vm3740, %v3484, %v4008
      %v4265 = vsel %vm3741, %v3485, %v4009
      %v4266 = vsel %vm3742, %v3486, %v4010
      %v4267 = vsel %vm3743, %v3487, %v4011
      %v4268 = vsel %vm3744, %v3488, %v4012
      %v4269 = vsel %vm3745, %v3489, %v4013
      %v4270 = vsel %vm3746, %v3490, %v4014
      %v4271 = vsel %vm3747, %v3491, %v4015
      %v4272 = vsel %vm3748, %v3492, %v4016
      %v4273 = vsel %vm3749, %v3493, %v4017
      %v4274 = vsel %vm3750, %v3494, %v4018
      %v4275 = vsel %vm3751, %v3495, %v4019
      %v4276 = vsel %vm3752, %v3496, %v4020
      %v4277 = vsel %vm3753, %v3497, %v4021
      %v4278 = vsel %vm3754, %v3498, %v4022
      %v4279 = vsel %vm3755, %v3499, %v4023
      %v4280 = vsel %vm3756, %v3500, %v4024
      %v4281 = vsel %vm3757, %v3501, %v4025
      %v4282 = vsel %vm3758, %v3502, %v4026
      %v4283 = vsel %vm3759, %v3503, %v4027
      %v4284 = vsel %vm3760, %v3504, %v4028
      %v4285 = vsel %vm3761, %v3505, %v4029
      %v4286 = vsel %vm3762, %v3506, %v4030
      %v4287 = vsel %vm3763, %v3507, %v4031
      %v4288 = vsel %vm3764, %v3508, %v4032
      %v4289 = vsel %vm3765, %v3509, %v4033
      %v4290 = vsel %vm3766, %v3510, %v4034
      %v4291 = vsel %vm3767, %v3511, %v4035
      %v4292 = vsel %vm3768, %v3512, %v4036
      %v4293 = vsel %vm3769, %v3513, %v4037
      %v4294 = vsel %vm3770, %v3514, %v4038
      %v4295 = vsel %vm3771, %v3515, %v4039
      %v4296 = vsel %vm3772, %v3516, %v4040
      %v4297 = vsel %vm3773, %v3517, %v4041
      %v4298 = vsel %vm3774, %v3518, %v4042
      %v4299 = vsel %vm3775, %v3519, %v4043
      %v4300 = vsel %vm3776, %v3520, %v4044
      %v4301 = vsel %vm3777, %v3521, %v4045
      %v4302 = vsel %vm3778, %v3522, %v4046
      %v4303 = vsel %vm3779, %v3523, %v4047
      %v4304 = vsel %vm3780, %v3524, %v4048
      %v4305 = vsel %vm3781, %v3525, %v4049
      %v4306 = vsel %vm3782, %v3526, %v4050
      %v4307 = vsel %vm3783, %v3527, %v4051
      %v4308 = vsel %vm3784, %v3528, %v4052
      %v4309 = vsel %vm3785, %v3529, %v4053
      %v4310 = vsel %vm3786, %v3530, %v4054
      %v4311 = vsel %vm3787, %v3531, %v4055
      %v4312 = vsel %vm3788, %v3532, %v4056
      %v4313 = vsel %vm3789, %v3533, %v4057
      %v4314 = vsel %vm3790, %v3534, %v4058
      %v4315 = vsel %vm3791, %v3535, %v4059
      %v4316 = vsel %vm3792, %v3536, %v4060
      %v4317 = vsel %vm3793, %v3537, %v4061
      %v4318 = vsel %vm3794, %v3538, %v4062
      %v4319 = vsel %vm3795, %v3539, %v4063
      %v4320 = vsel %vm3796, %v3540, %v4064
      %v4321 = vsel %vm3797, %v3541, %v4065
      %v4322 = vsel %vm3798, %v3542, %v4066
      %v4323 = vsel %vm3799, %v3543, %v4067
      %v4324 = vsel %vm3800, %v3544, %v4068
      %v4325 = vsel %vm3801, %v3545, %v4069
      %v4326 = vsel %vm3802, %v3546, %v4070
      %v4327 = vsel %vm3803, %v3547, %v4071
      %v4328 = vsel %vm3804, %v3548, %v4072
      %v4329 = vsel %vm3805, %v3549, %v4073
      %v4330 = vsel %vm3806, %v3550, %v4074
      %v4331 = vsel %vm3807, %v3551, %v4075
      %v4332 = vsel %vm3808, %v3552, %v4076
      %v4333 = vsel %vm3809, %v3553, %v4077
      %v4334 = vsel %vm3810, %v3554, %v4078
      %v4335 = vsel %vm3811, %v3555, %v4079
      %v4336 = vsel %vm3812, %v3556, %v4080
      %v4337 = vsel %vm3813, %v3557, %v4081
      %v4338 = vsel %vm3814, %v3558, %v4082
      %v4339 = vsel %vm3815, %v3559, %v4083
      %v4340 = vsel %vm3816, %v3560, %v4084
      %v4341 = vsel %vm3817, %v3561, %v4085
      %v4342 = vsel %vm3818, %v3562, %v4086
      %v4343 = vsel %vm3819, %v3563, %v4087
      %v4344 = vsel %vm3820, %v3564, %v4088
      %v4345 = vsel %vm3821, %v3565, %v4089
      %v4346 = vsel %vm3822, %v3566, %v4090
      %v4347 = vsel %vm3823, %v3567, %v4091
      %v4348 = vsel %vm3824, %v3568, %v4092
      %v4349 = vsel %vm3825, %v3569, %v4093
      %v4350 = vsel %vm3826, %v3570, %v4094
      %v4351 = vsel %vm3827, %v3571, %v4095
      %v4352 = vsel %vm3828, %v3572, %v4096
      %v4353 = vsel %vm3829, %v3573, %v4097
      %v4354 = vsel %vm3830, %v3574, %v4098
      %v4355 = vsel %vm3831, %v3575, %v4099
      %v4356 = vsel %vm3832, %v3576, %v4100
      %v4357 = vsel %vm3833, %v3577, %v4101
      %v4358 = vsel %vm3834, %v3578, %v4102
      %v4359 = vsel %vm3835, %v3579, %v4103
      %v4360 = vsel %vm3836, %v3580, %v4104
      %v4361 = vsel %vm3837, %v3581, %v4105
      %v4362 = vsel %vm3838, %v3582, %v4106
      %v4363 = vsel %vm3839, %v3583, %v4107
      %v4364 = vsel %vm3840, %v3584, %v4108
      %v4365 = vsel %vm3841, %v3585, %v4109
      %v4366 = vsel %vm3842, %v3586, %v4110
      %v4367 = vsel %vm3843, %v3587, %v4111
      %v4368 = vsel %vm3844, %v3588, %v4112
      %v4369 = vsel %vm3845, %v3589, %v4113
      %v4370 = vsel %vm3846, %v3590, %v4114
      %v4371 = vsel %vm3847, %v3591, %v4115
      %v4372 = vsel %vm3848, %v3592, %v4116
      %v4373 = vsel %vm3849, %v3593, %v4117
      %v4374 = vsel %vm3850, %v3594, %v4118
      %v4375 = vsel %vm3851, %v3595, %v4119
      %v4376 = vsel %vm3852, %v3596, %v4120
      %v4377 = vsel %vm3853, %v3597, %v4121
      %v4378 = vsel %vm3854, %v3598, %v4122
      %v4379 = vsel %vm3855, %v3599, %v4123
      %v4380 = vsel %vm3856, %v3600, %v4124
      %v4381 = vsel %vm3857, %v3601, %v4125
      %v4382 = vsel %vm3858, %v3602, %v4126
      %v4383 = vsel %vm3859, %v3603, %v4127
      %v4384 = vsel %vm3860, %v3604, %v4128
      %v4385 = vsel %vm3861, %v3605, %v4129
      %v4386 = vsel %vm3862, %v3606, %v4130
      %v4387 = vsel %vm3863, %v3607, %v4131
      %v4388 = vsel %vm3864, %v3608, %v4132
      %v4389 = vsel %vm3865, %v3609, %v4133
      %v4390 = vsel %vm3866, %v3610, %v4134
      %v4391 = vsel %vm3867, %v3611, %v4135
      %v4392 = vsel %vm3868, %v3612, %v4136
      %v4393 = vsel %vm3869, %v3613, %v4137
      %v4394 = vsel %vm3870, %v3614, %v4138
      %v4395 = vsel %vm3871, %v3615, %v4139
      %v4396 = vsel %vm3872, %v3616, %v4140
      %v4397 = vsel %vm3873, %v3617, %v4141
      %v4398 = vsel %vm3874, %v3618, %v4142
      %v4399 = vsel %vm3875, %v3619, %v4143
      %v4400 = vsel %vm3876, %v3620, %v4144
      %v4401 = vsel %vm3877, %v3621, %v4145
      %v4402 = vsel %vm3878, %v3622, %v4146
      %v4403 = vsel %vm3879, %v3623, %v4147
      %v4404 = vsel %vm3880, %v3624, %v4148
      %v4405 = vsel %vm3881, %v3625, %v4149
      %v4406 = vsel %vm3882, %v3626, %v4150
      %v4407 = vsel %vm3883, %v3627, %v4151
      %v4408 = vsel %vm3884, %v3628, %v4152
      %v4409 = vsel %vm3885, %v3629, %v4153
      %v4410 = vsel %vm3886, %v3630, %v4154
      %v4411 = vsel %vm3887, %v3631, %v4155
      %v4412 = vsel %vm3888, %v3632, %v4156
      %v4413 = vsel %vm3889, %v3633, %v4157
      %v4414 = vsel %vm3890, %v3634, %v4158
      %v4415 = vsel %vm3891, %v3635, %v4159
      %v4416 = vsel %vm3892, %v3636, %v4160
      %v4417 = vsel %vm3893, %v3637, %v4161
      %v4418 = vsel %vm3894, %v3638, %v4162
      %v4419 = vsel %vm3895, %v3639, %v4163
      %v4420 = vsel %vm3896, %v3640, %v4164
      %v4421 = vsel %vm3897, %v3641, %v4165
      %v4422 = vsel %vm3898, %v3642, %v4166
      %v4423 = vsel %vm3899, %v3643, %v4167
      %v4424 = vsel %vm3900, %v3644, %v4168
      %v4425 = vsel %vm3901, %v3645, %v4169
      %v4426 = vsel %vm3902, %v3646, %v4170
      %v4427 = vsel %vm3903, %v3647, %v4171
      %v4428 = vsel %vm3904, %v3648, %v4172
      %v4429 = vsel %vm3905, %v3649, %v4173
      %v4430 = vsel %vm3906, %v3650, %v4174
      %v4431 = vsel %vm3907, %v3651, %v4175
      %v4432 = vsel %vm3908, %v3652, %v4176
      %v4433 = vsel %vm3909, %v3653, %v4177
      %v4434 = vsel %vm3910, %v3654, %v4178
      %v4435 = vsel %vm3911, %v3655, %v4179
      %v4436 = vsel %vm3912, %v3656, %v4180
      %v4437 = vsel %vm3913, %v3657, %v4181
      %v4438 = vsel %vm3914, %v3658, %v4182
      %v4439 = vsel %vm3915, %v3659, %v4183
      %v4440 = vsel %vm3916, %v3660, %v4184
      %v4441 = vsel %vm3917, %v3661, %v4185
      %v4442 = vsel %vm3918, %v3662, %v4186
      %v4443 = vsel %vm3919, %v3663, %v4187
      %v4444 = vsel %vm3920, %v3664, %v4188
      %v4445 = vsel %vm3921, %v3665, %v4189
      %v4446 = vsel %vm3922, %v3666, %v4190
      %v4447 = vsel %vm3923, %v3667, %v4191
      %v4448 = vsel %vm3924, %v3668, %v4192
      %v4449 = vsel %vm3925, %v3669, %v4193
      %v4450 = vsel %vm3926, %v3670, %v4194
      %v4451 = vsel %vm3927, %v3671, %v4195
      %v4452 = vsel %vm3928, %v3672, %v4196
      %v4453 = vsel %vm3929, %v3673, %v4197
      %v4454 = vsel %vm3930, %v3674, %v4198
      %v4455 = vsel %vm3931, %v3675, %v4199
      %v4456 = vsel %vm3932, %v3676, %v4200
      %v4457 = vsel %vm3933, %v3677, %v4201
      %v4458 = vsel %vm3934, %v3678, %v4202
      %v4459 = vsel %vm3935, %v3679, %v4203
      %v4460 = vsel %vm3936, %v3680, %v4204
      %v4461 = vsel %vm3937, %v3681, %v4205
      %v4462 = vsel %vm3938, %v3682, %v4206
      %v4463 = vsel %vm3939, %v3683, %v4207
      %v4464 = vsel %vm3940, %v3684, %v4208
      %v4465 = vsel %vm3941, %v3685, %v4209
      %v4466 = vsel %vm3942, %v3686, %v4210
      %v4467 = vsel %vm3943, %v3687, %v4211
      %v4468 = vsel %vm3944, %v3688, %v4212
      %v4469 = vsel %vm3945, %v3689, %v4213
      %v4470 = vsel %vm3946, %v3690, %v4214
      %v4471 = vsel %vm3947, %v3691, %v4215
      %v4472 = vsel %vm3948, %v3692, %v4216
      %v4473 = vsel %vm3949, %v3693, %v4217
      %v4474 = vsel %vm3950, %v3694, %v4218
      %v4475 = vsel %vm3951, %v3695, %v4219
      %v4476 = vsel %vm3952, %v3696, %v4220
      %v4477 = vsel %vm3953, %v3697, %v4221
      %v4478 = vsel %vm3954, %v3698, %v4222
      %v4479 = vsel %vm3955, %v3699, %v4223
      %v4480 = vsel %vm3956, %v3700, %v4224
      %v4481 = vsel %vm3957, %v3701, %v4225
      %v4482 = vsel %vm3958, %v3702, %v4226
      %v4483 = vsel %vm3959, %v3703, %v4227
      %v4484 = vsel %vm3960, %v3704, %v4228
      %v4485 = vsel %vm3961, %v3705, %v4229
      %v4486 = vsel %vm3962, %v3706, %v4230
      %v4487 = vsel %vm3963, %v3707, %v4231
      %v4488 = vsel %vm3964, %v3708, %v4232
      %v4489 = vsel %vm3965, %v3709, %v4233
      %v4490 = vsel %vm3966, %v3710, %v4234
      %v4491 = vsel %vm3967, %v3711, %v4235
      %v4492 = vsel %vm3968, %v3712, %v4236
      %v4493 = vsel %vm3969, %v3713, %v4237
      %v4494 = vsel %vm3970, %v3714, %v4238
      %v4495 = vsel %vm3971, %v3715, %v4239
      %v4496 = vsel %vm3972, %v3716, %v4240
      %v4497 = vsel %vm3973, %v3717, %v4241
      %v4498 = vsel %vm3974, %v3718, %v4242
      %v4499 = vsel %vm3975, %v3719, %v4243
      %v4500 = vsel %vm3976, %v3720, %v4244
      %v4501 = vsel %vm3977, %v3721, %v4245
      %v4502 = vld [vmem:[%s6] sm:$0xff]
      %v4503 = vld [vmem:[%s6 + $0x8] sm:$0xff]
      %v4504 = vld [vmem:[%s6 + $0x10] sm:$0xff]
      %v4505 = vld [vmem:[%s6 + $0x18] sm:$0xff]
      %v4506 = vld [vmem:[%s6 + $0x20] sm:$0xff]
      %v4507 = vld [vmem:[%s6 + $0x28] sm:$0xff]
      %v4508 = vld [vmem:[%s6 + $0x30] sm:$0xff]
      %v4509 = vld [vmem:[%s6 + $0x38] sm:$0xff]
      %v4510 = vld [vmem:[%s6 + $0x40] sm:$0xff]
      %v4511 = vld [vmem:[%s6 + $0x48] sm:$0xff]
      %v4512 = vld [vmem:[%s6 + $0x50] sm:$0xff]
      %v4513 = vld [vmem:[%s6 + $0x58] sm:$0xff]
      %v4514 = vld [vmem:[%s6 + $0x60] sm:$0xff]
      %v4515 = vld [vmem:[%s6 + $0x68] sm:$0xff]
      %v4516 = vld [vmem:[%s6 + $0x70] sm:$0xff]
      %v4517 = vld [vmem:[%s6 + $0x78] sm:$0xff]
      %v4518 = vld [vmem:[%s6 + $0x80] sm:$0xff]
      %v4519 = vld [vmem:[%s6 + $0x88] sm:$0xff]
      %v4520 = vld [vmem:[%s6 + $0x90] sm:$0xff]
      %v4521 = vld [vmem:[%s6 + $0x98] sm:$0xff]
      %v4522 = vld [vmem:[%s6 + $0xa0] sm:$0xff]
      %v4523 = vld [vmem:[%s6 + $0xa8] sm:$0xff]
      %v4524 = vld [vmem:[%s6 + $0xb0] sm:$0xff]
      %v4525 = vld [vmem:[%s6 + $0xb8] sm:$0xff]
      %v4526 = vld [vmem:[%s6 + $0xc0] sm:$0xff]
      %v4527 = vld [vmem:[%s6 + $0xc8] sm:$0xff]
      %v4528 = vld [vmem:[%s6 + $0xd0] sm:$0xff]
      %v4529 = vld [vmem:[%s6 + $0xd8] sm:$0xff]
      %v4530 = vld [vmem:[%s6 + $0xe0] sm:$0xff]
      %v4531 = vld [vmem:[%s6 + $0xe8] sm:$0xff]
      %v4532 = vld [vmem:[%s6 + $0xf0] sm:$0xff]
      %v4533 = vld [vmem:[%s6 + $0xf8] sm:$0xff]
      %v4534 = vld [vmem:[%s6 + $0x100] sm:$0xff]
      %v4535 = vld [vmem:[%s6 + $0x108] sm:$0xff]
      %v4536 = vld [vmem:[%s6 + $0x110] sm:$0xff]
      %v4537 = vld [vmem:[%s6 + $0x118] sm:$0xff]
      %v4538 = vld [vmem:[%s6 + $0x120] sm:$0xff]
      %v4539 = vld [vmem:[%s6 + $0x128] sm:$0xff]
      %v4540 = vld [vmem:[%s6 + $0x130] sm:$0xff]
      %v4541 = vld [vmem:[%s6 + $0x138] sm:$0xff]
      %v4542 = vld [vmem:[%s6 + $0x140] sm:$0xff]
      %v4543 = vld [vmem:[%s6 + $0x148] sm:$0xff]
      %v4544 = vld [vmem:[%s6 + $0x150] sm:$0xff]
      %v4545 = vld [vmem:[%s6 + $0x158] sm:$0xff]
      %v4546 = vld [vmem:[%s6 + $0x160] sm:$0xff]
      %v4547 = vld [vmem:[%s6 + $0x168] sm:$0xff]
      %v4548 = vld [vmem:[%s6 + $0x170] sm:$0xff]
      %v4549 = vld [vmem:[%s6 + $0x178] sm:$0xff]
      %v4550 = vld [vmem:[%s7] sm:$0x3]
      %v4552 = vlaneseq
      %v4553 = vshrl.u32 %v4552, 7
      %v4554 = vsub.s32 0, %v4553
      %v4555 = vrot.slane %v4550, %v4554
      %v4556 = vlaneseq
      %v4557 = vshrl.u32 %v4556, 7
      %v4558 = vsub.s32 1, %v4557
      %v4559 = vrot.slane %v4550, %v4558
      %v4563 = vsel %vm1019, %v4247, 0
      %v4566 = vsel %vm1019, %v4249, 0
      %v4569 = vsel %vm1019, %v4251, 0
      %v4572 = vsel %vm1019, %v4253, 0
      %v4575 = vsel %vm1019, %v4255, 0
      %v4578 = vsel %vm1019, %v4257, 0
      %v4581 = vsel %vm1019, %v4259, 0
      %v4584 = vsel %vm1019, %v4261, 0
      %v4587 = vsel %vm1019, %v4263, 0
      %v4590 = vsel %vm1019, %v4265, 0
      %v4593 = vsel %vm1019, %v4267, 0
      %v4596 = vsel %vm1019, %v4269, 0
      %v4599 = vsel %vm1019, %v4271, 0
      %v4602 = vsel %vm1019, %v4273, 0
      %v4605 = vsel %vm1019, %v4275, 0
      %v4608 = vsel %vm1019, %v4277, 0
      %v4611 = vsel %vm1019, %v4279, 0
      %v4614 = vsel %vm1019, %v4281, 0
      %v4617 = vsel %vm1019, %v4283, 0
      %v4620 = vsel %vm1019, %v4285, 0
      %v4623 = vsel %vm1019, %v4287, 0
      %v4626 = vsel %vm1019, %v4289, 0
      %v4629 = vsel %vm1019, %v4291, 0
      %v4632 = vsel %vm1019, %v4293, 0
      %v4635 = vsel %vm1019, %v4295, 0
      %v4638 = vsel %vm1019, %v4297, 0
      %v4641 = vsel %vm1019, %v4299, 0
      %v4644 = vsel %vm1019, %v4301, 0
      %v4647 = vsel %vm1019, %v4303, 0
      %v4650 = vsel %vm1019, %v4305, 0
      %v4653 = vsel %vm1019, %v4307, 0
      %v4656 = vsel %vm1019, %v4309, 0
      %v4659 = vsel %vm1019, %v4311, 0
      %v4662 = vsel %vm1019, %v4313, 0
      %v4665 = vsel %vm1019, %v4315, 0
      %v4668 = vsel %vm1019, %v4317, 0
      %v4671 = vsel %vm1019, %v4319, 0
      %v4674 = vsel %vm1019, %v4321, 0
      %v4677 = vsel %vm1019, %v4323, 0
      %v4680 = vsel %vm1019, %v4325, 0
      %v4683 = vsel %vm1019, %v4327, 0
      %v4686 = vsel %vm1019, %v4329, 0
      %v4689 = vsel %vm1019, %v4331, 0
      %v4692 = vsel %vm1019, %v4333, 0
      %v4695 = vsel %vm1019, %v4335, 0
      %v4698 = vsel %vm1019, %v4337, 0
      %v4701 = vsel %vm1019, %v4339, 0
      %v4704 = vsel %vm1019, %v4341, 0
      %v4707 = vsel %vm1019, %v4343, 0
      %v4710 = vsel %vm1019, %v4345, 0
      %v4713 = vsel %vm1019, %v4347, 0
      %v4716 = vsel %vm1019, %v4349, 0
      %v4719 = vsel %vm1019, %v4351, 0
      %v4722 = vsel %vm1019, %v4353, 0
      %v4725 = vsel %vm1019, %v4355, 0
      %v4728 = vsel %vm1019, %v4357, 0
      %v4731 = vsel %vm1019, %v4359, 0
      %v4734 = vsel %vm1019, %v4361, 0
      %v4737 = vsel %vm1019, %v4363, 0
      %v4740 = vsel %vm1019, %v4365, 0
      %v4743 = vsel %vm1019, %v4367, 0
      %v4746 = vsel %vm1019, %v4369, 0
      %v4749 = vsel %vm1019, %v4371, 0
      %v4752 = vsel %vm1019, %v4373, 0
      %v4755 = vsel %vm1019, %v4375, 0
      %v4758 = vsel %vm1019, %v4377, 0
      %v4761 = vsel %vm1019, %v4379, 0
      %v4764 = vsel %vm1019, %v4381, 0
      %v4767 = vsel %vm1019, %v4383, 0
      %v4770 = vsel %vm1019, %v4385, 0
      %v4773 = vsel %vm1019, %v4387, 0
      %v4776 = vsel %vm1019, %v4389, 0
      %v4779 = vsel %vm1019, %v4391, 0
      %v4782 = vsel %vm1019, %v4393, 0
      %v4785 = vsel %vm1019, %v4395, 0
      %v4788 = vsel %vm1019, %v4397, 0
      %v4791 = vsel %vm1019, %v4399, 0
      %v4794 = vsel %vm1019, %v4401, 0
      %v4797 = vsel %vm1019, %v4403, 0
      %v4800 = vsel %vm1019, %v4405, 0
      %v4803 = vsel %vm1019, %v4407, 0
      %v4806 = vsel %vm1019, %v4409, 0
      %v4809 = vsel %vm1019, %v4411, 0
      %v4812 = vsel %vm1019, %v4413, 0
      %v4815 = vsel %vm1019, %v4415, 0
      %v4818 = vsel %vm1019, %v4417, 0
      %v4821 = vsel %vm1019, %v4419, 0
      %v4824 = vsel %vm1019, %v4421, 0
      %v4827 = vsel %vm1019, %v4423, 0
      %v4830 = vsel %vm1019, %v4425, 0
      %v4833 = vsel %vm1019, %v4427, 0
      %v4836 = vsel %vm1019, %v4429, 0
      %v4839 = vsel %vm1019, %v4431, 0
      %v4842 = vsel %vm1019, %v4433, 0
      %v4845 = vsel %vm1019, %v4435, 0
      %v4848 = vsel %vm1019, %v4437, 0
      %v4851 = vsel %vm1019, %v4439, 0
      %v4854 = vsel %vm1019, %v4441, 0
      %v4857 = vsel %vm1019, %v4443, 0
      %v4860 = vsel %vm1019, %v4445, 0
      %v4863 = vsel %vm1019, %v4447, 0
      %v4866 = vsel %vm1019, %v4449, 0
      %v4869 = vsel %vm1019, %v4451, 0
      %v4872 = vsel %vm1019, %v4453, 0
      %v4875 = vsel %vm1019, %v4455, 0
      %v4878 = vsel %vm1019, %v4457, 0
      %v4881 = vsel %vm1019, %v4459, 0
      %v4884 = vsel %vm1019, %v4461, 0
      %v4887 = vsel %vm1019, %v4463, 0
      %v4890 = vsel %vm1019, %v4465, 0
      %v4893 = vsel %vm1019, %v4467, 0
      %v4896 = vsel %vm1019, %v4469, 0
      %v4899 = vsel %vm1019, %v4471, 0
      %v4902 = vsel %vm1019, %v4473, 0
      %v4905 = vsel %vm1019, %v4475, 0
      %v4908 = vsel %vm1019, %v4477, 0
      %v4911 = vsel %vm1019, %v4479, 0
      %v4914 = vsel %vm1019, %v4481, 0
      %v4917 = vsel %vm1019, %v4483, 0
      %v4920 = vsel %vm1019, %v4485, 0
      %v4923 = vsel %vm1019, %v4487, 0
      %v4926 = vsel %vm1019, %v4489, 0
      %v4929 = vsel %vm1019, %v4491, 0
      %v4932 = vsel %vm1019, %v4493, 0
      %v4935 = vsel %vm1019, %v4495, 0
      %v4938 = vsel %vm1019, %v4497, 0
      %v4941 = vsel %vm1019, %v4499, 0
      %v4944 = vsel %vm1019, %v4501, 0
      %4946 = vmatprep.subr.mxu0 %v4503
      %4947 = vmatpush1.msra.mxu0 %v4502
      %4948 = vmatprep.subr.mxu0 %v4505
      %4949 = vmatpush1.msra.mxu0 %v4504
      %4950 = vmatprep.subr.mxu0 %v4507
      %4951 = vmatpush1.msra.mxu0 %v4506
      %4952 = vmatprep.subr.mxu0 %v4509
      %4953 = vmatpush1.msra.mxu0 %v4508
      %4954 = vmatprep.subr.mxu0 %v4511
      %4955 = vmatpush1.msra.mxu0 %v4510
      %4956 = vmatprep.subr.mxu0 %v4513
      %4957 = vmatpush1.msra.mxu0 %v4512
      %4958 = vmatprep.subr.mxu0 %v4515
      %4959 = vmatpush1.msra.mxu0 %v4514
      %4960 = vmatprep.subr.mxu0 %v4517
      %4961 = vmatpush1.msra.mxu0 %v4516
      %4962 = vmatprep.subr.mxu0 %v4519
      %4963 = vmatpush1.msra.mxu0 %v4518
      %4964 = vmatprep.subr.mxu0 %v4521
      %4965 = vmatpush1.msra.mxu0 %v4520
      %4966 = vmatprep.subr.mxu0 %v4523
      %4967 = vmatpush1.msra.mxu0 %v4522
      %4968 = vmatprep.subr.mxu0 %v4525
      %4969 = vmatpush1.msra.mxu0 %v4524
      %4970 = vmatprep.subr.mxu0 %v4527
      %4971 = vmatpush1.msra.mxu0 %v4526
      %4972 = vmatprep.subr.mxu0 %v4529
      %4973 = vmatpush1.msra.mxu0 %v4528
      %4974 = vmatprep.subr.mxu0 %v4531
      %4975 = vmatpush1.msra.mxu0 %v4530
      %4976 = vmatprep.subr.mxu0 %v4533
      %4977 = vmatpush1.msra.mxu0 %v4532
      %4978 = vmatprep.subr.mxu0 %v4535
      %4979 = vmatpush1.msra.mxu0 %v4534
      %4980 = vmatprep.subr.mxu0 %v4537
      %4981 = vmatpush1.msra.mxu0 %v4536
      %4982 = vmatprep.subr.mxu0 %v4539
      %4983 = vmatpush1.msra.mxu0 %v4538
      %4984 = vmatprep.subr.mxu0 %v4541
      %4985 = vmatpush1.msra.mxu0 %v4540
      %4986 = vmatprep.subr.mxu0 %v4543
      %4987 = vmatpush1.msra.mxu0 %v4542
      %4988 = vmatprep.subr.mxu0 %v4545
      %4989 = vmatpush1.msra.mxu0 %v4544
      %4990 = vmatprep.subr.mxu0 %v4547
      %4991 = vmatpush1.msra.mxu0 %v4546
      %4992 = vmatprep.subr.mxu0 %v4549
      %4993 = vmatpush1.msra.mxu0 %v4548
      %4994 = vmatprep.subr.mxu0 0.0
      %4995 = vmatpush1.msra.mxu0 0.0
      %4996 = vmatprep.subr.mxu0 0.0
      %4997 = vmatpush1.msra.mxu0 0.0
      %4998 = vmatprep.subr.mxu0 0.0
      %4999 = vmatpush1.msra.mxu0 0.0
      %5000 = vmatprep.subr.mxu0 0.0
      %5001 = vmatpush1.msra.mxu0 0.0
      %5002 = vmatprep.subr.mxu0 0.0
      %5003 = vmatpush1.msra.mxu0 0.0
      %5004 = vmatprep.subr.mxu0 0.0
      %5005 = vmatpush1.msra.mxu0 0.0
      %5006 = vmatprep.subr.mxu0 0.0
      %5007 = vmatpush1.msra.mxu0 0.0
      %5008 = vmatprep.subr.mxu0 0.0
      %5009 = vmatpush1.msra.mxu0 0.0
      %5010 = vmatprep.mubr.f32.mxu0 %v4563
      %5011 = vmatmul.mubr.f32.gmra.mrb[0].mxu0 %v4246
      %v5012 = vpop.f32.mrb[0].mxu0
      %v5013 = vadd.f32 %v4555, %v5012
      %v5014 = vpop.f32.mrb[0].mxu0
      %v5015 = vadd.f32 %v4559, %v5014
      %5016 = vmatprep.mubr.f32.mxu0 %v4566
      %5017 = vmatmul.mubr.f32.gmra.mrb[0].mxu0 %v4248
      %v5018 = vpop.f32.mrb[0].mxu0
      %v5019 = vadd.f32 %v4555, %v5018
      %v5020 = vpop.f32.mrb[0].mxu0
      %v5021 = vadd.f32 %v4559, %v5020
      %5022 = vmatprep.mubr.f32.mxu0 %v4569
      %5023 = vmatmul.mubr.f32.gmra.mrb[0].mxu0 %v4250
      %v5024 = vpop.f32.mrb[0].mxu0
      %v5025 = vadd.f32 %v4555, %v5024
      %v5026 = vpop.f32.mrb[0].mxu0
      %v5027 = vadd.f32 %v4559, %v5026
      %5028 = vmatprep.mubr.f32.mxu0 %v4572
      %5029 = vmatmul.mubr.f32.gmra.mrb[0].mxu0 %v4252
      %v5030 = vpop.f32.mrb[0].mxu0
      %v5031 = vadd.f32 %v4555, %v5030
      %v5032 = vpop.f32.mrb[0].mxu0
      %v5033 = vadd.f32 %v4559, %v5032
      %5034 = vmatprep.mubr.f32.mxu0 %v4575
      %5035 = vmatmul.mubr.f32.gmra.mrb[0].mxu0 %v4254
      %v5036 = vpop.f32.mrb[0].mxu0
      %v5037 = vadd.f32 %v4555, %v5036
      %v5038 = vpop.f32.mrb[0].mxu0
      %v5039 = vadd.f32 %v4559, %v5038
      %5040 = vmatprep.mubr.f32.mxu0 %v4578
      %5041 = vmatmul.mubr.f32.gmra.mrb[0].mxu0 %v4256
      %v5042 = vpop.f32.mrb[0].mxu0
      %v5043 = vadd.f32 %v4555, %v5042
      %v5044 = vpop.f32.mrb[0].mxu0
      %v5045 = vadd.f32 %v4559, %v5044
      %5046 = vmatprep.mubr.f32.mxu0 %v4581
      %5047 = vmatmul.mubr.f32.gmra.mrb[0].mxu0 %v4258
      %v5048 = vpop.f32.mrb[0].mxu0
      %v5049 = vadd.f32 %v4555, %v5048
      %v5050 = vpop.f32.mrb[0].mxu0
      %v5051 = vadd.f32 %v4559, %v5050
      %5052 = vmatprep.mubr.f32.mxu0 %v4584
      %5053 = vmatmul.mubr.f32.gmra.mrb[0].mxu0 %v4260
      %v5054 = vpop.f32.mrb[0].mxu0
      %v5055 = vadd.f32 %v4555, %v5054
      %v5056 = vpop.f32.mrb[0].mxu0
      %v5057 = vadd.f32 %v4559, %v5056
      %5058 = vmatprep.mubr.f32.mxu0 %v4587
      %5059 = vmatmul.mubr.f32.gmra.mrb[0].mxu0 %v4262
      %v5060 = vpop.f32.mrb[0].mxu0
      %v5061 = vadd.f32 %v4555, %v5060
      %v5062 = vpop.f32.mrb[0].mxu0
      %v5063 = vadd.f32 %v4559, %v5062
      %5064 = vmatprep.mubr.f32.mxu0 %v4590
      %5065 = vmatmul.mubr.f32.gmra.mrb[0].mxu0 %v4264
      %v5066 = vpop.f32.mrb[0].mxu0
      %v5067 = vadd.f32 %v4555, %v5066
      %v5068 = vpop.f32.mrb[0].mxu0
      %v5069 = vadd.f32 %v4559, %v5068
      %5070 = vmatprep.mubr.f32.mxu0 %v4593
      %5071 = vmatmul.mubr.f32.gmra.mrb[0].mxu0 %v4266
      %v5072 = vpop.f32.mrb[0].mxu0
      %v5073 = vadd.f32 %v4555, %v5072
      %v5074 = vpop.f32.mrb[0].mxu0
      %v5075 = vadd.f32 %v4559, %v5074
      %5076 = vmatprep.mubr.f32.mxu0 %v4596
      %5077 = vmatmul.mubr.f32.gmra.mrb[0].mxu0 %v4268
      %v5078 = vpop.f32.mrb[0].mxu0
      %v5079 = vadd.f32 %v4555, %v5078
      %v5080 = vpop.f32.mrb[0].mxu0
      %v5081 = vadd.f32 %v4559, %v5080
      %5082 = vmatprep.mubr.f32.mxu0 %v4599
      %5083 = vmatmul.mubr.f32.gmra.mrb[0].mxu0 %v4270
      %v5084 = vpop.f32.mrb[0].mxu0
      %v5085 = vadd.f32 %v4555, %v5084
      %v5086 = vpop.f32.mrb[0].mxu0
      %v5087 = vadd.f32 %v4559, %v5086
      %5088 = vmatprep.mubr.f32.mxu0 %v4602
      %5089 = vmatmul.mubr.f32.gmra.mrb[0].mxu0 %v4272
      %v5090 = vpop.f32.mrb[0].mxu0
      %v5091 = vadd.f32 %v4555, %v5090
      %v5092 = vpop.f32.mrb[0].mxu0
      %v5093 = vadd.f32 %v4559, %v5092
      %5094 = vmatprep.mubr.f32.mxu0 %v4605
      %5095 = vmatmul.mubr.f32.gmra.mrb[0].mxu0 %v4274
      %v5096 = vpop.f32.mrb[0].mxu0
      %v5097 = vadd.f32 %v4555, %v5096
      %v5098 = vpop.f32.mrb[0].mxu0
      %v5099 = vadd.f32 %v4559, %v5098
      %5100 = vmatprep.mubr.f32.mxu0 %v4608
      %5101 = vmatmul.mubr.f32.gmra.mrb[0].mxu0 %v4276
      %v5102 = vpop.f32.mrb[0].mxu0
      %v5103 = vadd.f32 %v4555, %v5102
      %v5104 = vpop.f32.mrb[0].mxu0
      %v5105 = vadd.f32 %v4559, %v5104
      %5106 = vmatprep.mubr.f32.mxu0 %v4611
      %5107 = vmatmul.mubr.f32.gmra.mrb[0].mxu0 %v4278
      %v5108 = vpop.f32.mrb[0].mxu0
      %v5109 = vadd.f32 %v4555, %v5108
      %v5110 = vpop.f32.mrb[0].mxu0
      %v5111 = vadd.f32 %v4559, %v5110
      %5112 = vmatprep.mubr.f32.mxu0 %v4614
      %5113 = vmatmul.mubr.f32.gmra.mrb[0].mxu0 %v4280
      %v5114 = vpop.f32.mrb[0].mxu0
      %v5115 = vadd.f32 %v4555, %v5114
      %v5116 = vpop.f32.mrb[0].mxu0
      %v5117 = vadd.f32 %v4559, %v5116
      %5118 = vmatprep.mubr.f32.mxu0 %v4617
      %5119 = vmatmul.mubr.f32.gmra.mrb[0].mxu0 %v4282
      %v5120 = vpop.f32.mrb[0].mxu0
      %v5121 = vadd.f32 %v4555, %v5120
      %v5122 = vpop.f32.mrb[0].mxu0
      %v5123 = vadd.f32 %v4559, %v5122
      %5124 = vmatprep.mubr.f32.mxu0 %v4620
      %5125 = vmatmul.mubr.f32.gmra.mrb[0].mxu0 %v4284
      %v5126 = vpop.f32.mrb[0].mxu0
      %v5127 = vadd.f32 %v4555, %v5126
      %v5128 = vpop.f32.mrb[0].mxu0
      %v5129 = vadd.f32 %v4559, %v5128
      %5130 = vmatprep.mubr.f32.mxu0 %v4623
      %5131 = vmatmul.mubr.f32.gmra.mrb[0].mxu0 %v4286
      %v5132 = vpop.f32.mrb[0].mxu0
      %v5133 = vadd.f32 %v4555, %v5132
      %v5134 = vpop.f32.mrb[0].mxu0
      %v5135 = vadd.f32 %v4559, %v5134
      %5136 = vmatprep.mubr.f32.mxu0 %v4626
      %5137 = vmatmul.mubr.f32.gmra.mrb[0].mxu0 %v4288
      %v5138 = vpop.f32.mrb[0].mxu0
      %v5139 = vadd.f32 %v4555, %v5138
      %v5140 = vpop.f32.mrb[0].mxu0
      %v5141 = vadd.f32 %v4559, %v5140
      %5142 = vmatprep.mubr.f32.mxu0 %v4629
      %5143 = vmatmul.mubr.f32.gmra.mrb[0].mxu0 %v4290
      %v5144 = vpop.f32.mrb[0].mxu0
      %v5145 = vadd.f32 %v4555, %v5144
      %v5146 = vpop.f32.mrb[0].mxu0
      %v5147 = vadd.f32 %v4559, %v5146
      %5148 = vmatprep.mubr.f32.mxu0 %v4632
      %5149 = vmatmul.mubr.f32.gmra.mrb[0].mxu0 %v4292
      %v5150 = vpop.f32.mrb[0].mxu0
      %v5151 = vadd.f32 %v4555, %v5150
      %v5152 = vpop.f32.mrb[0].mxu0
      %v5153 = vadd.f32 %v4559, %v5152
      %5154 = vmatprep.mubr.f32.mxu0 %v4635
      %5155 = vmatmul.mubr.f32.gmra.mrb[0].mxu0 %v4294
      %v5156 = vpop.f32.mrb[0].mxu0
      %v5157 = vadd.f32 %v4555, %v5156
      %v5158 = vpop.f32.mrb[0].mxu0
      %v5159 = vadd.f32 %v4559, %v5158
      %5160 = vmatprep.mubr.f32.mxu0 %v4638
      %5161 = vmatmul.mubr.f32.gmra.mrb[0].mxu0 %v4296
      %v5162 = vpop.f32.mrb[0].mxu0
      %v5163 = vadd.f32 %v4555, %v5162
      %v5164 = vpop.f32.mrb[0].mxu0
      %v5165 = vadd.f32 %v4559, %v5164
      %5166 = vmatprep.mubr.f32.mxu0 %v4641
      %5167 = vmatmul.mubr.f32.gmra.mrb[0].mxu0 %v4298
      %v5168 = vpop.f32.mrb[0].mxu0
      %v5169 = vadd.f32 %v4555, %v5168
      %v5170 = vpop.f32.mrb[0].mxu0
      %v5171 = vadd.f32 %v4559, %v5170
      %5172 = vmatprep.mubr.f32.mxu0 %v4644
      %5173 = vmatmul.mubr.f32.gmra.mrb[0].mxu0 %v4300
      %v5174 = vpop.f32.mrb[0].mxu0
      %v5175 = vadd.f32 %v4555, %v5174
      %v5176 = vpop.f32.mrb[0].mxu0
      %v5177 = vadd.f32 %v4559, %v5176
      %5178 = vmatprep.mubr.f32.mxu0 %v4647
      %5179 = vmatmul.mubr.f32.gmra.mrb[0].mxu0 %v4302
      %v5180 = vpop.f32.mrb[0].mxu0
      %v5181 = vadd.f32 %v4555, %v5180
      %v5182 = vpop.f32.mrb[0].mxu0
      %v5183 = vadd.f32 %v4559, %v5182
      %5184 = vmatprep.mubr.f32.mxu0 %v4650
      %5185 = vmatmul.mubr.f32.gmra.mrb[0].mxu0 %v4304
      %v5186 = vpop.f32.mrb[0].mxu0
      %v5187 = vadd.f32 %v4555, %v5186
      %v5188 = vpop.f32.mrb[0].mxu0
      %v5189 = vadd.f32 %v4559, %v5188
      %5190 = vmatprep.mubr.f32.mxu0 %v4653
      %5191 = vmatmul.mubr.f32.gmra.mrb[0].mxu0 %v4306
      %v5192 = vpop.f32.mrb[0].mxu0
      %v5193 = vadd.f32 %v4555, %v5192
      %v5194 = vpop.f32.mrb[0].mxu0
      %v5195 = vadd.f32 %v4559, %v5194
      %5196 = vmatprep.mubr.f32.mxu0 %v4656
      %5197 = vmatmul.mubr.f32.gmra.mrb[0].mxu0 %v4308
      %v5198 = vpop.f32.mrb[0].mxu0
      %v5199 = vadd.f32 %v4555, %v5198
      %v5200 = vpop.f32.mrb[0].mxu0
      %v5201 = vadd.f32 %v4559, %v5200
      %5202 = vmatprep.mubr.f32.mxu0 %v4659
      %5203 = vmatmul.mubr.f32.gmra.mrb[0].mxu0 %v4310
      %v5204 = vpop.f32.mrb[0].mxu0
      %v5205 = vadd.f32 %v4555, %v5204
      %v5206 = vpop.f32.mrb[0].mxu0
      %v5207 = vadd.f32 %v4559, %v5206
      %5208 = vmatprep.mubr.f32.mxu0 %v4662
      %5209 = vmatmul.mubr.f32.gmra.mrb[0].mxu0 %v4312
      %v5210 = vpop.f32.mrb[0].mxu0
      %v5211 = vadd.f32 %v4555, %v5210
      %v5212 = vpop.f32.mrb[0].mxu0
      %v5213 = vadd.f32 %v4559, %v5212
      %5214 = vmatprep.mubr.f32.mxu0 %v4665
      %5215 = vmatmul.mubr.f32.gmra.mrb[0].mxu0 %v4314
      %v5216 = vpop.f32.mrb[0].mxu0
      %v5217 = vadd.f32 %v4555, %v5216
      %v5218 = vpop.f32.mrb[0].mxu0
      %v5219 = vadd.f32 %v4559, %v5218
      %5220 = vmatprep.mubr.f32.mxu0 %v4668
      %5221 = vmatmul.mubr.f32.gmra.mrb[0].mxu0 %v4316
      %v5222 = vpop.f32.mrb[0].mxu0
      %v5223 = vadd.f32 %v4555, %v5222
      %v5224 = vpop.f32.mrb[0].mxu0
      %v5225 = vadd.f32 %v4559, %v5224
      %5226 = vmatprep.mubr.f32.mxu0 %v4671
      %5227 = vmatmul.mubr.f32.gmra.mrb[0].mxu0 %v4318
      %v5228 = vpop.f32.mrb[0].mxu0
      %v5229 = vadd.f32 %v4555, %v5228
      %v5230 = vpop.f32.mrb[0].mxu0
      %v5231 = vadd.f32 %v4559, %v5230
      %5232 = vmatprep.mubr.f32.mxu0 %v4674
      %5233 = vmatmul.mubr.f32.gmra.mrb[0].mxu0 %v4320
      %v5234 = vpop.f32.mrb[0].mxu0
      %v5235 = vadd.f32 %v4555, %v5234
      %v5236 = vpop.f32.mrb[0].mxu0
      %v5237 = vadd.f32 %v4559, %v5236
      %5238 = vmatprep.mubr.f32.mxu0 %v4677
      %5239 = vmatmul.mubr.f32.gmra.mrb[0].mxu0 %v4322
      %v5240 = vpop.f32.mrb[0].mxu0
      %v5241 = vadd.f32 %v4555, %v5240
      %v5242 = vpop.f32.mrb[0].mxu0
      %v5243 = vadd.f32 %v4559, %v5242
      %5244 = vmatprep.mubr.f32.mxu0 %v4680
      %5245 = vmatmul.mubr.f32.gmra.mrb[0].mxu0 %v4324
      %v5246 = vpop.f32.mrb[0].mxu0
      %v5247 = vadd.f32 %v4555, %v5246
      %v5248 = vpop.f32.mrb[0].mxu0
      %v5249 = vadd.f32 %v4559, %v5248
      %5250 = vmatprep.mubr.f32.mxu0 %v4683
      %5251 = vmatmul.mubr.f32.gmra.mrb[0].mxu0 %v4326
      %v5252 = vpop.f32.mrb[0].mxu0
      %v5253 = vadd.f32 %v4555, %v5252
      %v5254 = vpop.f32.mrb[0].mxu0
      %v5255 = vadd.f32 %v4559, %v5254
      %5256 = vmatprep.mubr.f32.mxu0 %v4686
      %5257 = vmatmul.mubr.f32.gmra.mrb[0].mxu0 %v4328
      %v5258 = vpop.f32.mrb[0].mxu0
      %v5259 = vadd.f32 %v4555, %v5258
      %v5260 = vpop.f32.mrb[0].mxu0
      %v5261 = vadd.f32 %v4559, %v5260
      %5262 = vmatprep.mubr.f32.mxu0 %v4689
      %5263 = vmatmul.mubr.f32.gmra.mrb[0].mxu0 %v4330
      %v5264 = vpop.f32.mrb[0].mxu0
      %v5265 = vadd.f32 %v4555, %v5264
      %v5266 = vpop.f32.mrb[0].mxu0
      %v5267 = vadd.f32 %v4559, %v5266
      %5268 = vmatprep.mubr.f32.mxu0 %v4692
      %5269 = vmatmul.mubr.f32.gmra.mrb[0].mxu0 %v4332
      %v5270 = vpop.f32.mrb[0].mxu0
      %v5271 = vadd.f32 %v4555, %v5270
      %v5272 = vpop.f32.mrb[0].mxu0
      %v5273 = vadd.f32 %v4559, %v5272
      %5274 = vmatprep.mubr.f32.mxu0 %v4695
      %5275 = vmatmul.mubr.f32.gmra.mrb[0].mxu0 %v4334
      %v5276 = vpop.f32.mrb[0].mxu0
      %v5277 = vadd.f32 %v4555, %v5276
      %v5278 = vpop.f32.mrb[0].mxu0
      %v5279 = vadd.f32 %v4559, %v5278
      %5280 = vmatprep.mubr.f32.mxu0 %v4698
      %5281 = vmatmul.mubr.f32.gmra.mrb[0].mxu0 %v4336
      %v5282 = vpop.f32.mrb[0].mxu0
      %v5283 = vadd.f32 %v4555, %v5282
      %v5284 = vpop.f32.mrb[0].mxu0
      %v5285 = vadd.f32 %v4559, %v5284
      %5286 = vmatprep.mubr.f32.mxu0 %v4701
      %5287 = vmatmul.mubr.f32.gmra.mrb[0].mxu0 %v4338
      %v5288 = vpop.f32.mrb[0].mxu0
      %v5289 = vadd.f32 %v4555, %v5288
      %v5290 = vpop.f32.mrb[0].mxu0
      %v5291 = vadd.f32 %v4559, %v5290
      %5292 = vmatprep.mubr.f32.mxu0 %v4704
      %5293 = vmatmul.mubr.f32.gmra.mrb[0].mxu0 %v4340
      %v5294 = vpop.f32.mrb[0].mxu0
      %v5295 = vadd.f32 %v4555, %v5294
      %v5296 = vpop.f32.mrb[0].mxu0
      %v5297 = vadd.f32 %v4559, %v5296
      %5298 = vmatprep.mubr.f32.mxu0 %v4707
      %5299 = vmatmul.mubr.f32.gmra.mrb[0].mxu0 %v4342
      %v5300 = vpop.f32.mrb[0].mxu0
      %v5301 = vadd.f32 %v4555, %v5300
      %v5302 = vpop.f32.mrb[0].mxu0
      %v5303 = vadd.f32 %v4559, %v5302
      %5304 = vmatprep.mubr.f32.mxu0 %v4710
      %5305 = vmatmul.mubr.f32.gmra.mrb[0].mxu0 %v4344
      %v5306 = vpop.f32.mrb[0].mxu0
      %v5307 = vadd.f32 %v4555, %v5306
      %v5308 = vpop.f32.mrb[0].mxu0
      %v5309 = vadd.f32 %v4559, %v5308
      %5310 = vmatprep.mubr.f32.mxu0 %v4713
      %5311 = vmatmul.mubr.f32.gmra.mrb[0].mxu0 %v4346
      %v5312 = vpop.f32.mrb[0].mxu0
      %v5313 = vadd.f32 %v4555, %v5312
      %v5314 = vpop.f32.mrb[0].mxu0
      %v5315 = vadd.f32 %v4559, %v5314
      %5316 = vmatprep.mubr.f32.mxu0 %v4716
      %5317 = vmatmul.mubr.f32.gmra.mrb[0].mxu0 %v4348
      %v5318 = vpop.f32.mrb[0].mxu0
      %v5319 = vadd.f32 %v4555, %v5318
      %v5320 = vpop.f32.mrb[0].mxu0
      %v5321 = vadd.f32 %v4559, %v5320
      %5322 = vmatprep.mubr.f32.mxu0 %v4719
      %5323 = vmatmul.mubr.f32.gmra.mrb[0].mxu0 %v4350
      %v5324 = vpop.f32.mrb[0].mxu0
      %v5325 = vadd.f32 %v4555, %v5324
      %v5326 = vpop.f32.mrb[0].mxu0
      %v5327 = vadd.f32 %v4559, %v5326
      %5328 = vmatprep.mubr.f32.mxu0 %v4722
      %5329 = vmatmul.mubr.f32.gmra.mrb[0].mxu0 %v4352
      %v5330 = vpop.f32.mrb[0].mxu0
      %v5331 = vadd.f32 %v4555, %v5330
      %v5332 = vpop.f32.mrb[0].mxu0
      %v5333 = vadd.f32 %v4559, %v5332
      %5334 = vmatprep.mubr.f32.mxu0 %v4725
      %5335 = vmatmul.mubr.f32.gmra.mrb[0].mxu0 %v4354
      %v5336 = vpop.f32.mrb[0].mxu0
      %v5337 = vadd.f32 %v4555, %v5336
      %v5338 = vpop.f32.mrb[0].mxu0
      %v5339 = vadd.f32 %v4559, %v5338
      %5340 = vmatprep.mubr.f32.mxu0 %v4728
      %5341 = vmatmul.mubr.f32.gmra.mrb[0].mxu0 %v4356
      %v5342 = vpop.f32.mrb[0].mxu0
      %v5343 = vadd.f32 %v4555, %v5342
      %v5344 = vpop.f32.mrb[0].mxu0
      %v5345 = vadd.f32 %v4559, %v5344
      %5346 = vmatprep.mubr.f32.mxu0 %v4731
      %5347 = vmatmul.mubr.f32.gmra.mrb[0].mxu0 %v4358
      %v5348 = vpop.f32.mrb[0].mxu0
      %v5349 = vadd.f32 %v4555, %v5348
      %v5350 = vpop.f32.mrb[0].mxu0
      %v5351 = vadd.f32 %v4559, %v5350
      %5352 = vmatprep.mubr.f32.mxu0 %v4734
      %5353 = vmatmul.mubr.f32.gmra.mrb[0].mxu0 %v4360
      %v5354 = vpop.f32.mrb[0].mxu0
      %v5355 = vadd.f32 %v4555, %v5354
      %v5356 = vpop.f32.mrb[0].mxu0
      %v5357 = vadd.f32 %v4559, %v5356
      %5358 = vmatprep.mubr.f32.mxu0 %v4737
      %5359 = vmatmul.mubr.f32.gmra.mrb[0].mxu0 %v4362
      %v5360 = vpop.f32.mrb[0].mxu0
      %v5361 = vadd.f32 %v4555, %v5360
      %v5362 = vpop.f32.mrb[0].mxu0
      %v5363 = vadd.f32 %v4559, %v5362
      %5364 = vmatprep.mubr.f32.mxu0 %v4740
      %5365 = vmatmul.mubr.f32.gmra.mrb[0].mxu0 %v4364
      %v5366 = vpop.f32.mrb[0].mxu0
      %v5367 = vadd.f32 %v4555, %v5366
      %v5368 = vpop.f32.mrb[0].mxu0
      %v5369 = vadd.f32 %v4559, %v5368
      %5370 = vmatprep.mubr.f32.mxu0 %v4743
      %5371 = vmatmul.mubr.f32.gmra.mrb[0].mxu0 %v4366
      %v5372 = vpop.f32.mrb[0].mxu0
      %v5373 = vadd.f32 %v4555, %v5372
      %v5374 = vpop.f32.mrb[0].mxu0
      %v5375 = vadd.f32 %v4559, %v5374
      %5376 = vmatprep.mubr.f32.mxu0 %v4746
      %5377 = vmatmul.mubr.f32.gmra.mrb[0].mxu0 %v4368
      %v5378 = vpop.f32.mrb[0].mxu0
      %v5379 = vadd.f32 %v4555, %v5378
      %v5380 = vpop.f32.mrb[0].mxu0
      %v5381 = vadd.f32 %v4559, %v5380
      %5382 = vmatprep.mubr.f32.mxu0 %v4749
      %5383 = vmatmul.mubr.f32.gmra.mrb[0].mxu0 %v4370
      %v5384 = vpop.f32.mrb[0].mxu0
      %v5385 = vadd.f32 %v4555, %v5384
      %v5386 = vpop.f32.mrb[0].mxu0
      %v5387 = vadd.f32 %v4559, %v5386
      %5388 = vmatprep.mubr.f32.mxu0 %v4752
      %5389 = vmatmul.mubr.f32.gmra.mrb[0].mxu0 %v4372
      %v5390 = vpop.f32.mrb[0].mxu0
      %v5391 = vadd.f32 %v4555, %v5390
      %v5392 = vpop.f32.mrb[0].mxu0
      %v5393 = vadd.f32 %v4559, %v5392
      %5394 = vmatprep.mubr.f32.mxu0 %v4755
      %5395 = vmatmul.mubr.f32.gmra.mrb[0].mxu0 %v4374
      %v5396 = vpop.f32.mrb[0].mxu0
      %v5397 = vadd.f32 %v4555, %v5396
      %v5398 = vpop.f32.mrb[0].mxu0
      %v5399 = vadd.f32 %v4559, %v5398
      %5400 = vmatprep.mubr.f32.mxu0 %v4758
      %5401 = vmatmul.mubr.f32.gmra.mrb[0].mxu0 %v4376
      %v5402 = vpop.f32.mrb[0].mxu0
      %v5403 = vadd.f32 %v4555, %v5402
      %v5404 = vpop.f32.mrb[0].mxu0
      %v5405 = vadd.f32 %v4559, %v5404
      %5406 = vmatprep.mubr.f32.mxu0 %v4761
      %5407 = vmatmul.mubr.f32.gmra.mrb[0].mxu0 %v4378
      %v5408 = vpop.f32.mrb[0].mxu0
      %v5409 = vadd.f32 %v4555, %v5408
      %v5410 = vpop.f32.mrb[0].mxu0
      %v5411 = vadd.f32 %v4559, %v5410
      %5412 = vmatprep.mubr.f32.mxu0 %v4764
      %5413 = vmatmul.mubr.f32.gmra.mrb[0].mxu0 %v4380
      %v5414 = vpop.f32.mrb[0].mxu0
      %v5415 = vadd.f32 %v4555, %v5414
      %v5416 = vpop.f32.mrb[0].mxu0
      %v5417 = vadd.f32 %v4559, %v5416
      %5418 = vmatprep.mubr.f32.mxu0 %v4767
      %5419 = vmatmul.mubr.f32.gmra.mrb[0].mxu0 %v4382
      %v5420 = vpop.f32.mrb[0].mxu0
      %v5421 = vadd.f32 %v4555, %v5420
      %v5422 = vpop.f32.mrb[0].mxu0
      %v5423 = vadd.f32 %v4559, %v5422
      %5424 = vmatprep.mubr.f32.mxu0 %v4770
      %5425 = vmatmul.mubr.f32.gmra.mrb[0].mxu0 %v4384
      %v5426 = vpop.f32.mrb[0].mxu0
      %v5427 = vadd.f32 %v4555, %v5426
      %v5428 = vpop.f32.mrb[0].mxu0
      %v5429 = vadd.f32 %v4559, %v5428
      %5430 = vmatprep.mubr.f32.mxu0 %v4773
      %5431 = vmatmul.mubr.f32.gmra.mrb[0].mxu0 %v4386
      %v5432 = vpop.f32.mrb[0].mxu0
      %v5433 = vadd.f32 %v4555, %v5432
      %v5434 = vpop.f32.mrb[0].mxu0
      %v5435 = vadd.f32 %v4559, %v5434
      %5436 = vmatprep.mubr.f32.mxu0 %v4776
      %5437 = vmatmul.mubr.f32.gmra.mrb[0].mxu0 %v4388
      %v5438 = vpop.f32.mrb[0].mxu0
      %v5439 = vadd.f32 %v4555, %v5438
      %v5440 = vpop.f32.mrb[0].mxu0
      %v5441 = vadd.f32 %v4559, %v5440
      %5442 = vmatprep.mubr.f32.mxu0 %v4779
      %5443 = vmatmul.mubr.f32.gmra.mrb[0].mxu0 %v4390
      %v5444 = vpop.f32.mrb[0].mxu0
      %v5445 = vadd.f32 %v4555, %v5444
      %v5446 = vpop.f32.mrb[0].mxu0
      %v5447 = vadd.f32 %v4559, %v5446
      %5448 = vmatprep.mubr.f32.mxu0 %v4782
      %5449 = vmatmul.mubr.f32.gmra.mrb[0].mxu0 %v4392
      %v5450 = vpop.f32.mrb[0].mxu0
      %v5451 = vadd.f32 %v4555, %v5450
      %v5452 = vpop.f32.mrb[0].mxu0
      %v5453 = vadd.f32 %v4559, %v5452
      %5454 = vmatprep.mubr.f32.mxu0 %v4785
      %5455 = vmatmul.mubr.f32.gmra.mrb[0].mxu0 %v4394
      %v5456 = vpop.f32.mrb[0].mxu0
      %v5457 = vadd.f32 %v4555, %v5456
      %v5458 = vpop.f32.mrb[0].mxu0
      %v5459 = vadd.f32 %v4559, %v5458
      %5460 = vmatprep.mubr.f32.mxu0 %v4788
      %5461 = vmatmul.mubr.f32.gmra.mrb[0].mxu0 %v4396
      %v5462 = vpop.f32.mrb[0].mxu0
      %v5463 = vadd.f32 %v4555, %v5462
      %v5464 = vpop.f32.mrb[0].mxu0
      %v5465 = vadd.f32 %v4559, %v5464
      %5466 = vmatprep.mubr.f32.mxu0 %v4791
      %5467 = vmatmul.mubr.f32.gmra.mrb[0].mxu0 %v4398
      %v5468 = vpop.f32.mrb[0].mxu0
      %v5469 = vadd.f32 %v4555, %v5468
      %v5470 = vpop.f32.mrb[0].mxu0
      %v5471 = vadd.f32 %v4559, %v5470
      %5472 = vmatprep.mubr.f32.mxu0 %v4794
      %5473 = vmatmul.mubr.f32.gmra.mrb[0].mxu0 %v4400
      %v5474 = vpop.f32.mrb[0].mxu0
      %v5475 = vadd.f32 %v4555, %v5474
      %v5476 = vpop.f32.mrb[0].mxu0
      %v5477 = vadd.f32 %v4559, %v5476
      %5478 = vmatprep.mubr.f32.mxu0 %v4797
      %5479 = vmatmul.mubr.f32.gmra.mrb[0].mxu0 %v4402
      %v5480 = vpop.f32.mrb[0].mxu0
      %v5481 = vadd.f32 %v4555, %v5480
      %v5482 = vpop.f32.mrb[0].mxu0
      %v5483 = vadd.f32 %v4559, %v5482
      %5484 = vmatprep.mubr.f32.mxu0 %v4800
      %5485 = vmatmul.mubr.f32.gmra.mrb[0].mxu0 %v4404
      %v5486 = vpop.f32.mrb[0].mxu0
      %v5487 = vadd.f32 %v4555, %v5486
      %v5488 = vpop.f32.mrb[0].mxu0
      %v5489 = vadd.f32 %v4559, %v5488
      %5490 = vmatprep.mubr.f32.mxu0 %v4803
      %5491 = vmatmul.mubr.f32.gmra.mrb[0].mxu0 %v4406
      %v5492 = vpop.f32.mrb[0].mxu0
      %v5493 = vadd.f32 %v4555, %v5492
      %v5494 = vpop.f32.mrb[0].mxu0
      %v5495 = vadd.f32 %v4559, %v5494
      %5496 = vmatprep.mubr.f32.mxu0 %v4806
      %5497 = vmatmul.mubr.f32.gmra.mrb[0].mxu0 %v4408
      %v5498 = vpop.f32.mrb[0].mxu0
      %v5499 = vadd.f32 %v4555, %v5498
      %v5500 = vpop.f32.mrb[0].mxu0
      %v5501 = vadd.f32 %v4559, %v5500
      %5502 = vmatprep.mubr.f32.mxu0 %v4809
      %5503 = vmatmul.mubr.f32.gmra.mrb[0].mxu0 %v4410
      %v5504 = vpop.f32.mrb[0].mxu0
      %v5505 = vadd.f32 %v4555, %v5504
      %v5506 = vpop.f32.mrb[0].mxu0
      %v5507 = vadd.f32 %v4559, %v5506
      %5508 = vmatprep.mubr.f32.mxu0 %v4812
      %5509 = vmatmul.mubr.f32.gmra.mrb[0].mxu0 %v4412
      %v5510 = vpop.f32.mrb[0].mxu0
      %v5511 = vadd.f32 %v4555, %v5510
      %v5512 = vpop.f32.mrb[0].mxu0
      %v5513 = vadd.f32 %v4559, %v5512
      %5514 = vmatprep.mubr.f32.mxu0 %v4815
      %5515 = vmatmul.mubr.f32.gmra.mrb[0].mxu0 %v4414
      %v5516 = vpop.f32.mrb[0].mxu0
      %v5517 = vadd.f32 %v4555, %v5516
      %v5518 = vpop.f32.mrb[0].mxu0
      %v5519 = vadd.f32 %v4559, %v5518
      %5520 = vmatprep.mubr.f32.mxu0 %v4818
      %5521 = vmatmul.mubr.f32.gmra.mrb[0].mxu0 %v4416
      %v5522 = vpop.f32.mrb[0].mxu0
      %v5523 = vadd.f32 %v4555, %v5522
      %v5524 = vpop.f32.mrb[0].mxu0
      %v5525 = vadd.f32 %v4559, %v5524
      %5526 = vmatprep.mubr.f32.mxu0 %v4821
      %5527 = vmatmul.mubr.f32.gmra.mrb[0].mxu0 %v4418
      %v5528 = vpop.f32.mrb[0].mxu0
      %v5529 = vadd.f32 %v4555, %v5528
      %v5530 = vpop.f32.mrb[0].mxu0
      %v5531 = vadd.f32 %v4559, %v5530
      %5532 = vmatprep.mubr.f32.mxu0 %v4824
      %5533 = vmatmul.mubr.f32.gmra.mrb[0].mxu0 %v4420
      %v5534 = vpop.f32.mrb[0].mxu0
      %v5535 = vadd.f32 %v4555, %v5534
      %v5536 = vpop.f32.mrb[0].mxu0
      %v5537 = vadd.f32 %v4559, %v5536
      %5538 = vmatprep.mubr.f32.mxu0 %v4827
      %5539 = vmatmul.mubr.f32.gmra.mrb[0].mxu0 %v4422
      %v5540 = vpop.f32.mrb[0].mxu0
      %v5541 = vadd.f32 %v4555, %v5540
      %v5542 = vpop.f32.mrb[0].mxu0
      %v5543 = vadd.f32 %v4559, %v5542
      %5544 = vmatprep.mubr.f32.mxu0 %v4830
      %5545 = vmatmul.mubr.f32.gmra.mrb[0].mxu0 %v4424
      %v5546 = vpop.f32.mrb[0].mxu0
      %v5547 = vadd.f32 %v4555, %v5546
      %v5548 = vpop.f32.mrb[0].mxu0
      %v5549 = vadd.f32 %v4559, %v5548
      %5550 = vmatprep.mubr.f32.mxu0 %v4833
      %5551 = vmatmul.mubr.f32.gmra.mrb[0].mxu0 %v4426
      %v5552 = vpop.f32.mrb[0].mxu0
      %v5553 = vadd.f32 %v4555, %v5552
      %v5554 = vpop.f32.mrb[0].mxu0
      %v5555 = vadd.f32 %v4559, %v5554
      %5556 = vmatprep.mubr.f32.mxu0 %v4836
      %5557 = vmatmul.mubr.f32.gmra.mrb[0].mxu0 %v4428
      %v5558 = vpop.f32.mrb[0].mxu0
      %v5559 = vadd.f32 %v4555, %v5558
      %v5560 = vpop.f32.mrb[0].mxu0
      %v5561 = vadd.f32 %v4559, %v5560
      %5562 = vmatprep.mubr.f32.mxu0 %v4839
      %5563 = vmatmul.mubr.f32.gmra.mrb[0].mxu0 %v4430
      %v5564 = vpop.f32.mrb[0].mxu0
      %v5565 = vadd.f32 %v4555, %v5564
      %v5566 = vpop.f32.mrb[0].mxu0
      %v5567 = vadd.f32 %v4559, %v5566
      %5568 = vmatprep.mubr.f32.mxu0 %v4842
      %5569 = vmatmul.mubr.f32.gmra.mrb[0].mxu0 %v4432
      %v5570 = vpop.f32.mrb[0].mxu0
      %v5571 = vadd.f32 %v4555, %v5570
      %v5572 = vpop.f32.mrb[0].mxu0
      %v5573 = vadd.f32 %v4559, %v5572
      %5574 = vmatprep.mubr.f32.mxu0 %v4845
      %5575 = vmatmul.mubr.f32.gmra.mrb[0].mxu0 %v4434
      %v5576 = vpop.f32.mrb[0].mxu0
      %v5577 = vadd.f32 %v4555, %v5576
      %v5578 = vpop.f32.mrb[0].mxu0
      %v5579 = vadd.f32 %v4559, %v5578
      %5580 = vmatprep.mubr.f32.mxu0 %v4848
      %5581 = vmatmul.mubr.f32.gmra.mrb[0].mxu0 %v4436
      %v5582 = vpop.f32.mrb[0].mxu0
      %v5583 = vadd.f32 %v4555, %v5582
      %v5584 = vpop.f32.mrb[0].mxu0
      %v5585 = vadd.f32 %v4559, %v5584
      %5586 = vmatprep.mubr.f32.mxu0 %v4851
      %5587 = vmatmul.mubr.f32.gmra.mrb[0].mxu0 %v4438
      %v5588 = vpop.f32.mrb[0].mxu0
      %v5589 = vadd.f32 %v4555, %v5588
      %v5590 = vpop.f32.mrb[0].mxu0
      %v5591 = vadd.f32 %v4559, %v5590
      %5592 = vmatprep.mubr.f32.mxu0 %v4854
      %5593 = vmatmul.mubr.f32.gmra.mrb[0].mxu0 %v4440
      %v5594 = vpop.f32.mrb[0].mxu0
      %v5595 = vadd.f32 %v4555, %v5594
      %v5596 = vpop.f32.mrb[0].mxu0
      %v5597 = vadd.f32 %v4559, %v5596
      %5598 = vmatprep.mubr.f32.mxu0 %v4857
      %5599 = vmatmul.mubr.f32.gmra.mrb[0].mxu0 %v4442
      %v5600 = vpop.f32.mrb[0].mxu0
      %v5601 = vadd.f32 %v4555, %v5600
      %v5602 = vpop.f32.mrb[0].mxu0
      %v5603 = vadd.f32 %v4559, %v5602
      %5604 = vmatprep.mubr.f32.mxu0 %v4860
      %5605 = vmatmul.mubr.f32.gmra.mrb[0].mxu0 %v4444
      %v5606 = vpop.f32.mrb[0].mxu0
      %v5607 = vadd.f32 %v4555, %v5606
      %v5608 = vpop.f32.mrb[0].mxu0
      %v5609 = vadd.f32 %v4559, %v5608
      %5610 = vmatprep.mubr.f32.mxu0 %v4863
      %5611 = vmatmul.mubr.f32.gmra.mrb[0].mxu0 %v4446
      %v5612 = vpop.f32.mrb[0].mxu0
      %v5613 = vadd.f32 %v4555, %v5612
      %v5614 = vpop.f32.mrb[0].mxu0
      %v5615 = vadd.f32 %v4559, %v5614
      %5616 = vmatprep.mubr.f32.mxu0 %v4866
      %5617 = vmatmul.mubr.f32.gmra.mrb[0].mxu0 %v4448
      %v5618 = vpop.f32.mrb[0].mxu0
      %v5619 = vadd.f32 %v4555, %v5618
      %v5620 = vpop.f32.mrb[0].mxu0
      %v5621 = vadd.f32 %v4559, %v5620
      %5622 = vmatprep.mubr.f32.mxu0 %v4869
      %5623 = vmatmul.mubr.f32.gmra.mrb[0].mxu0 %v4450
      %v5624 = vpop.f32.mrb[0].mxu0
      %v5625 = vadd.f32 %v4555, %v5624
      %v5626 = vpop.f32.mrb[0].mxu0
      %v5627 = vadd.f32 %v4559, %v5626
      %5628 = vmatprep.mubr.f32.mxu0 %v4872
      %5629 = vmatmul.mubr.f32.gmra.mrb[0].mxu0 %v4452
      %v5630 = vpop.f32.mrb[0].mxu0
      %v5631 = vadd.f32 %v4555, %v5630
      %v5632 = vpop.f32.mrb[0].mxu0
      %v5633 = vadd.f32 %v4559, %v5632
      %5634 = vmatprep.mubr.f32.mxu0 %v4875
      %5635 = vmatmul.mubr.f32.gmra.mrb[0].mxu0 %v4454
      %v5636 = vpop.f32.mrb[0].mxu0
      %v5637 = vadd.f32 %v4555, %v5636
      %v5638 = vpop.f32.mrb[0].mxu0
      %v5639 = vadd.f32 %v4559, %v5638
      %5640 = vmatprep.mubr.f32.mxu0 %v4878
      %5641 = vmatmul.mubr.f32.gmra.mrb[0].mxu0 %v4456
      %v5642 = vpop.f32.mrb[0].mxu0
      %v5643 = vadd.f32 %v4555, %v5642
      %v5644 = vpop.f32.mrb[0].mxu0
      %v5645 = vadd.f32 %v4559, %v5644
      %5646 = vmatprep.mubr.f32.mxu0 %v4881
      %5647 = vmatmul.mubr.f32.gmra.mrb[0].mxu0 %v4458
      %v5648 = vpop.f32.mrb[0].mxu0
      %v5649 = vadd.f32 %v4555, %v5648
      %v5650 = vpop.f32.mrb[0].mxu0
      %v5651 = vadd.f32 %v4559, %v5650
      %5652 = vmatprep.mubr.f32.mxu0 %v4884
      %5653 = vmatmul.mubr.f32.gmra.mrb[0].mxu0 %v4460
      %v5654 = vpop.f32.mrb[0].mxu0
      %v5655 = vadd.f32 %v4555, %v5654
      %v5656 = vpop.f32.mrb[0].mxu0
      %v5657 = vadd.f32 %v4559, %v5656
      %5658 = vmatprep.mubr.f32.mxu0 %v4887
      %5659 = vmatmul.mubr.f32.gmra.mrb[0].mxu0 %v4462
      %v5660 = vpop.f32.mrb[0].mxu0
      %v5661 = vadd.f32 %v4555, %v5660
      %v5662 = vpop.f32.mrb[0].mxu0
      %v5663 = vadd.f32 %v4559, %v5662
      %5664 = vmatprep.mubr.f32.mxu0 %v4890
      %5665 = vmatmul.mubr.f32.gmra.mrb[0].mxu0 %v4464
      %v5666 = vpop.f32.mrb[0].mxu0
      %v5667 = vadd.f32 %v4555, %v5666
      %v5668 = vpop.f32.mrb[0].mxu0
      %v5669 = vadd.f32 %v4559, %v5668
      %5670 = vmatprep.mubr.f32.mxu0 %v4893
      %5671 = vmatmul.mubr.f32.gmra.mrb[0].mxu0 %v4466
      %v5672 = vpop.f32.mrb[0].mxu0
      %v5673 = vadd.f32 %v4555, %v5672
      %v5674 = vpop.f32.mrb[0].mxu0
      %v5675 = vadd.f32 %v4559, %v5674
      %5676 = vmatprep.mubr.f32.mxu0 %v4896
      %5677 = vmatmul.mubr.f32.gmra.mrb[0].mxu0 %v4468
      %v5678 = vpop.f32.mrb[0].mxu0
      %v5679 = vadd.f32 %v4555, %v5678
      %v5680 = vpop.f32.mrb[0].mxu0
      %v5681 = vadd.f32 %v4559, %v5680
      %5682 = vmatprep.mubr.f32.mxu0 %v4899
      %5683 = vmatmul.mubr.f32.gmra.mrb[0].mxu0 %v4470
      %v5684 = vpop.f32.mrb[0].mxu0
      %v5685 = vadd.f32 %v4555, %v5684
      %v5686 = vpop.f32.mrb[0].mxu0
      %v5687 = vadd.f32 %v4559, %v5686
      %5688 = vmatprep.mubr.f32.mxu0 %v4902
      %5689 = vmatmul.mubr.f32.gmra.mrb[0].mxu0 %v4472
      %v5690 = vpop.f32.mrb[0].mxu0
      %v5691 = vadd.f32 %v4555, %v5690
      %v5692 = vpop.f32.mrb[0].mxu0
      %v5693 = vadd.f32 %v4559, %v5692
      %5694 = vmatprep.mubr.f32.mxu0 %v4905
      %5695 = vmatmul.mubr.f32.gmra.mrb[0].mxu0 %v4474
      %v5696 = vpop.f32.mrb[0].mxu0
      %v5697 = vadd.f32 %v4555, %v5696
      %v5698 = vpop.f32.mrb[0].mxu0
      %v5699 = vadd.f32 %v4559, %v5698
      %5700 = vmatprep.mubr.f32.mxu0 %v4908
      %5701 = vmatmul.mubr.f32.gmra.mrb[0].mxu0 %v4476
      %v5702 = vpop.f32.mrb[0].mxu0
      %v5703 = vadd.f32 %v4555, %v5702
      %v5704 = vpop.f32.mrb[0].mxu0
      %v5705 = vadd.f32 %v4559, %v5704
      %5706 = vmatprep.mubr.f32.mxu0 %v4911
      %5707 = vmatmul.mubr.f32.gmra.mrb[0].mxu0 %v4478
      %v5708 = vpop.f32.mrb[0].mxu0
      %v5709 = vadd.f32 %v4555, %v5708
      %v5710 = vpop.f32.mrb[0].mxu0
      %v5711 = vadd.f32 %v4559, %v5710
      %5712 = vmatprep.mubr.f32.mxu0 %v4914
      %5713 = vmatmul.mubr.f32.gmra.mrb[0].mxu0 %v4480
      %v5714 = vpop.f32.mrb[0].mxu0
      %v5715 = vadd.f32 %v4555, %v5714
      %v5716 = vpop.f32.mrb[0].mxu0
      %v5717 = vadd.f32 %v4559, %v5716
      %5718 = vmatprep.mubr.f32.mxu0 %v4917
      %5719 = vmatmul.mubr.f32.gmra.mrb[0].mxu0 %v4482
      %v5720 = vpop.f32.mrb[0].mxu0
      %v5721 = vadd.f32 %v4555, %v5720
      %v5722 = vpop.f32.mrb[0].mxu0
      %v5723 = vadd.f32 %v4559, %v5722
      %5724 = vmatprep.mubr.f32.mxu0 %v4920
      %5725 = vmatmul.mubr.f32.gmra.mrb[0].mxu0 %v4484
      %v5726 = vpop.f32.mrb[0].mxu0
      %v5727 = vadd.f32 %v4555, %v5726
      %v5728 = vpop.f32.mrb[0].mxu0
      %v5729 = vadd.f32 %v4559, %v5728
      %5730 = vmatprep.mubr.f32.mxu0 %v4923
      %5731 = vmatmul.mubr.f32.gmra.mrb[0].mxu0 %v4486
      %v5732 = vpop.f32.mrb[0].mxu0
      %v5733 = vadd.f32 %v4555, %v5732
      %v5734 = vpop.f32.mrb[0].mxu0
      %v5735 = vadd.f32 %v4559, %v5734
      %5736 = vmatprep.mubr.f32.mxu0 %v4926
      %5737 = vmatmul.mubr.f32.gmra.mrb[0].mxu0 %v4488
      %v5738 = vpop.f32.mrb[0].mxu0
      %v5739 = vadd.f32 %v4555, %v5738
      %v5740 = vpop.f32.mrb[0].mxu0
      %v5741 = vadd.f32 %v4559, %v5740
      %5742 = vmatprep.mubr.f32.mxu0 %v4929
      %5743 = vmatmul.mubr.f32.gmra.mrb[0].mxu0 %v4490
      %v5744 = vpop.f32.mrb[0].mxu0
      %v5745 = vadd.f32 %v4555, %v5744
      %v5746 = vpop.f32.mrb[0].mxu0
      %v5747 = vadd.f32 %v4559, %v5746
      %5748 = vmatprep.mubr.f32.mxu0 %v4932
      %5749 = vmatmul.mubr.f32.gmra.mrb[0].mxu0 %v4492
      %v5750 = vpop.f32.mrb[0].mxu0
      %v5751 = vadd.f32 %v4555, %v5750
      %v5752 = vpop.f32.mrb[0].mxu0
      %v5753 = vadd.f32 %v4559, %v5752
      %5754 = vmatprep.mubr.f32.mxu0 %v4935
      %5755 = vmatmul.mubr.f32.gmra.mrb[0].mxu0 %v4494
      %v5756 = vpop.f32.mrb[0].mxu0
      %v5757 = vadd.f32 %v4555, %v5756
      %v5758 = vpop.f32.mrb[0].mxu0
      %v5759 = vadd.f32 %v4559, %v5758
      %5760 = vmatprep.mubr.f32.mxu0 %v4938
      %5761 = vmatmul.mubr.f32.gmra.mrb[0].mxu0 %v4496
      %v5762 = vpop.f32.mrb[0].mxu0
      %v5763 = vadd.f32 %v4555, %v5762
      %v5764 = vpop.f32.mrb[0].mxu0
      %v5765 = vadd.f32 %v4559, %v5764
      %5766 = vmatprep.mubr.f32.mxu0 %v4941
      %5767 = vmatmul.mubr.f32.gmra.mrb[0].mxu0 %v4498
      %v5768 = vpop.f32.mrb[0].mxu0
      %v5769 = vadd.f32 %v4555, %v5768
      %v5770 = vpop.f32.mrb[0].mxu0
      %v5771 = vadd.f32 %v4559, %v5770
      %5772 = vmatprep.mubr.f32.mxu0 %v4944
      %5773 = vmatmul.mubr.f32.gmra.mrb[0].mxu0 %v4500
      %v5774 = vpop.f32.mrb[0].mxu0
      %v5775 = vadd.f32 %v4555, %v5774
      %v5776 = vpop.f32.mrb[0].mxu0
      %v5777 = vadd.f32 %v4559, %v5776
      %5778 = vdwg.mxu0
      %v5779 = vld [vmem:[%s8] sm:$0xff]
      %v5780 = vld [vmem:[%s8 + $0x8] sm:$0xff]
      %v5781 = vld [vmem:[%s8 + $0x10] sm:$0xff]
      %v5782 = vld [vmem:[%s8 + $0x18] sm:$0xff]
      %v5783 = vld [vmem:[%s8 + $0x20] sm:$0xff]
      %v5784 = vld [vmem:[%s8 + $0x28] sm:$0xff]
      %v5785 = vld [vmem:[%s8 + $0x30] sm:$0xff]
      %v5786 = vld [vmem:[%s8 + $0x38] sm:$0xff]
      %v5787 = vld [vmem:[%s8 + $0x40] sm:$0xff]
      %v5788 = vld [vmem:[%s8 + $0x48] sm:$0xff]
      %v5789 = vld [vmem:[%s8 + $0x50] sm:$0xff]
      %v5790 = vld [vmem:[%s8 + $0x58] sm:$0xff]
      %v5791 = vld [vmem:[%s8 + $0x60] sm:$0xff]
      %v5792 = vld [vmem:[%s8 + $0x68] sm:$0xff]
      %v5793 = vld [vmem:[%s8 + $0x70] sm:$0xff]
      %v5794 = vld [vmem:[%s8 + $0x78] sm:$0xff]
      %v5795 = vld [vmem:[%s8 + $0x80] sm:$0xff]
      %v5796 = vld [vmem:[%s8 + $0x88] sm:$0xff]
      %v5797 = vld [vmem:[%s8 + $0x90] sm:$0xff]
      %v5798 = vld [vmem:[%s8 + $0x98] sm:$0xff]
      %v5799 = vld [vmem:[%s8 + $0xa0] sm:$0xff]
      %v5800 = vld [vmem:[%s8 + $0xa8] sm:$0xff]
      %v5801 = vld [vmem:[%s8 + $0xb0] sm:$0xff]
      %v5802 = vld [vmem:[%s8 + $0xb8] sm:$0xff]
      %v5803 = vld [vmem:[%s8 + $0xc0] sm:$0xff]
      %v5804 = vld [vmem:[%s8 + $0xc8] sm:$0xff]
      %v5805 = vld [vmem:[%s8 + $0xd0] sm:$0xff]
      %v5806 = vld [vmem:[%s8 + $0xd8] sm:$0xff]
      %v5807 = vld [vmem:[%s8 + $0xe0] sm:$0xff]
      %v5808 = vld [vmem:[%s8 + $0xe8] sm:$0xff]
      %v5809 = vld [vmem:[%s8 + $0xf0] sm:$0xff]
      %v5810 = vld [vmem:[%s8 + $0xf8] sm:$0xff]
      %v5811 = vld [vmem:[%s8 + $0x100] sm:$0xff]
      %v5812 = vld [vmem:[%s8 + $0x108] sm:$0xff]
      %v5813 = vld [vmem:[%s8 + $0x110] sm:$0xff]
      %v5814 = vld [vmem:[%s8 + $0x118] sm:$0xff]
      %v5815 = vld [vmem:[%s8 + $0x120] sm:$0xff]
      %v5816 = vld [vmem:[%s8 + $0x128] sm:$0xff]
      %v5817 = vld [vmem:[%s8 + $0x130] sm:$0xff]
      %v5818 = vld [vmem:[%s8 + $0x138] sm:$0xff]
      %v5819 = vld [vmem:[%s8 + $0x140] sm:$0xff]
      %v5820 = vld [vmem:[%s8 + $0x148] sm:$0xff]
      %v5821 = vld [vmem:[%s8 + $0x150] sm:$0xff]
      %v5822 = vld [vmem:[%s8 + $0x158] sm:$0xff]
      %v5823 = vld [vmem:[%s8 + $0x160] sm:$0xff]
      %v5824 = vld [vmem:[%s8 + $0x168] sm:$0xff]
      %v5825 = vld [vmem:[%s8 + $0x170] sm:$0xff]
      %v5826 = vld [vmem:[%s8 + $0x178] sm:$0xff]
      %v5827 = vld [vmem:[%s8 + $0x180] sm:$0xff]
      %v5828 = vld [vmem:[%s8 + $0x188] sm:$0xff]
      %v5829 = vld [vmem:[%s8 + $0x190] sm:$0xff]
      %v5830 = vld [vmem:[%s8 + $0x198] sm:$0xff]
      %v5831 = vld [vmem:[%s8 + $0x1a0] sm:$0xff]
      %v5832 = vld [vmem:[%s8 + $0x1a8] sm:$0xff]
      %v5833 = vld [vmem:[%s8 + $0x1b0] sm:$0xff]
      %v5834 = vld [vmem:[%s8 + $0x1b8] sm:$0xff]
      %v5835 = vld [vmem:[%s8 + $0x1c0] sm:$0xff]
      %v5836 = vld [vmem:[%s8 + $0x1c8] sm:$0xff]
      %v5837 = vld [vmem:[%s8 + $0x1d0] sm:$0xff]
      %v5838 = vld [vmem:[%s8 + $0x1d8] sm:$0xff]
      %v5839 = vld [vmem:[%s8 + $0x1e0] sm:$0xff]
      %v5840 = vld [vmem:[%s8 + $0x1e8] sm:$0xff]
      %v5841 = vld [vmem:[%s8 + $0x1f0] sm:$0xff]
      %v5842 = vld [vmem:[%s8 + $0x1f8] sm:$0xff]
      %v5843 = vld [vmem:[%s8 + $0x200] sm:$0xff]
      %v5844 = vld [vmem:[%s8 + $0x208] sm:$0xff]
      %v5845 = vld [vmem:[%s8 + $0x210] sm:$0xff]
      %v5846 = vld [vmem:[%s8 + $0x218] sm:$0xff]
      %v5847 = vld [vmem:[%s8 + $0x220] sm:$0xff]
      %v5848 = vld [vmem:[%s8 + $0x228] sm:$0xff]
      %v5849 = vld [vmem:[%s8 + $0x230] sm:$0xff]
      %v5850 = vld [vmem:[%s8 + $0x238] sm:$0xff]
      %v5851 = vld [vmem:[%s8 + $0x240] sm:$0xff]
      %v5852 = vld [vmem:[%s8 + $0x248] sm:$0xff]
      %v5853 = vld [vmem:[%s8 + $0x250] sm:$0xff]
      %v5854 = vld [vmem:[%s8 + $0x258] sm:$0xff]
      %v5855 = vld [vmem:[%s8 + $0x260] sm:$0xff]
      %v5856 = vld [vmem:[%s8 + $0x268] sm:$0xff]
      %v5857 = vld [vmem:[%s8 + $0x270] sm:$0xff]
      %v5858 = vld [vmem:[%s8 + $0x278] sm:$0xff]
      %v5859 = vld [vmem:[%s8 + $0x280] sm:$0xff]
      %v5860 = vld [vmem:[%s8 + $0x288] sm:$0xff]
      %v5861 = vld [vmem:[%s8 + $0x290] sm:$0xff]
      %v5862 = vld [vmem:[%s8 + $0x298] sm:$0xff]
      %v5863 = vld [vmem:[%s8 + $0x2a0] sm:$0xff]
      %v5864 = vld [vmem:[%s8 + $0x2a8] sm:$0xff]
      %v5865 = vld [vmem:[%s8 + $0x2b0] sm:$0xff]
      %v5866 = vld [vmem:[%s8 + $0x2b8] sm:$0xff]
      %v5867 = vld [vmem:[%s8 + $0x2c0] sm:$0xff]
      %v5868 = vld [vmem:[%s8 + $0x2c8] sm:$0xff]
      %v5869 = vld [vmem:[%s8 + $0x2d0] sm:$0xff]
      %v5870 = vld [vmem:[%s8 + $0x2d8] sm:$0xff]
      %v5871 = vld [vmem:[%s8 + $0x2e0] sm:$0xff]
      %v5872 = vld [vmem:[%s8 + $0x2e8] sm:$0xff]
      %v5873 = vld [vmem:[%s8 + $0x2f0] sm:$0xff]
      %v5874 = vld [vmem:[%s8 + $0x2f8] sm:$0xff]
      %v5875 = vld [vmem:[%s8 + $0x300] sm:$0xff]
      %v5876 = vld [vmem:[%s8 + $0x308] sm:$0xff]
      %v5877 = vld [vmem:[%s8 + $0x310] sm:$0xff]
      %v5878 = vld [vmem:[%s8 + $0x318] sm:$0xff]
      %v5879 = vld [vmem:[%s8 + $0x320] sm:$0xff]
      %v5880 = vld [vmem:[%s8 + $0x328] sm:$0xff]
      %v5881 = vld [vmem:[%s8 + $0x330] sm:$0xff]
      %v5882 = vld [vmem:[%s8 + $0x338] sm:$0xff]
      %v5883 = vld [vmem:[%s8 + $0x340] sm:$0xff]
      %v5884 = vld [vmem:[%s8 + $0x348] sm:$0xff]
      %v5885 = vld [vmem:[%s8 + $0x350] sm:$0xff]
      %v5886 = vld [vmem:[%s8 + $0x358] sm:$0xff]
      %v5887 = vld [vmem:[%s8 + $0x360] sm:$0xff]
      %v5888 = vld [vmem:[%s8 + $0x368] sm:$0xff]
      %v5889 = vld [vmem:[%s8 + $0x370] sm:$0xff]
      %v5890 = vld [vmem:[%s8 + $0x378] sm:$0xff]
      %v5891 = vld [vmem:[%s8 + $0x380] sm:$0xff]
      %v5892 = vld [vmem:[%s8 + $0x388] sm:$0xff]
      %v5893 = vld [vmem:[%s8 + $0x390] sm:$0xff]
      %v5894 = vld [vmem:[%s8 + $0x398] sm:$0xff]
      %v5895 = vld [vmem:[%s8 + $0x3a0] sm:$0xff]
      %v5896 = vld [vmem:[%s8 + $0x3a8] sm:$0xff]
      %v5897 = vld [vmem:[%s8 + $0x3b0] sm:$0xff]
      %v5898 = vld [vmem:[%s8 + $0x3b8] sm:$0xff]
      %v5899 = vld [vmem:[%s8 + $0x3c0] sm:$0xff]
      %v5900 = vld [vmem:[%s8 + $0x3c8] sm:$0xff]
      %v5901 = vld [vmem:[%s8 + $0x3d0] sm:$0xff]
      %v5902 = vld [vmem:[%s8 + $0x3d8] sm:$0xff]
      %v5903 = vld [vmem:[%s8 + $0x3e0] sm:$0xff]
      %v5904 = vld [vmem:[%s8 + $0x3e8] sm:$0xff]
      %v5905 = vld [vmem:[%s8 + $0x3f0] sm:$0xff]
      %v5906 = vld [vmem:[%s8 + $0x3f8] sm:$0xff]
      %v5907 = vmul.f32 %v5013, %v5779
      %v5908 = vmul.f32 %v5019, %v5780
      %v5909 = vmul.f32 %v5025, %v5781
      %v5910 = vmul.f32 %v5031, %v5782
      %v5911 = vmul.f32 %v5037, %v5783
      %v5912 = vmul.f32 %v5043, %v5784
      %v5913 = vmul.f32 %v5049, %v5785
      %v5914 = vmul.f32 %v5055, %v5786
      %v5915 = vmul.f32 %v5061, %v5787
      %v5916 = vmul.f32 %v5067, %v5788
      %v5917 = vmul.f32 %v5073, %v5789
      %v5918 = vmul.f32 %v5079, %v5790
      %v5919 = vmul.f32 %v5085, %v5791
      %v5920 = vmul.f32 %v5091, %v5792
      %v5921 = vmul.f32 %v5097, %v5793
      %v5922 = vmul.f32 %v5103, %v5794
      %v5923 = vmul.f32 %v5109, %v5795
      %v5924 = vmul.f32 %v5115, %v5796
      %v5925 = vmul.f32 %v5121, %v5797
      %v5926 = vmul.f32 %v5127, %v5798
      %v5927 = vmul.f32 %v5133, %v5799
      %v5928 = vmul.f32 %v5139, %v5800
      %v5929 = vmul.f32 %v5145, %v5801
      %v5930 = vmul.f32 %v5151, %v5802
      %v5931 = vmul.f32 %v5157, %v5803
      %v5932 = vmul.f32 %v5163, %v5804
      %v5933 = vmul.f32 %v5169, %v5805
      %v5934 = vmul.f32 %v5175, %v5806
      %v5935 = vmul.f32 %v5181, %v5807
      %v5936 = vmul.f32 %v5187, %v5808
      %v5937 = vmul.f32 %v5193, %v5809
      %v5938 = vmul.f32 %v5199, %v5810
      %v5939 = vmul.f32 %v5205, %v5811
      %v5940 = vmul.f32 %v5211, %v5812
      %v5941 = vmul.f32 %v5217, %v5813
      %v5942 = vmul.f32 %v5223, %v5814
      %v5943 = vmul.f32 %v5229, %v5815
      %v5944 = vmul.f32 %v5235, %v5816
      %v5945 = vmul.f32 %v5241, %v5817
      %v5946 = vmul.f32 %v5247, %v5818
      %v5947 = vmul.f32 %v5253, %v5819
      %v5948 = vmul.f32 %v5259, %v5820
      %v5949 = vmul.f32 %v5265, %v5821
      %v5950 = vmul.f32 %v5271, %v5822
      %v5951 = vmul.f32 %v5277, %v5823
      %v5952 = vmul.f32 %v5283, %v5824
      %v5953 = vmul.f32 %v5289, %v5825
      %v5954 = vmul.f32 %v5295, %v5826
      %v5955 = vmul.f32 %v5301, %v5827
      %v5956 = vmul.f32 %v5307, %v5828
      %v5957 = vmul.f32 %v5313, %v5829
      %v5958 = vmul.f32 %v5319, %v5830
      %v5959 = vmul.f32 %v5325, %v5831
      %v5960 = vmul.f32 %v5331, %v5832
      %v5961 = vmul.f32 %v5337, %v5833
      %v5962 = vmul.f32 %v5343, %v5834
      %v5963 = vmul.f32 %v5349, %v5835
      %v5964 = vmul.f32 %v5355, %v5836
      %v5965 = vmul.f32 %v5361, %v5837
      %v5966 = vmul.f32 %v5367, %v5838
      %v5967 = vmul.f32 %v5373, %v5839
      %v5968 = vmul.f32 %v5379, %v5840
      %v5969 = vmul.f32 %v5385, %v5841
      %v5970 = vmul.f32 %v5391, %v5842
      %v5971 = vmul.f32 %v5397, %v5843
      %v5972 = vmul.f32 %v5403, %v5844
      %v5973 = vmul.f32 %v5409, %v5845
      %v5974 = vmul.f32 %v5415, %v5846
      %v5975 = vmul.f32 %v5421, %v5847
      %v5976 = vmul.f32 %v5427, %v5848
      %v5977 = vmul.f32 %v5433, %v5849
      %v5978 = vmul.f32 %v5439, %v5850
      %v5979 = vmul.f32 %v5445, %v5851
      %v5980 = vmul.f32 %v5451, %v5852
      %v5981 = vmul.f32 %v5457, %v5853
      %v5982 = vmul.f32 %v5463, %v5854
      %v5983 = vmul.f32 %v5469, %v5855
      %v5984 = vmul.f32 %v5475, %v5856
      %v5985 = vmul.f32 %v5481, %v5857
      %v5986 = vmul.f32 %v5487, %v5858
      %v5987 = vmul.f32 %v5493, %v5859
      %v5988 = vmul.f32 %v5499, %v5860
      %v5989 = vmul.f32 %v5505, %v5861
      %v5990 = vmul.f32 %v5511, %v5862
      %v5991 = vmul.f32 %v5517, %v5863
      %v5992 = vmul.f32 %v5523, %v5864
      %v5993 = vmul.f32 %v5529, %v5865
      %v5994 = vmul.f32 %v5535, %v5866
      %v5995 = vmul.f32 %v5541, %v5867
      %v5996 = vmul.f32 %v5547, %v5868
      %v5997 = vmul.f32 %v5553, %v5869
      %v5998 = vmul.f32 %v5559, %v5870
      %v5999 = vmul.f32 %v5565, %v5871
      %v6000 = vmul.f32 %v5571, %v5872
      %v6001 = vmul.f32 %v5577, %v5873
      %v6002 = vmul.f32 %v5583, %v5874
      %v6003 = vmul.f32 %v5589, %v5875
      %v6004 = vmul.f32 %v5595, %v5876
      %v6005 = vmul.f32 %v5601, %v5877
      %v6006 = vmul.f32 %v5607, %v5878
      %v6007 = vmul.f32 %v5613, %v5879
      %v6008 = vmul.f32 %v5619, %v5880
      %v6009 = vmul.f32 %v5625, %v5881
      %v6010 = vmul.f32 %v5631, %v5882
      %v6011 = vmul.f32 %v5637, %v5883
      %v6012 = vmul.f32 %v5643, %v5884
      %v6013 = vmul.f32 %v5649, %v5885
      %v6014 = vmul.f32 %v5655, %v5886
      %v6015 = vmul.f32 %v5661, %v5887
      %v6016 = vmul.f32 %v5667, %v5888
      %v6017 = vmul.f32 %v5673, %v5889
      %v6018 = vmul.f32 %v5679, %v5890
      %v6019 = vmul.f32 %v5685, %v5891
      %v6020 = vmul.f32 %v5691, %v5892
      %v6021 = vmul.f32 %v5697, %v5893
      %v6022 = vmul.f32 %v5703, %v5894
      %v6023 = vmul.f32 %v5709, %v5895
      %v6024 = vmul.f32 %v5715, %v5896
      %v6025 = vmul.f32 %v5721, %v5897
      %v6026 = vmul.f32 %v5727, %v5898
      %v6027 = vmul.f32 %v5733, %v5899
      %v6028 = vmul.f32 %v5739, %v5900
      %v6029 = vmul.f32 %v5745, %v5901
      %v6030 = vmul.f32 %v5751, %v5902
      %v6031 = vmul.f32 %v5757, %v5903
      %v6032 = vmul.f32 %v5763, %v5904
      %v6033 = vmul.f32 %v5769, %v5905
      %v6034 = vmul.f32 %v5775, %v5906
      %v6035 = vsel %vm1019, %v5907, 0.0
      %v6036 = vsel %vm1019, %v5908, 0.0
      %v6037 = vadd.f32 %v6035, %v6036
      %v6038 = vsel %vm1019, %v5909, 0.0
      %v6039 = vadd.f32 %v6037, %v6038
      %v6040 = vsel %vm1019, %v5910, 0.0
      %v6041 = vadd.f32 %v6039, %v6040
      %v6042 = vsel %vm1019, %v5911, 0.0
      %v6043 = vadd.f32 %v6041, %v6042
      %v6044 = vsel %vm1019, %v5912, 0.0
      %v6045 = vadd.f32 %v6043, %v6044
      %v6046 = vsel %vm1019, %v5913, 0.0
      %v6047 = vadd.f32 %v6045, %v6046
      %v6048 = vsel %vm1019, %v5914, 0.0
      %v6049 = vadd.f32 %v6047, %v6048
      %v6050 = vsel %vm1019, %v5915, 0.0
      %v6051 = vadd.f32 %v6049, %v6050
      %v6052 = vsel %vm1019, %v5916, 0.0
      %v6053 = vadd.f32 %v6051, %v6052
      %v6054 = vsel %vm1019, %v5917, 0.0
      %v6055 = vadd.f32 %v6053, %v6054
      %v6056 = vsel %vm1019, %v5918, 0.0
      %v6057 = vadd.f32 %v6055, %v6056
      %v6058 = vsel %vm1019, %v5919, 0.0
      %v6059 = vadd.f32 %v6057, %v6058
      %v6060 = vsel %vm1019, %v5920, 0.0
      %v6061 = vadd.f32 %v6059, %v6060
      %v6062 = vsel %vm1019, %v5921, 0.0
      %v6063 = vadd.f32 %v6061, %v6062
      %v6064 = vsel %vm1019, %v5922, 0.0
      %v6065 = vadd.f32 %v6063, %v6064
      %v6066 = vsel %vm1019, %v5923, 0.0
      %v6067 = vadd.f32 %v6065, %v6066
      %v6068 = vsel %vm1019, %v5924, 0.0
      %v6069 = vadd.f32 %v6067, %v6068
      %v6070 = vsel %vm1019, %v5925, 0.0
      %v6071 = vadd.f32 %v6069, %v6070
      %v6072 = vsel %vm1019, %v5926, 0.0
      %v6073 = vadd.f32 %v6071, %v6072
      %v6074 = vsel %vm1019, %v5927, 0.0
      %v6075 = vadd.f32 %v6073, %v6074
      %v6076 = vsel %vm1019, %v5928, 0.0
      %v6077 = vadd.f32 %v6075, %v6076
      %v6078 = vsel %vm1019, %v5929, 0.0
      %v6079 = vadd.f32 %v6077, %v6078
      %v6080 = vsel %vm1019, %v5930, 0.0
      %v6081 = vadd.f32 %v6079, %v6080
      %v6082 = vsel %vm1019, %v5931, 0.0
      %v6083 = vadd.f32 %v6081, %v6082
      %v6084 = vsel %vm1019, %v5932, 0.0
      %v6085 = vadd.f32 %v6083, %v6084
      %v6086 = vsel %vm1019, %v5933, 0.0
      %v6087 = vadd.f32 %v6085, %v6086
      %v6088 = vsel %vm1019, %v5934, 0.0
      %v6089 = vadd.f32 %v6087, %v6088
      %v6090 = vsel %vm1019, %v5935, 0.0
      %v6091 = vadd.f32 %v6089, %v6090
      %v6092 = vsel %vm1019, %v5936, 0.0
      %v6093 = vadd.f32 %v6091, %v6092
      %v6094 = vsel %vm1019, %v5937, 0.0
      %v6095 = vadd.f32 %v6093, %v6094
      %v6096 = vsel %vm1019, %v5938, 0.0
      %v6097 = vadd.f32 %v6095, %v6096
      %v6098 = vsel %vm1019, %v5939, 0.0
      %v6099 = vadd.f32 %v6097, %v6098
      %v6100 = vsel %vm1019, %v5940, 0.0
      %v6101 = vadd.f32 %v6099, %v6100
      %v6102 = vsel %vm1019, %v5941, 0.0
      %v6103 = vadd.f32 %v6101, %v6102
      %v6104 = vsel %vm1019, %v5942, 0.0
      %v6105 = vadd.f32 %v6103, %v6104
      %v6106 = vsel %vm1019, %v5943, 0.0
      %v6107 = vadd.f32 %v6105, %v6106
      %v6108 = vsel %vm1019, %v5944, 0.0
      %v6109 = vadd.f32 %v6107, %v6108
      %v6110 = vsel %vm1019, %v5945, 0.0
      %v6111 = vadd.f32 %v6109, %v6110
      %v6112 = vsel %vm1019, %v5946, 0.0
      %v6113 = vadd.f32 %v6111, %v6112
      %v6114 = vsel %vm1019, %v5947, 0.0
      %v6115 = vadd.f32 %v6113, %v6114
      %v6116 = vsel %vm1019, %v5948, 0.0
      %v6117 = vadd.f32 %v6115, %v6116
      %v6118 = vsel %vm1019, %v5949, 0.0
      %v6119 = vadd.f32 %v6117, %v6118
      %v6120 = vsel %vm1019, %v5950, 0.0
      %v6121 = vadd.f32 %v6119, %v6120
      %v6122 = vsel %vm1019, %v5951, 0.0
      %v6123 = vadd.f32 %v6121, %v6122
      %v6124 = vsel %vm1019, %v5952, 0.0
      %v6125 = vadd.f32 %v6123, %v6124
      %v6126 = vsel %vm1019, %v5953, 0.0
      %v6127 = vadd.f32 %v6125, %v6126
      %v6128 = vsel %vm1019, %v5954, 0.0
      %v6129 = vadd.f32 %v6127, %v6128
      %v6130 = vsel %vm1019, %v5955, 0.0
      %v6131 = vadd.f32 %v6129, %v6130
      %v6132 = vsel %vm1019, %v5956, 0.0
      %v6133 = vadd.f32 %v6131, %v6132
      %v6134 = vsel %vm1019, %v5957, 0.0
      %v6135 = vadd.f32 %v6133, %v6134
      %v6136 = vsel %vm1019, %v5958, 0.0
      %v6137 = vadd.f32 %v6135, %v6136
      %v6138 = vsel %vm1019, %v5959, 0.0
      %v6139 = vadd.f32 %v6137, %v6138
      %v6140 = vsel %vm1019, %v5960, 0.0
      %v6141 = vadd.f32 %v6139, %v6140
      %v6142 = vsel %vm1019, %v5961, 0.0
      %v6143 = vadd.f32 %v6141, %v6142
      %v6144 = vsel %vm1019, %v5962, 0.0
      %v6145 = vadd.f32 %v6143, %v6144
      %v6146 = vsel %vm1019, %v5963, 0.0
      %v6147 = vadd.f32 %v6145, %v6146
      %v6148 = vsel %vm1019, %v5964, 0.0
      %v6149 = vadd.f32 %v6147, %v6148
      %v6150 = vsel %vm1019, %v5965, 0.0
      %v6151 = vadd.f32 %v6149, %v6150
      %v6152 = vsel %vm1019, %v5966, 0.0
      %v6153 = vadd.f32 %v6151, %v6152
      %v6154 = vsel %vm1019, %v5967, 0.0
      %v6155 = vadd.f32 %v6153, %v6154
      %v6156 = vsel %vm1019, %v5968, 0.0
      %v6157 = vadd.f32 %v6155, %v6156
      %v6158 = vsel %vm1019, %v5969, 0.0
      %v6159 = vadd.f32 %v6157, %v6158
      %v6160 = vsel %vm1019, %v5970, 0.0
      %v6161 = vadd.f32 %v6159, %v6160
      %v6162 = vsel %vm1019, %v5971, 0.0
      %v6163 = vadd.f32 %v6161, %v6162
      %v6164 = vsel %vm1019, %v5972, 0.0
      %v6165 = vadd.f32 %v6163, %v6164
      %v6166 = vsel %vm1019, %v5973, 0.0
      %v6167 = vadd.f32 %v6165, %v6166
      %v6168 = vsel %vm1019, %v5974, 0.0
      %v6169 = vadd.f32 %v6167, %v6168
      %v6170 = vsel %vm1019, %v5975, 0.0
      %v6171 = vadd.f32 %v6169, %v6170
      %v6172 = vsel %vm1019, %v5976, 0.0
      %v6173 = vadd.f32 %v6171, %v6172
      %v6174 = vsel %vm1019, %v5977, 0.0
      %v6175 = vadd.f32 %v6173, %v6174
      %v6176 = vsel %vm1019, %v5978, 0.0
      %v6177 = vadd.f32 %v6175, %v6176
      %v6178 = vsel %vm1019, %v5979, 0.0
      %v6179 = vadd.f32 %v6177, %v6178
      %v6180 = vsel %vm1019, %v5980, 0.0
      %v6181 = vadd.f32 %v6179, %v6180
      %v6182 = vsel %vm1019, %v5981, 0.0
      %v6183 = vadd.f32 %v6181, %v6182
      %v6184 = vsel %vm1019, %v5982, 0.0
      %v6185 = vadd.f32 %v6183, %v6184
      %v6186 = vsel %vm1019, %v5983, 0.0
      %v6187 = vadd.f32 %v6185, %v6186
      %v6188 = vsel %vm1019, %v5984, 0.0
      %v6189 = vadd.f32 %v6187, %v6188
      %v6190 = vsel %vm1019, %v5985, 0.0
      %v6191 = vadd.f32 %v6189, %v6190
      %v6192 = vsel %vm1019, %v5986, 0.0
      %v6193 = vadd.f32 %v6191, %v6192
      %v6194 = vsel %vm1019, %v5987, 0.0
      %v6195 = vadd.f32 %v6193, %v6194
      %v6196 = vsel %vm1019, %v5988, 0.0
      %v6197 = vadd.f32 %v6195, %v6196
      %v6198 = vsel %vm1019, %v5989, 0.0
      %v6199 = vadd.f32 %v6197, %v6198
      %v6200 = vsel %vm1019, %v5990, 0.0
      %v6201 = vadd.f32 %v6199, %v6200
      %v6202 = vsel %vm1019, %v5991, 0.0
      %v6203 = vadd.f32 %v6201, %v6202
      %v6204 = vsel %vm1019, %v5992, 0.0
      %v6205 = vadd.f32 %v6203, %v6204
      %v6206 = vsel %vm1019, %v5993, 0.0
      %v6207 = vadd.f32 %v6205, %v6206
      %v6208 = vsel %vm1019, %v5994, 0.0
      %v6209 = vadd.f32 %v6207, %v6208
      %v6210 = vsel %vm1019, %v5995, 0.0
      %v6211 = vadd.f32 %v6209, %v6210
      %v6212 = vsel %vm1019, %v5996, 0.0
      %v6213 = vadd.f32 %v6211, %v6212
      %v6214 = vsel %vm1019, %v5997, 0.0
      %v6215 = vadd.f32 %v6213, %v6214
      %v6216 = vsel %vm1019, %v5998, 0.0
      %v6217 = vadd.f32 %v6215, %v6216
      %v6218 = vsel %vm1019, %v5999, 0.0
      %v6219 = vadd.f32 %v6217, %v6218
      %v6220 = vsel %vm1019, %v6000, 0.0
      %v6221 = vadd.f32 %v6219, %v6220
      %v6222 = vsel %vm1019, %v6001, 0.0
      %v6223 = vadd.f32 %v6221, %v6222
      %v6224 = vsel %vm1019, %v6002, 0.0
      %v6225 = vadd.f32 %v6223, %v6224
      %v6226 = vsel %vm1019, %v6003, 0.0
      %v6227 = vadd.f32 %v6225, %v6226
      %v6228 = vsel %vm1019, %v6004, 0.0
      %v6229 = vadd.f32 %v6227, %v6228
      %v6230 = vsel %vm1019, %v6005, 0.0
      %v6231 = vadd.f32 %v6229, %v6230
      %v6232 = vsel %vm1019, %v6006, 0.0
      %v6233 = vadd.f32 %v6231, %v6232
      %v6234 = vsel %vm1019, %v6007, 0.0
      %v6235 = vadd.f32 %v6233, %v6234
      %v6236 = vsel %vm1019, %v6008, 0.0
      %v6237 = vadd.f32 %v6235, %v6236
      %v6238 = vsel %vm1019, %v6009, 0.0
      %v6239 = vadd.f32 %v6237, %v6238
      %v6240 = vsel %vm1019, %v6010, 0.0
      %v6241 = vadd.f32 %v6239, %v6240
      %v6242 = vsel %vm1019, %v6011, 0.0
      %v6243 = vadd.f32 %v6241, %v6242
      %v6244 = vsel %vm1019, %v6012, 0.0
      %v6245 = vadd.f32 %v6243, %v6244
      %v6246 = vsel %vm1019, %v6013, 0.0
      %v6247 = vadd.f32 %v6245, %v6246
      %v6248 = vsel %vm1019, %v6014, 0.0
      %v6249 = vadd.f32 %v6247, %v6248
      %v6250 = vsel %vm1019, %v6015, 0.0
      %v6251 = vadd.f32 %v6249, %v6250
      %v6252 = vsel %vm1019, %v6016, 0.0
      %v6253 = vadd.f32 %v6251, %v6252
      %v6254 = vsel %vm1019, %v6017, 0.0
      %v6255 = vadd.f32 %v6253, %v6254
      %v6256 = vsel %vm1019, %v6018, 0.0
      %v6257 = vadd.f32 %v6255, %v6256
      %v6258 = vsel %vm1019, %v6019, 0.0
      %v6259 = vadd.f32 %v6257, %v6258
      %v6260 = vsel %vm1019, %v6020, 0.0
      %v6261 = vadd.f32 %v6259, %v6260
      %v6262 = vsel %vm1019, %v6021, 0.0
      %v6263 = vadd.f32 %v6261, %v6262
      %v6264 = vsel %vm1019, %v6022, 0.0
      %v6265 = vadd.f32 %v6263, %v6264
      %v6266 = vsel %vm1019, %v6023, 0.0
      %v6267 = vadd.f32 %v6265, %v6266
      %v6268 = vsel %vm1019, %v6024, 0.0
      %v6269 = vadd.f32 %v6267, %v6268
      %v6270 = vsel %vm1019, %v6025, 0.0
      %v6271 = vadd.f32 %v6269, %v6270
      %v6272 = vsel %vm1019, %v6026, 0.0
      %v6273 = vadd.f32 %v6271, %v6272
      %v6274 = vsel %vm1019, %v6027, 0.0
      %v6275 = vadd.f32 %v6273, %v6274
      %v6276 = vsel %vm1019, %v6028, 0.0
      %v6277 = vadd.f32 %v6275, %v6276
      %v6278 = vsel %vm1019, %v6029, 0.0
      %v6279 = vadd.f32 %v6277, %v6278
      %v6280 = vsel %vm1019, %v6030, 0.0
      %v6281 = vadd.f32 %v6279, %v6280
      %v6282 = vsel %vm1019, %v6031, 0.0
      %v6283 = vadd.f32 %v6281, %v6282
      %v6284 = vsel %vm1019, %v6032, 0.0
      %v6285 = vadd.f32 %v6283, %v6284
      %v6286 = vsel %vm1019, %v6033, 0.0
      %v6287 = vadd.f32 %v6285, %v6286
      %v6288 = vsel %vm1019, %v6034, 0.0
      %v6289 = vadd.f32 %v6287, %v6288
      %v6290 = vrot.slane %v6289, 4
      %v6291 = vadd.f32 %v6289, %v6290
      %v6292 = vrot.slane %v6291, 2
      %v6293 = vadd.f32 %v6291, %v6292
      %v6294 = vrot.slane %v6293, 1
      %v6295 = vadd.f32 %v6293, %v6294
      %v6296 = vld [vmem:[%s9] sm:$0x1]
      %v6297 = vadd.f32 %v6295, %v6296
      %v6298 = vld [vmem:[%s10] sm:$0xff]
      %v6299 = vld [vmem:[%s10 + $0x8] sm:$0xff]
      %v6300 = vld [vmem:[%s10 + $0x10] sm:$0xff]
      %v6301 = vld [vmem:[%s10 + $0x18] sm:$0xff]
      %v6302 = vld [vmem:[%s10 + $0x20] sm:$0xff]
      %v6303 = vld [vmem:[%s10 + $0x28] sm:$0xff]
      %v6304 = vld [vmem:[%s10 + $0x30] sm:$0xff]
      %v6305 = vld [vmem:[%s10 + $0x38] sm:$0xff]
      %v6306 = vld [vmem:[%s11] sm:$0x1]
      %v6308 = vsel %vm1019, %v6297, 0
      %6310 = vmatprep.subr.mxu0 0.0
      %6311 = vmatpush1.msra.mxu0 %v6298
      %6312 = vmatprep.subr.mxu0 0.0
      %6313 = vmatpush1.msra.mxu0 %v6299
      %6314 = vmatprep.subr.mxu0 0.0
      %6315 = vmatpush1.msra.mxu0 %v6300
      %6316 = vmatprep.subr.mxu0 0.0
      %6317 = vmatpush1.msra.mxu0 %v6301
      %6318 = vmatprep.subr.mxu0 0.0
      %6319 = vmatpush1.msra.mxu0 %v6302
      %6320 = vmatprep.subr.mxu0 0.0
      %6321 = vmatpush1.msra.mxu0 %v6303
      %6322 = vmatprep.subr.mxu0 0.0
      %6323 = vmatpush1.msra.mxu0 %v6304
      %6324 = vmatprep.subr.mxu0 0.0
      %6325 = vmatpush1.msra.mxu0 %v6305
      %6326 = vmatprep.subr.mxu0 0.0
      %6327 = vmatpush1.msra.mxu0 0.0
      %6328 = vmatprep.subr.mxu0 0.0
      %6329 = vmatpush1.msra.mxu0 0.0
      %6330 = vmatprep.subr.mxu0 0.0
      %6331 = vmatpush1.msra.mxu0 0.0
      %6332 = vmatprep.subr.mxu0 0.0
      %6333 = vmatpush1.msra.mxu0 0.0
      %6334 = vmatprep.subr.mxu0 0.0
      %6335 = vmatpush1.msra.mxu0 0.0
      %6336 = vmatprep.subr.mxu0 0.0
      %6337 = vmatpush1.msra.mxu0 0.0
      %6338 = vmatprep.subr.mxu0 0.0
      %6339 = vmatpush1.msra.mxu0 0.0
      %6340 = vmatprep.subr.mxu0 0.0
      %6341 = vmatpush1.msra.mxu0 0.0
      %6342 = vmatprep.subr.mxu0 0.0
      %6343 = vmatpush1.msra.mxu0 0.0
      %6344 = vmatprep.subr.mxu0 0.0
      %6345 = vmatpush1.msra.mxu0 0.0
      %6346 = vmatprep.subr.mxu0 0.0
      %6347 = vmatpush1.msra.mxu0 0.0
      %6348 = vmatprep.subr.mxu0 0.0
      %6349 = vmatpush1.msra.mxu0 0.0
      %6350 = vmatprep.subr.mxu0 0.0
      %6351 = vmatpush1.msra.mxu0 0.0
      %6352 = vmatprep.subr.mxu0 0.0
      %6353 = vmatpush1.msra.mxu0 0.0
      %6354 = vmatprep.subr.mxu0 0.0
      %6355 = vmatpush1.msra.mxu0 0.0
      %6356 = vmatprep.subr.mxu0 0.0
      %6357 = vmatpush1.msra.mxu0 0.0
      %6358 = vmatprep.subr.mxu0 0.0
      %6359 = vmatpush1.msra.mxu0 0.0
      %6360 = vmatprep.subr.mxu0 0.0
      %6361 = vmatpush1.msra.mxu0 0.0
      %6362 = vmatprep.subr.mxu0 0.0
      %6363 = vmatpush1.msra.mxu0 0.0
      %6364 = vmatprep.subr.mxu0 0.0
      %6365 = vmatpush1.msra.mxu0 0.0
      %6366 = vmatprep.subr.mxu0 0.0
      %6367 = vmatpush1.msra.mxu0 0.0
      %6368 = vmatprep.subr.mxu0 0.0
      %6369 = vmatpush1.msra.mxu0 0.0
      %6370 = vmatprep.subr.mxu0 0.0
      %6371 = vmatpush1.msra.mxu0 0.0
      %6372 = vmatprep.subr.mxu0 0.0
      %6373 = vmatpush1.msra.mxu0 0.0
      %6374 = vmatprep.mubr.f32.mxu0 0.0
      %6375 = vmatmul.mubr.f32.gmra.mrb[0].mxu0 %v6308
      %v6376 = vpop.f32.mrb[0].mxu0
      %v6377 = vadd.f32 %v6306, %v6376
      %v6378 = vpop.f32.mrb[0].mxu0
      %6379 = vdwg.mxu0
      %v6380 = vmax.f32 %v6377, 0.0
      %v6381 = vld [vmem:[%s12] sm:$0xff]
      %v6382 = vld [vmem:[%s12 + $0x8] sm:$0xff]
      %v6383 = vld [vmem:[%s12 + $0x10] sm:$0xff]
      %v6384 = vld [vmem:[%s12 + $0x18] sm:$0xff]
      %v6385 = vld [vmem:[%s12 + $0x20] sm:$0xff]
      %v6386 = vld [vmem:[%s12 + $0x28] sm:$0xff]
      %v6387 = vld [vmem:[%s12 + $0x30] sm:$0xff]
      %v6388 = vld [vmem:[%s12 + $0x38] sm:$0xff]
      %v6389 = vld [vmem:[%s13] sm:$0x1]
      %v6391 = vsel %vm1019, %v6380, 0
      %6393 = vmatprep.subr.mxu0 0.0
      %6394 = vmatpush1.msra.mxu0 %v6381
      %6395 = vmatprep.subr.mxu0 0.0
      %6396 = vmatpush1.msra.mxu0 %v6382
      %6397 = vmatprep.subr.mxu0 0.0
      %6398 = vmatpush1.msra.mxu0 %v6383
      %6399 = vmatprep.subr.mxu0 0.0
      %6400 = vmatpush1.msra.mxu0 %v6384
      %6401 = vmatprep.subr.mxu0 0.0
      %6402 = vmatpush1.msra.mxu0 %v6385
      %6403 = vmatprep.subr.mxu0 0.0
      %6404 = vmatpush1.msra.mxu0 %v6386
      %6405 = vmatprep.subr.mxu0 0.0
      %6406 = vmatpush1.msra.mxu0 %v6387
      %6407 = vmatprep.subr.mxu0 0.0
      %6408 = vmatpush1.msra.mxu0 %v6388
      %6409 = vmatprep.subr.mxu0 0.0
      %6410 = vmatpush1.msra.mxu0 0.0
      %6411 = vmatprep.subr.mxu0 0.0
      %6412 = vmatpush1.msra.mxu0 0.0
      %6413 = vmatprep.subr.mxu0 0.0
      %6414 = vmatpush1.msra.mxu0 0.0
      %6415 = vmatprep.subr.mxu0 0.0
      %6416 = vmatpush1.msra.mxu0 0.0
      %6417 = vmatprep.subr.mxu0 0.0
      %6418 = vmatpush1.msra.mxu0 0.0
      %6419 = vmatprep.subr.mxu0 0.0
      %6420 = vmatpush1.msra.mxu0 0.0
      %6421 = vmatprep.subr.mxu0 0.0
      %6422 = vmatpush1.msra.mxu0 0.0
      %6423 = vmatprep.subr.mxu0 0.0
      %6424 = vmatpush1.msra.mxu0 0.0
      %6425 = vmatprep.subr.mxu0 0.0
      %6426 = vmatpush1.msra.mxu0 0.0
      %6427 = vmatprep.subr.mxu0 0.0
      %6428 = vmatpush1.msra.mxu0 0.0
      %6429 = vmatprep.subr.mxu0 0.0
      %6430 = vmatpush1.msra.mxu0 0.0
      %6431 = vmatprep.subr.mxu0 0.0
      %6432 = vmatpush1.msra.mxu0 0.0
      %6433 = vmatprep.subr.mxu0 0.0
      %6434 = vmatpush1.msra.mxu0 0.0
      %6435 = vmatprep.subr.mxu0 0.0
      %6436 = vmatpush1.msra.mxu0 0.0
      %6437 = vmatprep.subr.mxu0 0.0
      %6438 = vmatpush1.msra.mxu0 0.0
      %6439 = vmatprep.subr.mxu0 0.0
      %6440 = vmatpush1.msra.mxu0 0.0
      %6441 = vmatprep.subr.mxu0 0.0
      %6442 = vmatpush1.msra.mxu0 0.0
      %6443 = vmatprep.subr.mxu0 0.0
      %6444 = vmatpush1.msra.mxu0 0.0
      %6445 = vmatprep.subr.mxu0 0.0
      %6446 = vmatpush1.msra.mxu0 0.0
      %6447 = vmatprep.subr.mxu0 0.0
      %6448 = vmatpush1.msra.mxu0 0.0
      %6449 = vmatprep.subr.mxu0 0.0
      %6450 = vmatpush1.msra.mxu0 0.0
      %6451 = vmatprep.subr.mxu0 0.0
      %6452 = vmatpush1.msra.mxu0 0.0
      %6453 = vmatprep.subr.mxu0 0.0
      %6454 = vmatpush1.msra.mxu0 0.0
      %6455 = vmatprep.subr.mxu0 0.0
      %6456 = vmatpush1.msra.mxu0 0.0
      %6457 = vmatprep.mubr.f32.mxu0 0.0
      %6458 = vmatmul.mubr.f32.gmra.mrb[0].mxu0 %v6391
      %v6459 = vpop.f32.mrb[0].mxu0
      %v6460 = vadd.f32 %v6389, %v6459
      %v6461 = vpop.f32.mrb[0].mxu0
      %6462 = vdwg.mxu0
      %v6463 = vmax.f32 %v6460, 0.0
      %v6464 = vld [vmem:[%s14] sm:$0xff]
      %v6465 = vld [vmem:[%s14 + $0x8] sm:$0xff]
      %v6466 = vld [vmem:[%s14 + $0x10] sm:$0xff]
      %v6467 = vld [vmem:[%s14 + $0x18] sm:$0xff]
      %v6468 = vld [vmem:[%s14 + $0x20] sm:$0xff]
      %v6469 = vld [vmem:[%s14 + $0x28] sm:$0xff]
      %v6470 = vld [vmem:[%s14 + $0x30] sm:$0xff]
      %v6471 = vld [vmem:[%s14 + $0x38] sm:$0xff]
      %v6472 = vld [vmem:[%s15] sm:$0x1]
      %v6474 = vsel %vm1019, %v6463, 0
      %6476 = vmatprep.subr.mxu0 0.0
      %6477 = vmatpush1.msra.mxu0 %v6464
      %6478 = vmatprep.subr.mxu0 0.0
      %6479 = vmatpush1.msra.mxu0 %v6465
      %6480 = vmatprep.subr.mxu0 0.0
      %6481 = vmatpush1.msra.mxu0 %v6466
      %6482 = vmatprep.subr.mxu0 0.0
      %6483 = vmatpush1.msra.mxu0 %v6467
      %6484 = vmatprep.subr.mxu0 0.0
      %6485 = vmatpush1.msra.mxu0 %v6468
      %6486 = vmatprep.subr.mxu0 0.0
      %6487 = vmatpush1.msra.mxu0 %v6469
      %6488 = vmatprep.subr.mxu0 0.0
      %6489 = vmatpush1.msra.mxu0 %v6470
      %6490 = vmatprep.subr.mxu0 0.0
      %6491 = vmatpush1.msra.mxu0 %v6471
      %6492 = vmatprep.subr.mxu0 0.0
      %6493 = vmatpush1.msra.mxu0 0.0
      %6494 = vmatprep.subr.mxu0 0.0
      %6495 = vmatpush1.msra.mxu0 0.0
      %6496 = vmatprep.subr.mxu0 0.0
      %6497 = vmatpush1.msra.mxu0 0.0
      %6498 = vmatprep.subr.mxu0 0.0
      %6499 = vmatpush1.msra.mxu0 0.0
      %6500 = vmatprep.subr.mxu0 0.0
      %6501 = vmatpush1.msra.mxu0 0.0
      %6502 = vmatprep.subr.mxu0 0.0
      %6503 = vmatpush1.msra.mxu0 0.0
      %6504 = vmatprep.subr.mxu0 0.0
      %6505 = vmatpush1.msra.mxu0 0.0
      %6506 = vmatprep.subr.mxu0 0.0
      %6507 = vmatpush1.msra.mxu0 0.0
      %6508 = vmatprep.subr.mxu0 0.0
      %6509 = vmatpush1.msra.mxu0 0.0
      %6510 = vmatprep.subr.mxu0 0.0
      %6511 = vmatpush1.msra.mxu0 0.0
      %6512 = vmatprep.subr.mxu0 0.0
      %6513 = vmatpush1.msra.mxu0 0.0
      %6514 = vmatprep.subr.mxu0 0.0
      %6515 = vmatpush1.msra.mxu0 0.0
      %6516 = vmatprep.subr.mxu0 0.0
      %6517 = vmatpush1.msra.mxu0 0.0
      %6518 = vmatprep.subr.mxu0 0.0
      %6519 = vmatpush1.msra.mxu0 0.0
      %6520 = vmatprep.subr.mxu0 0.0
      %6521 = vmatpush1.msra.mxu0 0.0
      %6522 = vmatprep.subr.mxu0 0.0
      %6523 = vmatpush1.msra.mxu0 0.0
      %6524 = vmatprep.subr.mxu0 0.0
      %6525 = vmatpush1.msra.mxu0 0.0
      %6526 = vmatprep.subr.mxu0 0.0
      %6527 = vmatpush1.msra.mxu0 0.0
      %6528 = vmatprep.subr.mxu0 0.0
      %6529 = vmatpush1.msra.mxu0 0.0
      %6530 = vmatprep.subr.mxu0 0.0
      %6531 = vmatpush1.msra.mxu0 0.0
      %6532 = vmatprep.subr.mxu0 0.0
      %6533 = vmatpush1.msra.mxu0 0.0
      %6534 = vmatprep.subr.mxu0 0.0
      %6535 = vmatpush1.msra.mxu0 0.0
      %6536 = vmatprep.subr.mxu0 0.0
      %6537 = vmatpush1.msra.mxu0 0.0
      %6538 = vmatprep.subr.mxu0 0.0
      %6539 = vmatpush1.msra.mxu0 0.0
      %6540 = vmatprep.mubr.f32.mxu0 0.0
      %6541 = vmatmul.mubr.f32.gmra.mrb[0].mxu0 %v6474
      %v6542 = vpop.f32.mrb[0].mxu0
      %v6543 = vadd.f32 %v6472, %v6542
      %v6544 = vpop.f32.mrb[0].mxu0
      %6545 = vdwg.mxu0
      %v6546 = vxor.u32 %v6543, 2147483648
      %v6547 = vmul.f32 %v6546, 1.442695
      %v6548 = vpow.pop %v6547
      %v6549 = vadd.f32 %v6548, 1.0
      %v6550 = vrcp.pop %v6549
      %v6551 = vmul.f32 1.0, %v6550
      %v6552 = vlaneseq
      %v6553 = vshrl.u32 %v6552, 7
      %v6554 = vsub.s32 0, %v6553
      %v6555 = vrot.slane %v6551, %v6554
      %6557 = vrot.lane.b32.xlu0 %v6555, 64
      %v6558 = vpop.permute.xlu0 %6557
      %v6560 = vmul.f32 %v5013, %v6558
      %v6561 = vmul.f32 %v5019, %v6558
      %v6562 = vmul.f32 %v5025, %v6558
      %v6563 = vmul.f32 %v5031, %v6558
      %v6564 = vmul.f32 %v5037, %v6558
      %v6565 = vmul.f32 %v5043, %v6558
      %v6566 = vmul.f32 %v5049, %v6558
      %v6567 = vmul.f32 %v5055, %v6558
      %v6568 = vmul.f32 %v5061, %v6558
      %v6569 = vmul.f32 %v5067, %v6558
      %v6570 = vmul.f32 %v5073, %v6558
      %v6571 = vmul.f32 %v5079, %v6558
      %v6572 = vmul.f32 %v5085, %v6558
      %v6573 = vmul.f32 %v5091, %v6558
      %v6574 = vmul.f32 %v5097, %v6558
      %v6575 = vmul.f32 %v5103, %v6558
      %v6576 = vmul.f32 %v5109, %v6558
      %v6577 = vmul.f32 %v5115, %v6558
      %v6578 = vmul.f32 %v5121, %v6558
      %v6579 = vmul.f32 %v5127, %v6558
      %v6580 = vmul.f32 %v5133, %v6558
      %v6581 = vmul.f32 %v5139, %v6558
      %v6582 = vmul.f32 %v5145, %v6558
      %v6583 = vmul.f32 %v5151, %v6558
      %v6584 = vmul.f32 %v5157, %v6558
      %v6585 = vmul.f32 %v5163, %v6558
      %v6586 = vmul.f32 %v5169, %v6558
      %v6587 = vmul.f32 %v5175, %v6558
      %v6588 = vmul.f32 %v5181, %v6558
      %v6589 = vmul.f32 %v5187, %v6558
      %v6590 = vmul.f32 %v5193, %v6558
      %v6591 = vmul.f32 %v5199, %v6558
      %v6592 = vmul.f32 %v5205, %v6558
      %v6593 = vmul.f32 %v5211, %v6558
      %v6594 = vmul.f32 %v5217, %v6558
      %v6595 = vmul.f32 %v5223, %v6558
      %v6596 = vmul.f32 %v5229, %v6558
      %v6597 = vmul.f32 %v5235, %v6558
      %v6598 = vmul.f32 %v5241, %v6558
      %v6599 = vmul.f32 %v5247, %v6558
      %v6600 = vmul.f32 %v5253, %v6558
      %v6601 = vmul.f32 %v5259, %v6558
      %v6602 = vmul.f32 %v5265, %v6558
      %v6603 = vmul.f32 %v5271, %v6558
      %v6604 = vmul.f32 %v5277, %v6558
      %v6605 = vmul.f32 %v5283, %v6558
      %v6606 = vmul.f32 %v5289, %v6558
      %v6607 = vmul.f32 %v5295, %v6558
      %v6608 = vmul.f32 %v5301, %v6558
      %v6609 = vmul.f32 %v5307, %v6558
      %v6610 = vmul.f32 %v5313, %v6558
      %v6611 = vmul.f32 %v5319, %v6558
      %v6612 = vmul.f32 %v5325, %v6558
      %v6613 = vmul.f32 %v5331, %v6558
      %v6614 = vmul.f32 %v5337, %v6558
      %v6615 = vmul.f32 %v5343, %v6558
      %v6616 = vmul.f32 %v5349, %v6558
      %v6617 = vmul.f32 %v5355, %v6558
      %v6618 = vmul.f32 %v5361, %v6558
      %v6619 = vmul.f32 %v5367, %v6558
      %v6620 = vmul.f32 %v5373, %v6558
      %v6621 = vmul.f32 %v5379, %v6558
      %v6622 = vmul.f32 %v5385, %v6558
      %v6623 = vmul.f32 %v5391, %v6558
      %v6624 = vmul.f32 %v5397, %v6558
      %v6625 = vmul.f32 %v5403, %v6558
      %v6626 = vmul.f32 %v5409, %v6558
      %v6627 = vmul.f32 %v5415, %v6558
      %v6628 = vmul.f32 %v5421, %v6558
      %v6629 = vmul.f32 %v5427, %v6558
      %v6630 = vmul.f32 %v5433, %v6558
      %v6631 = vmul.f32 %v5439, %v6558
      %v6632 = vmul.f32 %v5445, %v6558
      %v6633 = vmul.f32 %v5451, %v6558
      %v6634 = vmul.f32 %v5457, %v6558
      %v6635 = vmul.f32 %v5463, %v6558
      %v6636 = vmul.f32 %v5469, %v6558
      %v6637 = vmul.f32 %v5475, %v6558
      %v6638 = vmul.f32 %v5481, %v6558
      %v6639 = vmul.f32 %v5487, %v6558
      %v6640 = vmul.f32 %v5493, %v6558
      %v6641 = vmul.f32 %v5499, %v6558
      %v6642 = vmul.f32 %v5505, %v6558
      %v6643 = vmul.f32 %v5511, %v6558
      %v6644 = vmul.f32 %v5517, %v6558
      %v6645 = vmul.f32 %v5523, %v6558
      %v6646 = vmul.f32 %v5529, %v6558
      %v6647 = vmul.f32 %v5535, %v6558
      %v6648 = vmul.f32 %v5541, %v6558
      %v6649 = vmul.f32 %v5547, %v6558
      %v6650 = vmul.f32 %v5553, %v6558
      %v6651 = vmul.f32 %v5559, %v6558
      %v6652 = vmul.f32 %v5565, %v6558
      %v6653 = vmul.f32 %v5571, %v6558
      %v6654 = vmul.f32 %v5577, %v6558
      %v6655 = vmul.f32 %v5583, %v6558
      %v6656 = vmul.f32 %v5589, %v6558
      %v6657 = vmul.f32 %v5595, %v6558
      %v6658 = vmul.f32 %v5601, %v6558
      %v6659 = vmul.f32 %v5607, %v6558
      %v6660 = vmul.f32 %v5613, %v6558
      %v6661 = vmul.f32 %v5619, %v6558
      %v6662 = vmul.f32 %v5625, %v6558
      %v6663 = vmul.f32 %v5631, %v6558
      %v6664 = vmul.f32 %v5637, %v6558
      %v6665 = vmul.f32 %v5643, %v6558
      %v6666 = vmul.f32 %v5649, %v6558
      %v6667 = vmul.f32 %v5655, %v6558
      %v6668 = vmul.f32 %v5661, %v6558
      %v6669 = vmul.f32 %v5667, %v6558
      %v6670 = vmul.f32 %v5673, %v6558
      %v6671 = vmul.f32 %v5679, %v6558
      %v6672 = vmul.f32 %v5685, %v6558
      %v6673 = vmul.f32 %v5691, %v6558
      %v6674 = vmul.f32 %v5697, %v6558
      %v6675 = vmul.f32 %v5703, %v6558
      %v6676 = vmul.f32 %v5709, %v6558
      %v6677 = vmul.f32 %v5715, %v6558
      %v6678 = vmul.f32 %v5721, %v6558
      %v6679 = vmul.f32 %v5727, %v6558
      %v6680 = vmul.f32 %v5733, %v6558
      %v6681 = vmul.f32 %v5739, %v6558
      %v6682 = vmul.f32 %v5745, %v6558
      %v6683 = vmul.f32 %v5751, %v6558
      %v6684 = vmul.f32 %v5757, %v6558
      %v6685 = vmul.f32 %v5763, %v6558
      %v6686 = vmul.f32 %v5769, %v6558
      %v6687 = vmul.f32 %v5775, %v6558
      %v6688 = vld [vmem:[%s16] sm:$0xff]
      %v6689 = vld [vmem:[%s16 + $0x8] sm:$0xff]
      %v6690 = vld [vmem:[%s16 + $0x10] sm:$0xff]
      %v6691 = vld [vmem:[%s16 + $0x18] sm:$0xff]
      %v6692 = vld [vmem:[%s16 + $0x20] sm:$0xff]
      %v6693 = vld [vmem:[%s16 + $0x28] sm:$0xff]
      %v6694 = vld [vmem:[%s16 + $0x30] sm:$0xff]
      %v6695 = vld [vmem:[%s16 + $0x38] sm:$0xff]
      %v6696 = vld [vmem:[%s17] sm:$0x1]
      %v6698 = vlaneseq
      %v6699 = vshrl.u32 %v6698, 7
      %v6700 = vsub.s32 0, %v6699
      %v6701 = vrot.slane %v6696, %v6700
      %6831 = vrot.lane.b32.xlu0 %v6560, 64
      %v6832 = vpop.permute.xlu0 %6831
      %6833 = vrot.lane.b32.xlu0 %v6561, 64
      %v6834 = vpop.permute.xlu0 %6833
      %6835 = vrot.lane.b32.xlu0 %v6562, 64
      %v6836 = vpop.permute.xlu0 %6835
      %6837 = vrot.lane.b32.xlu0 %v6563, 64
      %v6838 = vpop.permute.xlu0 %6837
      %6839 = vrot.lane.b32.xlu0 %v6564, 64
      %v6840 = vpop.permute.xlu0 %6839
      %6841 = vrot.lane.b32.xlu0 %v6565, 64
      %v6842 = vpop.permute.xlu0 %6841
      %6843 = vrot.lane.b32.xlu0 %v6566, 64
      %v6844 = vpop.permute.xlu0 %6843
      %6845 = vrot.lane.b32.xlu0 %v6567, 64
      %v6846 = vpop.permute.xlu0 %6845
      %6847 = vrot.lane.b32.xlu0 %v6568, 64
      %v6848 = vpop.permute.xlu0 %6847
      %6849 = vrot.lane.b32.xlu0 %v6569, 64
      %v6850 = vpop.permute.xlu0 %6849
      %6851 = vrot.lane.b32.xlu0 %v6570, 64
      %v6852 = vpop.permute.xlu0 %6851
      %6853 = vrot.lane.b32.xlu0 %v6571, 64
      %v6854 = vpop.permute.xlu0 %6853
      %6855 = vrot.lane.b32.xlu0 %v6572, 64
      %v6856 = vpop.permute.xlu0 %6855
      %6857 = vrot.lane.b32.xlu0 %v6573, 64
      %v6858 = vpop.permute.xlu0 %6857
      %6859 = vrot.lane.b32.xlu0 %v6574, 64
      %v6860 = vpop.permute.xlu0 %6859
      %6861 = vrot.lane.b32.xlu0 %v6575, 64
      %v6862 = vpop.permute.xlu0 %6861
      %6863 = vrot.lane.b32.xlu0 %v6576, 64
      %v6864 = vpop.permute.xlu0 %6863
      %6865 = vrot.lane.b32.xlu0 %v6577, 64
      %v6866 = vpop.permute.xlu0 %6865
      %6867 = vrot.lane.b32.xlu0 %v6578, 64
      %v6868 = vpop.permute.xlu0 %6867
      %6869 = vrot.lane.b32.xlu0 %v6579, 64
      %v6870 = vpop.permute.xlu0 %6869
      %6871 = vrot.lane.b32.xlu0 %v6580, 64
      %v6872 = vpop.permute.xlu0 %6871
      %6873 = vrot.lane.b32.xlu0 %v6581, 64
      %v6874 = vpop.permute.xlu0 %6873
      %6875 = vrot.lane.b32.xlu0 %v6582, 64
      %v6876 = vpop.permute.xlu0 %6875
      %6877 = vrot.lane.b32.xlu0 %v6583, 64
      %v6878 = vpop.permute.xlu0 %6877
      %6879 = vrot.lane.b32.xlu0 %v6584, 64
      %v6880 = vpop.permute.xlu0 %6879
      %6881 = vrot.lane.b32.xlu0 %v6585, 64
      %v6882 = vpop.permute.xlu0 %6881
      %6883 = vrot.lane.b32.xlu0 %v6586, 64
      %v6884 = vpop.permute.xlu0 %6883
      %6885 = vrot.lane.b32.xlu0 %v6587, 64
      %v6886 = vpop.permute.xlu0 %6885
      %6887 = vrot.lane.b32.xlu0 %v6588, 64
      %v6888 = vpop.permute.xlu0 %6887
      %6889 = vrot.lane.b32.xlu0 %v6589, 64
      %v6890 = vpop.permute.xlu0 %6889
      %6891 = vrot.lane.b32.xlu0 %v6590, 64
      %v6892 = vpop.permute.xlu0 %6891
      %6893 = vrot.lane.b32.xlu0 %v6591, 64
      %v6894 = vpop.permute.xlu0 %6893
      %6895 = vrot.lane.b32.xlu0 %v6592, 64
      %v6896 = vpop.permute.xlu0 %6895
      %6897 = vrot.lane.b32.xlu0 %v6593, 64
      %v6898 = vpop.permute.xlu0 %6897
      %6899 = vrot.lane.b32.xlu0 %v6594, 64
      %v6900 = vpop.permute.xlu0 %6899
      %6901 = vrot.lane.b32.xlu0 %v6595, 64
      %v6902 = vpop.permute.xlu0 %6901
      %6903 = vrot.lane.b32.xlu0 %v6596, 64
      %v6904 = vpop.permute.xlu0 %6903
      %6905 = vrot.lane.b32.xlu0 %v6597, 64
      %v6906 = vpop.permute.xlu0 %6905
      %6907 = vrot.lane.b32.xlu0 %v6598, 64
      %v6908 = vpop.permute.xlu0 %6907
      %6909 = vrot.lane.b32.xlu0 %v6599, 64
      %v6910 = vpop.permute.xlu0 %6909
      %6911 = vrot.lane.b32.xlu0 %v6600, 64
      %v6912 = vpop.permute.xlu0 %6911
      %6913 = vrot.lane.b32.xlu0 %v6601, 64
      %v6914 = vpop.permute.xlu0 %6913
      %6915 = vrot.lane.b32.xlu0 %v6602, 64
      %v6916 = vpop.permute.xlu0 %6915
      %6917 = vrot.lane.b32.xlu0 %v6603, 64
      %v6918 = vpop.permute.xlu0 %6917
      %6919 = vrot.lane.b32.xlu0 %v6604, 64
      %v6920 = vpop.permute.xlu0 %6919
      %6921 = vrot.lane.b32.xlu0 %v6605, 64
      %v6922 = vpop.permute.xlu0 %6921
      %6923 = vrot.lane.b32.xlu0 %v6606, 64
      %v6924 = vpop.permute.xlu0 %6923
      %6925 = vrot.lane.b32.xlu0 %v6607, 64
      %v6926 = vpop.permute.xlu0 %6925
      %6927 = vrot.lane.b32.xlu0 %v6608, 64
      %v6928 = vpop.permute.xlu0 %6927
      %6929 = vrot.lane.b32.xlu0 %v6609, 64
      %v6930 = vpop.permute.xlu0 %6929
      %6931 = vrot.lane.b32.xlu0 %v6610, 64
      %v6932 = vpop.permute.xlu0 %6931
      %6933 = vrot.lane.b32.xlu0 %v6611, 64
      %v6934 = vpop.permute.xlu0 %6933
      %6935 = vrot.lane.b32.xlu0 %v6612, 64
      %v6936 = vpop.permute.xlu0 %6935
      %6937 = vrot.lane.b32.xlu0 %v6613, 64
      %v6938 = vpop.permute.xlu0 %6937
      %6939 = vrot.lane.b32.xlu0 %v6614, 64
      %v6940 = vpop.permute.xlu0 %6939
      %6941 = vrot.lane.b32.xlu0 %v6615, 64
      %v6942 = vpop.permute.xlu0 %6941
      %6943 = vrot.lane.b32.xlu0 %v6616, 64
      %v6944 = vpop.permute.xlu0 %6943
      %6945 = vrot.lane.b32.xlu0 %v6617, 64
      %v6946 = vpop.permute.xlu0 %6945
      %6947 = vrot.lane.b32.xlu0 %v6618, 64
      %v6948 = vpop.permute.xlu0 %6947
      %6949 = vrot.lane.b32.xlu0 %v6619, 64
      %v6950 = vpop.permute.xlu0 %6949
      %6951 = vrot.lane.b32.xlu0 %v6620, 64
      %v6952 = vpop.permute.xlu0 %6951
      %6953 = vrot.lane.b32.xlu0 %v6621, 64
      %v6954 = vpop.permute.xlu0 %6953
      %6955 = vrot.lane.b32.xlu0 %v6622, 64
      %v6956 = vpop.permute.xlu0 %6955
      %6957 = vrot.lane.b32.xlu0 %v6623, 64
      %v6958 = vpop.permute.xlu0 %6957
      %6959 = vrot.lane.b32.xlu0 %v6624, 64
      %v6960 = vpop.permute.xlu0 %6959
      %6961 = vrot.lane.b32.xlu0 %v6625, 64
      %v6962 = vpop.permute.xlu0 %6961
      %6963 = vrot.lane.b32.xlu0 %v6626, 64
      %v6964 = vpop.permute.xlu0 %6963
      %6965 = vrot.lane.b32.xlu0 %v6627, 64
      %v6966 = vpop.permute.xlu0 %6965
      %6967 = vrot.lane.b32.xlu0 %v6628, 64
      %v6968 = vpop.permute.xlu0 %6967
      %6969 = vrot.lane.b32.xlu0 %v6629, 64
      %v6970 = vpop.permute.xlu0 %6969
      %6971 = vrot.lane.b32.xlu0 %v6630, 64
      %v6972 = vpop.permute.xlu0 %6971
      %6973 = vrot.lane.b32.xlu0 %v6631, 64
      %v6974 = vpop.permute.xlu0 %6973
      %6975 = vrot.lane.b32.xlu0 %v6632, 64
      %v6976 = vpop.permute.xlu0 %6975
      %6977 = vrot.lane.b32.xlu0 %v6633, 64
      %v6978 = vpop.permute.xlu0 %6977
      %6979 = vrot.lane.b32.xlu0 %v6634, 64
      %v6980 = vpop.permute.xlu0 %6979
      %6981 = vrot.lane.b32.xlu0 %v6635, 64
      %v6982 = vpop.permute.xlu0 %6981
      %6983 = vrot.lane.b32.xlu0 %v6636, 64
      %v6984 = vpop.permute.xlu0 %6983
      %6985 = vrot.lane.b32.xlu0 %v6637, 64
      %v6986 = vpop.permute.xlu0 %6985
      %6987 = vrot.lane.b32.xlu0 %v6638, 64
      %v6988 = vpop.permute.xlu0 %6987
      %6989 = vrot.lane.b32.xlu0 %v6639, 64
      %v6990 = vpop.permute.xlu0 %6989
      %6991 = vrot.lane.b32.xlu0 %v6640, 64
      %v6992 = vpop.permute.xlu0 %6991
      %6993 = vrot.lane.b32.xlu0 %v6641, 64
      %v6994 = vpop.permute.xlu0 %6993
      %6995 = vrot.lane.b32.xlu0 %v6642, 64
      %v6996 = vpop.permute.xlu0 %6995
      %6997 = vrot.lane.b32.xlu0 %v6643, 64
      %v6998 = vpop.permute.xlu0 %6997
      %6999 = vrot.lane.b32.xlu0 %v6644, 64
      %v7000 = vpop.permute.xlu0 %6999
      %7001 = vrot.lane.b32.xlu0 %v6645, 64
      %v7002 = vpop.permute.xlu0 %7001
      %7003 = vrot.lane.b32.xlu0 %v6646, 64
      %v7004 = vpop.permute.xlu0 %7003
      %7005 = vrot.lane.b32.xlu0 %v6647, 64
      %v7006 = vpop.permute.xlu0 %7005
      %7007 = vrot.lane.b32.xlu0 %v6648, 64
      %v7008 = vpop.permute.xlu0 %7007
      %7009 = vrot.lane.b32.xlu0 %v6649, 64
      %v7010 = vpop.permute.xlu0 %7009
      %7011 = vrot.lane.b32.xlu0 %v6650, 64
      %v7012 = vpop.permute.xlu0 %7011
      %7013 = vrot.lane.b32.xlu0 %v6651, 64
      %v7014 = vpop.permute.xlu0 %7013
      %7015 = vrot.lane.b32.xlu0 %v6652, 64
      %v7016 = vpop.permute.xlu0 %7015
      %7017 = vrot.lane.b32.xlu0 %v6653, 64
      %v7018 = vpop.permute.xlu0 %7017
      %7019 = vrot.lane.b32.xlu0 %v6654, 64
      %v7020 = vpop.permute.xlu0 %7019
      %7021 = vrot.lane.b32.xlu0 %v6655, 64
      %v7022 = vpop.permute.xlu0 %7021
      %7023 = vrot.lane.b32.xlu0 %v6656, 64
      %v7024 = vpop.permute.xlu0 %7023
      %7025 = vrot.lane.b32.xlu0 %v6657, 64
      %v7026 = vpop.permute.xlu0 %7025
      %7027 = vrot.lane.b32.xlu0 %v6658, 64
      %v7028 = vpop.permute.xlu0 %7027
      %7029 = vrot.lane.b32.xlu0 %v6659, 64
      %v7030 = vpop.permute.xlu0 %7029
      %7031 = vrot.lane.b32.xlu0 %v6660, 64
      %v7032 = vpop.permute.xlu0 %7031
      %7033 = vrot.lane.b32.xlu0 %v6661, 64
      %v7034 = vpop.permute.xlu0 %7033
      %7035 = vrot.lane.b32.xlu0 %v6662, 64
      %v7036 = vpop.permute.xlu0 %7035
      %7037 = vrot.lane.b32.xlu0 %v6663, 64
      %v7038 = vpop.permute.xlu0 %7037
      %7039 = vrot.lane.b32.xlu0 %v6664, 64
      %v7040 = vpop.permute.xlu0 %7039
      %7041 = vrot.lane.b32.xlu0 %v6665, 64
      %v7042 = vpop.permute.xlu0 %7041
      %7043 = vrot.lane.b32.xlu0 %v6666, 64
      %v7044 = vpop.permute.xlu0 %7043
      %7045 = vrot.lane.b32.xlu0 %v6667, 64
      %v7046 = vpop.permute.xlu0 %7045
      %7047 = vrot.lane.b32.xlu0 %v6668, 64
      %v7048 = vpop.permute.xlu0 %7047
      %7049 = vrot.lane.b32.xlu0 %v6669, 64
      %v7050 = vpop.permute.xlu0 %7049
      %7051 = vrot.lane.b32.xlu0 %v6670, 64
      %v7052 = vpop.permute.xlu0 %7051
      %7053 = vrot.lane.b32.xlu0 %v6671, 64
      %v7054 = vpop.permute.xlu0 %7053
      %7055 = vrot.lane.b32.xlu0 %v6672, 64
      %v7056 = vpop.permute.xlu0 %7055
      %7057 = vrot.lane.b32.xlu0 %v6673, 64
      %v7058 = vpop.permute.xlu0 %7057
      %7059 = vrot.lane.b32.xlu0 %v6674, 64
      %v7060 = vpop.permute.xlu0 %7059
      %7061 = vrot.lane.b32.xlu0 %v6675, 64
      %v7062 = vpop.permute.xlu0 %7061
      %7063 = vrot.lane.b32.xlu0 %v6676, 64
      %v7064 = vpop.permute.xlu0 %7063
      %7065 = vrot.lane.b32.xlu0 %v6677, 64
      %v7066 = vpop.permute.xlu0 %7065
      %7067 = vrot.lane.b32.xlu0 %v6678, 64
      %v7068 = vpop.permute.xlu0 %7067
      %7069 = vrot.lane.b32.xlu0 %v6679, 64
      %v7070 = vpop.permute.xlu0 %7069
      %7071 = vrot.lane.b32.xlu0 %v6680, 64
      %v7072 = vpop.permute.xlu0 %7071
      %7073 = vrot.lane.b32.xlu0 %v6681, 64
      %v7074 = vpop.permute.xlu0 %7073
      %7075 = vrot.lane.b32.xlu0 %v6682, 64
      %v7076 = vpop.permute.xlu0 %7075
      %7077 = vrot.lane.b32.xlu0 %v6683, 64
      %v7078 = vpop.permute.xlu0 %7077
      %7079 = vrot.lane.b32.xlu0 %v6684, 64
      %v7080 = vpop.permute.xlu0 %7079
      %7081 = vrot.lane.b32.xlu0 %v6685, 64
      %v7082 = vpop.permute.xlu0 %7081
      %7083 = vrot.lane.b32.xlu0 %v6686, 64
      %v7084 = vpop.permute.xlu0 %7083
      %7085 = vrot.lane.b32.xlu0 %v6687, 64
      %v7086 = vpop.permute.xlu0 %7085
      %v7087 = vsel %vm1019, %v6832, 0
      %v7089 = vsel %vm1019, %v6834, 0
      %v7091 = vsel %vm1019, %v6836, 0
      %v7093 = vsel %vm1019, %v6838, 0
      %v7095 = vsel %vm1019, %v6840, 0
      %v7097 = vsel %vm1019, %v6842, 0
      %v7099 = vsel %vm1019, %v6844, 0
      %v7101 = vsel %vm1019, %v6846, 0
      %v7103 = vsel %vm1019, %v6848, 0
      %v7105 = vsel %vm1019, %v6850, 0
      %v7107 = vsel %vm1019, %v6852, 0
      %v7109 = vsel %vm1019, %v6854, 0
      %v7111 = vsel %vm1019, %v6856, 0
      %v7113 = vsel %vm1019, %v6858, 0
      %v7115 = vsel %vm1019, %v6860, 0
      %v7117 = vsel %vm1019, %v6862, 0
      %v7119 = vsel %vm1019, %v6864, 0
      %v7121 = vsel %vm1019, %v6866, 0
      %v7123 = vsel %vm1019, %v6868, 0
      %v7125 = vsel %vm1019, %v6870, 0
      %v7127 = vsel %vm1019, %v6872, 0
      %v7129 = vsel %vm1019, %v6874, 0
      %v7131 = vsel %vm1019, %v6876, 0
      %v7133 = vsel %vm1019, %v6878, 0
      %v7135 = vsel %vm1019, %v6880, 0
      %v7137 = vsel %vm1019, %v6882, 0
      %v7139 = vsel %vm1019, %v6884, 0
      %v7141 = vsel %vm1019, %v6886, 0
      %v7143 = vsel %vm1019, %v6888, 0
      %v7145 = vsel %vm1019, %v6890, 0
      %v7147 = vsel %vm1019, %v6892, 0
      %v7149 = vsel %vm1019, %v6894, 0
      %v7151 = vsel %vm1019, %v6896, 0
      %v7153 = vsel %vm1019, %v6898, 0
      %v7155 = vsel %vm1019, %v6900, 0
      %v7157 = vsel %vm1019, %v6902, 0
      %v7159 = vsel %vm1019, %v6904, 0
      %v7161 = vsel %vm1019, %v6906, 0
      %v7163 = vsel %vm1019, %v6908, 0
      %v7165 = vsel %vm1019, %v6910, 0
      %v7167 = vsel %vm1019, %v6912, 0
      %v7169 = vsel %vm1019, %v6914, 0
      %v7171 = vsel %vm1019, %v6916, 0
      %v7173 = vsel %vm1019, %v6918, 0
      %v7175 = vsel %vm1019, %v6920, 0
      %v7177 = vsel %vm1019, %v6922, 0
      %v7179 = vsel %vm1019, %v6924, 0
      %v7181 = vsel %vm1019, %v6926, 0
      %v7183 = vsel %vm1019, %v6928, 0
      %v7185 = vsel %vm1019, %v6930, 0
      %v7187 = vsel %vm1019, %v6932, 0
      %v7189 = vsel %vm1019, %v6934, 0
      %v7191 = vsel %vm1019, %v6936, 0
      %v7193 = vsel %vm1019, %v6938, 0
      %v7195 = vsel %vm1019, %v6940, 0
      %v7197 = vsel %vm1019, %v6942, 0
      %v7199 = vsel %vm1019, %v6944, 0
      %v7201 = vsel %vm1019, %v6946, 0
      %v7203 = vsel %vm1019, %v6948, 0
      %v7205 = vsel %vm1019, %v6950, 0
      %v7207 = vsel %vm1019, %v6952, 0
      %v7209 = vsel %vm1019, %v6954, 0
      %v7211 = vsel %vm1019, %v6956, 0
      %v7213 = vsel %vm1019, %v6958, 0
      %v7215 = vsel %vm1019, %v6960, 0
      %v7217 = vsel %vm1019, %v6962, 0
      %v7219 = vsel %vm1019, %v6964, 0
      %v7221 = vsel %vm1019, %v6966, 0
      %v7223 = vsel %vm1019, %v6968, 0
      %v7225 = vsel %vm1019, %v6970, 0
      %v7227 = vsel %vm1019, %v6972, 0
      %v7229 = vsel %vm1019, %v6974, 0
      %v7231 = vsel %vm1019, %v6976, 0
      %v7233 = vsel %vm1019, %v6978, 0
      %v7235 = vsel %vm1019, %v6980, 0
      %v7237 = vsel %vm1019, %v6982, 0
      %v7239 = vsel %vm1019, %v6984, 0
      %v7241 = vsel %vm1019, %v6986, 0
      %v7243 = vsel %vm1019, %v6988, 0
      %v7245 = vsel %vm1019, %v6990, 0
      %v7247 = vsel %vm1019, %v6992, 0
      %v7249 = vsel %vm1019, %v6994, 0
      %v7251 = vsel %vm1019, %v6996, 0
      %v7253 = vsel %vm1019, %v6998, 0
      %v7255 = vsel %vm1019, %v7000, 0
      %v7257 = vsel %vm1019, %v7002, 0
      %v7259 = vsel %vm1019, %v7004, 0
      %v7261 = vsel %vm1019, %v7006, 0
      %v7263 = vsel %vm1019, %v7008, 0
      %v7265 = vsel %vm1019, %v7010, 0
      %v7267 = vsel %vm1019, %v7012, 0
      %v7269 = vsel %vm1019, %v7014, 0
      %v7271 = vsel %vm1019, %v7016, 0
      %v7273 = vsel %vm1019, %v7018, 0
      %v7275 = vsel %vm1019, %v7020, 0
      %v7277 = vsel %vm1019, %v7022, 0
      %v7279 = vsel %vm1019, %v7024, 0
      %v7281 = vsel %vm1019, %v7026, 0
      %v7283 = vsel %vm1019, %v7028, 0
      %v7285 = vsel %vm1019, %v7030, 0
      %v7287 = vsel %vm1019, %v7032, 0
      %v7289 = vsel %vm1019, %v7034, 0
      %v7291 = vsel %vm1019, %v7036, 0
      %v7293 = vsel %vm1019, %v7038, 0
      %v7295 = vsel %vm1019, %v7040, 0
      %v7297 = vsel %vm1019, %v7042, 0
      %v7299 = vsel %vm1019, %v7044, 0
      %v7301 = vsel %vm1019, %v7046, 0
      %v7303 = vsel %vm1019, %v7048, 0
      %v7305 = vsel %vm1019, %v7050, 0
      %v7307 = vsel %vm1019, %v7052, 0
      %v7309 = vsel %vm1019, %v7054, 0
      %v7311 = vsel %vm1019, %v7056, 0
      %v7313 = vsel %vm1019, %v7058, 0
      %v7315 = vsel %vm1019, %v7060, 0
      %v7317 = vsel %vm1019, %v7062, 0
      %v7319 = vsel %vm1019, %v7064, 0
      %v7321 = vsel %vm1019, %v7066, 0
      %v7323 = vsel %vm1019, %v7068, 0
      %v7325 = vsel %vm1019, %v7070, 0
      %v7327 = vsel %vm1019, %v7072, 0
      %v7329 = vsel %vm1019, %v7074, 0
      %v7331 = vsel %vm1019, %v7076, 0
      %v7333 = vsel %vm1019, %v7078, 0
      %v7335 = vsel %vm1019, %v7080, 0
      %v7337 = vsel %vm1019, %v7082, 0
      %v7339 = vsel %vm1019, %v7084, 0
      %v7341 = vsel %vm1019, %v7086, 0
      %7343 = vmatprep.subr.mxu0 0.0
      %7344 = vmatpush1.msra.mxu0 %v6688
      %7345 = vmatprep.subr.mxu0 0.0
      %7346 = vmatpush1.msra.mxu0 %v6689
      %7347 = vmatprep.subr.mxu0 0.0
      %7348 = vmatpush1.msra.mxu0 %v6690
      %7349 = vmatprep.subr.mxu0 0.0
      %7350 = vmatpush1.msra.mxu0 %v6691
      %7351 = vmatprep.subr.mxu0 0.0
      %7352 = vmatpush1.msra.mxu0 %v6692
      %7353 = vmatprep.subr.mxu0 0.0
      %7354 = vmatpush1.msra.mxu0 %v6693
      %7355 = vmatprep.subr.mxu0 0.0
      %7356 = vmatpush1.msra.mxu0 %v6694
      %7357 = vmatprep.subr.mxu0 0.0
      %7358 = vmatpush1.msra.mxu0 %v6695
      %7359 = vmatprep.subr.mxu0 0.0
      %7360 = vmatpush1.msra.mxu0 0.0
      %7361 = vmatprep.subr.mxu0 0.0
      %7362 = vmatpush1.msra.mxu0 0.0
      %7363 = vmatprep.subr.mxu0 0.0
      %7364 = vmatpush1.msra.mxu0 0.0
      %7365 = vmatprep.subr.mxu0 0.0
      %7366 = vmatpush1.msra.mxu0 0.0
      %7367 = vmatprep.subr.mxu0 0.0
      %7368 = vmatpush1.msra.mxu0 0.0
      %7369 = vmatprep.subr.mxu0 0.0
      %7370 = vmatpush1.msra.mxu0 0.0
      %7371 = vmatprep.subr.mxu0 0.0
      %7372 = vmatpush1.msra.mxu0 0.0
      %7373 = vmatprep.subr.mxu0 0.0
      %7374 = vmatpush1.msra.mxu0 0.0
      %7375 = vmatprep.subr.mxu0 0.0
      %7376 = vmatpush1.msra.mxu0 0.0
      %7377 = vmatprep.subr.mxu0 0.0
      %7378 = vmatpush1.msra.mxu0 0.0
      %7379 = vmatprep.subr.mxu0 0.0
      %7380 = vmatpush1.msra.mxu0 0.0
      %7381 = vmatprep.subr.mxu0 0.0
      %7382 = vmatpush1.msra.mxu0 0.0
      %7383 = vmatprep.subr.mxu0 0.0
      %7384 = vmatpush1.msra.mxu0 0.0
      %7385 = vmatprep.subr.mxu0 0.0
      %7386 = vmatpush1.msra.mxu0 0.0
      %7387 = vmatprep.subr.mxu0 0.0
      %7388 = vmatpush1.msra.mxu0 0.0
      %7389 = vmatprep.subr.mxu0 0.0
      %7390 = vmatpush1.msra.mxu0 0.0
      %7391 = vmatprep.subr.mxu0 0.0
      %7392 = vmatpush1.msra.mxu0 0.0
      %7393 = vmatprep.subr.mxu0 0.0
      %7394 = vmatpush1.msra.mxu0 0.0
      %7395 = vmatprep.subr.mxu0 0.0
      %7396 = vmatpush1.msra.mxu0 0.0
      %7397 = vmatprep.subr.mxu0 0.0
      %7398 = vmatpush1.msra.mxu0 0.0
      %7399 = vmatprep.subr.mxu0 0.0
      %7400 = vmatpush1.msra.mxu0 0.0
      %7401 = vmatprep.subr.mxu0 0.0
      %7402 = vmatpush1.msra.mxu0 0.0
      %7403 = vmatprep.subr.mxu0 0.0
      %7404 = vmatpush1.msra.mxu0 0.0
      %7405 = vmatprep.subr.mxu0 0.0
      %7406 = vmatpush1.msra.mxu0 0.0
      %7407 = vmatprep.mubr.f32.mxu0 0.0
      %7408 = vmatmul.mubr.f32.gmra.mrb[0].mxu0 %v7087
      %v7409 = vpop.f32.mrb[0].mxu0
      %v7410 = vadd.f32 %v6701, %v7409
      %v7411 = vpop.f32.mrb[0].mxu0
      %7412 = vmatprep.mubr.f32.mxu0 0.0
      %7413 = vmatmul.mubr.f32.gmra.mrb[0].mxu0 %v7089
      %v7414 = vpop.f32.mrb[0].mxu0
      %v7415 = vadd.f32 %v6701, %v7414
      %v7416 = vpop.f32.mrb[0].mxu0
      %7417 = vmatprep.mubr.f32.mxu0 0.0
      %7418 = vmatmul.mubr.f32.gmra.mrb[0].mxu0 %v7091
      %v7419 = vpop.f32.mrb[0].mxu0
      %v7420 = vadd.f32 %v6701, %v7419
      %v7421 = vpop.f32.mrb[0].mxu0
      %7422 = vmatprep.mubr.f32.mxu0 0.0
      %7423 = vmatmul.mubr.f32.gmra.mrb[0].mxu0 %v7093
      %v7424 = vpop.f32.mrb[0].mxu0
      %v7425 = vadd.f32 %v6701, %v7424
      %v7426 = vpop.f32.mrb[0].mxu0
      %7427 = vmatprep.mubr.f32.mxu0 0.0
      %7428 = vmatmul.mubr.f32.gmra.mrb[0].mxu0 %v7095
      %v7429 = vpop.f32.mrb[0].mxu0
      %v7430 = vadd.f32 %v6701, %v7429
      %v7431 = vpop.f32.mrb[0].mxu0
      %7432 = vmatprep.mubr.f32.mxu0 0.0
      %7433 = vmatmul.mubr.f32.gmra.mrb[0].mxu0 %v7097
      %v7434 = vpop.f32.mrb[0].mxu0
      %v7435 = vadd.f32 %v6701, %v7434
      %v7436 = vpop.f32.mrb[0].mxu0
      %7437 = vmatprep.mubr.f32.mxu0 0.0
      %7438 = vmatmul.mubr.f32.gmra.mrb[0].mxu0 %v7099
      %v7439 = vpop.f32.mrb[0].mxu0
      %v7440 = vadd.f32 %v6701, %v7439
      %v7441 = vpop.f32.mrb[0].mxu0
      %7442 = vmatprep.mubr.f32.mxu0 0.0
      %7443 = vmatmul.mubr.f32.gmra.mrb[0].mxu0 %v7101
      %v7444 = vpop.f32.mrb[0].mxu0
      %v7445 = vadd.f32 %v6701, %v7444
      %v7446 = vpop.f32.mrb[0].mxu0
      %7447 = vmatprep.mubr.f32.mxu0 0.0
      %7448 = vmatmul.mubr.f32.gmra.mrb[0].mxu0 %v7103
      %v7449 = vpop.f32.mrb[0].mxu0
      %v7450 = vadd.f32 %v6701, %v7449
      %v7451 = vpop.f32.mrb[0].mxu0
      %7452 = vmatprep.mubr.f32.mxu0 0.0
      %7453 = vmatmul.mubr.f32.gmra.mrb[0].mxu0 %v7105
      %v7454 = vpop.f32.mrb[0].mxu0
      %v7455 = vadd.f32 %v6701, %v7454
      %v7456 = vpop.f32.mrb[0].mxu0
      %7457 = vmatprep.mubr.f32.mxu0 0.0
      %7458 = vmatmul.mubr.f32.gmra.mrb[0].mxu0 %v7107
      %v7459 = vpop.f32.mrb[0].mxu0
      %v7460 = vadd.f32 %v6701, %v7459
      %v7461 = vpop.f32.mrb[0].mxu0
      %7462 = vmatprep.mubr.f32.mxu0 0.0
      %7463 = vmatmul.mubr.f32.gmra.mrb[0].mxu0 %v7109
      %v7464 = vpop.f32.mrb[0].mxu0
      %v7465 = vadd.f32 %v6701, %v7464
      %v7466 = vpop.f32.mrb[0].mxu0
      %7467 = vmatprep.mubr.f32.mxu0 0.0
      %7468 = vmatmul.mubr.f32.gmra.mrb[0].mxu0 %v7111
      %v7469 = vpop.f32.mrb[0].mxu0
      %v7470 = vadd.f32 %v6701, %v7469
      %v7471 = vpop.f32.mrb[0].mxu0
      %7472 = vmatprep.mubr.f32.mxu0 0.0
      %7473 = vmatmul.mubr.f32.gmra.mrb[0].mxu0 %v7113
      %v7474 = vpop.f32.mrb[0].mxu0
      %v7475 = vadd.f32 %v6701, %v7474
      %v7476 = vpop.f32.mrb[0].mxu0
      %7477 = vmatprep.mubr.f32.mxu0 0.0
      %7478 = vmatmul.mubr.f32.gmra.mrb[0].mxu0 %v7115
      %v7479 = vpop.f32.mrb[0].mxu0
      %v7480 = vadd.f32 %v6701, %v7479
      %v7481 = vpop.f32.mrb[0].mxu0
      %7482 = vmatprep.mubr.f32.mxu0 0.0
      %7483 = vmatmul.mubr.f32.gmra.mrb[0].mxu0 %v7117
      %v7484 = vpop.f32.mrb[0].mxu0
      %v7485 = vadd.f32 %v6701, %v7484
      %v7486 = vpop.f32.mrb[0].mxu0
      %7487 = vmatprep.mubr.f32.mxu0 0.0
      %7488 = vmatmul.mubr.f32.gmra.mrb[0].mxu0 %v7119
      %v7489 = vpop.f32.mrb[0].mxu0
      %v7490 = vadd.f32 %v6701, %v7489
      %v7491 = vpop.f32.mrb[0].mxu0
      %7492 = vmatprep.mubr.f32.mxu0 0.0
      %7493 = vmatmul.mubr.f32.gmra.mrb[0].mxu0 %v7121
      %v7494 = vpop.f32.mrb[0].mxu0
      %v7495 = vadd.f32 %v6701, %v7494
      %v7496 = vpop.f32.mrb[0].mxu0
      %7497 = vmatprep.mubr.f32.mxu0 0.0
      %7498 = vmatmul.mubr.f32.gmra.mrb[0].mxu0 %v7123
      %v7499 = vpop.f32.mrb[0].mxu0
      %v7500 = vadd.f32 %v6701, %v7499
      %v7501 = vpop.f32.mrb[0].mxu0
      %7502 = vmatprep.mubr.f32.mxu0 0.0
      %7503 = vmatmul.mubr.f32.gmra.mrb[0].mxu0 %v7125
      %v7504 = vpop.f32.mrb[0].mxu0
      %v7505 = vadd.f32 %v6701, %v7504
      %v7506 = vpop.f32.mrb[0].mxu0
      %7507 = vmatprep.mubr.f32.mxu0 0.0
      %7508 = vmatmul.mubr.f32.gmra.mrb[0].mxu0 %v7127
      %v7509 = vpop.f32.mrb[0].mxu0
      %v7510 = vadd.f32 %v6701, %v7509
      %v7511 = vpop.f32.mrb[0].mxu0
      %7512 = vmatprep.mubr.f32.mxu0 0.0
      %7513 = vmatmul.mubr.f32.gmra.mrb[0].mxu0 %v7129
      %v7514 = vpop.f32.mrb[0].mxu0
      %v7515 = vadd.f32 %v6701, %v7514
      %v7516 = vpop.f32.mrb[0].mxu0
      %7517 = vmatprep.mubr.f32.mxu0 0.0
      %7518 = vmatmul.mubr.f32.gmra.mrb[0].mxu0 %v7131
      %v7519 = vpop.f32.mrb[0].mxu0
      %v7520 = vadd.f32 %v6701, %v7519
      %v7521 = vpop.f32.mrb[0].mxu0
      %7522 = vmatprep.mubr.f32.mxu0 0.0
      %7523 = vmatmul.mubr.f32.gmra.mrb[0].mxu0 %v7133
      %v7524 = vpop.f32.mrb[0].mxu0
      %v7525 = vadd.f32 %v6701, %v7524
      %v7526 = vpop.f32.mrb[0].mxu0
      %7527 = vmatprep.mubr.f32.mxu0 0.0
      %7528 = vmatmul.mubr.f32.gmra.mrb[0].mxu0 %v7135
      %v7529 = vpop.f32.mrb[0].mxu0
      %v7530 = vadd.f32 %v6701, %v7529
      %v7531 = vpop.f32.mrb[0].mxu0
      %7532 = vmatprep.mubr.f32.mxu0 0.0
      %7533 = vmatmul.mubr.f32.gmra.mrb[0].mxu0 %v7137
      %v7534 = vpop.f32.mrb[0].mxu0
      %v7535 = vadd.f32 %v6701, %v7534
      %v7536 = vpop.f32.mrb[0].mxu0
      %7537 = vmatprep.mubr.f32.mxu0 0.0
      %7538 = vmatmul.mubr.f32.gmra.mrb[0].mxu0 %v7139
      %v7539 = vpop.f32.mrb[0].mxu0
      %v7540 = vadd.f32 %v6701, %v7539
      %v7541 = vpop.f32.mrb[0].mxu0
      %7542 = vmatprep.mubr.f32.mxu0 0.0
      %7543 = vmatmul.mubr.f32.gmra.mrb[0].mxu0 %v7141
      %v7544 = vpop.f32.mrb[0].mxu0
      %v7545 = vadd.f32 %v6701, %v7544
      %v7546 = vpop.f32.mrb[0].mxu0
      %7547 = vmatprep.mubr.f32.mxu0 0.0
      %7548 = vmatmul.mubr.f32.gmra.mrb[0].mxu0 %v7143
      %v7549 = vpop.f32.mrb[0].mxu0
      %v7550 = vadd.f32 %v6701, %v7549
      %v7551 = vpop.f32.mrb[0].mxu0
      %7552 = vmatprep.mubr.f32.mxu0 0.0
      %7553 = vmatmul.mubr.f32.gmra.mrb[0].mxu0 %v7145
      %v7554 = vpop.f32.mrb[0].mxu0
      %v7555 = vadd.f32 %v6701, %v7554
      %v7556 = vpop.f32.mrb[0].mxu0
      %7557 = vmatprep.mubr.f32.mxu0 0.0
      %7558 = vmatmul.mubr.f32.gmra.mrb[0].mxu0 %v7147
      %v7559 = vpop.f32.mrb[0].mxu0
      %v7560 = vadd.f32 %v6701, %v7559
      %v7561 = vpop.f32.mrb[0].mxu0
      %7562 = vmatprep.mubr.f32.mxu0 0.0
      %7563 = vmatmul.mubr.f32.gmra.mrb[0].mxu0 %v7149
      %v7564 = vpop.f32.mrb[0].mxu0
      %v7565 = vadd.f32 %v6701, %v7564
      %v7566 = vpop.f32.mrb[0].mxu0
      %7567 = vmatprep.mubr.f32.mxu0 0.0
      %7568 = vmatmul.mubr.f32.gmra.mrb[0].mxu0 %v7151
      %v7569 = vpop.f32.mrb[0].mxu0
      %v7570 = vadd.f32 %v6701, %v7569
      %v7571 = vpop.f32.mrb[0].mxu0
      %7572 = vmatprep.mubr.f32.mxu0 0.0
      %7573 = vmatmul.mubr.f32.gmra.mrb[0].mxu0 %v7153
      %v7574 = vpop.f32.mrb[0].mxu0
      %v7575 = vadd.f32 %v6701, %v7574
      %v7576 = vpop.f32.mrb[0].mxu0
      %7577 = vmatprep.mubr.f32.mxu0 0.0
      %7578 = vmatmul.mubr.f32.gmra.mrb[0].mxu0 %v7155
      %v7579 = vpop.f32.mrb[0].mxu0
      %v7580 = vadd.f32 %v6701, %v7579
      %v7581 = vpop.f32.mrb[0].mxu0
      %7582 = vmatprep.mubr.f32.mxu0 0.0
      %7583 = vmatmul.mubr.f32.gmra.mrb[0].mxu0 %v7157
      %v7584 = vpop.f32.mrb[0].mxu0
      %v7585 = vadd.f32 %v6701, %v7584
      %v7586 = vpop.f32.mrb[0].mxu0
      %7587 = vmatprep.mubr.f32.mxu0 0.0
      %7588 = vmatmul.mubr.f32.gmra.mrb[0].mxu0 %v7159
      %v7589 = vpop.f32.mrb[0].mxu0
      %v7590 = vadd.f32 %v6701, %v7589
      %v7591 = vpop.f32.mrb[0].mxu0
      %7592 = vmatprep.mubr.f32.mxu0 0.0
      %7593 = vmatmul.mubr.f32.gmra.mrb[0].mxu0 %v7161
      %v7594 = vpop.f32.mrb[0].mxu0
      %v7595 = vadd.f32 %v6701, %v7594
      %v7596 = vpop.f32.mrb[0].mxu0
      %7597 = vmatprep.mubr.f32.mxu0 0.0
      %7598 = vmatmul.mubr.f32.gmra.mrb[0].mxu0 %v7163
      %v7599 = vpop.f32.mrb[0].mxu0
      %v7600 = vadd.f32 %v6701, %v7599
      %v7601 = vpop.f32.mrb[0].mxu0
      %7602 = vmatprep.mubr.f32.mxu0 0.0
      %7603 = vmatmul.mubr.f32.gmra.mrb[0].mxu0 %v7165
      %v7604 = vpop.f32.mrb[0].mxu0
      %v7605 = vadd.f32 %v6701, %v7604
      %v7606 = vpop.f32.mrb[0].mxu0
      %7607 = vmatprep.mubr.f32.mxu0 0.0
      %7608 = vmatmul.mubr.f32.gmra.mrb[0].mxu0 %v7167
      %v7609 = vpop.f32.mrb[0].mxu0
      %v7610 = vadd.f32 %v6701, %v7609
      %v7611 = vpop.f32.mrb[0].mxu0
      %7612 = vmatprep.mubr.f32.mxu0 0.0
      %7613 = vmatmul.mubr.f32.gmra.mrb[0].mxu0 %v7169
      %v7614 = vpop.f32.mrb[0].mxu0
      %v7615 = vadd.f32 %v6701, %v7614
      %v7616 = vpop.f32.mrb[0].mxu0
      %7617 = vmatprep.mubr.f32.mxu0 0.0
      %7618 = vmatmul.mubr.f32.gmra.mrb[0].mxu0 %v7171
      %v7619 = vpop.f32.mrb[0].mxu0
      %v7620 = vadd.f32 %v6701, %v7619
      %v7621 = vpop.f32.mrb[0].mxu0
      %7622 = vmatprep.mubr.f32.mxu0 0.0
      %7623 = vmatmul.mubr.f32.gmra.mrb[0].mxu0 %v7173
      %v7624 = vpop.f32.mrb[0].mxu0
      %v7625 = vadd.f32 %v6701, %v7624
      %v7626 = vpop.f32.mrb[0].mxu0
      %7627 = vmatprep.mubr.f32.mxu0 0.0
      %7628 = vmatmul.mubr.f32.gmra.mrb[0].mxu0 %v7175
      %v7629 = vpop.f32.mrb[0].mxu0
      %v7630 = vadd.f32 %v6701, %v7629
      %v7631 = vpop.f32.mrb[0].mxu0
      %7632 = vmatprep.mubr.f32.mxu0 0.0
      %7633 = vmatmul.mubr.f32.gmra.mrb[0].mxu0 %v7177
      %v7634 = vpop.f32.mrb[0].mxu0
      %v7635 = vadd.f32 %v6701, %v7634
      %v7636 = vpop.f32.mrb[0].mxu0
      %7637 = vmatprep.mubr.f32.mxu0 0.0
      %7638 = vmatmul.mubr.f32.gmra.mrb[0].mxu0 %v7179
      %v7639 = vpop.f32.mrb[0].mxu0
      %v7640 = vadd.f32 %v6701, %v7639
      %v7641 = vpop.f32.mrb[0].mxu0
      %7642 = vmatprep.mubr.f32.mxu0 0.0
      %7643 = vmatmul.mubr.f32.gmra.mrb[0].mxu0 %v7181
      %v7644 = vpop.f32.mrb[0].mxu0
      %v7645 = vadd.f32 %v6701, %v7644
      %v7646 = vpop.f32.mrb[0].mxu0
      %7647 = vmatprep.mubr.f32.mxu0 0.0
      %7648 = vmatmul.mubr.f32.gmra.mrb[0].mxu0 %v7183
      %v7649 = vpop.f32.mrb[0].mxu0
      %v7650 = vadd.f32 %v6701, %v7649
      %v7651 = vpop.f32.mrb[0].mxu0
      %7652 = vmatprep.mubr.f32.mxu0 0.0
      %7653 = vmatmul.mubr.f32.gmra.mrb[0].mxu0 %v7185
      %v7654 = vpop.f32.mrb[0].mxu0
      %v7655 = vadd.f32 %v6701, %v7654
      %v7656 = vpop.f32.mrb[0].mxu0
      %7657 = vmatprep.mubr.f32.mxu0 0.0
      %7658 = vmatmul.mubr.f32.gmra.mrb[0].mxu0 %v7187
      %v7659 = vpop.f32.mrb[0].mxu0
      %v7660 = vadd.f32 %v6701, %v7659
      %v7661 = vpop.f32.mrb[0].mxu0
      %7662 = vmatprep.mubr.f32.mxu0 0.0
      %7663 = vmatmul.mubr.f32.gmra.mrb[0].mxu0 %v7189
      %v7664 = vpop.f32.mrb[0].mxu0
      %v7665 = vadd.f32 %v6701, %v7664
      %v7666 = vpop.f32.mrb[0].mxu0
      %7667 = vmatprep.mubr.f32.mxu0 0.0
      %7668 = vmatmul.mubr.f32.gmra.mrb[0].mxu0 %v7191
      %v7669 = vpop.f32.mrb[0].mxu0
      %v7670 = vadd.f32 %v6701, %v7669
      %v7671 = vpop.f32.mrb[0].mxu0
      %7672 = vmatprep.mubr.f32.mxu0 0.0
      %7673 = vmatmul.mubr.f32.gmra.mrb[0].mxu0 %v7193
      %v7674 = vpop.f32.mrb[0].mxu0
      %v7675 = vadd.f32 %v6701, %v7674
      %v7676 = vpop.f32.mrb[0].mxu0
      %7677 = vmatprep.mubr.f32.mxu0 0.0
      %7678 = vmatmul.mubr.f32.gmra.mrb[0].mxu0 %v7195
      %v7679 = vpop.f32.mrb[0].mxu0
      %v7680 = vadd.f32 %v6701, %v7679
      %v7681 = vpop.f32.mrb[0].mxu0
      %7682 = vmatprep.mubr.f32.mxu0 0.0
      %7683 = vmatmul.mubr.f32.gmra.mrb[0].mxu0 %v7197
      %v7684 = vpop.f32.mrb[0].mxu0
      %v7685 = vadd.f32 %v6701, %v7684
      %v7686 = vpop.f32.mrb[0].mxu0
      %7687 = vmatprep.mubr.f32.mxu0 0.0
      %7688 = vmatmul.mubr.f32.gmra.mrb[0].mxu0 %v7199
      %v7689 = vpop.f32.mrb[0].mxu0
      %v7690 = vadd.f32 %v6701, %v7689
      %v7691 = vpop.f32.mrb[0].mxu0
      %7692 = vmatprep.mubr.f32.mxu0 0.0
      %7693 = vmatmul.mubr.f32.gmra.mrb[0].mxu0 %v7201
      %v7694 = vpop.f32.mrb[0].mxu0
      %v7695 = vadd.f32 %v6701, %v7694
      %v7696 = vpop.f32.mrb[0].mxu0
      %7697 = vmatprep.mubr.f32.mxu0 0.0
      %7698 = vmatmul.mubr.f32.gmra.mrb[0].mxu0 %v7203
      %v7699 = vpop.f32.mrb[0].mxu0
      %v7700 = vadd.f32 %v6701, %v7699
      %v7701 = vpop.f32.mrb[0].mxu0
      %7702 = vmatprep.mubr.f32.mxu0 0.0
      %7703 = vmatmul.mubr.f32.gmra.mrb[0].mxu0 %v7205
      %v7704 = vpop.f32.mrb[0].mxu0
      %v7705 = vadd.f32 %v6701, %v7704
      %v7706 = vpop.f32.mrb[0].mxu0
      %7707 = vmatprep.mubr.f32.mxu0 0.0
      %7708 = vmatmul.mubr.f32.gmra.mrb[0].mxu0 %v7207
      %v7709 = vpop.f32.mrb[0].mxu0
      %v7710 = vadd.f32 %v6701, %v7709
      %v7711 = vpop.f32.mrb[0].mxu0
      %7712 = vmatprep.mubr.f32.mxu0 0.0
      %7713 = vmatmul.mubr.f32.gmra.mrb[0].mxu0 %v7209
      %v7714 = vpop.f32.mrb[0].mxu0
      %v7715 = vadd.f32 %v6701, %v7714
      %v7716 = vpop.f32.mrb[0].mxu0
      %7717 = vmatprep.mubr.f32.mxu0 0.0
      %7718 = vmatmul.mubr.f32.gmra.mrb[0].mxu0 %v7211
      %v7719 = vpop.f32.mrb[0].mxu0
      %v7720 = vadd.f32 %v6701, %v7719
      %v7721 = vpop.f32.mrb[0].mxu0
      %7722 = vmatprep.mubr.f32.mxu0 0.0
      %7723 = vmatmul.mubr.f32.gmra.mrb[0].mxu0 %v7213
      %v7724 = vpop.f32.mrb[0].mxu0
      %v7725 = vadd.f32 %v6701, %v7724
      %v7726 = vpop.f32.mrb[0].mxu0
      %7727 = vmatprep.mubr.f32.mxu0 0.0
      %7728 = vmatmul.mubr.f32.gmra.mrb[0].mxu0 %v7215
      %v7729 = vpop.f32.mrb[0].mxu0
      %v7730 = vadd.f32 %v6701, %v7729
      %v7731 = vpop.f32.mrb[0].mxu0
      %7732 = vmatprep.mubr.f32.mxu0 0.0
      %7733 = vmatmul.mubr.f32.gmra.mrb[0].mxu0 %v7217
      %v7734 = vpop.f32.mrb[0].mxu0
      %v7735 = vadd.f32 %v6701, %v7734
      %v7736 = vpop.f32.mrb[0].mxu0
      %7737 = vmatprep.mubr.f32.mxu0 0.0
      %7738 = vmatmul.mubr.f32.gmra.mrb[0].mxu0 %v7219
      %v7739 = vpop.f32.mrb[0].mxu0
      %v7740 = vadd.f32 %v6701, %v7739
      %v7741 = vpop.f32.mrb[0].mxu0
      %7742 = vmatprep.mubr.f32.mxu0 0.0
      %7743 = vmatmul.mubr.f32.gmra.mrb[0].mxu0 %v7221
      %v7744 = vpop.f32.mrb[0].mxu0
      %v7745 = vadd.f32 %v6701, %v7744
      %v7746 = vpop.f32.mrb[0].mxu0
      %7747 = vmatprep.mubr.f32.mxu0 0.0
      %7748 = vmatmul.mubr.f32.gmra.mrb[0].mxu0 %v7223
      %v7749 = vpop.f32.mrb[0].mxu0
      %v7750 = vadd.f32 %v6701, %v7749
      %v7751 = vpop.f32.mrb[0].mxu0
      %7752 = vmatprep.mubr.f32.mxu0 0.0
      %7753 = vmatmul.mubr.f32.gmra.mrb[0].mxu0 %v7225
      %v7754 = vpop.f32.mrb[0].mxu0
      %v7755 = vadd.f32 %v6701, %v7754
      %v7756 = vpop.f32.mrb[0].mxu0
      %7757 = vmatprep.mubr.f32.mxu0 0.0
      %7758 = vmatmul.mubr.f32.gmra.mrb[0].mxu0 %v7227
      %v7759 = vpop.f32.mrb[0].mxu0
      %v7760 = vadd.f32 %v6701, %v7759
      %v7761 = vpop.f32.mrb[0].mxu0
      %7762 = vmatprep.mubr.f32.mxu0 0.0
      %7763 = vmatmul.mubr.f32.gmra.mrb[0].mxu0 %v7229
      %v7764 = vpop.f32.mrb[0].mxu0
      %v7765 = vadd.f32 %v6701, %v7764
      %v7766 = vpop.f32.mrb[0].mxu0
      %7767 = vmatprep.mubr.f32.mxu0 0.0
      %7768 = vmatmul.mubr.f32.gmra.mrb[0].mxu0 %v7231
      %v7769 = vpop.f32.mrb[0].mxu0
      %v7770 = vadd.f32 %v6701, %v7769
      %v7771 = vpop.f32.mrb[0].mxu0
      %7772 = vmatprep.mubr.f32.mxu0 0.0
      %7773 = vmatmul.mubr.f32.gmra.mrb[0].mxu0 %v7233
      %v7774 = vpop.f32.mrb[0].mxu0
      %v7775 = vadd.f32 %v6701, %v7774
      %v7776 = vpop.f32.mrb[0].mxu0
      %7777 = vmatprep.mubr.f32.mxu0 0.0
      %7778 = vmatmul.mubr.f32.gmra.mrb[0].mxu0 %v7235
      %v7779 = vpop.f32.mrb[0].mxu0
      %v7780 = vadd.f32 %v6701, %v7779
      %v7781 = vpop.f32.mrb[0].mxu0
      %7782 = vmatprep.mubr.f32.mxu0 0.0
      %7783 = vmatmul.mubr.f32.gmra.mrb[0].mxu0 %v7237
      %v7784 = vpop.f32.mrb[0].mxu0
      %v7785 = vadd.f32 %v6701, %v7784
      %v7786 = vpop.f32.mrb[0].mxu0
      %7787 = vmatprep.mubr.f32.mxu0 0.0
      %7788 = vmatmul.mubr.f32.gmra.mrb[0].mxu0 %v7239
      %v7789 = vpop.f32.mrb[0].mxu0
      %v7790 = vadd.f32 %v6701, %v7789
      %v7791 = vpop.f32.mrb[0].mxu0
      %7792 = vmatprep.mubr.f32.mxu0 0.0
      %7793 = vmatmul.mubr.f32.gmra.mrb[0].mxu0 %v7241
      %v7794 = vpop.f32.mrb[0].mxu0
      %v7795 = vadd.f32 %v6701, %v7794
      %v7796 = vpop.f32.mrb[0].mxu0
      %7797 = vmatprep.mubr.f32.mxu0 0.0
      %7798 = vmatmul.mubr.f32.gmra.mrb[0].mxu0 %v7243
      %v7799 = vpop.f32.mrb[0].mxu0
      %v7800 = vadd.f32 %v6701, %v7799
      %v7801 = vpop.f32.mrb[0].mxu0
      %7802 = vmatprep.mubr.f32.mxu0 0.0
      %7803 = vmatmul.mubr.f32.gmra.mrb[0].mxu0 %v7245
      %v7804 = vpop.f32.mrb[0].mxu0
      %v7805 = vadd.f32 %v6701, %v7804
      %v7806 = vpop.f32.mrb[0].mxu0
      %7807 = vmatprep.mubr.f32.mxu0 0.0
      %7808 = vmatmul.mubr.f32.gmra.mrb[0].mxu0 %v7247
      %v7809 = vpop.f32.mrb[0].mxu0
      %v7810 = vadd.f32 %v6701, %v7809
      %v7811 = vpop.f32.mrb[0].mxu0
      %7812 = vmatprep.mubr.f32.mxu0 0.0
      %7813 = vmatmul.mubr.f32.gmra.mrb[0].mxu0 %v7249
      %v7814 = vpop.f32.mrb[0].mxu0
      %v7815 = vadd.f32 %v6701, %v7814
      %v7816 = vpop.f32.mrb[0].mxu0
      %7817 = vmatprep.mubr.f32.mxu0 0.0
      %7818 = vmatmul.mubr.f32.gmra.mrb[0].mxu0 %v7251
      %v7819 = vpop.f32.mrb[0].mxu0
      %v7820 = vadd.f32 %v6701, %v7819
      %v7821 = vpop.f32.mrb[0].mxu0
      %7822 = vmatprep.mubr.f32.mxu0 0.0
      %7823 = vmatmul.mubr.f32.gmra.mrb[0].mxu0 %v7253
      %v7824 = vpop.f32.mrb[0].mxu0
      %v7825 = vadd.f32 %v6701, %v7824
      %v7826 = vpop.f32.mrb[0].mxu0
      %7827 = vmatprep.mubr.f32.mxu0 0.0
      %7828 = vmatmul.mubr.f32.gmra.mrb[0].mxu0 %v7255
      %v7829 = vpop.f32.mrb[0].mxu0
      %v7830 = vadd.f32 %v6701, %v7829
      %v7831 = vpop.f32.mrb[0].mxu0
      %7832 = vmatprep.mubr.f32.mxu0 0.0
      %7833 = vmatmul.mubr.f32.gmra.mrb[0].mxu0 %v7257
      %v7834 = vpop.f32.mrb[0].mxu0
      %v7835 = vadd.f32 %v6701, %v7834
      %v7836 = vpop.f32.mrb[0].mxu0
      %7837 = vmatprep.mubr.f32.mxu0 0.0
      %7838 = vmatmul.mubr.f32.gmra.mrb[0].mxu0 %v7259
      %v7839 = vpop.f32.mrb[0].mxu0
      %v7840 = vadd.f32 %v6701, %v7839
      %v7841 = vpop.f32.mrb[0].mxu0
      %7842 = vmatprep.mubr.f32.mxu0 0.0
      %7843 = vmatmul.mubr.f32.gmra.mrb[0].mxu0 %v7261
      %v7844 = vpop.f32.mrb[0].mxu0
      %v7845 = vadd.f32 %v6701, %v7844
      %v7846 = vpop.f32.mrb[0].mxu0
      %7847 = vmatprep.mubr.f32.mxu0 0.0
      %7848 = vmatmul.mubr.f32.gmra.mrb[0].mxu0 %v7263
      %v7849 = vpop.f32.mrb[0].mxu0
      %v7850 = vadd.f32 %v6701, %v7849
      %v7851 = vpop.f32.mrb[0].mxu0
      %7852 = vmatprep.mubr.f32.mxu0 0.0
      %7853 = vmatmul.mubr.f32.gmra.mrb[0].mxu0 %v7265
      %v7854 = vpop.f32.mrb[0].mxu0
      %v7855 = vadd.f32 %v6701, %v7854
      %v7856 = vpop.f32.mrb[0].mxu0
      %7857 = vmatprep.mubr.f32.mxu0 0.0
      %7858 = vmatmul.mubr.f32.gmra.mrb[0].mxu0 %v7267
      %v7859 = vpop.f32.mrb[0].mxu0
      %v7860 = vadd.f32 %v6701, %v7859
      %v7861 = vpop.f32.mrb[0].mxu0
      %7862 = vmatprep.mubr.f32.mxu0 0.0
      %7863 = vmatmul.mubr.f32.gmra.mrb[0].mxu0 %v7269
      %v7864 = vpop.f32.mrb[0].mxu0
      %v7865 = vadd.f32 %v6701, %v7864
      %v7866 = vpop.f32.mrb[0].mxu0
      %7867 = vmatprep.mubr.f32.mxu0 0.0
      %7868 = vmatmul.mubr.f32.gmra.mrb[0].mxu0 %v7271
      %v7869 = vpop.f32.mrb[0].mxu0
      %v7870 = vadd.f32 %v6701, %v7869
      %v7871 = vpop.f32.mrb[0].mxu0
      %7872 = vmatprep.mubr.f32.mxu0 0.0
      %7873 = vmatmul.mubr.f32.gmra.mrb[0].mxu0 %v7273
      %v7874 = vpop.f32.mrb[0].mxu0
      %v7875 = vadd.f32 %v6701, %v7874
      %v7876 = vpop.f32.mrb[0].mxu0
      %7877 = vmatprep.mubr.f32.mxu0 0.0
      %7878 = vmatmul.mubr.f32.gmra.mrb[0].mxu0 %v7275
      %v7879 = vpop.f32.mrb[0].mxu0
      %v7880 = vadd.f32 %v6701, %v7879
      %v7881 = vpop.f32.mrb[0].mxu0
      %7882 = vmatprep.mubr.f32.mxu0 0.0
      %7883 = vmatmul.mubr.f32.gmra.mrb[0].mxu0 %v7277
      %v7884 = vpop.f32.mrb[0].mxu0
      %v7885 = vadd.f32 %v6701, %v7884
      %v7886 = vpop.f32.mrb[0].mxu0
      %7887 = vmatprep.mubr.f32.mxu0 0.0
      %7888 = vmatmul.mubr.f32.gmra.mrb[0].mxu0 %v7279
      %v7889 = vpop.f32.mrb[0].mxu0
      %v7890 = vadd.f32 %v6701, %v7889
      %v7891 = vpop.f32.mrb[0].mxu0
      %7892 = vmatprep.mubr.f32.mxu0 0.0
      %7893 = vmatmul.mubr.f32.gmra.mrb[0].mxu0 %v7281
      %v7894 = vpop.f32.mrb[0].mxu0
      %v7895 = vadd.f32 %v6701, %v7894
      %v7896 = vpop.f32.mrb[0].mxu0
      %7897 = vmatprep.mubr.f32.mxu0 0.0
      %7898 = vmatmul.mubr.f32.gmra.mrb[0].mxu0 %v7283
      %v7899 = vpop.f32.mrb[0].mxu0
      %v7900 = vadd.f32 %v6701, %v7899
      %v7901 = vpop.f32.mrb[0].mxu0
      %7902 = vmatprep.mubr.f32.mxu0 0.0
      %7903 = vmatmul.mubr.f32.gmra.mrb[0].mxu0 %v7285
      %v7904 = vpop.f32.mrb[0].mxu0
      %v7905 = vadd.f32 %v6701, %v7904
      %v7906 = vpop.f32.mrb[0].mxu0
      %7907 = vmatprep.mubr.f32.mxu0 0.0
      %7908 = vmatmul.mubr.f32.gmra.mrb[0].mxu0 %v7287
      %v7909 = vpop.f32.mrb[0].mxu0
      %v7910 = vadd.f32 %v6701, %v7909
      %v7911 = vpop.f32.mrb[0].mxu0
      %7912 = vmatprep.mubr.f32.mxu0 0.0
      %7913 = vmatmul.mubr.f32.gmra.mrb[0].mxu0 %v7289
      %v7914 = vpop.f32.mrb[0].mxu0
      %v7915 = vadd.f32 %v6701, %v7914
      %v7916 = vpop.f32.mrb[0].mxu0
      %7917 = vmatprep.mubr.f32.mxu0 0.0
      %7918 = vmatmul.mubr.f32.gmra.mrb[0].mxu0 %v7291
      %v7919 = vpop.f32.mrb[0].mxu0
      %v7920 = vadd.f32 %v6701, %v7919
      %v7921 = vpop.f32.mrb[0].mxu0
      %7922 = vmatprep.mubr.f32.mxu0 0.0
      %7923 = vmatmul.mubr.f32.gmra.mrb[0].mxu0 %v7293
      %v7924 = vpop.f32.mrb[0].mxu0
      %v7925 = vadd.f32 %v6701, %v7924
      %v7926 = vpop.f32.mrb[0].mxu0
      %7927 = vmatprep.mubr.f32.mxu0 0.0
      %7928 = vmatmul.mubr.f32.gmra.mrb[0].mxu0 %v7295
      %v7929 = vpop.f32.mrb[0].mxu0
      %v7930 = vadd.f32 %v6701, %v7929
      %v7931 = vpop.f32.mrb[0].mxu0
      %7932 = vmatprep.mubr.f32.mxu0 0.0
      %7933 = vmatmul.mubr.f32.gmra.mrb[0].mxu0 %v7297
      %v7934 = vpop.f32.mrb[0].mxu0
      %v7935 = vadd.f32 %v6701, %v7934
      %v7936 = vpop.f32.mrb[0].mxu0
      %7937 = vmatprep.mubr.f32.mxu0 0.0
      %7938 = vmatmul.mubr.f32.gmra.mrb[0].mxu0 %v7299
      %v7939 = vpop.f32.mrb[0].mxu0
      %v7940 = vadd.f32 %v6701, %v7939
      %v7941 = vpop.f32.mrb[0].mxu0
      %7942 = vmatprep.mubr.f32.mxu0 0.0
      %7943 = vmatmul.mubr.f32.gmra.mrb[0].mxu0 %v7301
      %v7944 = vpop.f32.mrb[0].mxu0
      %v7945 = vadd.f32 %v6701, %v7944
      %v7946 = vpop.f32.mrb[0].mxu0
      %7947 = vmatprep.mubr.f32.mxu0 0.0
      %7948 = vmatmul.mubr.f32.gmra.mrb[0].mxu0 %v7303
      %v7949 = vpop.f32.mrb[0].mxu0
      %v7950 = vadd.f32 %v6701, %v7949
      %v7951 = vpop.f32.mrb[0].mxu0
      %7952 = vmatprep.mubr.f32.mxu0 0.0
      %7953 = vmatmul.mubr.f32.gmra.mrb[0].mxu0 %v7305
      %v7954 = vpop.f32.mrb[0].mxu0
      %v7955 = vadd.f32 %v6701, %v7954
      %v7956 = vpop.f32.mrb[0].mxu0
      %7957 = vmatprep.mubr.f32.mxu0 0.0
      %7958 = vmatmul.mubr.f32.gmra.mrb[0].mxu0 %v7307
      %v7959 = vpop.f32.mrb[0].mxu0
      %v7960 = vadd.f32 %v6701, %v7959
      %v7961 = vpop.f32.mrb[0].mxu0
      %7962 = vmatprep.mubr.f32.mxu0 0.0
      %7963 = vmatmul.mubr.f32.gmra.mrb[0].mxu0 %v7309
      %v7964 = vpop.f32.mrb[0].mxu0
      %v7965 = vadd.f32 %v6701, %v7964
      %v7966 = vpop.f32.mrb[0].mxu0
      %7967 = vmatprep.mubr.f32.mxu0 0.0
      %7968 = vmatmul.mubr.f32.gmra.mrb[0].mxu0 %v7311
      %v7969 = vpop.f32.mrb[0].mxu0
      %v7970 = vadd.f32 %v6701, %v7969
      %v7971 = vpop.f32.mrb[0].mxu0
      %7972 = vmatprep.mubr.f32.mxu0 0.0
      %7973 = vmatmul.mubr.f32.gmra.mrb[0].mxu0 %v7313
      %v7974 = vpop.f32.mrb[0].mxu0
      %v7975 = vadd.f32 %v6701, %v7974
      %v7976 = vpop.f32.mrb[0].mxu0
      %7977 = vmatprep.mubr.f32.mxu0 0.0
      %7978 = vmatmul.mubr.f32.gmra.mrb[0].mxu0 %v7315
      %v7979 = vpop.f32.mrb[0].mxu0
      %v7980 = vadd.f32 %v6701, %v7979
      %v7981 = vpop.f32.mrb[0].mxu0
      %7982 = vmatprep.mubr.f32.mxu0 0.0
      %7983 = vmatmul.mubr.f32.gmra.mrb[0].mxu0 %v7317
      %v7984 = vpop.f32.mrb[0].mxu0
      %v7985 = vadd.f32 %v6701, %v7984
      %v7986 = vpop.f32.mrb[0].mxu0
      %7987 = vmatprep.mubr.f32.mxu0 0.0
      %7988 = vmatmul.mubr.f32.gmra.mrb[0].mxu0 %v7319
      %v7989 = vpop.f32.mrb[0].mxu0
      %v7990 = vadd.f32 %v6701, %v7989
      %v7991 = vpop.f32.mrb[0].mxu0
      %7992 = vmatprep.mubr.f32.mxu0 0.0
      %7993 = vmatmul.mubr.f32.gmra.mrb[0].mxu0 %v7321
      %v7994 = vpop.f32.mrb[0].mxu0
      %v7995 = vadd.f32 %v6701, %v7994
      %v7996 = vpop.f32.mrb[0].mxu0
      %7997 = vmatprep.mubr.f32.mxu0 0.0
      %7998 = vmatmul.mubr.f32.gmra.mrb[0].mxu0 %v7323
      %v7999 = vpop.f32.mrb[0].mxu0
      %v8000 = vadd.f32 %v6701, %v7999
      %v8001 = vpop.f32.mrb[0].mxu0
      %8002 = vmatprep.mubr.f32.mxu0 0.0
      %8003 = vmatmul.mubr.f32.gmra.mrb[0].mxu0 %v7325
      %v8004 = vpop.f32.mrb[0].mxu0
      %v8005 = vadd.f32 %v6701, %v8004
      %v8006 = vpop.f32.mrb[0].mxu0
      %8007 = vmatprep.mubr.f32.mxu0 0.0
      %8008 = vmatmul.mubr.f32.gmra.mrb[0].mxu0 %v7327
      %v8009 = vpop.f32.mrb[0].mxu0
      %v8010 = vadd.f32 %v6701, %v8009
      %v8011 = vpop.f32.mrb[0].mxu0
      %8012 = vmatprep.mubr.f32.mxu0 0.0
      %8013 = vmatmul.mubr.f32.gmra.mrb[0].mxu0 %v7329
      %v8014 = vpop.f32.mrb[0].mxu0
      %v8015 = vadd.f32 %v6701, %v8014
      %v8016 = vpop.f32.mrb[0].mxu0
      %8017 = vmatprep.mubr.f32.mxu0 0.0
      %8018 = vmatmul.mubr.f32.gmra.mrb[0].mxu0 %v7331
      %v8019 = vpop.f32.mrb[0].mxu0
      %v8020 = vadd.f32 %v6701, %v8019
      %v8021 = vpop.f32.mrb[0].mxu0
      %8022 = vmatprep.mubr.f32.mxu0 0.0
      %8023 = vmatmul.mubr.f32.gmra.mrb[0].mxu0 %v7333
      %v8024 = vpop.f32.mrb[0].mxu0
      %v8025 = vadd.f32 %v6701, %v8024
      %v8026 = vpop.f32.mrb[0].mxu0
      %8027 = vmatprep.mubr.f32.mxu0 0.0
      %8028 = vmatmul.mubr.f32.gmra.mrb[0].mxu0 %v7335
      %v8029 = vpop.f32.mrb[0].mxu0
      %v8030 = vadd.f32 %v6701, %v8029
      %v8031 = vpop.f32.mrb[0].mxu0
      %8032 = vmatprep.mubr.f32.mxu0 0.0
      %8033 = vmatmul.mubr.f32.gmra.mrb[0].mxu0 %v7337
      %v8034 = vpop.f32.mrb[0].mxu0
      %v8035 = vadd.f32 %v6701, %v8034
      %v8036 = vpop.f32.mrb[0].mxu0
      %8037 = vmatprep.mubr.f32.mxu0 0.0
      %8038 = vmatmul.mubr.f32.gmra.mrb[0].mxu0 %v7339
      %v8039 = vpop.f32.mrb[0].mxu0
      %v8040 = vadd.f32 %v6701, %v8039
      %v8041 = vpop.f32.mrb[0].mxu0
      %8042 = vmatprep.mubr.f32.mxu0 0.0
      %8043 = vmatmul.mubr.f32.gmra.mrb[0].mxu0 %v7341
      %v8044 = vpop.f32.mrb[0].mxu0
      %v8045 = vadd.f32 %v6701, %v8044
      %v8046 = vpop.f32.mrb[0].mxu0
      %8047 = vdwg.mxu0
      %vm8048 = vcmp.gt.f32.partialorder %v7410, 0.0
      %vm8049 = vcmp.gt.f32.partialorder %v7415, 0.0
      %vm8050 = vcmp.gt.f32.partialorder %v7420, 0.0
      %vm8051 = vcmp.gt.f32.partialorder %v7425, 0.0
      %vm8052 = vcmp.gt.f32.partialorder %v7430, 0.0
      %vm8053 = vcmp.gt.f32.partialorder %v7435, 0.0
      %vm8054 = vcmp.gt.f32.partialorder %v7440, 0.0
      %vm8055 = vcmp.gt.f32.partialorder %v7445, 0.0
      %vm8056 = vcmp.gt.f32.partialorder %v7450, 0.0
      %vm8057 = vcmp.gt.f32.partialorder %v7455, 0.0
      %vm8058 = vcmp.gt.f32.partialorder %v7460, 0.0
      %vm8059 = vcmp.gt.f32.partialorder %v7465, 0.0
      %vm8060 = vcmp.gt.f32.partialorder %v7470, 0.0
      %vm8061 = vcmp.gt.f32.partialorder %v7475, 0.0
      %vm8062 = vcmp.gt.f32.partialorder %v7480, 0.0
      %vm8063 = vcmp.gt.f32.partialorder %v7485, 0.0
      %vm8064 = vcmp.gt.f32.partialorder %v7490, 0.0
      %vm8065 = vcmp.gt.f32.partialorder %v7495, 0.0
      %vm8066 = vcmp.gt.f32.partialorder %v7500, 0.0
      %vm8067 = vcmp.gt.f32.partialorder %v7505, 0.0
      %vm8068 = vcmp.gt.f32.partialorder %v7510, 0.0
      %vm8069 = vcmp.gt.f32.partialorder %v7515, 0.0
      %vm8070 = vcmp.gt.f32.partialorder %v7520, 0.0
      %vm8071 = vcmp.gt.f32.partialorder %v7525, 0.0
      %vm8072 = vcmp.gt.f32.partialorder %v7530, 0.0
      %vm8073 = vcmp.gt.f32.partialorder %v7535, 0.0
      %vm8074 = vcmp.gt.f32.partialorder %v7540, 0.0
      %vm8075 = vcmp.gt.f32.partialorder %v7545, 0.0
      %vm8076 = vcmp.gt.f32.partialorder %v7550, 0.0
      %vm8077 = vcmp.gt.f32.partialorder %v7555, 0.0
      %vm8078 = vcmp.gt.f32.partialorder %v7560, 0.0
      %vm8079 = vcmp.gt.f32.partialorder %v7565, 0.0
      %vm8080 = vcmp.gt.f32.partialorder %v7570, 0.0
      %vm8081 = vcmp.gt.f32.partialorder %v7575, 0.0
      %vm8082 = vcmp.gt.f32.partialorder %v7580, 0.0
      %vm8083 = vcmp.gt.f32.partialorder %v7585, 0.0
      %vm8084 = vcmp.gt.f32.partialorder %v7590, 0.0
      %vm8085 = vcmp.gt.f32.partialorder %v7595, 0.0
      %vm8086 = vcmp.gt.f32.partialorder %v7600, 0.0
      %vm8087 = vcmp.gt.f32.partialorder %v7605, 0.0
      %vm8088 = vcmp.gt.f32.partialorder %v7610, 0.0
      %vm8089 = vcmp.gt.f32.partialorder %v7615, 0.0
      %vm8090 = vcmp.gt.f32.partialorder %v7620, 0.0
      %vm8091 = vcmp.gt.f32.partialorder %v7625, 0.0
      %vm8092 = vcmp.gt.f32.partialorder %v7630, 0.0
      %vm8093 = vcmp.gt.f32.partialorder %v7635, 0.0
      %vm8094 = vcmp.gt.f32.partialorder %v7640, 0.0
      %vm8095 = vcmp.gt.f32.partialorder %v7645, 0.0
      %vm8096 = vcmp.gt.f32.partialorder %v7650, 0.0
      %vm8097 = vcmp.gt.f32.partialorder %v7655, 0.0
      %vm8098 = vcmp.gt.f32.partialorder %v7660, 0.0
      %vm8099 = vcmp.gt.f32.partialorder %v7665, 0.0
      %vm8100 = vcmp.gt.f32.partialorder %v7670, 0.0
      %vm8101 = vcmp.gt.f32.partialorder %v7675, 0.0
      %vm8102 = vcmp.gt.f32.partialorder %v7680, 0.0
      %vm8103 = vcmp.gt.f32.partialorder %v7685, 0.0
      %vm8104 = vcmp.gt.f32.partialorder %v7690, 0.0
      %vm8105 = vcmp.gt.f32.partialorder %v7695, 0.0
      %vm8106 = vcmp.gt.f32.partialorder %v7700, 0.0
      %vm8107 = vcmp.gt.f32.partialorder %v7705, 0.0
      %vm8108 = vcmp.gt.f32.partialorder %v7710, 0.0
      %vm8109 = vcmp.gt.f32.partialorder %v7715, 0.0
      %vm8110 = vcmp.gt.f32.partialorder %v7720, 0.0
      %vm8111 = vcmp.gt.f32.partialorder %v7725, 0.0
      %vm8112 = vcmp.gt.f32.partialorder %v7730, 0.0
      %vm8113 = vcmp.gt.f32.partialorder %v7735, 0.0
      %vm8114 = vcmp.gt.f32.partialorder %v7740, 0.0
      %vm8115 = vcmp.gt.f32.partialorder %v7745, 0.0
      %vm8116 = vcmp.gt.f32.partialorder %v7750, 0.0
      %vm8117 = vcmp.gt.f32.partialorder %v7755, 0.0
      %vm8118 = vcmp.gt.f32.partialorder %v7760, 0.0
      %vm8119 = vcmp.gt.f32.partialorder %v7765, 0.0
      %vm8120 = vcmp.gt.f32.partialorder %v7770, 0.0
      %vm8121 = vcmp.gt.f32.partialorder %v7775, 0.0
      %vm8122 = vcmp.gt.f32.partialorder %v7780, 0.0
      %vm8123 = vcmp.gt.f32.partialorder %v7785, 0.0
      %vm8124 = vcmp.gt.f32.partialorder %v7790, 0.0
      %vm8125 = vcmp.gt.f32.partialorder %v7795, 0.0
      %vm8126 = vcmp.gt.f32.partialorder %v7800, 0.0
      %vm8127 = vcmp.gt.f32.partialorder %v7805, 0.0
      %vm8128 = vcmp.gt.f32.partialorder %v7810, 0.0
      %vm8129 = vcmp.gt.f32.partialorder %v7815, 0.0
      %vm8130 = vcmp.gt.f32.partialorder %v7820, 0.0
      %vm8131 = vcmp.gt.f32.partialorder %v7825, 0.0
      %vm8132 = vcmp.gt.f32.partialorder %v7830, 0.0
      %vm8133 = vcmp.gt.f32.partialorder %v7835, 0.0
      %vm8134 = vcmp.gt.f32.partialorder %v7840, 0.0
      %vm8135 = vcmp.gt.f32.partialorder %v7845, 0.0
      %vm8136 = vcmp.gt.f32.partialorder %v7850, 0.0
      %vm8137 = vcmp.gt.f32.partialorder %v7855, 0.0
      %vm8138 = vcmp.gt.f32.partialorder %v7860, 0.0
      %vm8139 = vcmp.gt.f32.partialorder %v7865, 0.0
      %vm8140 = vcmp.gt.f32.partialorder %v7870, 0.0
      %vm8141 = vcmp.gt.f32.partialorder %v7875, 0.0
      %vm8142 = vcmp.gt.f32.partialorder %v7880, 0.0
      %vm8143 = vcmp.gt.f32.partialorder %v7885, 0.0
      %vm8144 = vcmp.gt.f32.partialorder %v7890, 0.0
      %vm8145 = vcmp.gt.f32.partialorder %v7895, 0.0
      %vm8146 = vcmp.gt.f32.partialorder %v7900, 0.0
      %vm8147 = vcmp.gt.f32.partialorder %v7905, 0.0
      %vm8148 = vcmp.gt.f32.partialorder %v7910, 0.0
      %vm8149 = vcmp.gt.f32.partialorder %v7915, 0.0
      %vm8150 = vcmp.gt.f32.partialorder %v7920, 0.0
      %vm8151 = vcmp.gt.f32.partialorder %v7925, 0.0
      %vm8152 = vcmp.gt.f32.partialorder %v7930, 0.0
      %vm8153 = vcmp.gt.f32.partialorder %v7935, 0.0
      %vm8154 = vcmp.gt.f32.partialorder %v7940, 0.0
      %vm8155 = vcmp.gt.f32.partialorder %v7945, 0.0
      %vm8156 = vcmp.gt.f32.partialorder %v7950, 0.0
      %vm8157 = vcmp.gt.f32.partialorder %v7955, 0.0
      %vm8158 = vcmp.gt.f32.partialorder %v7960, 0.0
      %vm8159 = vcmp.gt.f32.partialorder %v7965, 0.0
      %vm8160 = vcmp.gt.f32.partialorder %v7970, 0.0
      %vm8161 = vcmp.gt.f32.partialorder %v7975, 0.0
      %vm8162 = vcmp.gt.f32.partialorder %v7980, 0.0
      %vm8163 = vcmp.gt.f32.partialorder %v7985, 0.0
      %vm8164 = vcmp.gt.f32.partialorder %v7990, 0.0
      %vm8165 = vcmp.gt.f32.partialorder %v7995, 0.0
      %vm8166 = vcmp.gt.f32.partialorder %v8000, 0.0
      %vm8167 = vcmp.gt.f32.partialorder %v8005, 0.0
      %vm8168 = vcmp.gt.f32.partialorder %v8010, 0.0
      %vm8169 = vcmp.gt.f32.partialorder %v8015, 0.0
      %vm8170 = vcmp.gt.f32.partialorder %v8020, 0.0
      %vm8171 = vcmp.gt.f32.partialorder %v8025, 0.0
      %vm8172 = vcmp.gt.f32.partialorder %v8030, 0.0
      %vm8173 = vcmp.gt.f32.partialorder %v8035, 0.0
      %vm8174 = vcmp.gt.f32.partialorder %v8040, 0.0
      %vm8175 = vcmp.gt.f32.partialorder %v8045, 0.0
      %v8176 = vld [vmem:[%s18] sm:$0x1]
      %v8178 = vlaneseq
      %v8179 = vshrl.u32 %v8178, 7
      %v8180 = vsub.s32 0, %v8179
      %v8181 = vrot.slane %v8176, %v8180
      %v8183 = vmul.f32 %v8181, %v7410
      %v8184 = vmul.f32 %v8181, %v7415
      %v8185 = vmul.f32 %v8181, %v7420
      %v8186 = vmul.f32 %v8181, %v7425
      %v8187 = vmul.f32 %v8181, %v7430
      %v8188 = vmul.f32 %v8181, %v7435
      %v8189 = vmul.f32 %v8181, %v7440
      %v8190 = vmul.f32 %v8181, %v7445
      %v8191 = vmul.f32 %v8181, %v7450
      %v8192 = vmul.f32 %v8181, %v7455
      %v8193 = vmul.f32 %v8181, %v7460
      %v8194 = vmul.f32 %v8181, %v7465
      %v8195 = vmul.f32 %v8181, %v7470
      %v8196 = vmul.f32 %v8181, %v7475
      %v8197 = vmul.f32 %v8181, %v7480
      %v8198 = vmul.f32 %v8181, %v7485
      %v8199 = vmul.f32 %v8181, %v7490
      %v8200 = vmul.f32 %v8181, %v7495
      %v8201 = vmul.f32 %v8181, %v7500
      %v8202 = vmul.f32 %v8181, %v7505
      %v8203 = vmul.f32 %v8181, %v7510
      %v8204 = vmul.f32 %v8181, %v7515
      %v8205 = vmul.f32 %v8181, %v7520
      %v8206 = vmul.f32 %v8181, %v7525
      %v8207 = vmul.f32 %v8181, %v7530
      %v8208 = vmul.f32 %v8181, %v7535
      %v8209 = vmul.f32 %v8181, %v7540
      %v8210 = vmul.f32 %v8181, %v7545
      %v8211 = vmul.f32 %v8181, %v7550
      %v8212 = vmul.f32 %v8181, %v7555
      %v8213 = vmul.f32 %v8181, %v7560
      %v8214 = vmul.f32 %v8181, %v7565
      %v8215 = vmul.f32 %v8181, %v7570
      %v8216 = vmul.f32 %v8181, %v7575
      %v8217 = vmul.f32 %v8181, %v7580
      %v8218 = vmul.f32 %v8181, %v7585
      %v8219 = vmul.f32 %v8181, %v7590
      %v8220 = vmul.f32 %v8181, %v7595
      %v8221 = vmul.f32 %v8181, %v7600
      %v8222 = vmul.f32 %v8181, %v7605
      %v8223 = vmul.f32 %v8181, %v7610
      %v8224 = vmul.f32 %v8181, %v7615
      %v8225 = vmul.f32 %v8181, %v7620
      %v8226 = vmul.f32 %v8181, %v7625
      %v8227 = vmul.f32 %v8181, %v7630
      %v8228 = vmul.f32 %v8181, %v7635
      %v8229 = vmul.f32 %v8181, %v7640
      %v8230 = vmul.f32 %v8181, %v7645
      %v8231 = vmul.f32 %v8181, %v7650
      %v8232 = vmul.f32 %v8181, %v7655
      %v8233 = vmul.f32 %v8181, %v7660
      %v8234 = vmul.f32 %v8181, %v7665
      %v8235 = vmul.f32 %v8181, %v7670
      %v8236 = vmul.f32 %v8181, %v7675
      %v8237 = vmul.f32 %v8181, %v7680
      %v8238 = vmul.f32 %v8181, %v7685
      %v8239 = vmul.f32 %v8181, %v7690
      %v8240 = vmul.f32 %v8181, %v7695
      %v8241 = vmul.f32 %v8181, %v7700
      %v8242 = vmul.f32 %v8181, %v7705
      %v8243 = vmul.f32 %v8181, %v7710
      %v8244 = vmul.f32 %v8181, %v7715
      %v8245 = vmul.f32 %v8181, %v7720
      %v8246 = vmul.f32 %v8181, %v7725
      %v8247 = vmul.f32 %v8181, %v7730
      %v8248 = vmul.f32 %v8181, %v7735
      %v8249 = vmul.f32 %v8181, %v7740
      %v8250 = vmul.f32 %v8181, %v7745
      %v8251 = vmul.f32 %v8181, %v7750
      %v8252 = vmul.f32 %v8181, %v7755
      %v8253 = vmul.f32 %v8181, %v7760
      %v8254 = vmul.f32 %v8181, %v7765
      %v8255 = vmul.f32 %v8181, %v7770
      %v8256 = vmul.f32 %v8181, %v7775
      %v8257 = vmul.f32 %v8181, %v7780
      %v8258 = vmul.f32 %v8181, %v7785
      %v8259 = vmul.f32 %v8181, %v7790
      %v8260 = vmul.f32 %v8181, %v7795
      %v8261 = vmul.f32 %v8181, %v7800
      %v8262 = vmul.f32 %v8181, %v7805
      %v8263 = vmul.f32 %v8181, %v7810
      %v8264 = vmul.f32 %v8181, %v7815
      %v8265 = vmul.f32 %v8181, %v7820
      %v8266 = vmul.f32 %v8181, %v7825
      %v8267 = vmul.f32 %v8181, %v7830
      %v8268 = vmul.f32 %v8181, %v7835
      %v8269 = vmul.f32 %v8181, %v7840
      %v8270 = vmul.f32 %v8181, %v7845
      %v8271 = vmul.f32 %v8181, %v7850
      %v8272 = vmul.f32 %v8181, %v7855
      %v8273 = vmul.f32 %v8181, %v7860
      %v8274 = vmul.f32 %v8181, %v7865
      %v8275 = vmul.f32 %v8181, %v7870
      %v8276 = vmul.f32 %v8181, %v7875
      %v8277 = vmul.f32 %v8181, %v7880
      %v8278 = vmul.f32 %v8181, %v7885
      %v8279 = vmul.f32 %v8181, %v7890
      %v8280 = vmul.f32 %v8181, %v7895
      %v8281 = vmul.f32 %v8181, %v7900
      %v8282 = vmul.f32 %v8181, %v7905
      %v8283 = vmul.f32 %v8181, %v7910
      %v8284 = vmul.f32 %v8181, %v7915
      %v8285 = vmul.f32 %v8181, %v7920
      %v8286 = vmul.f32 %v8181, %v7925
      %v8287 = vmul.f32 %v8181, %v7930
      %v8288 = vmul.f32 %v8181, %v7935
      %v8289 = vmul.f32 %v8181, %v7940
      %v8290 = vmul.f32 %v8181, %v7945
      %v8291 = vmul.f32 %v8181, %v7950
      %v8292 = vmul.f32 %v8181, %v7955
      %v8293 = vmul.f32 %v8181, %v7960
      %v8294 = vmul.f32 %v8181, %v7965
      %v8295 = vmul.f32 %v8181, %v7970
      %v8296 = vmul.f32 %v8181, %v7975
      %v8297 = vmul.f32 %v8181, %v7980
      %v8298 = vmul.f32 %v8181, %v7985
      %v8299 = vmul.f32 %v8181, %v7990
      %v8300 = vmul.f32 %v8181, %v7995
      %v8301 = vmul.f32 %v8181, %v8000
      %v8302 = vmul.f32 %v8181, %v8005
      %v8303 = vmul.f32 %v8181, %v8010
      %v8304 = vmul.f32 %v8181, %v8015
      %v8305 = vmul.f32 %v8181, %v8020
      %v8306 = vmul.f32 %v8181, %v8025
      %v8307 = vmul.f32 %v8181, %v8030
      %v8308 = vmul.f32 %v8181, %v8035
      %v8309 = vmul.f32 %v8181, %v8040
      %v8310 = vmul.f32 %v8181, %v8045
      %v8311 = vsel %vm8048, %v7410, %v8183
      %v8312 = vsel %vm8049, %v7415, %v8184
      %v8313 = vsel %vm8050, %v7420, %v8185
      %v8314 = vsel %vm8051, %v7425, %v8186
      %v8315 = vsel %vm8052, %v7430, %v8187
      %v8316 = vsel %vm8053, %v7435, %v8188
      %v8317 = vsel %vm8054, %v7440, %v8189
      %v8318 = vsel %vm8055, %v7445, %v8190
      %v8319 = vsel %vm8056, %v7450, %v8191
      %v8320 = vsel %vm8057, %v7455, %v8192
      %v8321 = vsel %vm8058, %v7460, %v8193
      %v8322 = vsel %vm8059, %v7465, %v8194
      %v8323 = vsel %vm8060, %v7470, %v8195
      %v8324 = vsel %vm8061, %v7475, %v8196
      %v8325 = vsel %vm8062, %v7480, %v8197
      %v8326 = vsel %vm8063, %v7485, %v8198
      %v8327 = vsel %vm8064, %v7490, %v8199
      %v8328 = vsel %vm8065, %v7495, %v8200
      %v8329 = vsel %vm8066, %v7500, %v8201
      %v8330 = vsel %vm8067, %v7505, %v8202
      %v8331 = vsel %vm8068, %v7510, %v8203
      %v8332 = vsel %vm8069, %v7515, %v8204
      %v8333 = vsel %vm8070, %v7520, %v8205
      %v8334 = vsel %vm8071, %v7525, %v8206
      %v8335 = vsel %vm8072, %v7530, %v8207
      %v8336 = vsel %vm8073, %v7535, %v8208
      %v8337 = vsel %vm8074, %v7540, %v8209
      %v8338 = vsel %vm8075, %v7545, %v8210
      %v8339 = vsel %vm8076, %v7550, %v8211
      %v8340 = vsel %vm8077, %v7555, %v8212
      %v8341 = vsel %vm8078, %v7560, %v8213
      %v8342 = vsel %vm8079, %v7565, %v8214
      %v8343 = vsel %vm8080, %v7570, %v8215
      %v8344 = vsel %vm8081, %v7575, %v8216
      %v8345 = vsel %vm8082, %v7580, %v8217
      %v8346 = vsel %vm8083, %v7585, %v8218
      %v8347 = vsel %vm8084, %v7590, %v8219
      %v8348 = vsel %vm8085, %v7595, %v8220
      %v8349 = vsel %vm8086, %v7600, %v8221
      %v8350 = vsel %vm8087, %v7605, %v8222
      %v8351 = vsel %vm8088, %v7610, %v8223
      %v8352 = vsel %vm8089, %v7615, %v8224
      %v8353 = vsel %vm8090, %v7620, %v8225
      %v8354 = vsel %vm8091, %v7625, %v8226
      %v8355 = vsel %vm8092, %v7630, %v8227
      %v8356 = vsel %vm8093, %v7635, %v8228
      %v8357 = vsel %vm8094, %v7640, %v8229
      %v8358 = vsel %vm8095, %v7645, %v8230
      %v8359 = vsel %vm8096, %v7650, %v8231
      %v8360 = vsel %vm8097, %v7655, %v8232
      %v8361 = vsel %vm8098, %v7660, %v8233
      %v8362 = vsel %vm8099, %v7665, %v8234
      %v8363 = vsel %vm8100, %v7670, %v8235
      %v8364 = vsel %vm8101, %v7675, %v8236
      %v8365 = vsel %vm8102, %v7680, %v8237
      %v8366 = vsel %vm8103, %v7685, %v8238
      %v8367 = vsel %vm8104, %v7690, %v8239
      %v8368 = vsel %vm8105, %v7695, %v8240
      %v8369 = vsel %vm8106, %v7700, %v8241
      %v8370 = vsel %vm8107, %v7705, %v8242
      %v8371 = vsel %vm8108, %v7710, %v8243
      %v8372 = vsel %vm8109, %v7715, %v8244
      %v8373 = vsel %vm8110, %v7720, %v8245
      %v8374 = vsel %vm8111, %v7725, %v8246
      %v8375 = vsel %vm8112, %v7730, %v8247
      %v8376 = vsel %vm8113, %v7735, %v8248
      %v8377 = vsel %vm8114, %v7740, %v8249
      %v8378 = vsel %vm8115, %v7745, %v8250
      %v8379 = vsel %vm8116, %v7750, %v8251
      %v8380 = vsel %vm8117, %v7755, %v8252
      %v8381 = vsel %vm8118, %v7760, %v8253
      %v8382 = vsel %vm8119, %v7765, %v8254
      %v8383 = vsel %vm8120, %v7770, %v8255
      %v8384 = vsel %vm8121, %v7775, %v8256
      %v8385 = vsel %vm8122, %v7780, %v8257
      %v8386 = vsel %vm8123, %v7785, %v8258
      %v8387 = vsel %vm8124, %v7790, %v8259
      %v8388 = vsel %vm8125, %v7795, %v8260
      %v8389 = vsel %vm8126, %v7800, %v8261
      %v8390 = vsel %vm8127, %v7805, %v8262
      %v8391 = vsel %vm8128, %v7810, %v8263
      %v8392 = vsel %vm8129, %v7815, %v8264
      %v8393 = vsel %vm8130, %v7820, %v8265
      %v8394 = vsel %vm8131, %v7825, %v8266
      %v8395 = vsel %vm8132, %v7830, %v8267
      %v8396 = vsel %vm8133, %v7835, %v8268
      %v8397 = vsel %vm8134, %v7840, %v8269
      %v8398 = vsel %vm8135, %v7845, %v8270
      %v8399 = vsel %vm8136, %v7850, %v8271
      %v8400 = vsel %vm8137, %v7855, %v8272
      %v8401 = vsel %vm8138, %v7860, %v8273
      %v8402 = vsel %vm8139, %v7865, %v8274
      %v8403 = vsel %vm8140, %v7870, %v8275
      %v8404 = vsel %vm8141, %v7875, %v8276
      %v8405 = vsel %vm8142, %v7880, %v8277
      %v8406 = vsel %vm8143, %v7885, %v8278
      %v8407 = vsel %vm8144, %v7890, %v8279
      %v8408 = vsel %vm8145, %v7895, %v8280
      %v8409 = vsel %vm8146, %v7900, %v8281
      %v8410 = vsel %vm8147, %v7905, %v8282
      %v8411 = vsel %vm8148, %v7910, %v8283
      %v8412 = vsel %vm8149, %v7915, %v8284
      %v8413 = vsel %vm8150, %v7920, %v8285
      %v8414 = vsel %vm8151, %v7925, %v8286
      %v8415 = vsel %vm8152, %v7930, %v8287
      %v8416 = vsel %vm8153, %v7935, %v8288
      %v8417 = vsel %vm8154, %v7940, %v8289
      %v8418 = vsel %vm8155, %v7945, %v8290
      %v8419 = vsel %vm8156, %v7950, %v8291
      %v8420 = vsel %vm8157, %v7955, %v8292
      %v8421 = vsel %vm8158, %v7960, %v8293
      %v8422 = vsel %vm8159, %v7965, %v8294
      %v8423 = vsel %vm8160, %v7970, %v8295
      %v8424 = vsel %vm8161, %v7975, %v8296
      %v8425 = vsel %vm8162, %v7980, %v8297
      %v8426 = vsel %vm8163, %v7985, %v8298
      %v8427 = vsel %vm8164, %v7990, %v8299
      %v8428 = vsel %vm8165, %v7995, %v8300
      %v8429 = vsel %vm8166, %v8000, %v8301
      %v8430 = vsel %vm8167, %v8005, %v8302
      %v8431 = vsel %vm8168, %v8010, %v8303
      %v8432 = vsel %vm8169, %v8015, %v8304
      %v8433 = vsel %vm8170, %v8020, %v8305
      %v8434 = vsel %vm8171, %v8025, %v8306
      %v8435 = vsel %vm8172, %v8030, %v8307
      %v8436 = vsel %vm8173, %v8035, %v8308
      %v8437 = vsel %vm8174, %v8040, %v8309
      %v8438 = vsel %vm8175, %v8045, %v8310
      %v8439 = vld [vmem:[%s19] sm:$0xff]
      %v8440 = vld [vmem:[%s19 + $0x8] sm:$0xff]
      %v8441 = vld [vmem:[%s19 + $0x10] sm:$0xff]
      %v8442 = vld [vmem:[%s19 + $0x18] sm:$0xff]
      %v8443 = vld [vmem:[%s19 + $0x20] sm:$0xff]
      %v8444 = vld [vmem:[%s19 + $0x28] sm:$0xff]
      %v8445 = vld [vmem:[%s19 + $0x30] sm:$0xff]
      %v8446 = vld [vmem:[%s19 + $0x38] sm:$0xff]
      %v8447 = vld [vmem:[%s20] sm:$0x1]
      %v8449 = vlaneseq
      %v8450 = vshrl.u32 %v8449, 7
      %v8451 = vsub.s32 0, %v8450
      %v8452 = vrot.slane %v8447, %v8451
      %v8455 = vsel %vm1019, %v8311, 0
      %v8458 = vsel %vm1019, %v8312, 0
      %v8461 = vsel %vm1019, %v8313, 0
      %v8464 = vsel %vm1019, %v8314, 0
      %v8467 = vsel %vm1019, %v8315, 0
      %v8470 = vsel %vm1019, %v8316, 0
      %v8473 = vsel %vm1019, %v8317, 0
      %v8476 = vsel %vm1019, %v8318, 0
      %v8479 = vsel %vm1019, %v8319, 0
      %v8482 = vsel %vm1019, %v8320, 0
      %v8485 = vsel %vm1019, %v8321, 0
      %v8488 = vsel %vm1019, %v8322, 0
      %v8491 = vsel %vm1019, %v8323, 0
      %v8494 = vsel %vm1019, %v8324, 0
      %v8497 = vsel %vm1019, %v8325, 0
      %v8500 = vsel %vm1019, %v8326, 0
      %v8503 = vsel %vm1019, %v8327, 0
      %v8506 = vsel %vm1019, %v8328, 0
      %v8509 = vsel %vm1019, %v8329, 0
      %v8512 = vsel %vm1019, %v8330, 0
      %v8515 = vsel %vm1019, %v8331, 0
      %v8518 = vsel %vm1019, %v8332, 0
      %v8521 = vsel %vm1019, %v8333, 0
      %v8524 = vsel %vm1019, %v8334, 0
      %v8527 = vsel %vm1019, %v8335, 0
      %v8530 = vsel %vm1019, %v8336, 0
      %v8533 = vsel %vm1019, %v8337, 0
      %v8536 = vsel %vm1019, %v8338, 0
      %v8539 = vsel %vm1019, %v8339, 0
      %v8542 = vsel %vm1019, %v8340, 0
      %v8545 = vsel %vm1019, %v8341, 0
      %v8548 = vsel %vm1019, %v8342, 0
      %v8551 = vsel %vm1019, %v8343, 0
      %v8554 = vsel %vm1019, %v8344, 0
      %v8557 = vsel %vm1019, %v8345, 0
      %v8560 = vsel %vm1019, %v8346, 0
      %v8563 = vsel %vm1019, %v8347, 0
      %v8566 = vsel %vm1019, %v8348, 0
      %v8569 = vsel %vm1019, %v8349, 0
      %v8572 = vsel %vm1019, %v8350, 0
      %v8575 = vsel %vm1019, %v8351, 0
      %v8578 = vsel %vm1019, %v8352, 0
      %v8581 = vsel %vm1019, %v8353, 0
      %v8584 = vsel %vm1019, %v8354, 0
      %v8587 = vsel %vm1019, %v8355, 0
      %v8590 = vsel %vm1019, %v8356, 0
      %v8593 = vsel %vm1019, %v8357, 0
      %v8596 = vsel %vm1019, %v8358, 0
      %v8599 = vsel %vm1019, %v8359, 0
      %v8602 = vsel %vm1019, %v8360, 0
      %v8605 = vsel %vm1019, %v8361, 0
      %v8608 = vsel %vm1019, %v8362, 0
      %v8611 = vsel %vm1019, %v8363, 0
      %v8614 = vsel %vm1019, %v8364, 0
      %v8617 = vsel %vm1019, %v8365, 0
      %v8620 = vsel %vm1019, %v8366, 0
      %v8623 = vsel %vm1019, %v8367, 0
      %v8626 = vsel %vm1019, %v8368, 0
      %v8629 = vsel %vm1019, %v8369, 0
      %v8632 = vsel %vm1019, %v8370, 0
      %v8635 = vsel %vm1019, %v8371, 0
      %v8638 = vsel %vm1019, %v8372, 0
      %v8641 = vsel %vm1019, %v8373, 0
      %v8644 = vsel %vm1019, %v8374, 0
      %v8647 = vsel %vm1019, %v8375, 0
      %v8650 = vsel %vm1019, %v8376, 0
      %v8653 = vsel %vm1019, %v8377, 0
      %v8656 = vsel %vm1019, %v8378, 0
      %v8659 = vsel %vm1019, %v8379, 0
      %v8662 = vsel %vm1019, %v8380, 0
      %v8665 = vsel %vm1019, %v8381, 0
      %v8668 = vsel %vm1019, %v8382, 0
      %v8671 = vsel %vm1019, %v8383, 0
      %v8674 = vsel %vm1019, %v8384, 0
      %v8677 = vsel %vm1019, %v8385, 0
      %v8680 = vsel %vm1019, %v8386, 0
      %v8683 = vsel %vm1019, %v8387, 0
      %v8686 = vsel %vm1019, %v8388, 0
      %v8689 = vsel %vm1019, %v8389, 0
      %v8692 = vsel %vm1019, %v8390, 0
      %v8695 = vsel %vm1019, %v8391, 0
      %v8698 = vsel %vm1019, %v8392, 0
      %v8701 = vsel %vm1019, %v8393, 0
      %v8704 = vsel %vm1019, %v8394, 0
      %v8707 = vsel %vm1019, %v8395, 0
      %v8710 = vsel %vm1019, %v8396, 0
      %v8713 = vsel %vm1019, %v8397, 0
      %v8716 = vsel %vm1019, %v8398, 0
      %v8719 = vsel %vm1019, %v8399, 0
      %v8722 = vsel %vm1019, %v8400, 0
      %v8725 = vsel %vm1019, %v8401, 0
      %v8728 = vsel %vm1019, %v8402, 0
      %v8731 = vsel %vm1019, %v8403, 0
      %v8734 = vsel %vm1019, %v8404, 0
      %v8737 = vsel %vm1019, %v8405, 0
      %v8740 = vsel %vm1019, %v8406, 0
      %v8743 = vsel %vm1019, %v8407, 0
      %v8746 = vsel %vm1019, %v8408, 0
      %v8749 = vsel %vm1019, %v8409, 0
      %v8752 = vsel %vm1019, %v8410, 0
      %v8755 = vsel %vm1019, %v8411, 0
      %v8758 = vsel %vm1019, %v8412, 0
      %v8761 = vsel %vm1019, %v8413, 0
      %v8764 = vsel %vm1019, %v8414, 0
      %v8767 = vsel %vm1019, %v8415, 0
      %v8770 = vsel %vm1019, %v8416, 0
      %v8773 = vsel %vm1019, %v8417, 0
      %v8776 = vsel %vm1019, %v8418, 0
      %v8779 = vsel %vm1019, %v8419, 0
      %v8782 = vsel %vm1019, %v8420, 0
      %v8785 = vsel %vm1019, %v8421, 0
      %v8788 = vsel %vm1019, %v8422, 0
      %v8791 = vsel %vm1019, %v8423, 0
      %v8794 = vsel %vm1019, %v8424, 0
      %v8797 = vsel %vm1019, %v8425, 0
      %v8800 = vsel %vm1019, %v8426, 0
      %v8803 = vsel %vm1019, %v8427, 0
      %v8806 = vsel %vm1019, %v8428, 0
      %v8809 = vsel %vm1019, %v8429, 0
      %v8812 = vsel %vm1019, %v8430, 0
      %v8815 = vsel %vm1019, %v8431, 0
      %v8818 = vsel %vm1019, %v8432, 0
      %v8821 = vsel %vm1019, %v8433, 0
      %v8824 = vsel %vm1019, %v8434, 0
      %v8827 = vsel %vm1019, %v8435, 0
      %v8830 = vsel %vm1019, %v8436, 0
      %v8833 = vsel %vm1019, %v8437, 0
      %v8836 = vsel %vm1019, %v8438, 0
      %8838 = vmatprep.subr.mxu0 0.0
      %8839 = vmatpush1.msra.mxu0 %v8439
      %8840 = vmatprep.subr.mxu0 0.0
      %8841 = vmatpush1.msra.mxu0 %v8440
      %8842 = vmatprep.subr.mxu0 0.0
      %8843 = vmatpush1.msra.mxu0 %v8441
      %8844 = vmatprep.subr.mxu0 0.0
      %8845 = vmatpush1.msra.mxu0 %v8442
      %8846 = vmatprep.subr.mxu0 0.0
      %8847 = vmatpush1.msra.mxu0 %v8443
      %8848 = vmatprep.subr.mxu0 0.0
      %8849 = vmatpush1.msra.mxu0 %v8444
      %8850 = vmatprep.subr.mxu0 0.0
      %8851 = vmatpush1.msra.mxu0 %v8445
      %8852 = vmatprep.subr.mxu0 0.0
      %8853 = vmatpush1.msra.mxu0 %v8446
      %8854 = vmatprep.subr.mxu0 0.0
      %8855 = vmatpush1.msra.mxu0 0.0
      %8856 = vmatprep.subr.mxu0 0.0
      %8857 = vmatpush1.msra.mxu0 0.0
      %8858 = vmatprep.subr.mxu0 0.0
      %8859 = vmatpush1.msra.mxu0 0.0
      %8860 = vmatprep.subr.mxu0 0.0
      %8861 = vmatpush1.msra.mxu0 0.0
      %8862 = vmatprep.subr.mxu0 0.0
      %8863 = vmatpush1.msra.mxu0 0.0
      %8864 = vmatprep.subr.mxu0 0.0
      %8865 = vmatpush1.msra.mxu0 0.0
      %8866 = vmatprep.subr.mxu0 0.0
      %8867 = vmatpush1.msra.mxu0 0.0
      %8868 = vmatprep.subr.mxu0 0.0
      %8869 = vmatpush1.msra.mxu0 0.0
      %8870 = vmatprep.subr.mxu0 0.0
      %8871 = vmatpush1.msra.mxu0 0.0
      %8872 = vmatprep.subr.mxu0 0.0
      %8873 = vmatpush1.msra.mxu0 0.0
      %8874 = vmatprep.subr.mxu0 0.0
      %8875 = vmatpush1.msra.mxu0 0.0
      %8876 = vmatprep.subr.mxu0 0.0
      %8877 = vmatpush1.msra.mxu0 0.0
      %8878 = vmatprep.subr.mxu0 0.0
      %8879 = vmatpush1.msra.mxu0 0.0
      %8880 = vmatprep.subr.mxu0 0.0
      %8881 = vmatpush1.msra.mxu0 0.0
      %8882 = vmatprep.subr.mxu0 0.0
      %8883 = vmatpush1.msra.mxu0 0.0
      %8884 = vmatprep.subr.mxu0 0.0
      %8885 = vmatpush1.msra.mxu0 0.0
      %8886 = vmatprep.subr.mxu0 0.0
      %8887 = vmatpush1.msra.mxu0 0.0
      %8888 = vmatprep.subr.mxu0 0.0
      %8889 = vmatpush1.msra.mxu0 0.0
      %8890 = vmatprep.subr.mxu0 0.0
      %8891 = vmatpush1.msra.mxu0 0.0
      %8892 = vmatprep.subr.mxu0 0.0
      %8893 = vmatpush1.msra.mxu0 0.0
      %8894 = vmatprep.subr.mxu0 0.0
      %8895 = vmatpush1.msra.mxu0 0.0
      %8896 = vmatprep.subr.mxu0 0.0
      %8897 = vmatpush1.msra.mxu0 0.0
      %8898 = vmatprep.subr.mxu0 0.0
      %8899 = vmatpush1.msra.mxu0 0.0
      %8900 = vmatprep.subr.mxu0 0.0
      %8901 = vmatpush1.msra.mxu0 0.0
      %8902 = vmatprep.mubr.f32.mxu0 0.0
      %8903 = vmatmul.mubr.f32.gmra.mrb[0].mxu0 %v8455
      %v8904 = vpop.f32.mrb[0].mxu0
      %v8905 = vadd.f32 %v8452, %v8904
      %v8906 = vpop.f32.mrb[0].mxu0
      %8907 = vmatprep.mubr.f32.mxu0 0.0
      %8908 = vmatmul.mubr.f32.gmra.mrb[0].mxu0 %v8458
      %v8909 = vpop.f32.mrb[0].mxu0
      %v8910 = vadd.f32 %v8452, %v8909
      %v8911 = vpop.f32.mrb[0].mxu0
      %8912 = vmatprep.mubr.f32.mxu0 0.0
      %8913 = vmatmul.mubr.f32.gmra.mrb[0].mxu0 %v8461
      %v8914 = vpop.f32.mrb[0].mxu0
      %v8915 = vadd.f32 %v8452, %v8914
      %v8916 = vpop.f32.mrb[0].mxu0
      %8917 = vmatprep.mubr.f32.mxu0 0.0
      %8918 = vmatmul.mubr.f32.gmra.mrb[0].mxu0 %v8464
      %v8919 = vpop.f32.mrb[0].mxu0
      %v8920 = vadd.f32 %v8452, %v8919
      %v8921 = vpop.f32.mrb[0].mxu0
      %8922 = vmatprep.mubr.f32.mxu0 0.0
      %8923 = vmatmul.mubr.f32.gmra.mrb[0].mxu0 %v8467
      %v8924 = vpop.f32.mrb[0].mxu0
      %v8925 = vadd.f32 %v8452, %v8924
      %v8926 = vpop.f32.mrb[0].mxu0
      %8927 = vmatprep.mubr.f32.mxu0 0.0
      %8928 = vmatmul.mubr.f32.gmra.mrb[0].mxu0 %v8470
      %v8929 = vpop.f32.mrb[0].mxu0
      %v8930 = vadd.f32 %v8452, %v8929
      %v8931 = vpop.f32.mrb[0].mxu0
      %8932 = vmatprep.mubr.f32.mxu0 0.0
      %8933 = vmatmul.mubr.f32.gmra.mrb[0].mxu0 %v8473
      %v8934 = vpop.f32.mrb[0].mxu0
      %v8935 = vadd.f32 %v8452, %v8934
      %v8936 = vpop.f32.mrb[0].mxu0
      %8937 = vmatprep.mubr.f32.mxu0 0.0
      %8938 = vmatmul.mubr.f32.gmra.mrb[0].mxu0 %v8476
      %v8939 = vpop.f32.mrb[0].mxu0
      %v8940 = vadd.f32 %v8452, %v8939
      %v8941 = vpop.f32.mrb[0].mxu0
      %8942 = vmatprep.mubr.f32.mxu0 0.0
      %8943 = vmatmul.mubr.f32.gmra.mrb[0].mxu0 %v8479
      %v8944 = vpop.f32.mrb[0].mxu0
      %v8945 = vadd.f32 %v8452, %v8944
      %v8946 = vpop.f32.mrb[0].mxu0
      %8947 = vmatprep.mubr.f32.mxu0 0.0
      %8948 = vmatmul.mubr.f32.gmra.mrb[0].mxu0 %v8482
      %v8949 = vpop.f32.mrb[0].mxu0
      %v8950 = vadd.f32 %v8452, %v8949
      %v8951 = vpop.f32.mrb[0].mxu0
      %8952 = vmatprep.mubr.f32.mxu0 0.0
      %8953 = vmatmul.mubr.f32.gmra.mrb[0].mxu0 %v8485
      %v8954 = vpop.f32.mrb[0].mxu0
      %v8955 = vadd.f32 %v8452, %v8954
      %v8956 = vpop.f32.mrb[0].mxu0
      %8957 = vmatprep.mubr.f32.mxu0 0.0
      %8958 = vmatmul.mubr.f32.gmra.mrb[0].mxu0 %v8488
      %v8959 = vpop.f32.mrb[0].mxu0
      %v8960 = vadd.f32 %v8452, %v8959
      %v8961 = vpop.f32.mrb[0].mxu0
      %8962 = vmatprep.mubr.f32.mxu0 0.0
      %8963 = vmatmul.mubr.f32.gmra.mrb[0].mxu0 %v8491
      %v8964 = vpop.f32.mrb[0].mxu0
      %v8965 = vadd.f32 %v8452, %v8964
      %v8966 = vpop.f32.mrb[0].mxu0
      %8967 = vmatprep.mubr.f32.mxu0 0.0
      %8968 = vmatmul.mubr.f32.gmra.mrb[0].mxu0 %v8494
      %v8969 = vpop.f32.mrb[0].mxu0
      %v8970 = vadd.f32 %v8452, %v8969
      %v8971 = vpop.f32.mrb[0].mxu0
      %8972 = vmatprep.mubr.f32.mxu0 0.0
      %8973 = vmatmul.mubr.f32.gmra.mrb[0].mxu0 %v8497
      %v8974 = vpop.f32.mrb[0].mxu0
      %v8975 = vadd.f32 %v8452, %v8974
      %v8976 = vpop.f32.mrb[0].mxu0
      %8977 = vmatprep.mubr.f32.mxu0 0.0
      %8978 = vmatmul.mubr.f32.gmra.mrb[0].mxu0 %v8500
      %v8979 = vpop.f32.mrb[0].mxu0
      %v8980 = vadd.f32 %v8452, %v8979
      %v8981 = vpop.f32.mrb[0].mxu0
      %8982 = vmatprep.mubr.f32.mxu0 0.0
      %8983 = vmatmul.mubr.f32.gmra.mrb[0].mxu0 %v8503
      %v8984 = vpop.f32.mrb[0].mxu0
      %v8985 = vadd.f32 %v8452, %v8984
      %v8986 = vpop.f32.mrb[0].mxu0
      %8987 = vmatprep.mubr.f32.mxu0 0.0
      %8988 = vmatmul.mubr.f32.gmra.mrb[0].mxu0 %v8506
      %v8989 = vpop.f32.mrb[0].mxu0
      %v8990 = vadd.f32 %v8452, %v8989
      %v8991 = vpop.f32.mrb[0].mxu0
      %8992 = vmatprep.mubr.f32.mxu0 0.0
      %8993 = vmatmul.mubr.f32.gmra.mrb[0].mxu0 %v8509
      %v8994 = vpop.f32.mrb[0].mxu0
      %v8995 = vadd.f32 %v8452, %v8994
      %v8996 = vpop.f32.mrb[0].mxu0
      %8997 = vmatprep.mubr.f32.mxu0 0.0
      %8998 = vmatmul.mubr.f32.gmra.mrb[0].mxu0 %v8512
      %v8999 = vpop.f32.mrb[0].mxu0
      %v9000 = vadd.f32 %v8452, %v8999
      %v9001 = vpop.f32.mrb[0].mxu0
      %9002 = vmatprep.mubr.f32.mxu0 0.0
      %9003 = vmatmul.mubr.f32.gmra.mrb[0].mxu0 %v8515
      %v9004 = vpop.f32.mrb[0].mxu0
      %v9005 = vadd.f32 %v8452, %v9004
      %v9006 = vpop.f32.mrb[0].mxu0
      %9007 = vmatprep.mubr.f32.mxu0 0.0
      %9008 = vmatmul.mubr.f32.gmra.mrb[0].mxu0 %v8518
      %v9009 = vpop.f32.mrb[0].mxu0
      %v9010 = vadd.f32 %v8452, %v9009
      %v9011 = vpop.f32.mrb[0].mxu0
      %9012 = vmatprep.mubr.f32.mxu0 0.0
      %9013 = vmatmul.mubr.f32.gmra.mrb[0].mxu0 %v8521
      %v9014 = vpop.f32.mrb[0].mxu0
      %v9015 = vadd.f32 %v8452, %v9014
      %v9016 = vpop.f32.mrb[0].mxu0
      %9017 = vmatprep.mubr.f32.mxu0 0.0
      %9018 = vmatmul.mubr.f32.gmra.mrb[0].mxu0 %v8524
      %v9019 = vpop.f32.mrb[0].mxu0
      %v9020 = vadd.f32 %v8452, %v9019
      %v9021 = vpop.f32.mrb[0].mxu0
      %9022 = vmatprep.mubr.f32.mxu0 0.0
      %9023 = vmatmul.mubr.f32.gmra.mrb[0].mxu0 %v8527
      %v9024 = vpop.f32.mrb[0].mxu0
      %v9025 = vadd.f32 %v8452, %v9024
      %v9026 = vpop.f32.mrb[0].mxu0
      %9027 = vmatprep.mubr.f32.mxu0 0.0
      %9028 = vmatmul.mubr.f32.gmra.mrb[0].mxu0 %v8530
      %v9029 = vpop.f32.mrb[0].mxu0
      %v9030 = vadd.f32 %v8452, %v9029
      %v9031 = vpop.f32.mrb[0].mxu0
      %9032 = vmatprep.mubr.f32.mxu0 0.0
      %9033 = vmatmul.mubr.f32.gmra.mrb[0].mxu0 %v8533
      %v9034 = vpop.f32.mrb[0].mxu0
      %v9035 = vadd.f32 %v8452, %v9034
      %v9036 = vpop.f32.mrb[0].mxu0
      %9037 = vmatprep.mubr.f32.mxu0 0.0
      %9038 = vmatmul.mubr.f32.gmra.mrb[0].mxu0 %v8536
      %v9039 = vpop.f32.mrb[0].mxu0
      %v9040 = vadd.f32 %v8452, %v9039
      %v9041 = vpop.f32.mrb[0].mxu0
      %9042 = vmatprep.mubr.f32.mxu0 0.0
      %9043 = vmatmul.mubr.f32.gmra.mrb[0].mxu0 %v8539
      %v9044 = vpop.f32.mrb[0].mxu0
      %v9045 = vadd.f32 %v8452, %v9044
      %v9046 = vpop.f32.mrb[0].mxu0
      %9047 = vmatprep.mubr.f32.mxu0 0.0
      %9048 = vmatmul.mubr.f32.gmra.mrb[0].mxu0 %v8542
      %v9049 = vpop.f32.mrb[0].mxu0
      %v9050 = vadd.f32 %v8452, %v9049
      %v9051 = vpop.f32.mrb[0].mxu0
      %9052 = vmatprep.mubr.f32.mxu0 0.0
      %9053 = vmatmul.mubr.f32.gmra.mrb[0].mxu0 %v8545
      %v9054 = vpop.f32.mrb[0].mxu0
      %v9055 = vadd.f32 %v8452, %v9054
      %v9056 = vpop.f32.mrb[0].mxu0
      %9057 = vmatprep.mubr.f32.mxu0 0.0
      %9058 = vmatmul.mubr.f32.gmra.mrb[0].mxu0 %v8548
      %v9059 = vpop.f32.mrb[0].mxu0
      %v9060 = vadd.f32 %v8452, %v9059
      %v9061 = vpop.f32.mrb[0].mxu0
      %9062 = vmatprep.mubr.f32.mxu0 0.0
      %9063 = vmatmul.mubr.f32.gmra.mrb[0].mxu0 %v8551
      %v9064 = vpop.f32.mrb[0].mxu0
      %v9065 = vadd.f32 %v8452, %v9064
      %v9066 = vpop.f32.mrb[0].mxu0
      %9067 = vmatprep.mubr.f32.mxu0 0.0
      %9068 = vmatmul.mubr.f32.gmra.mrb[0].mxu0 %v8554
      %v9069 = vpop.f32.mrb[0].mxu0
      %v9070 = vadd.f32 %v8452, %v9069
      %v9071 = vpop.f32.mrb[0].mxu0
      %9072 = vmatprep.mubr.f32.mxu0 0.0
      %9073 = vmatmul.mubr.f32.gmra.mrb[0].mxu0 %v8557
      %v9074 = vpop.f32.mrb[0].mxu0
      %v9075 = vadd.f32 %v8452, %v9074
      %v9076 = vpop.f32.mrb[0].mxu0
      %9077 = vmatprep.mubr.f32.mxu0 0.0
      %9078 = vmatmul.mubr.f32.gmra.mrb[0].mxu0 %v8560
      %v9079 = vpop.f32.mrb[0].mxu0
      %v9080 = vadd.f32 %v8452, %v9079
      %v9081 = vpop.f32.mrb[0].mxu0
      %9082 = vmatprep.mubr.f32.mxu0 0.0
      %9083 = vmatmul.mubr.f32.gmra.mrb[0].mxu0 %v8563
      %v9084 = vpop.f32.mrb[0].mxu0
      %v9085 = vadd.f32 %v8452, %v9084
      %v9086 = vpop.f32.mrb[0].mxu0
      %9087 = vmatprep.mubr.f32.mxu0 0.0
      %9088 = vmatmul.mubr.f32.gmra.mrb[0].mxu0 %v8566
      %v9089 = vpop.f32.mrb[0].mxu0
      %v9090 = vadd.f32 %v8452, %v9089
      %v9091 = vpop.f32.mrb[0].mxu0
      %9092 = vmatprep.mubr.f32.mxu0 0.0
      %9093 = vmatmul.mubr.f32.gmra.mrb[0].mxu0 %v8569
      %v9094 = vpop.f32.mrb[0].mxu0
      %v9095 = vadd.f32 %v8452, %v9094
      %v9096 = vpop.f32.mrb[0].mxu0
      %9097 = vmatprep.mubr.f32.mxu0 0.0
      %9098 = vmatmul.mubr.f32.gmra.mrb[0].mxu0 %v8572
      %v9099 = vpop.f32.mrb[0].mxu0
      %v9100 = vadd.f32 %v8452, %v9099
      %v9101 = vpop.f32.mrb[0].mxu0
      %9102 = vmatprep.mubr.f32.mxu0 0.0
      %9103 = vmatmul.mubr.f32.gmra.mrb[0].mxu0 %v8575
      %v9104 = vpop.f32.mrb[0].mxu0
      %v9105 = vadd.f32 %v8452, %v9104
      %v9106 = vpop.f32.mrb[0].mxu0
      %9107 = vmatprep.mubr.f32.mxu0 0.0
      %9108 = vmatmul.mubr.f32.gmra.mrb[0].mxu0 %v8578
      %v9109 = vpop.f32.mrb[0].mxu0
      %v9110 = vadd.f32 %v8452, %v9109
      %v9111 = vpop.f32.mrb[0].mxu0
      %9112 = vmatprep.mubr.f32.mxu0 0.0
      %9113 = vmatmul.mubr.f32.gmra.mrb[0].mxu0 %v8581
      %v9114 = vpop.f32.mrb[0].mxu0
      %v9115 = vadd.f32 %v8452, %v9114
      %v9116 = vpop.f32.mrb[0].mxu0
      %9117 = vmatprep.mubr.f32.mxu0 0.0
      %9118 = vmatmul.mubr.f32.gmra.mrb[0].mxu0 %v8584
      %v9119 = vpop.f32.mrb[0].mxu0
      %v9120 = vadd.f32 %v8452, %v9119
      %v9121 = vpop.f32.mrb[0].mxu0
      %9122 = vmatprep.mubr.f32.mxu0 0.0
      %9123 = vmatmul.mubr.f32.gmra.mrb[0].mxu0 %v8587
      %v9124 = vpop.f32.mrb[0].mxu0
      %v9125 = vadd.f32 %v8452, %v9124
      %v9126 = vpop.f32.mrb[0].mxu0
      %9127 = vmatprep.mubr.f32.mxu0 0.0
      %9128 = vmatmul.mubr.f32.gmra.mrb[0].mxu0 %v8590
      %v9129 = vpop.f32.mrb[0].mxu0
      %v9130 = vadd.f32 %v8452, %v9129
      %v9131 = vpop.f32.mrb[0].mxu0
      %9132 = vmatprep.mubr.f32.mxu0 0.0
      %9133 = vmatmul.mubr.f32.gmra.mrb[0].mxu0 %v8593
      %v9134 = vpop.f32.mrb[0].mxu0
      %v9135 = vadd.f32 %v8452, %v9134
      %v9136 = vpop.f32.mrb[0].mxu0
      %9137 = vmatprep.mubr.f32.mxu0 0.0
      %9138 = vmatmul.mubr.f32.gmra.mrb[0].mxu0 %v8596
      %v9139 = vpop.f32.mrb[0].mxu0
      %v9140 = vadd.f32 %v8452, %v9139
      %v9141 = vpop.f32.mrb[0].mxu0
      %9142 = vmatprep.mubr.f32.mxu0 0.0
      %9143 = vmatmul.mubr.f32.gmra.mrb[0].mxu0 %v8599
      %v9144 = vpop.f32.mrb[0].mxu0
      %v9145 = vadd.f32 %v8452, %v9144
      %v9146 = vpop.f32.mrb[0].mxu0
      %9147 = vmatprep.mubr.f32.mxu0 0.0
      %9148 = vmatmul.mubr.f32.gmra.mrb[0].mxu0 %v8602
      %v9149 = vpop.f32.mrb[0].mxu0
      %v9150 = vadd.f32 %v8452, %v9149
      %v9151 = vpop.f32.mrb[0].mxu0
      %9152 = vmatprep.mubr.f32.mxu0 0.0
      %9153 = vmatmul.mubr.f32.gmra.mrb[0].mxu0 %v8605
      %v9154 = vpop.f32.mrb[0].mxu0
      %v9155 = vadd.f32 %v8452, %v9154
      %v9156 = vpop.f32.mrb[0].mxu0
      %9157 = vmatprep.mubr.f32.mxu0 0.0
      %9158 = vmatmul.mubr.f32.gmra.mrb[0].mxu0 %v8608
      %v9159 = vpop.f32.mrb[0].mxu0
      %v9160 = vadd.f32 %v8452, %v9159
      %v9161 = vpop.f32.mrb[0].mxu0
      %9162 = vmatprep.mubr.f32.mxu0 0.0
      %9163 = vmatmul.mubr.f32.gmra.mrb[0].mxu0 %v8611
      %v9164 = vpop.f32.mrb[0].mxu0
      %v9165 = vadd.f32 %v8452, %v9164
      %v9166 = vpop.f32.mrb[0].mxu0
      %9167 = vmatprep.mubr.f32.mxu0 0.0
      %9168 = vmatmul.mubr.f32.gmra.mrb[0].mxu0 %v8614
      %v9169 = vpop.f32.mrb[0].mxu0
      %v9170 = vadd.f32 %v8452, %v9169
      %v9171 = vpop.f32.mrb[0].mxu0
      %9172 = vmatprep.mubr.f32.mxu0 0.0
      %9173 = vmatmul.mubr.f32.gmra.mrb[0].mxu0 %v8617
      %v9174 = vpop.f32.mrb[0].mxu0
      %v9175 = vadd.f32 %v8452, %v9174
      %v9176 = vpop.f32.mrb[0].mxu0
      %9177 = vmatprep.mubr.f32.mxu0 0.0
      %9178 = vmatmul.mubr.f32.gmra.mrb[0].mxu0 %v8620
      %v9179 = vpop.f32.mrb[0].mxu0
      %v9180 = vadd.f32 %v8452, %v9179
      %v9181 = vpop.f32.mrb[0].mxu0
      %9182 = vmatprep.mubr.f32.mxu0 0.0
      %9183 = vmatmul.mubr.f32.gmra.mrb[0].mxu0 %v8623
      %v9184 = vpop.f32.mrb[0].mxu0
      %v9185 = vadd.f32 %v8452, %v9184
      %v9186 = vpop.f32.mrb[0].mxu0
      %9187 = vmatprep.mubr.f32.mxu0 0.0
      %9188 = vmatmul.mubr.f32.gmra.mrb[0].mxu0 %v8626
      %v9189 = vpop.f32.mrb[0].mxu0
      %v9190 = vadd.f32 %v8452, %v9189
      %v9191 = vpop.f32.mrb[0].mxu0
      %9192 = vmatprep.mubr.f32.mxu0 0.0
      %9193 = vmatmul.mubr.f32.gmra.mrb[0].mxu0 %v8629
      %v9194 = vpop.f32.mrb[0].mxu0
      %v9195 = vadd.f32 %v8452, %v9194
      %v9196 = vpop.f32.mrb[0].mxu0
      %9197 = vmatprep.mubr.f32.mxu0 0.0
      %9198 = vmatmul.mubr.f32.gmra.mrb[0].mxu0 %v8632
      %v9199 = vpop.f32.mrb[0].mxu0
      %v9200 = vadd.f32 %v8452, %v9199
      %v9201 = vpop.f32.mrb[0].mxu0
      %9202 = vmatprep.mubr.f32.mxu0 0.0
      %9203 = vmatmul.mubr.f32.gmra.mrb[0].mxu0 %v8635
      %v9204 = vpop.f32.mrb[0].mxu0
      %v9205 = vadd.f32 %v8452, %v9204
      %v9206 = vpop.f32.mrb[0].mxu0
      %9207 = vmatprep.mubr.f32.mxu0 0.0
      %9208 = vmatmul.mubr.f32.gmra.mrb[0].mxu0 %v8638
      %v9209 = vpop.f32.mrb[0].mxu0
      %v9210 = vadd.f32 %v8452, %v9209
      %v9211 = vpop.f32.mrb[0].mxu0
      %9212 = vmatprep.mubr.f32.mxu0 0.0
      %9213 = vmatmul.mubr.f32.gmra.mrb[0].mxu0 %v8641
      %v9214 = vpop.f32.mrb[0].mxu0
      %v9215 = vadd.f32 %v8452, %v9214
      %v9216 = vpop.f32.mrb[0].mxu0
      %9217 = vmatprep.mubr.f32.mxu0 0.0
      %9218 = vmatmul.mubr.f32.gmra.mrb[0].mxu0 %v8644
      %v9219 = vpop.f32.mrb[0].mxu0
      %v9220 = vadd.f32 %v8452, %v9219
      %v9221 = vpop.f32.mrb[0].mxu0
      %9222 = vmatprep.mubr.f32.mxu0 0.0
      %9223 = vmatmul.mubr.f32.gmra.mrb[0].mxu0 %v8647
      %v9224 = vpop.f32.mrb[0].mxu0
      %v9225 = vadd.f32 %v8452, %v9224
      %v9226 = vpop.f32.mrb[0].mxu0
      %9227 = vmatprep.mubr.f32.mxu0 0.0
      %9228 = vmatmul.mubr.f32.gmra.mrb[0].mxu0 %v8650
      %v9229 = vpop.f32.mrb[0].mxu0
      %v9230 = vadd.f32 %v8452, %v9229
      %v9231 = vpop.f32.mrb[0].mxu0
      %9232 = vmatprep.mubr.f32.mxu0 0.0
      %9233 = vmatmul.mubr.f32.gmra.mrb[0].mxu0 %v8653
      %v9234 = vpop.f32.mrb[0].mxu0
      %v9235 = vadd.f32 %v8452, %v9234
      %v9236 = vpop.f32.mrb[0].mxu0
      %9237 = vmatprep.mubr.f32.mxu0 0.0
      %9238 = vmatmul.mubr.f32.gmra.mrb[0].mxu0 %v8656
      %v9239 = vpop.f32.mrb[0].mxu0
      %v9240 = vadd.f32 %v8452, %v9239
      %v9241 = vpop.f32.mrb[0].mxu0
      %9242 = vmatprep.mubr.f32.mxu0 0.0
      %9243 = vmatmul.mubr.f32.gmra.mrb[0].mxu0 %v8659
      %v9244 = vpop.f32.mrb[0].mxu0
      %v9245 = vadd.f32 %v8452, %v9244
      %v9246 = vpop.f32.mrb[0].mxu0
      %9247 = vmatprep.mubr.f32.mxu0 0.0
      %9248 = vmatmul.mubr.f32.gmra.mrb[0].mxu0 %v8662
      %v9249 = vpop.f32.mrb[0].mxu0
      %v9250 = vadd.f32 %v8452, %v9249
      %v9251 = vpop.f32.mrb[0].mxu0
      %9252 = vmatprep.mubr.f32.mxu0 0.0
      %9253 = vmatmul.mubr.f32.gmra.mrb[0].mxu0 %v8665
      %v9254 = vpop.f32.mrb[0].mxu0
      %v9255 = vadd.f32 %v8452, %v9254
      %v9256 = vpop.f32.mrb[0].mxu0
      %9257 = vmatprep.mubr.f32.mxu0 0.0
      %9258 = vmatmul.mubr.f32.gmra.mrb[0].mxu0 %v8668
      %v9259 = vpop.f32.mrb[0].mxu0
      %v9260 = vadd.f32 %v8452, %v9259
      %v9261 = vpop.f32.mrb[0].mxu0
      %9262 = vmatprep.mubr.f32.mxu0 0.0
      %9263 = vmatmul.mubr.f32.gmra.mrb[0].mxu0 %v8671
      %v9264 = vpop.f32.mrb[0].mxu0
      %v9265 = vadd.f32 %v8452, %v9264
      %v9266 = vpop.f32.mrb[0].mxu0
      %9267 = vmatprep.mubr.f32.mxu0 0.0
      %9268 = vmatmul.mubr.f32.gmra.mrb[0].mxu0 %v8674
      %v9269 = vpop.f32.mrb[0].mxu0
      %v9270 = vadd.f32 %v8452, %v9269
      %v9271 = vpop.f32.mrb[0].mxu0
      %9272 = vmatprep.mubr.f32.mxu0 0.0
      %9273 = vmatmul.mubr.f32.gmra.mrb[0].mxu0 %v8677
      %v9274 = vpop.f32.mrb[0].mxu0
      %v9275 = vadd.f32 %v8452, %v9274
      %v9276 = vpop.f32.mrb[0].mxu0
      %9277 = vmatprep.mubr.f32.mxu0 0.0
      %9278 = vmatmul.mubr.f32.gmra.mrb[0].mxu0 %v8680
      %v9279 = vpop.f32.mrb[0].mxu0
      %v9280 = vadd.f32 %v8452, %v9279
      %v9281 = vpop.f32.mrb[0].mxu0
      %9282 = vmatprep.mubr.f32.mxu0 0.0
      %9283 = vmatmul.mubr.f32.gmra.mrb[0].mxu0 %v8683
      %v9284 = vpop.f32.mrb[0].mxu0
      %v9285 = vadd.f32 %v8452, %v9284
      %v9286 = vpop.f32.mrb[0].mxu0
      %9287 = vmatprep.mubr.f32.mxu0 0.0
      %9288 = vmatmul.mubr.f32.gmra.mrb[0].mxu0 %v8686
      %v9289 = vpop.f32.mrb[0].mxu0
      %v9290 = vadd.f32 %v8452, %v9289
      %v9291 = vpop.f32.mrb[0].mxu0
      %9292 = vmatprep.mubr.f32.mxu0 0.0
      %9293 = vmatmul.mubr.f32.gmra.mrb[0].mxu0 %v8689
      %v9294 = vpop.f32.mrb[0].mxu0
      %v9295 = vadd.f32 %v8452, %v9294
      %v9296 = vpop.f32.mrb[0].mxu0
      %9297 = vmatprep.mubr.f32.mxu0 0.0
      %9298 = vmatmul.mubr.f32.gmra.mrb[0].mxu0 %v8692
      %v9299 = vpop.f32.mrb[0].mxu0
      %v9300 = vadd.f32 %v8452, %v9299
      %v9301 = vpop.f32.mrb[0].mxu0
      %9302 = vmatprep.mubr.f32.mxu0 0.0
      %9303 = vmatmul.mubr.f32.gmra.mrb[0].mxu0 %v8695
      %v9304 = vpop.f32.mrb[0].mxu0
      %v9305 = vadd.f32 %v8452, %v9304
      %v9306 = vpop.f32.mrb[0].mxu0
      %9307 = vmatprep.mubr.f32.mxu0 0.0
      %9308 = vmatmul.mubr.f32.gmra.mrb[0].mxu0 %v8698
      %v9309 = vpop.f32.mrb[0].mxu0
      %v9310 = vadd.f32 %v8452, %v9309
      %v9311 = vpop.f32.mrb[0].mxu0
      %9312 = vmatprep.mubr.f32.mxu0 0.0
      %9313 = vmatmul.mubr.f32.gmra.mrb[0].mxu0 %v8701
      %v9314 = vpop.f32.mrb[0].mxu0
      %v9315 = vadd.f32 %v8452, %v9314
      %v9316 = vpop.f32.mrb[0].mxu0
      %9317 = vmatprep.mubr.f32.mxu0 0.0
      %9318 = vmatmul.mubr.f32.gmra.mrb[0].mxu0 %v8704
      %v9319 = vpop.f32.mrb[0].mxu0
      %v9320 = vadd.f32 %v8452, %v9319
      %v9321 = vpop.f32.mrb[0].mxu0
      %9322 = vmatprep.mubr.f32.mxu0 0.0
      %9323 = vmatmul.mubr.f32.gmra.mrb[0].mxu0 %v8707
      %v9324 = vpop.f32.mrb[0].mxu0
      %v9325 = vadd.f32 %v8452, %v9324
      %v9326 = vpop.f32.mrb[0].mxu0
      %9327 = vmatprep.mubr.f32.mxu0 0.0
      %9328 = vmatmul.mubr.f32.gmra.mrb[0].mxu0 %v8710
      %v9329 = vpop.f32.mrb[0].mxu0
      %v9330 = vadd.f32 %v8452, %v9329
      %v9331 = vpop.f32.mrb[0].mxu0
      %9332 = vmatprep.mubr.f32.mxu0 0.0
      %9333 = vmatmul.mubr.f32.gmra.mrb[0].mxu0 %v8713
      %v9334 = vpop.f32.mrb[0].mxu0
      %v9335 = vadd.f32 %v8452, %v9334
      %v9336 = vpop.f32.mrb[0].mxu0
      %9337 = vmatprep.mubr.f32.mxu0 0.0
      %9338 = vmatmul.mubr.f32.gmra.mrb[0].mxu0 %v8716
      %v9339 = vpop.f32.mrb[0].mxu0
      %v9340 = vadd.f32 %v8452, %v9339
      %v9341 = vpop.f32.mrb[0].mxu0
      %9342 = vmatprep.mubr.f32.mxu0 0.0
      %9343 = vmatmul.mubr.f32.gmra.mrb[0].mxu0 %v8719
      %v9344 = vpop.f32.mrb[0].mxu0
      %v9345 = vadd.f32 %v8452, %v9344
      %v9346 = vpop.f32.mrb[0].mxu0
      %9347 = vmatprep.mubr.f32.mxu0 0.0
      %9348 = vmatmul.mubr.f32.gmra.mrb[0].mxu0 %v8722
      %v9349 = vpop.f32.mrb[0].mxu0
      %v9350 = vadd.f32 %v8452, %v9349
      %v9351 = vpop.f32.mrb[0].mxu0
      %9352 = vmatprep.mubr.f32.mxu0 0.0
      %9353 = vmatmul.mubr.f32.gmra.mrb[0].mxu0 %v8725
      %v9354 = vpop.f32.mrb[0].mxu0
      %v9355 = vadd.f32 %v8452, %v9354
      %v9356 = vpop.f32.mrb[0].mxu0
      %9357 = vmatprep.mubr.f32.mxu0 0.0
      %9358 = vmatmul.mubr.f32.gmra.mrb[0].mxu0 %v8728
      %v9359 = vpop.f32.mrb[0].mxu0
      %v9360 = vadd.f32 %v8452, %v9359
      %v9361 = vpop.f32.mrb[0].mxu0
      %9362 = vmatprep.mubr.f32.mxu0 0.0
      %9363 = vmatmul.mubr.f32.gmra.mrb[0].mxu0 %v8731
      %v9364 = vpop.f32.mrb[0].mxu0
      %v9365 = vadd.f32 %v8452, %v9364
      %v9366 = vpop.f32.mrb[0].mxu0
      %9367 = vmatprep.mubr.f32.mxu0 0.0
      %9368 = vmatmul.mubr.f32.gmra.mrb[0].mxu0 %v8734
      %v9369 = vpop.f32.mrb[0].mxu0
      %v9370 = vadd.f32 %v8452, %v9369
      %v9371 = vpop.f32.mrb[0].mxu0
      %9372 = vmatprep.mubr.f32.mxu0 0.0
      %9373 = vmatmul.mubr.f32.gmra.mrb[0].mxu0 %v8737
      %v9374 = vpop.f32.mrb[0].mxu0
      %v9375 = vadd.f32 %v8452, %v9374
      %v9376 = vpop.f32.mrb[0].mxu0
      %9377 = vmatprep.mubr.f32.mxu0 0.0
      %9378 = vmatmul.mubr.f32.gmra.mrb[0].mxu0 %v8740
      %v9379 = vpop.f32.mrb[0].mxu0
      %v9380 = vadd.f32 %v8452, %v9379
      %v9381 = vpop.f32.mrb[0].mxu0
      %9382 = vmatprep.mubr.f32.mxu0 0.0
      %9383 = vmatmul.mubr.f32.gmra.mrb[0].mxu0 %v8743
      %v9384 = vpop.f32.mrb[0].mxu0
      %v9385 = vadd.f32 %v8452, %v9384
      %v9386 = vpop.f32.mrb[0].mxu0
      %9387 = vmatprep.mubr.f32.mxu0 0.0
      %9388 = vmatmul.mubr.f32.gmra.mrb[0].mxu0 %v8746
      %v9389 = vpop.f32.mrb[0].mxu0
      %v9390 = vadd.f32 %v8452, %v9389
      %v9391 = vpop.f32.mrb[0].mxu0
      %9392 = vmatprep.mubr.f32.mxu0 0.0
      %9393 = vmatmul.mubr.f32.gmra.mrb[0].mxu0 %v8749
      %v9394 = vpop.f32.mrb[0].mxu0
      %v9395 = vadd.f32 %v8452, %v9394
      %v9396 = vpop.f32.mrb[0].mxu0
      %9397 = vmatprep.mubr.f32.mxu0 0.0
      %9398 = vmatmul.mubr.f32.gmra.mrb[0].mxu0 %v8752
      %v9399 = vpop.f32.mrb[0].mxu0
      %v9400 = vadd.f32 %v8452, %v9399
      %v9401 = vpop.f32.mrb[0].mxu0
      %9402 = vmatprep.mubr.f32.mxu0 0.0
      %9403 = vmatmul.mubr.f32.gmra.mrb[0].mxu0 %v8755
      %v9404 = vpop.f32.mrb[0].mxu0
      %v9405 = vadd.f32 %v8452, %v9404
      %v9406 = vpop.f32.mrb[0].mxu0
      %9407 = vmatprep.mubr.f32.mxu0 0.0
      %9408 = vmatmul.mubr.f32.gmra.mrb[0].mxu0 %v8758
      %v9409 = vpop.f32.mrb[0].mxu0
      %v9410 = vadd.f32 %v8452, %v9409
      %v9411 = vpop.f32.mrb[0].mxu0
      %9412 = vmatprep.mubr.f32.mxu0 0.0
      %9413 = vmatmul.mubr.f32.gmra.mrb[0].mxu0 %v8761
      %v9414 = vpop.f32.mrb[0].mxu0
      %v9415 = vadd.f32 %v8452, %v9414
      %v9416 = vpop.f32.mrb[0].mxu0
      %9417 = vmatprep.mubr.f32.mxu0 0.0
      %9418 = vmatmul.mubr.f32.gmra.mrb[0].mxu0 %v8764
      %v9419 = vpop.f32.mrb[0].mxu0
      %v9420 = vadd.f32 %v8452, %v9419
      %v9421 = vpop.f32.mrb[0].mxu0
      %9422 = vmatprep.mubr.f32.mxu0 0.0
      %9423 = vmatmul.mubr.f32.gmra.mrb[0].mxu0 %v8767
      %v9424 = vpop.f32.mrb[0].mxu0
      %v9425 = vadd.f32 %v8452, %v9424
      %v9426 = vpop.f32.mrb[0].mxu0
      %9427 = vmatprep.mubr.f32.mxu0 0.0
      %9428 = vmatmul.mubr.f32.gmra.mrb[0].mxu0 %v8770
      %v9429 = vpop.f32.mrb[0].mxu0
      %v9430 = vadd.f32 %v8452, %v9429
      %v9431 = vpop.f32.mrb[0].mxu0
      %9432 = vmatprep.mubr.f32.mxu0 0.0
      %9433 = vmatmul.mubr.f32.gmra.mrb[0].mxu0 %v8773
      %v9434 = vpop.f32.mrb[0].mxu0
      %v9435 = vadd.f32 %v8452, %v9434
      %v9436 = vpop.f32.mrb[0].mxu0
      %9437 = vmatprep.mubr.f32.mxu0 0.0
      %9438 = vmatmul.mubr.f32.gmra.mrb[0].mxu0 %v8776
      %v9439 = vpop.f32.mrb[0].mxu0
      %v9440 = vadd.f32 %v8452, %v9439
      %v9441 = vpop.f32.mrb[0].mxu0
      %9442 = vmatprep.mubr.f32.mxu0 0.0
      %9443 = vmatmul.mubr.f32.gmra.mrb[0].mxu0 %v8779
      %v9444 = vpop.f32.mrb[0].mxu0
      %v9445 = vadd.f32 %v8452, %v9444
      %v9446 = vpop.f32.mrb[0].mxu0
      %9447 = vmatprep.mubr.f32.mxu0 0.0
      %9448 = vmatmul.mubr.f32.gmra.mrb[0].mxu0 %v8782
      %v9449 = vpop.f32.mrb[0].mxu0
      %v9450 = vadd.f32 %v8452, %v9449
      %v9451 = vpop.f32.mrb[0].mxu0
      %9452 = vmatprep.mubr.f32.mxu0 0.0
      %9453 = vmatmul.mubr.f32.gmra.mrb[0].mxu0 %v8785
      %v9454 = vpop.f32.mrb[0].mxu0
      %v9455 = vadd.f32 %v8452, %v9454
      %v9456 = vpop.f32.mrb[0].mxu0
      %9457 = vmatprep.mubr.f32.mxu0 0.0
      %9458 = vmatmul.mubr.f32.gmra.mrb[0].mxu0 %v8788
      %v9459 = vpop.f32.mrb[0].mxu0
      %v9460 = vadd.f32 %v8452, %v9459
      %v9461 = vpop.f32.mrb[0].mxu0
      %9462 = vmatprep.mubr.f32.mxu0 0.0
      %9463 = vmatmul.mubr.f32.gmra.mrb[0].mxu0 %v8791
      %v9464 = vpop.f32.mrb[0].mxu0
      %v9465 = vadd.f32 %v8452, %v9464
      %v9466 = vpop.f32.mrb[0].mxu0
      %9467 = vmatprep.mubr.f32.mxu0 0.0
      %9468 = vmatmul.mubr.f32.gmra.mrb[0].mxu0 %v8794
      %v9469 = vpop.f32.mrb[0].mxu0
      %v9470 = vadd.f32 %v8452, %v9469
      %v9471 = vpop.f32.mrb[0].mxu0
      %9472 = vmatprep.mubr.f32.mxu0 0.0
      %9473 = vmatmul.mubr.f32.gmra.mrb[0].mxu0 %v8797
      %v9474 = vpop.f32.mrb[0].mxu0
      %v9475 = vadd.f32 %v8452, %v9474
      %v9476 = vpop.f32.mrb[0].mxu0
      %9477 = vmatprep.mubr.f32.mxu0 0.0
      %9478 = vmatmul.mubr.f32.gmra.mrb[0].mxu0 %v8800
      %v9479 = vpop.f32.mrb[0].mxu0
      %v9480 = vadd.f32 %v8452, %v9479
      %v9481 = vpop.f32.mrb[0].mxu0
      %9482 = vmatprep.mubr.f32.mxu0 0.0
      %9483 = vmatmul.mubr.f32.gmra.mrb[0].mxu0 %v8803
      %v9484 = vpop.f32.mrb[0].mxu0
      %v9485 = vadd.f32 %v8452, %v9484
      %v9486 = vpop.f32.mrb[0].mxu0
      %9487 = vmatprep.mubr.f32.mxu0 0.0
      %9488 = vmatmul.mubr.f32.gmra.mrb[0].mxu0 %v8806
      %v9489 = vpop.f32.mrb[0].mxu0
      %v9490 = vadd.f32 %v8452, %v9489
      %v9491 = vpop.f32.mrb[0].mxu0
      %9492 = vmatprep.mubr.f32.mxu0 0.0
      %9493 = vmatmul.mubr.f32.gmra.mrb[0].mxu0 %v8809
      %v9494 = vpop.f32.mrb[0].mxu0
      %v9495 = vadd.f32 %v8452, %v9494
      %v9496 = vpop.f32.mrb[0].mxu0
      %9497 = vmatprep.mubr.f32.mxu0 0.0
      %9498 = vmatmul.mubr.f32.gmra.mrb[0].mxu0 %v8812
      %v9499 = vpop.f32.mrb[0].mxu0
      %v9500 = vadd.f32 %v8452, %v9499
      %v9501 = vpop.f32.mrb[0].mxu0
      %9502 = vmatprep.mubr.f32.mxu0 0.0
      %9503 = vmatmul.mubr.f32.gmra.mrb[0].mxu0 %v8815
      %v9504 = vpop.f32.mrb[0].mxu0
      %v9505 = vadd.f32 %v8452, %v9504
      %v9506 = vpop.f32.mrb[0].mxu0
      %9507 = vmatprep.mubr.f32.mxu0 0.0
      %9508 = vmatmul.mubr.f32.gmra.mrb[0].mxu0 %v8818
      %v9509 = vpop.f32.mrb[0].mxu0
      %v9510 = vadd.f32 %v8452, %v9509
      %v9511 = vpop.f32.mrb[0].mxu0
      %9512 = vmatprep.mubr.f32.mxu0 0.0
      %9513 = vmatmul.mubr.f32.gmra.mrb[0].mxu0 %v8821
      %v9514 = vpop.f32.mrb[0].mxu0
      %v9515 = vadd.f32 %v8452, %v9514
      %v9516 = vpop.f32.mrb[0].mxu0
      %9517 = vmatprep.mubr.f32.mxu0 0.0
      %9518 = vmatmul.mubr.f32.gmra.mrb[0].mxu0 %v8824
      %v9519 = vpop.f32.mrb[0].mxu0
      %v9520 = vadd.f32 %v8452, %v9519
      %v9521 = vpop.f32.mrb[0].mxu0
      %9522 = vmatprep.mubr.f32.mxu0 0.0
      %9523 = vmatmul.mubr.f32.gmra.mrb[0].mxu0 %v8827
      %v9524 = vpop.f32.mrb[0].mxu0
      %v9525 = vadd.f32 %v8452, %v9524
      %v9526 = vpop.f32.mrb[0].mxu0
      %9527 = vmatprep.mubr.f32.mxu0 0.0
      %9528 = vmatmul.mubr.f32.gmra.mrb[0].mxu0 %v8830
      %v9529 = vpop.f32.mrb[0].mxu0
      %v9530 = vadd.f32 %v8452, %v9529
      %v9531 = vpop.f32.mrb[0].mxu0
      %9532 = vmatprep.mubr.f32.mxu0 0.0
      %9533 = vmatmul.mubr.f32.gmra.mrb[0].mxu0 %v8833
      %v9534 = vpop.f32.mrb[0].mxu0
      %v9535 = vadd.f32 %v8452, %v9534
      %v9536 = vpop.f32.mrb[0].mxu0
      %9537 = vmatprep.mubr.f32.mxu0 0.0
      %9538 = vmatmul.mubr.f32.gmra.mrb[0].mxu0 %v8836
      %v9539 = vpop.f32.mrb[0].mxu0
      %v9540 = vadd.f32 %v8452, %v9539
      %v9541 = vpop.f32.mrb[0].mxu0
      %9542 = vdwg.mxu0
      %v9543 = vadd.f32 %v5015, %v8905
      %v9544 = vadd.f32 %v5021, %v8910
      %v9545 = vadd.f32 %v5027, %v8915
      %v9546 = vadd.f32 %v5033, %v8920
      %v9547 = vadd.f32 %v5039, %v8925
      %v9548 = vadd.f32 %v5045, %v8930
      %v9549 = vadd.f32 %v5051, %v8935
      %v9550 = vadd.f32 %v5057, %v8940
      %v9551 = vadd.f32 %v5063, %v8945
      %v9552 = vadd.f32 %v5069, %v8950
      %v9553 = vadd.f32 %v5075, %v8955
      %v9554 = vadd.f32 %v5081, %v8960
      %v9555 = vadd.f32 %v5087, %v8965
      %v9556 = vadd.f32 %v5093, %v8970
      %v9557 = vadd.f32 %v5099, %v8975
      %v9558 = vadd.f32 %v5105, %v8980
      %v9559 = vadd.f32 %v5111, %v8985
      %v9560 = vadd.f32 %v5117, %v8990
      %v9561 = vadd.f32 %v5123, %v8995
      %v9562 = vadd.f32 %v5129, %v9000
      %v9563 = vadd.f32 %v5135, %v9005
      %v9564 = vadd.f32 %v5141, %v9010
      %v9565 = vadd.f32 %v5147, %v9015
      %v9566 = vadd.f32 %v5153, %v9020
      %v9567 = vadd.f32 %v5159, %v9025
      %v9568 = vadd.f32 %v5165, %v9030
      %v9569 = vadd.f32 %v5171, %v9035
      %v9570 = vadd.f32 %v5177, %v9040
      %v9571 = vadd.f32 %v5183, %v9045
      %v9572 = vadd.f32 %v5189, %v9050
      %v9573 = vadd.f32 %v5195, %v9055
      %v9574 = vadd.f32 %v5201, %v9060
      %v9575 = vadd.f32 %v5207, %v9065
      %v9576 = vadd.f32 %v5213, %v9070
      %v9577 = vadd.f32 %v5219, %v9075
      %v9578 = vadd.f32 %v5225, %v9080
      %v9579 = vadd.f32 %v5231, %v9085
      %v9580 = vadd.f32 %v5237, %v9090
      %v9581 = vadd.f32 %v5243, %v9095
      %v9582 = vadd.f32 %v5249, %v9100
      %v9583 = vadd.f32 %v5255, %v9105
      %v9584 = vadd.f32 %v5261, %v9110
      %v9585 = vadd.f32 %v5267, %v9115
      %v9586 = vadd.f32 %v5273, %v9120
      %v9587 = vadd.f32 %v5279, %v9125
      %v9588 = vadd.f32 %v5285, %v9130
      %v9589 = vadd.f32 %v5291, %v9135
      %v9590 = vadd.f32 %v5297, %v9140
      %v9591 = vadd.f32 %v5303, %v9145
      %v9592 = vadd.f32 %v5309, %v9150
      %v9593 = vadd.f32 %v5315, %v9155
      %v9594 = vadd.f32 %v5321, %v9160
      %v9595 = vadd.f32 %v5327, %v9165
      %v9596 = vadd.f32 %v5333, %v9170
      %v9597 = vadd.f32 %v5339, %v9175
      %v9598 = vadd.f32 %v5345, %v9180
      %v9599 = vadd.f32 %v5351, %v9185
      %v9600 = vadd.f32 %v5357, %v9190
      %v9601 = vadd.f32 %v5363, %v9195
      %v9602 = vadd.f32 %v5369, %v9200
      %v9603 = vadd.f32 %v5375, %v9205
      %v9604 = vadd.f32 %v5381, %v9210
      %v9605 = vadd.f32 %v5387, %v9215
      %v9606 = vadd.f32 %v5393, %v9220
      %v9607 = vadd.f32 %v5399, %v9225
      %v9608 = vadd.f32 %v5405, %v9230
      %v9609 = vadd.f32 %v5411, %v9235
      %v9610 = vadd.f32 %v5417, %v9240
      %v9611 = vadd.f32 %v5423, %v9245
      %v9612 = vadd.f32 %v5429, %v9250
      %v9613 = vadd.f32 %v5435, %v9255
      %v9614 = vadd.f32 %v5441, %v9260
      %v9615 = vadd.f32 %v5447, %v9265
      %v9616 = vadd.f32 %v5453, %v9270
      %v9617 = vadd.f32 %v5459, %v9275
      %v9618 = vadd.f32 %v5465, %v9280
      %v9619 = vadd.f32 %v5471, %v9285
      %v9620 = vadd.f32 %v5477, %v9290
      %v9621 = vadd.f32 %v5483, %v9295
      %v9622 = vadd.f32 %v5489, %v9300
      %v9623 = vadd.f32 %v5495, %v9305
      %v9624 = vadd.f32 %v5501, %v9310
      %v9625 = vadd.f32 %v5507, %v9315
      %v9626 = vadd.f32 %v5513, %v9320
      %v9627 = vadd.f32 %v5519, %v9325
      %v9628 = vadd.f32 %v5525, %v9330
      %v9629 = vadd.f32 %v5531, %v9335
      %v9630 = vadd.f32 %v5537, %v9340
      %v9631 = vadd.f32 %v5543, %v9345
      %v9632 = vadd.f32 %v5549, %v9350
      %v9633 = vadd.f32 %v5555, %v9355
      %v9634 = vadd.f32 %v5561, %v9360
      %v9635 = vadd.f32 %v5567, %v9365
      %v9636 = vadd.f32 %v5573, %v9370
      %v9637 = vadd.f32 %v5579, %v9375
      %v9638 = vadd.f32 %v5585, %v9380
      %v9639 = vadd.f32 %v5591, %v9385
      %v9640 = vadd.f32 %v5597, %v9390
      %v9641 = vadd.f32 %v5603, %v9395
      %v9642 = vadd.f32 %v5609, %v9400
      %v9643 = vadd.f32 %v5615, %v9405
      %v9644 = vadd.f32 %v5621, %v9410
      %v9645 = vadd.f32 %v5627, %v9415
      %v9646 = vadd.f32 %v5633, %v9420
      %v9647 = vadd.f32 %v5639, %v9425
      %v9648 = vadd.f32 %v5645, %v9430
      %v9649 = vadd.f32 %v5651, %v9435
      %v9650 = vadd.f32 %v5657, %v9440
      %v9651 = vadd.f32 %v5663, %v9445
      %v9652 = vadd.f32 %v5669, %v9450
      %v9653 = vadd.f32 %v5675, %v9455
      %v9654 = vadd.f32 %v5681, %v9460
      %v9655 = vadd.f32 %v5687, %v9465
      %v9656 = vadd.f32 %v5693, %v9470
      %v9657 = vadd.f32 %v5699, %v9475
      %v9658 = vadd.f32 %v5705, %v9480
      %v9659 = vadd.f32 %v5711, %v9485
      %v9660 = vadd.f32 %v5717, %v9490
      %v9661 = vadd.f32 %v5723, %v9495
      %v9662 = vadd.f32 %v5729, %v9500
      %v9663 = vadd.f32 %v5735, %v9505
      %v9664 = vadd.f32 %v5741, %v9510
      %v9665 = vadd.f32 %v5747, %v9515
      %v9666 = vadd.f32 %v5753, %v9520
      %v9667 = vadd.f32 %v5759, %v9525
      %v9668 = vadd.f32 %v5765, %v9530
      %v9669 = vadd.f32 %v5771, %v9535
      %v9670 = vadd.f32 %v5777, %v9540
      %v9671 = vld [vmem:[%s21] sm:$0x1]
      %v9673 = vlaneseq
      %v9674 = vshrl.u32 %v9673, 7
      %v9675 = vsub.s32 0, %v9674
      %v9676 = vrot.slane %v9671, %v9675
      %v9678 = vmul.f32 %v9543, %v9676
      %v9679 = vmul.f32 %v9544, %v9676
      %v9680 = vmul.f32 %v9545, %v9676
      %v9681 = vmul.f32 %v9546, %v9676
      %v9682 = vmul.f32 %v9547, %v9676
      %v9683 = vmul.f32 %v9548, %v9676
      %v9684 = vmul.f32 %v9549, %v9676
      %v9685 = vmul.f32 %v9550, %v9676
      %v9686 = vmul.f32 %v9551, %v9676
      %v9687 = vmul.f32 %v9552, %v9676
      %v9688 = vmul.f32 %v9553, %v9676
      %v9689 = vmul.f32 %v9554, %v9676
      %v9690 = vmul.f32 %v9555, %v9676
      %v9691 = vmul.f32 %v9556, %v9676
      %v9692 = vmul.f32 %v9557, %v9676
      %v9693 = vmul.f32 %v9558, %v9676
      %v9694 = vmul.f32 %v9559, %v9676
      %v9695 = vmul.f32 %v9560, %v9676
      %v9696 = vmul.f32 %v9561, %v9676
      %v9697 = vmul.f32 %v9562, %v9676
      %v9698 = vmul.f32 %v9563, %v9676
      %v9699 = vmul.f32 %v9564, %v9676
      %v9700 = vmul.f32 %v9565, %v9676
      %v9701 = vmul.f32 %v9566, %v9676
      %v9702 = vmul.f32 %v9567, %v9676
      %v9703 = vmul.f32 %v9568, %v9676
      %v9704 = vmul.f32 %v9569, %v9676
      %v9705 = vmul.f32 %v9570, %v9676
      %v9706 = vmul.f32 %v9571, %v9676
      %v9707 = vmul.f32 %v9572, %v9676
      %v9708 = vmul.f32 %v9573, %v9676
      %v9709 = vmul.f32 %v9574, %v9676
      %v9710 = vmul.f32 %v9575, %v9676
      %v9711 = vmul.f32 %v9576, %v9676
      %v9712 = vmul.f32 %v9577, %v9676
      %v9713 = vmul.f32 %v9578, %v9676
      %v9714 = vmul.f32 %v9579, %v9676
      %v9715 = vmul.f32 %v9580, %v9676
      %v9716 = vmul.f32 %v9581, %v9676
      %v9717 = vmul.f32 %v9582, %v9676
      %v9718 = vmul.f32 %v9583, %v9676
      %v9719 = vmul.f32 %v9584, %v9676
      %v9720 = vmul.f32 %v9585, %v9676
      %v9721 = vmul.f32 %v9586, %v9676
      %v9722 = vmul.f32 %v9587, %v9676
      %v9723 = vmul.f32 %v9588, %v9676
      %v9724 = vmul.f32 %v9589, %v9676
      %v9725 = vmul.f32 %v9590, %v9676
      %v9726 = vmul.f32 %v9591, %v9676
      %v9727 = vmul.f32 %v9592, %v9676
      %v9728 = vmul.f32 %v9593, %v9676
      %v9729 = vmul.f32 %v9594, %v9676
      %v9730 = vmul.f32 %v9595, %v9676
      %v9731 = vmul.f32 %v9596, %v9676
      %v9732 = vmul.f32 %v9597, %v9676
      %v9733 = vmul.f32 %v9598, %v9676
      %v9734 = vmul.f32 %v9599, %v9676
      %v9735 = vmul.f32 %v9600, %v9676
      %v9736 = vmul.f32 %v9601, %v9676
      %v9737 = vmul.f32 %v9602, %v9676
      %v9738 = vmul.f32 %v9603, %v9676
      %v9739 = vmul.f32 %v9604, %v9676
      %v9740 = vmul.f32 %v9605, %v9676
      %v9741 = vmul.f32 %v9606, %v9676
      %v9742 = vmul.f32 %v9607, %v9676
      %v9743 = vmul.f32 %v9608, %v9676
      %v9744 = vmul.f32 %v9609, %v9676
      %v9745 = vmul.f32 %v9610, %v9676
      %v9746 = vmul.f32 %v9611, %v9676
      %v9747 = vmul.f32 %v9612, %v9676
      %v9748 = vmul.f32 %v9613, %v9676
      %v9749 = vmul.f32 %v9614, %v9676
      %v9750 = vmul.f32 %v9615, %v9676
      %v9751 = vmul.f32 %v9616, %v9676
      %v9752 = vmul.f32 %v9617, %v9676
      %v9753 = vmul.f32 %v9618, %v9676
      %v9754 = vmul.f32 %v9619, %v9676
      %v9755 = vmul.f32 %v9620, %v9676
      %v9756 = vmul.f32 %v9621, %v9676
      %v9757 = vmul.f32 %v9622, %v9676
      %v9758 = vmul.f32 %v9623, %v9676
      %v9759 = vmul.f32 %v9624, %v9676
      %v9760 = vmul.f32 %v9625, %v9676
      %v9761 = vmul.f32 %v9626, %v9676
      %v9762 = vmul.f32 %v9627, %v9676
      %v9763 = vmul.f32 %v9628, %v9676
      %v9764 = vmul.f32 %v9629, %v9676
      %v9765 = vmul.f32 %v9630, %v9676
      %v9766 = vmul.f32 %v9631, %v9676
      %v9767 = vmul.f32 %v9632, %v9676
      %v9768 = vmul.f32 %v9633, %v9676
      %v9769 = vmul.f32 %v9634, %v9676
      %v9770 = vmul.f32 %v9635, %v9676
      %v9771 = vmul.f32 %v9636, %v9676
      %v9772 = vmul.f32 %v9637, %v9676
      %v9773 = vmul.f32 %v9638, %v9676
      %v9774 = vmul.f32 %v9639, %v9676
      %v9775 = vmul.f32 %v9640, %v9676
      %v9776 = vmul.f32 %v9641, %v9676
      %v9777 = vmul.f32 %v9642, %v9676
      %v9778 = vmul.f32 %v9643, %v9676
      %v9779 = vmul.f32 %v9644, %v9676
      %v9780 = vmul.f32 %v9645, %v9676
      %v9781 = vmul.f32 %v9646, %v9676
      %v9782 = vmul.f32 %v9647, %v9676
      %v9783 = vmul.f32 %v9648, %v9676
      %v9784 = vmul.f32 %v9649, %v9676
      %v9785 = vmul.f32 %v9650, %v9676
      %v9786 = vmul.f32 %v9651, %v9676
      %v9787 = vmul.f32 %v9652, %v9676
      %v9788 = vmul.f32 %v9653, %v9676
      %v9789 = vmul.f32 %v9654, %v9676
      %v9790 = vmul.f32 %v9655, %v9676
      %v9791 = vmul.f32 %v9656, %v9676
      %v9792 = vmul.f32 %v9657, %v9676
      %v9793 = vmul.f32 %v9658, %v9676
      %v9794 = vmul.f32 %v9659, %v9676
      %v9795 = vmul.f32 %v9660, %v9676
      %v9796 = vmul.f32 %v9661, %v9676
      %v9797 = vmul.f32 %v9662, %v9676
      %v9798 = vmul.f32 %v9663, %v9676
      %v9799 = vmul.f32 %v9664, %v9676
      %v9800 = vmul.f32 %v9665, %v9676
      %v9801 = vmul.f32 %v9666, %v9676
      %v9802 = vmul.f32 %v9667, %v9676
      %v9803 = vmul.f32 %v9668, %v9676
      %v9804 = vmul.f32 %v9669, %v9676
      %v9805 = vmul.f32 %v9670, %v9676
      %v9806 = vld [vmem:[%s22] sm:$0x1]
      %v9808 = vlaneseq
      %v9809 = vshrl.u32 %v9808, 7
      %v9810 = vsub.s32 0, %v9809
      %v9811 = vrot.slane %v9806, %v9810
      %v9813 = vadd.f32 %v9678, %v9811
      %v9814 = vadd.f32 %v9679, %v9811
      %v9815 = vadd.f32 %v9680, %v9811
      %v9816 = vadd.f32 %v9681, %v9811
      %v9817 = vadd.f32 %v9682, %v9811
      %v9818 = vadd.f32 %v9683, %v9811
      %v9819 = vadd.f32 %v9684, %v9811
      %v9820 = vadd.f32 %v9685, %v9811
      %v9821 = vadd.f32 %v9686, %v9811
      %v9822 = vadd.f32 %v9687, %v9811
      %v9823 = vadd.f32 %v9688, %v9811
      %v9824 = vadd.f32 %v9689, %v9811
      %v9825 = vadd.f32 %v9690, %v9811
      %v9826 = vadd.f32 %v9691, %v9811
      %v9827 = vadd.f32 %v9692, %v9811
      %v9828 = vadd.f32 %v9693, %v9811
      %v9829 = vadd.f32 %v9694, %v9811
      %v9830 = vadd.f32 %v9695, %v9811
      %v9831 = vadd.f32 %v9696, %v9811
      %v9832 = vadd.f32 %v9697, %v9811
      %v9833 = vadd.f32 %v9698, %v9811
      %v9834 = vadd.f32 %v9699, %v9811
      %v9835 = vadd.f32 %v9700, %v9811
      %v9836 = vadd.f32 %v9701, %v9811
      %v9837 = vadd.f32 %v9702, %v9811
      %v9838 = vadd.f32 %v9703, %v9811
      %v9839 = vadd.f32 %v9704, %v9811
      %v9840 = vadd.f32 %v9705, %v9811
      %v9841 = vadd.f32 %v9706, %v9811
      %v9842 = vadd.f32 %v9707, %v9811
      %v9843 = vadd.f32 %v9708, %v9811
      %v9844 = vadd.f32 %v9709, %v9811
      %v9845 = vadd.f32 %v9710, %v9811
      %v9846 = vadd.f32 %v9711, %v9811
      %v9847 = vadd.f32 %v9712, %v9811
      %v9848 = vadd.f32 %v9713, %v9811
      %v9849 = vadd.f32 %v9714, %v9811
      %v9850 = vadd.f32 %v9715, %v9811
      %v9851 = vadd.f32 %v9716, %v9811
      %v9852 = vadd.f32 %v9717, %v9811
      %v9853 = vadd.f32 %v9718, %v9811
      %v9854 = vadd.f32 %v9719, %v9811
      %v9855 = vadd.f32 %v9720, %v9811
      %v9856 = vadd.f32 %v9721, %v9811
      %v9857 = vadd.f32 %v9722, %v9811
      %v9858 = vadd.f32 %v9723, %v9811
      %v9859 = vadd.f32 %v9724, %v9811
      %v9860 = vadd.f32 %v9725, %v9811
      %v9861 = vadd.f32 %v9726, %v9811
      %v9862 = vadd.f32 %v9727, %v9811
      %v9863 = vadd.f32 %v9728, %v9811
      %v9864 = vadd.f32 %v9729, %v9811
      %v9865 = vadd.f32 %v9730, %v9811
      %v9866 = vadd.f32 %v9731, %v9811
      %v9867 = vadd.f32 %v9732, %v9811
      %v9868 = vadd.f32 %v9733, %v9811
      %v9869 = vadd.f32 %v9734, %v9811
      %v9870 = vadd.f32 %v9735, %v9811
      %v9871 = vadd.f32 %v9736, %v9811
      %v9872 = vadd.f32 %v9737, %v9811
      %v9873 = vadd.f32 %v9738, %v9811
      %v9874 = vadd.f32 %v9739, %v9811
      %v9875 = vadd.f32 %v9740, %v9811
      %v9876 = vadd.f32 %v9741, %v9811
      %v9877 = vadd.f32 %v9742, %v9811
      %v9878 = vadd.f32 %v9743, %v9811
      %v9879 = vadd.f32 %v9744, %v9811
      %v9880 = vadd.f32 %v9745, %v9811
      %v9881 = vadd.f32 %v9746, %v9811
      %v9882 = vadd.f32 %v9747, %v9811
      %v9883 = vadd.f32 %v9748, %v9811
      %v9884 = vadd.f32 %v9749, %v9811
      %v9885 = vadd.f32 %v9750, %v9811
      %v9886 = vadd.f32 %v9751, %v9811
      %v9887 = vadd.f32 %v9752, %v9811
      %v9888 = vadd.f32 %v9753, %v9811
      %v9889 = vadd.f32 %v9754, %v9811
      %v9890 = vadd.f32 %v9755, %v9811
      %v9891 = vadd.f32 %v9756, %v9811
      %v9892 = vadd.f32 %v9757, %v9811
      %v9893 = vadd.f32 %v9758, %v9811
      %v9894 = vadd.f32 %v9759, %v9811
      %v9895 = vadd.f32 %v9760, %v9811
      %v9896 = vadd.f32 %v9761, %v9811
      %v9897 = vadd.f32 %v9762, %v9811
      %v9898 = vadd.f32 %v9763, %v9811
      %v9899 = vadd.f32 %v9764, %v9811
      %v9900 = vadd.f32 %v9765, %v9811
      %v9901 = vadd.f32 %v9766, %v9811
      %v9902 = vadd.f32 %v9767, %v9811
      %v9903 = vadd.f32 %v9768, %v9811
      %v9904 = vadd.f32 %v9769, %v9811
      %v9905 = vadd.f32 %v9770, %v9811
      %v9906 = vadd.f32 %v9771, %v9811
      %v9907 = vadd.f32 %v9772, %v9811
      %v9908 = vadd.f32 %v9773, %v9811
      %v9909 = vadd.f32 %v9774, %v9811
      %v9910 = vadd.f32 %v9775, %v9811
      %v9911 = vadd.f32 %v9776, %v9811
      %v9912 = vadd.f32 %v9777, %v9811
      %v9913 = vadd.f32 %v9778, %v9811
      %v9914 = vadd.f32 %v9779, %v9811
      %v9915 = vadd.f32 %v9780, %v9811
      %v9916 = vadd.f32 %v9781, %v9811
      %v9917 = vadd.f32 %v9782, %v9811
      %v9918 = vadd.f32 %v9783, %v9811
      %v9919 = vadd.f32 %v9784, %v9811
      %v9920 = vadd.f32 %v9785, %v9811
      %v9921 = vadd.f32 %v9786, %v9811
      %v9922 = vadd.f32 %v9787, %v9811
      %v9923 = vadd.f32 %v9788, %v9811
      %v9924 = vadd.f32 %v9789, %v9811
      %v9925 = vadd.f32 %v9790, %v9811
      %v9926 = vadd.f32 %v9791, %v9811
      %v9927 = vadd.f32 %v9792, %v9811
      %v9928 = vadd.f32 %v9793, %v9811
      %v9929 = vadd.f32 %v9794, %v9811
      %v9930 = vadd.f32 %v9795, %v9811
      %v9931 = vadd.f32 %v9796, %v9811
      %v9932 = vadd.f32 %v9797, %v9811
      %v9933 = vadd.f32 %v9798, %v9811
      %v9934 = vadd.f32 %v9799, %v9811
      %v9935 = vadd.f32 %v9800, %v9811
      %v9936 = vadd.f32 %v9801, %v9811
      %v9937 = vadd.f32 %v9802, %v9811
      %v9938 = vadd.f32 %v9803, %v9811
      %v9939 = vadd.f32 %v9804, %v9811
      %v9940 = vadd.f32 %v9805, %v9811
      %9941 = vst.msk [vmem:[%s730] sm:$0xff] %vm1019, %v9813
      %9942 = vst.msk [vmem:[%s730 + $0x8] sm:$0xff] %vm1019, %v9814
      %9943 = vst.msk [vmem:[%s730 + $0x10] sm:$0xff] %vm1019, %v9815
      %9944 = vst.msk [vmem:[%s730 + $0x18] sm:$0xff] %vm1019, %v9816
      %9945 = vst.msk [vmem:[%s730 + $0x20] sm:$0xff] %vm1019, %v9817
      %9946 = vst.msk [vmem:[%s730 + $0x28] sm:$0xff] %vm1019, %v9818
      %9947 = vst.msk [vmem:[%s730 + $0x30] sm:$0xff] %vm1019, %v9819
      %9948 = vst.msk [vmem:[%s730 + $0x38] sm:$0xff] %vm1019, %v9820
      %9949 = vst.msk [vmem:[%s730 + $0x40] sm:$0xff] %vm1019, %v9821
      %9950 = vst.msk [vmem:[%s730 + $0x48] sm:$0xff] %vm1019, %v9822
      %9951 = vst.msk [vmem:[%s730 + $0x50] sm:$0xff] %vm1019, %v9823
      %9952 = vst.msk [vmem:[%s730 + $0x58] sm:$0xff] %vm1019, %v9824
      %9953 = vst.msk [vmem:[%s730 + $0x60] sm:$0xff] %vm1019, %v9825
      %9954 = vst.msk [vmem:[%s730 + $0x68] sm:$0xff] %vm1019, %v9826
      %9955 = vst.msk [vmem:[%s730 + $0x70] sm:$0xff] %vm1019, %v9827
      %9956 = vst.msk [vmem:[%s730 + $0x78] sm:$0xff] %vm1019, %v9828
      %9957 = vst.msk [vmem:[%s730 + $0x80] sm:$0xff] %vm1019, %v9829
      %9958 = vst.msk [vmem:[%s730 + $0x88] sm:$0xff] %vm1019, %v9830
      %9959 = vst.msk [vmem:[%s730 + $0x90] sm:$0xff] %vm1019, %v9831
      %9960 = vst.msk [vmem:[%s730 + $0x98] sm:$0xff] %vm1019, %v9832
      %9961 = vst.msk [vmem:[%s730 + $0xa0] sm:$0xff] %vm1019, %v9833
      %9962 = vst.msk [vmem:[%s730 + $0xa8] sm:$0xff] %vm1019, %v9834
      %9963 = vst.msk [vmem:[%s730 + $0xb0] sm:$0xff] %vm1019, %v9835
      %9964 = vst.msk [vmem:[%s730 + $0xb8] sm:$0xff] %vm1019, %v9836
      %9965 = vst.msk [vmem:[%s730 + $0xc0] sm:$0xff] %vm1019, %v9837
      %9966 = vst.msk [vmem:[%s730 + $0xc8] sm:$0xff] %vm1019, %v9838
      %9967 = vst.msk [vmem:[%s730 + $0xd0] sm:$0xff] %vm1019, %v9839
      %9968 = vst.msk [vmem:[%s730 + $0xd8] sm:$0xff] %vm1019, %v9840
      %9969 = vst.msk [vmem:[%s730 + $0xe0] sm:$0xff] %vm1019, %v9841
      %9970 = vst.msk [vmem:[%s730 + $0xe8] sm:$0xff] %vm1019, %v9842
      %9971 = vst.msk [vmem:[%s730 + $0xf0] sm:$0xff] %vm1019, %v9843
      %9972 = vst.msk [vmem:[%s730 + $0xf8] sm:$0xff] %vm1019, %v9844
      %9973 = vst.msk [vmem:[%s730 + $0x100] sm:$0xff] %vm1019, %v9845
      %9974 = vst.msk [vmem:[%s730 + $0x108] sm:$0xff] %vm1019, %v9846
      %9975 = vst.msk [vmem:[%s730 + $0x110] sm:$0xff] %vm1019, %v9847
      %9976 = vst.msk [vmem:[%s730 + $0x118] sm:$0xff] %vm1019, %v9848
      %9977 = vst.msk [vmem:[%s730 + $0x120] sm:$0xff] %vm1019, %v9849
      %9978 = vst.msk [vmem:[%s730 + $0x128] sm:$0xff] %vm1019, %v9850
      %9979 = vst.msk [vmem:[%s730 + $0x130] sm:$0xff] %vm1019, %v9851
      %9980 = vst.msk [vmem:[%s730 + $0x138] sm:$0xff] %vm1019, %v9852
      %9981 = vst.msk [vmem:[%s730 + $0x140] sm:$0xff] %vm1019, %v9853
      %9982 = vst.msk [vmem:[%s730 + $0x148] sm:$0xff] %vm1019, %v9854
      %9983 = vst.msk [vmem:[%s730 + $0x150] sm:$0xff] %vm1019, %v9855
      %9984 = vst.msk [vmem:[%s730 + $0x158] sm:$0xff] %vm1019, %v9856
      %9985 = vst.msk [vmem:[%s730 + $0x160] sm:$0xff] %vm1019, %v9857
      %9986 = vst.msk [vmem:[%s730 + $0x168] sm:$0xff] %vm1019, %v9858
      %9987 = vst.msk [vmem:[%s730 + $0x170] sm:$0xff] %vm1019, %v9859
      %9988 = vst.msk [vmem:[%s730 + $0x178] sm:$0xff] %vm1019, %v9860
      %9989 = vst.msk [vmem:[%s730 + $0x180] sm:$0xff] %vm1019, %v9861
      %9990 = vst.msk [vmem:[%s730 + $0x188] sm:$0xff] %vm1019, %v9862
      %9991 = vst.msk [vmem:[%s730 + $0x190] sm:$0xff] %vm1019, %v9863
      %9992 = vst.msk [vmem:[%s730 + $0x198] sm:$0xff] %vm1019, %v9864
      %9993 = vst.msk [vmem:[%s730 + $0x1a0] sm:$0xff] %vm1019, %v9865
      %9994 = vst.msk [vmem:[%s730 + $0x1a8] sm:$0xff] %vm1019, %v9866
      %9995 = vst.msk [vmem:[%s730 + $0x1b0] sm:$0xff] %vm1019, %v9867
      %9996 = vst.msk [vmem:[%s730 + $0x1b8] sm:$0xff] %vm1019, %v9868
      %9997 = vst.msk [vmem:[%s730 + $0x1c0] sm:$0xff] %vm1019, %v9869
      %9998 = vst.msk [vmem:[%s730 + $0x1c8] sm:$0xff] %vm1019, %v9870
      %9999 = vst.msk [vmem:[%s730 + $0x1d0] sm:$0xff] %vm1019, %v9871
      %10000 = vst.msk [vmem:[%s730 + $0x1d8] sm:$0xff] %vm1019, %v9872
      %10001 = vst.msk [vmem:[%s730 + $0x1e0] sm:$0xff] %vm1019, %v9873
      %10002 = vst.msk [vmem:[%s730 + $0x1e8] sm:$0xff] %vm1019, %v9874
      %10003 = vst.msk [vmem:[%s730 + $0x1f0] sm:$0xff] %vm1019, %v9875
      %10004 = vst.msk [vmem:[%s730 + $0x1f8] sm:$0xff] %vm1019, %v9876
      %10005 = vst.msk [vmem:[%s730 + $0x200] sm:$0xff] %vm1019, %v9877
      %10006 = vst.msk [vmem:[%s730 + $0x208] sm:$0xff] %vm1019, %v9878
      %10007 = vst.msk [vmem:[%s730 + $0x210] sm:$0xff] %vm1019, %v9879
      %10008 = vst.msk [vmem:[%s730 + $0x218] sm:$0xff] %vm1019, %v9880
      %10009 = vst.msk [vmem:[%s730 + $0x220] sm:$0xff] %vm1019, %v9881
      %10010 = vst.msk [vmem:[%s730 + $0x228] sm:$0xff] %vm1019, %v9882
      %10011 = vst.msk [vmem:[%s730 + $0x230] sm:$0xff] %vm1019, %v9883
      %10012 = vst.msk [vmem:[%s730 + $0x238] sm:$0xff] %vm1019, %v9884
      %10013 = vst.msk [vmem:[%s730 + $0x240] sm:$0xff] %vm1019, %v9885
      %10014 = vst.msk [vmem:[%s730 + $0x248] sm:$0xff] %vm1019, %v9886
      %10015 = vst.msk [vmem:[%s730 + $0x250] sm:$0xff] %vm1019, %v9887
      %10016 = vst.msk [vmem:[%s730 + $0x258] sm:$0xff] %vm1019, %v9888
      %10017 = vst.msk [vmem:[%s730 + $0x260] sm:$0xff] %vm1019, %v9889
      %10018 = vst.msk [vmem:[%s730 + $0x268] sm:$0xff] %vm1019, %v9890
      %10019 = vst.msk [vmem:[%s730 + $0x270] sm:$0xff] %vm1019, %v9891
      %10020 = vst.msk [vmem:[%s730 + $0x278] sm:$0xff] %vm1019, %v9892
      %10021 = vst.msk [vmem:[%s730 + $0x280] sm:$0xff] %vm1019, %v9893
      %10022 = vst.msk [vmem:[%s730 + $0x288] sm:$0xff] %vm1019, %v9894
      %10023 = vst.msk [vmem:[%s730 + $0x290] sm:$0xff] %vm1019, %v9895
      %10024 = vst.msk [vmem:[%s730 + $0x298] sm:$0xff] %vm1019, %v9896
      %10025 = vst.msk [vmem:[%s730 + $0x2a0] sm:$0xff] %vm1019, %v9897
      %10026 = vst.msk [vmem:[%s730 + $0x2a8] sm:$0xff] %vm1019, %v9898
      %10027 = vst.msk [vmem:[%s730 + $0x2b0] sm:$0xff] %vm1019, %v9899
      %10028 = vst.msk [vmem:[%s730 + $0x2b8] sm:$0xff] %vm1019, %v9900
      %10029 = vst.msk [vmem:[%s730 + $0x2c0] sm:$0xff] %vm1019, %v9901
      %10030 = vst.msk [vmem:[%s730 + $0x2c8] sm:$0xff] %vm1019, %v9902
      %10031 = vst.msk [vmem:[%s730 + $0x2d0] sm:$0xff] %vm1019, %v9903
      %10032 = vst.msk [vmem:[%s730 + $0x2d8] sm:$0xff] %vm1019, %v9904
      %10033 = vst.msk [vmem:[%s730 + $0x2e0] sm:$0xff] %vm1019, %v9905
      %10034 = vst.msk [vmem:[%s730 + $0x2e8] sm:$0xff] %vm1019, %v9906
      %10035 = vst.msk [vmem:[%s730 + $0x2f0] sm:$0xff] %vm1019, %v9907
      %10036 = vst.msk [vmem:[%s730 + $0x2f8] sm:$0xff] %vm1019, %v9908
      %10037 = vst.msk [vmem:[%s730 + $0x300] sm:$0xff] %vm1019, %v9909
      %10038 = vst.msk [vmem:[%s730 + $0x308] sm:$0xff] %vm1019, %v9910
      %10039 = vst.msk [vmem:[%s730 + $0x310] sm:$0xff] %vm1019, %v9911
      %10040 = vst.msk [vmem:[%s730 + $0x318] sm:$0xff] %vm1019, %v9912
      %10041 = vst.msk [vmem:[%s730 + $0x320] sm:$0xff] %vm1019, %v9913
      %10042 = vst.msk [vmem:[%s730 + $0x328] sm:$0xff] %vm1019, %v9914
      %10043 = vst.msk [vmem:[%s730 + $0x330] sm:$0xff] %vm1019, %v9915
      %10044 = vst.msk [vmem:[%s730 + $0x338] sm:$0xff] %vm1019, %v9916
      %10045 = vst.msk [vmem:[%s730 + $0x340] sm:$0xff] %vm1019, %v9917
      %10046 = vst.msk [vmem:[%s730 + $0x348] sm:$0xff] %vm1019, %v9918
      %10047 = vst.msk [vmem:[%s730 + $0x350] sm:$0xff] %vm1019, %v9919
      %10048 = vst.msk [vmem:[%s730 + $0x358] sm:$0xff] %vm1019, %v9920
      %10049 = vst.msk [vmem:[%s730 + $0x360] sm:$0xff] %vm1019, %v9921
      %10050 = vst.msk [vmem:[%s730 + $0x368] sm:$0xff] %vm1019, %v9922
      %10051 = vst.msk [vmem:[%s730 + $0x370] sm:$0xff] %vm1019, %v9923
      %10052 = vst.msk [vmem:[%s730 + $0x378] sm:$0xff] %vm1019, %v9924
      %10053 = vst.msk [vmem:[%s730 + $0x380] sm:$0xff] %vm1019, %v9925
      %10054 = vst.msk [vmem:[%s730 + $0x388] sm:$0xff] %vm1019, %v9926
      %10055 = vst.msk [vmem:[%s730 + $0x390] sm:$0xff] %vm1019, %v9927
      %10056 = vst.msk [vmem:[%s730 + $0x398] sm:$0xff] %vm1019, %v9928
      %10057 = vst.msk [vmem:[%s730 + $0x3a0] sm:$0xff] %vm1019, %v9929
      %10058 = vst.msk [vmem:[%s730 + $0x3a8] sm:$0xff] %vm1019, %v9930
      %10059 = vst.msk [vmem:[%s730 + $0x3b0] sm:$0xff] %vm1019, %v9931
      %10060 = vst.msk [vmem:[%s730 + $0x3b8] sm:$0xff] %vm1019, %v9932
      %10061 = vst.msk [vmem:[%s730 + $0x3c0] sm:$0xff] %vm1019, %v9933
      %10062 = vst.msk [vmem:[%s730 + $0x3c8] sm:$0xff] %vm1019, %v9934
      %10063 = vst.msk [vmem:[%s730 + $0x3d0] sm:$0xff] %vm1019, %v9935
      %10064 = vst.msk [vmem:[%s730 + $0x3d8] sm:$0xff] %vm1019, %v9936
      %10065 = vst.msk [vmem:[%s730 + $0x3e0] sm:$0xff] %vm1019, %v9937
      %10066 = vst.msk [vmem:[%s730 + $0x3e8] sm:$0xff] %vm1019, %v9938
      %10067 = vst.msk [vmem:[%s730 + $0x3f0] sm:$0xff] %vm1019, %v9939
      %10068 = vst.msk [vmem:[%s730 + $0x3f8] sm:$0xff] %vm1019, %v9940
      %p10069 = scmp.lt.s32.totalorder %s34, 1
      %s10070 = scalar_select %p10069, %s34, 1
      %s10071 = smul.addr %s10070, 128
      %s10072 = smul.addr %s10071, 8
      %s10073 = scalar_lea.vmem %s23, %s10072
      // Predicated region
      $region113: #{tpu_custom_call.1} parent=111 // pred_check
        %p10074 = pneg %p545
      $region114: #{tpu_custom_call.1} parent=111 // pred_check_branch
        %10076 = sbr.rel (%p10074) target = $region116
      $region115: #{tpu_custom_call.1} parent=111 // pred_region
        _
      $region116: #{tpu_custom_call.1} parent=111 // pred_fallthru
        _
    $region112: #{tpu_custom_call.1} parent=5 // pred_fallthru
      _
    %p10077 = scmp.le.s32.totalorder 2, %s29
    // Predicated region
    $region117: #{tpu_custom_call.1} parent=5 // pred_check
      %p10078 = pneg %p10077
    $region118: #{tpu_custom_call.1} parent=5 // pred_check_branch
      %10080 = sbr.rel (%p10078) target = $region120
    $region119: #{tpu_custom_call.1} parent=5 // pred_region
      %s10081 = ssub.s32 %s29, 2
      // Predicated region
      $region121: #{tpu_custom_call.1} parent=119 // pred_check
        %p10082 = pneg %p551
      $region122: #{tpu_custom_call.1} parent=119 // pred_check_branch
        %10084 = sbr.rel (%p10082) target = $region124
      $region123: #{tpu_custom_call.1} parent=119 // pred_region
        %p10085 = scmp.lt.s32.totalorder %s35, 1
        %s10086 = scalar_select %p10085, %s35, 1
        %s10087 = smul.addr %s10086, 128
        %s10088 = smul.addr %s10087, 8
        %s10089 = scalar_lea.vmem %s23, %s10088
      $region124: #{tpu_custom_call.1} parent=119 // pred_fallthru
        _
    $region120: #{tpu_custom_call.1} parent=5 // pred_fallthru
      _
  $region6: #{tpu_custom_call.1} parent=0 // loop_footer
    %s33 = sadd.s32 1, %s29
  $region7: #{tpu_custom_call.1} parent=0 // loop_footer_branch
    %28 = sbr.rel target = $region3
  $region8: #{tpu_custom_call.1} parent=0 // loop_exit
    _

</llo_original>
